<compile_context>
chip_gen: v7x
topology: tpu7x:2x2x1
jax: 0.10.0
libtpu: 0.0.40
codegen_flags: <defaults>
</compile_context>

<pallas_src>
import jax
import jax.numpy as jnp
from jax.experimental import pallas as pl
from jax.experimental.pallas import tpu as pltpu

MAP_H, MAP_W = 28, 28


# ----------------------------------------------------------------------------
# Fused kernel: one grid step == one image; everything stays in VMEM.
# ----------------------------------------------------------------------------
def _fused_encoder_kernel(x_ref,
                          m1, b1, m2, b2, m3, b3, m4, b4, m5, b5, m6, b6,
                          wc, bc, o_ref):
    f32 = jnp.float32
    bf16 = jnp.bfloat16

    def conv(a, m_ref, b_ref, *, H, W, Cin, Cout, k, stride, pad, relu):
        """a: [H, W*Cin] f32 value -> [Ho, Wo*Cout] f32 value.

        out = sum_ki  a_pad[rows(ki), :] @ M[ki]   (banded weight matmuls).
        """
        Hp, Wp = H + 2 * pad, W + 2 * pad
        Ho = (Hp - k) // stride + 1
        Wo = (Wp - k) // stride + 1
        if pad:
            zc = jnp.zeros((H, pad * Cin), f32)
            a = jnp.concatenate([zc, a, zc], axis=1)            # [H, Wp*Cin]
            zr = jnp.zeros((pad, Wp * Cin), f32)
            a = jnp.concatenate([zr, a, zr], axis=0)            # [Hp, Wp*Cin]
        acc = jnp.zeros((Ho, Wo * Cout), f32)
        for ki in range(k):
            if stride == 1:
                slab = a[ki:ki + Ho, :]
            else:                                               # strided rows
                slab = jnp.concatenate(
                    [a[ki + stride * i:ki + stride * i + 1, :]
                     for i in range(Ho)], axis=0)
            acc = acc + jnp.dot(slab.astype(bf16), m_ref[ki],
                                preferred_element_type=f32)
        acc = acc + b_ref[...]                                  # [1, Wo*Cout]
        if relu:
            acc = jnp.maximum(acc, 0.0)
        return acc

    def pool(a, *, H, W, C):
        """2x2 / stride-2 max pool on a [H, W*C] value -> [H//2, (W//2)*C]."""
        t = jnp.maximum(a[:-1, :], a[1:, :])                    # rows (i, i+1)
        t = jnp.maximum(t[:, :-C], t[:, C:])                    # cols (j, j+1)
        t = jnp.concatenate([t[2 * i:2 * i + 1, :]
                             for i in range(H // 2)], axis=0)   # keep even rows
        t = jnp.concatenate([t[:, 2 * j * C:(2 * j + 1) * C]
                             for j in range(W // 2)], axis=1)   # even col blocks
        return t

    h = x_ref[0].astype(f32)                                                 # [28, 28]
    h = conv(h, m1, b1, H=28, W=28, Cin=1, Cout=8, k=3, stride=1, pad=1, relu=True)
    h = conv(h, m2, b2, H=28, W=28, Cin=8, Cout=8, k=3, stride=1, pad=1, relu=True)
    h = pool(h, H=28, W=28, C=8)                                             # [14, 112]
    h = conv(h, m3, b3, H=14, W=14, Cin=8, Cout=16, k=3, stride=1, pad=1, relu=True)
    h = conv(h, m4, b4, H=14, W=14, Cin=16, Cout=16, k=3, stride=1, pad=1, relu=True)
    h = pool(h, H=14, W=14, C=16)                                            # [7, 112]
    h = conv(h, m5, b5, H=7, W=7, Cin=16, Cout=32, k=3, stride=1, pad=1, relu=True)
    h = conv(h, m6, b6, H=7, W=7, Cin=32, Cout=64, k=5, stride=2, pad=2, relu=True)  # [4, 256]
    # conv7 (4x4 valid, no ReLU) folded with the Linear into (wc, bc):
    res = bc[...]                                                            # [1, dim_out]
    for r in range(4):
        res = res + jnp.dot(h[r:r + 1, :].astype(bf16), wc[r],
                            preferred_element_type=f32)
    o_ref[0] = res


# ----------------------------------------------------------------------------
# Trace-time weight preprocessing (plain JAX, tiny): banded conv matrices,
# row-tiled biases, and the conv7+Linear fold.
# ----------------------------------------------------------------------------
def _band_matrices(w, W, stride, pad):
    """w: [k,k,Cin,Cout] HWIO.  Returns [k, (W+2p)*Cin, Wo*Cout] f32 with
    M[ki][(j*stride+kj)*Cin+ci, j*Cout+co] == w[ki, kj, ci, co]."""
    k, _, cin, cout = w.shape
    wp = W + 2 * pad
    wo = (wp - k) // stride + 1
    j = jnp.arange(wo)
    mats = []
    for ki in range(k):
        m = jnp.zeros((wp * cin, wo * cout), jnp.float32)
        for kj in range(k):
            sel = jnp.zeros((wp, wo), jnp.float32).at[j * stride + kj, j].set(1.0)
            m = m + jnp.kron(sel, w[ki, kj].astype(jnp.float32))
        mats.append(m)
    return jnp.stack(mats, axis=0)


_CONV_GEOM = (("c1", 28, 1, 1), ("c2", 28, 1, 1), ("c3", 14, 1, 1),
              ("c4", 14, 1, 1), ("c5", 7, 1, 1), ("c6", 7, 2, 2))


def _prepare_operands(params):
    ops = []
    for name, W, stride, pad in _CONV_GEOM:
        w, b = params[name]
        k = w.shape[0]
        wo = (W + 2 * pad - k) // stride + 1
        ops.append(_band_matrices(w, W, stride, pad).astype(jnp.bfloat16))
        ops.append(jnp.tile(b, wo)[None, :].astype(jnp.float32))
    w7, b7 = params["c7"]
    lin_w = params["lin_w"].astype(jnp.float32)
    dim_out = lin_w.shape[1]
    wc = w7.reshape(4 * 4 * 64, 64).astype(jnp.float32) @ lin_w     # [1024, dim_out]
    bc = b7.astype(jnp.float32) @ lin_w + params["lin_b"]
    ops.append(wc.reshape(4, 4 * 64, dim_out).astype(jnp.bfloat16))
    ops.append(bc[None, :].astype(jnp.float32))
    return ops


# ----------------------------------------------------------------------------
# Full forward pass (mirrors VAE_encoder.forward)
# ----------------------------------------------------------------------------
def vae_encoder_forward(params, x):
    dim_out = params["lin_b"].shape[0]
    B = x.size // (MAP_H * MAP_W)
    # torch.reshape(x, [-1, 1, 28, 28]); with C==1, NCHW -> per-image [H, W*C].
    x2 = x.reshape(B, MAP_H, MAP_W).astype(jnp.float32)
    ops = _prepare_operands(params)

    in_specs = [pl.BlockSpec((1, MAP_H, MAP_W), lambda b: (b, 0, 0))]
    for a in ops:
        if a.ndim == 3:
            in_specs.append(pl.BlockSpec(a.shape, lambda b: (0, 0, 0)))
        else:
            in_specs.append(pl.BlockSpec(a.shape, lambda b: (0, 0)))

    out = pl.pallas_call(
        _fused_encoder_kernel,
        out_shape=jax.ShapeDtypeStruct((B, 1, dim_out), jnp.float32),
        grid=(B,),
        in_specs=in_specs,
        out_specs=pl.BlockSpec((1, 1, dim_out), lambda b: (b, 0, 0)),
        compiler_params=pltpu.CompilerParams(
            dimension_semantics=("parallel",)),
    )(x2, *ops)
    return out.reshape(B, dim_out)


# ----------------------------------------------------------------------------
# Deterministic parameter init (shapes from the module __init__; HWIO layout)
# ----------------------------------------------------------------------------
def init_params(key, dim_out):
    def conv_p(k, kh, kw, cin, cout):
        k1, k2 = jax.random.split(k)
        fan_in = kh * kw * cin
        w = jax.random.normal(k1, (kh, kw, cin, cout), jnp.float32) / jnp.sqrt(
            jnp.float32(fan_in))
        b = 0.01 * jax.random.normal(k2, (cout,), jnp.float32)
        return w, b

    keys = jax.random.split(key, 8)
    params = {
        "c1": conv_p(keys[0], 3, 3, 1, 8),     # Conv2d(1, 8, 3, padding=1)
        "c2": conv_p(keys[1], 3, 3, 8, 8),     # Conv2d(8, 8, 3, padding=1)
        "c3": conv_p(keys[2], 3, 3, 8, 16),    # Conv2d(8, 16, 3, padding=1)
        "c4": conv_p(keys[3], 3, 3, 16, 16),   # Conv2d(16, 16, 3, padding=1)
        "c5": conv_p(keys[4], 3, 3, 16, 32),   # Conv2d(16, 32, 3, padding=1)
        "c6": conv_p(keys[5], 5, 5, 32, 64),   # Conv2d(32, 64, 5, stride=2, padding=2)
        "c7": conv_p(keys[6], 4, 4, 64, 64),   # Conv2d(64, 64, 4)
    }
    kw_, kb_ = jax.random.split(keys[7])
    params["lin_w"] = jax.random.normal(kw_, (64, dim_out), jnp.float32) / 8.0
    params["lin_b"] = 0.01 * jax.random.normal(kb_, (dim_out,), jnp.float32)
    return params


# ----------------------------------------------------------------------------
# Pure-JAX (XLA) f32 reference for validation
# ----------------------------------------------------------------------------
def reference_forward(params, x):
    B = x.size // (MAP_H * MAP_W)
    h = x.reshape(B, MAP_H, MAP_W, 1).astype(jnp.float32)

    def conv(h, w, b, stride, pad):
        out = jax.lax.conv_general_dilated(
            h, w.astype(jnp.float32), (stride, stride),
            [(pad, pad), (pad, pad)],
            dimension_numbers=("NHWC", "HWIO", "NHWC"))
        return out + b.reshape(1, 1, 1, -1)

    def pool(h):
        return jax.lax.reduce_window(h, -jnp.inf, jax.lax.max,
                                     (1, 2, 2, 1), (1, 2, 2, 1), "VALID")

    h = jax.nn.relu(conv(h, *params["c1"], 1, 1))
    h = jax.nn.relu(conv(h, *params["c2"], 1, 1))
    h = pool(h)
    h = jax.nn.relu(conv(h, *params["c3"], 1, 1))
    h = jax.nn.relu(conv(h, *params["c4"], 1, 1))
    h = pool(h)
    h = jax.nn.relu(conv(h, *params["c5"], 1, 1))
    h = jax.nn.relu(conv(h, *params["c6"], 2, 2))
    h = conv(h, *params["c7"], 1, 0)                        # no ReLU
    return h.reshape(B, 64) @ params["lin_w"] + params["lin_b"]


if __name__ == "__main__":
    key = jax.random.PRNGKey(0)
    pkey, xkey = jax.random.split(key)
    dim_out = 16
    params = init_params(pkey, dim_out)
    x = jax.random.normal(xkey, (2, 1, MAP_H, MAP_W), jnp.float32)  # batch=2

    fwd = jax.jit(vae_encoder_forward)
    out = jax.block_until_ready(fwd(params, x))
    assert out.shape == (2, dim_out), out.shape
    assert bool(jnp.all(jnp.isfinite(out)))

    ref = jax.block_until_ready(jax.jit(reference_forward)(params, x))
    max_err = float(jnp.max(jnp.abs(out - ref)))
    assert max_err < 1e-1, f"mismatch vs f32 reference: {max_err}"
    print("KERNEL_OK")
</pallas_src>

<mosaic_0001>
module attributes {stable_mosaic.version = 11 : i64} {
  func.func @_fused_encoder_kernel(%arg0: i32, %arg1: memref<1x28x28xf32, #tpu.memory_space<vmem>>, %arg2: memref<3x30x224xbf16, #tpu.memory_space<vmem>>, %arg3: memref<1x224xf32, #tpu.memory_space<vmem>>, %arg4: memref<3x240x224xbf16, #tpu.memory_space<vmem>>, %arg5: memref<1x224xf32, #tpu.memory_space<vmem>>, %arg6: memref<3x128x224xbf16, #tpu.memory_space<vmem>>, %arg7: memref<1x224xf32, #tpu.memory_space<vmem>>, %arg8: memref<3x256x224xbf16, #tpu.memory_space<vmem>>, %arg9: memref<1x224xf32, #tpu.memory_space<vmem>>, %arg10: memref<3x144x224xbf16, #tpu.memory_space<vmem>>, %arg11: memref<1x224xf32, #tpu.memory_space<vmem>>, %arg12: memref<5x352x256xbf16, #tpu.memory_space<vmem>>, %arg13: memref<1x256xf32, #tpu.memory_space<vmem>>, %arg14: memref<4x256x16xbf16, #tpu.memory_space<vmem>>, %arg15: memref<1x16xf32, #tpu.memory_space<vmem>>, %arg16: memref<1x1x16xf32, #tpu.memory_space<vmem>>) attributes {dimension_semantics = [#tpu.dimension_semantics<parallel>], iteration_bounds = array<i64: 2>, scalar_prefetch = 0 : i64, scratch_operands = 0 : i64, tpu.core_type = #tpu.core_type<tc>, window_params = [{transform_indices = @transform_0, window_bounds = array<i64: 1, 28, 28>}, {pipeline_mode = #tpu.pipeline_mode<synchronous>, transform_indices = @transform_1, window_bounds = array<i64: 3, 30, 224>}, {pipeline_mode = #tpu.pipeline_mode<synchronous>, transform_indices = @transform_2, window_bounds = array<i64: 1, 224>}, {pipeline_mode = #tpu.pipeline_mode<synchronous>, transform_indices = @transform_3, window_bounds = array<i64: 3, 240, 224>}, {pipeline_mode = #tpu.pipeline_mode<synchronous>, transform_indices = @transform_4, window_bounds = array<i64: 1, 224>}, {pipeline_mode = #tpu.pipeline_mode<synchronous>, transform_indices = @transform_5, window_bounds = array<i64: 3, 128, 224>}, {pipeline_mode = #tpu.pipeline_mode<synchronous>, transform_indices = @transform_6, window_bounds = array<i64: 1, 224>}, {pipeline_mode = #tpu.pipeline_mode<synchronous>, transform_indices = @transform_7, window_bounds = array<i64: 3, 256, 224>}, {pipeline_mode = #tpu.pipeline_mode<synchronous>, transform_indices = @transform_8, window_bounds = array<i64: 1, 224>}, {pipeline_mode = #tpu.pipeline_mode<synchronous>, transform_indices = @transform_9, window_bounds = array<i64: 3, 144, 224>}, {pipeline_mode = #tpu.pipeline_mode<synchronous>, transform_indices = @transform_10, window_bounds = array<i64: 1, 224>}, {pipeline_mode = #tpu.pipeline_mode<synchronous>, transform_indices = @transform_11, window_bounds = array<i64: 5, 352, 256>}, {pipeline_mode = #tpu.pipeline_mode<synchronous>, transform_indices = @transform_12, window_bounds = array<i64: 1, 256>}, {pipeline_mode = #tpu.pipeline_mode<synchronous>, transform_indices = @transform_13, window_bounds = array<i64: 4, 256, 16>}, {pipeline_mode = #tpu.pipeline_mode<synchronous>, transform_indices = @transform_14, window_bounds = array<i64: 1, 16>}, {transform_indices = @transform_15, window_bounds = array<i64: 1, 1, 16>}]} {
    %c0 = arith.constant 0 : index
    %c0_0 = arith.constant 0 : index
    %c0_1 = arith.constant 0 : index
    %0 = vector.load %arg1[%c0, %c0_0, %c0_1] : memref<1x28x28xf32, #tpu.memory_space<vmem>>, vector<1x28x28xf32>
    %1 = vector.shape_cast %0 : vector<1x28x28xf32> to vector<28x28xf32>
    %cst = arith.constant 0.000000e+00 : f32
    %2 = vector.broadcast %cst : f32 to vector<28x1xf32>
    %3 = tpu.concatenate %2, %1, %2 in 1 : vector<28x1xf32>, vector<28x28xf32>, vector<28x1xf32> -> vector<28x30xf32>
    %cst_2 = arith.constant 0.000000e+00 : f32
    %4 = vector.broadcast %cst_2 : f32 to vector<1x30xf32>
    %5 = tpu.concatenate %4, %3, %4 in 0 : vector<1x30xf32>, vector<28x30xf32>, vector<1x30xf32> -> vector<30x30xf32>
    %cst_3 = arith.constant 0.000000e+00 : f32
    %6 = vector.broadcast %cst_3 : f32 to vector<28x224xf32>
    %7 = vector.extract_strided_slice %5 {offsets = [0, 0], sizes = [28, 30], strides = [1, 1]} : vector<30x30xf32> to vector<28x30xf32>
    %8 = arith.truncf %7 : vector<28x30xf32> to vector<28x30xbf16>
    %c0_4 = arith.constant 0 : index
    %c0_5 = arith.constant 0 : index
    %c0_6 = arith.constant 0 : index
    %9 = vector.load %arg2[%c0_4, %c0_5, %c0_6] : memref<3x30x224xbf16, #tpu.memory_space<vmem>>, vector<1x30x224xbf16>
    %10 = vector.shape_cast %9 : vector<1x30x224xbf16> to vector<30x224xbf16>
    %cst_7 = arith.constant dense<0.000000e+00> : vector<28x224xf32>
    %11 = tpu.matmul %8, %10, %cst_7 {dimension_numbers = #tpu.dot_dimension_numbers<[1], [0], [0], [1], [0, 0, 1, 1], [], []>} : vector<28x30xbf16>, vector<30x224xbf16>, vector<28x224xf32> -> vector<28x224xf32>
    %12 = arith.addf %6, %11 : vector<28x224xf32>
    %13 = vector.extract_strided_slice %5 {offsets = [1, 0], sizes = [28, 30], strides = [1, 1]} : vector<30x30xf32> to vector<28x30xf32>
    %14 = arith.truncf %13 : vector<28x30xf32> to vector<28x30xbf16>
    %c1 = arith.constant 1 : index
    %c0_8 = arith.constant 0 : index
    %c0_9 = arith.constant 0 : index
    %15 = vector.load %arg2[%c1, %c0_8, %c0_9] : memref<3x30x224xbf16, #tpu.memory_space<vmem>>, vector<1x30x224xbf16>
    %16 = vector.shape_cast %15 : vector<1x30x224xbf16> to vector<30x224xbf16>
    %cst_10 = arith.constant dense<0.000000e+00> : vector<28x224xf32>
    %17 = tpu.matmul %14, %16, %cst_10 {dimension_numbers = #tpu.dot_dimension_numbers<[1], [0], [0], [1], [0, 0, 1, 1], [], []>} : vector<28x30xbf16>, vector<30x224xbf16>, vector<28x224xf32> -> vector<28x224xf32>
    %18 = arith.addf %12, %17 : vector<28x224xf32>
    %19 = vector.extract_strided_slice %5 {offsets = [2, 0], sizes = [28, 30], strides = [1, 1]} : vector<30x30xf32> to vector<28x30xf32>
    %20 = arith.truncf %19 : vector<28x30xf32> to vector<28x30xbf16>
    %c2 = arith.constant 2 : index
    %c0_11 = arith.constant 0 : index
    %c0_12 = arith.constant 0 : index
    %21 = vector.load %arg2[%c2, %c0_11, %c0_12] : memref<3x30x224xbf16, #tpu.memory_space<vmem>>, vector<1x30x224xbf16>
    %22 = vector.shape_cast %21 : vector<1x30x224xbf16> to vector<30x224xbf16>
    %cst_13 = arith.constant dense<0.000000e+00> : vector<28x224xf32>
    %23 = tpu.matmul %20, %22, %cst_13 {dimension_numbers = #tpu.dot_dimension_numbers<[1], [0], [0], [1], [0, 0, 1, 1], [], []>} : vector<28x30xbf16>, vector<30x224xbf16>, vector<28x224xf32> -> vector<28x224xf32>
    %24 = arith.addf %18, %23 : vector<28x224xf32>
    %c0_14 = arith.constant 0 : index
    %c0_15 = arith.constant 0 : index
    %25 = vector.load %arg3[%c0_14, %c0_15] : memref<1x224xf32, #tpu.memory_space<vmem>>, vector<1x224xf32>
    %26 = vector.broadcast %25 : vector<1x224xf32> to vector<28x224xf32>
    %27 = arith.addf %24, %26 : vector<28x224xf32>
    %cst_16 = arith.constant 0.000000e+00 : f32
    %28 = vector.broadcast %cst_16 : f32 to vector<28x224xf32>
    %29 = arith.maximumf %27, %28 : vector<28x224xf32>
    %cst_17 = arith.constant 0.000000e+00 : f32
    %30 = vector.broadcast %cst_17 : f32 to vector<28x8xf32>
    %31 = tpu.concatenate %30, %29, %30 in 1 : vector<28x8xf32>, vector<28x224xf32>, vector<28x8xf32> -> vector<28x240xf32>
    %cst_18 = arith.constant 0.000000e+00 : f32
    %32 = vector.broadcast %cst_18 : f32 to vector<1x240xf32>
    %33 = tpu.concatenate %32, %31, %32 in 0 : vector<1x240xf32>, vector<28x240xf32>, vector<1x240xf32> -> vector<30x240xf32>
    %cst_19 = arith.constant 0.000000e+00 : f32
    %34 = vector.broadcast %cst_19 : f32 to vector<28x224xf32>
    %35 = vector.extract_strided_slice %33 {offsets = [0, 0], sizes = [28, 240], strides = [1, 1]} : vector<30x240xf32> to vector<28x240xf32>
    %36 = arith.truncf %35 : vector<28x240xf32> to vector<28x240xbf16>
    %c0_20 = arith.constant 0 : index
    %c0_21 = arith.constant 0 : index
    %c0_22 = arith.constant 0 : index
    %37 = vector.load %arg4[%c0_20, %c0_21, %c0_22] : memref<3x240x224xbf16, #tpu.memory_space<vmem>>, vector<1x240x224xbf16>
    %38 = vector.shape_cast %37 : vector<1x240x224xbf16> to vector<240x224xbf16>
    %cst_23 = arith.constant dense<0.000000e+00> : vector<28x224xf32>
    %39 = tpu.matmul %36, %38, %cst_23 {dimension_numbers = #tpu.dot_dimension_numbers<[1], [0], [0], [1], [0, 0, 1, 1], [], []>} : vector<28x240xbf16>, vector<240x224xbf16>, vector<28x224xf32> -> vector<28x224xf32>
    %40 = arith.addf %34, %39 : vector<28x224xf32>
    %41 = vector.extract_strided_slice %33 {offsets = [1, 0], sizes = [28, 240], strides = [1, 1]} : vector<30x240xf32> to vector<28x240xf32>
    %42 = arith.truncf %41 : vector<28x240xf32> to vector<28x240xbf16>
    %c1_24 = arith.constant 1 : index
    %c0_25 = arith.constant 0 : index
    %c0_26 = arith.constant 0 : index
    %43 = vector.load %arg4[%c1_24, %c0_25, %c0_26] : memref<3x240x224xbf16, #tpu.memory_space<vmem>>, vector<1x240x224xbf16>
    %44 = vector.shape_cast %43 : vector<1x240x224xbf16> to vector<240x224xbf16>
    %cst_27 = arith.constant dense<0.000000e+00> : vector<28x224xf32>
    %45 = tpu.matmul %42, %44, %cst_27 {dimension_numbers = #tpu.dot_dimension_numbers<[1], [0], [0], [1], [0, 0, 1, 1], [], []>} : vector<28x240xbf16>, vector<240x224xbf16>, vector<28x224xf32> -> vector<28x224xf32>
    %46 = arith.addf %40, %45 : vector<28x224xf32>
    %47 = vector.extract_strided_slice %33 {offsets = [2, 0], sizes = [28, 240], strides = [1, 1]} : vector<30x240xf32> to vector<28x240xf32>
    %48 = arith.truncf %47 : vector<28x240xf32> to vector<28x240xbf16>
    %c2_28 = arith.constant 2 : index
    %c0_29 = arith.constant 0 : index
    %c0_30 = arith.constant 0 : index
    %49 = vector.load %arg4[%c2_28, %c0_29, %c0_30] : memref<3x240x224xbf16, #tpu.memory_space<vmem>>, vector<1x240x224xbf16>
    %50 = vector.shape_cast %49 : vector<1x240x224xbf16> to vector<240x224xbf16>
    %cst_31 = arith.constant dense<0.000000e+00> : vector<28x224xf32>
    %51 = tpu.matmul %48, %50, %cst_31 {dimension_numbers = #tpu.dot_dimension_numbers<[1], [0], [0], [1], [0, 0, 1, 1], [], []>} : vector<28x240xbf16>, vector<240x224xbf16>, vector<28x224xf32> -> vector<28x224xf32>
    %52 = arith.addf %46, %51 : vector<28x224xf32>
    %c0_32 = arith.constant 0 : index
    %c0_33 = arith.constant 0 : index
    %53 = vector.load %arg5[%c0_32, %c0_33] : memref<1x224xf32, #tpu.memory_space<vmem>>, vector<1x224xf32>
    %54 = vector.broadcast %53 : vector<1x224xf32> to vector<28x224xf32>
    %55 = arith.addf %52, %54 : vector<28x224xf32>
    %cst_34 = arith.constant 0.000000e+00 : f32
    %56 = vector.broadcast %cst_34 : f32 to vector<28x224xf32>
    %57 = arith.maximumf %55, %56 : vector<28x224xf32>
    %58 = vector.extract_strided_slice %57 {offsets = [0, 0], sizes = [27, 224], strides = [1, 1]} : vector<28x224xf32> to vector<27x224xf32>
    %59 = vector.extract_strided_slice %57 {offsets = [1, 0], sizes = [27, 224], strides = [1, 1]} : vector<28x224xf32> to vector<27x224xf32>
    %60 = arith.maximumf %58, %59 : vector<27x224xf32>
    %61 = vector.extract_strided_slice %60 {offsets = [0, 0], sizes = [27, 216], strides = [1, 1]} : vector<27x224xf32> to vector<27x216xf32>
    %62 = vector.extract_strided_slice %60 {offsets = [0, 8], sizes = [27, 216], strides = [1, 1]} : vector<27x224xf32> to vector<27x216xf32>
    %63 = arith.maximumf %61, %62 : vector<27x216xf32>
    %64 = vector.extract_strided_slice %63 {offsets = [0, 0], sizes = [1, 216], strides = [1, 1]} : vector<27x216xf32> to vector<1x216xf32>
    %65 = vector.extract_strided_slice %63 {offsets = [2, 0], sizes = [1, 216], strides = [1, 1]} : vector<27x216xf32> to vector<1x216xf32>
    %66 = vector.extract_strided_slice %63 {offsets = [4, 0], sizes = [1, 216], strides = [1, 1]} : vector<27x216xf32> to vector<1x216xf32>
    %67 = vector.extract_strided_slice %63 {offsets = [6, 0], sizes = [1, 216], strides = [1, 1]} : vector<27x216xf32> to vector<1x216xf32>
    %68 = vector.extract_strided_slice %63 {offsets = [8, 0], sizes = [1, 216], strides = [1, 1]} : vector<27x216xf32> to vector<1x216xf32>
    %69 = vector.extract_strided_slice %63 {offsets = [10, 0], sizes = [1, 216], strides = [1, 1]} : vector<27x216xf32> to vector<1x216xf32>
    %70 = vector.extract_strided_slice %63 {offsets = [12, 0], sizes = [1, 216], strides = [1, 1]} : vector<27x216xf32> to vector<1x216xf32>
    %71 = vector.extract_strided_slice %63 {offsets = [14, 0], sizes = [1, 216], strides = [1, 1]} : vector<27x216xf32> to vector<1x216xf32>
    %72 = vector.extract_strided_slice %63 {offsets = [16, 0], sizes = [1, 216], strides = [1, 1]} : vector<27x216xf32> to vector<1x216xf32>
    %73 = vector.extract_strided_slice %63 {offsets = [18, 0], sizes = [1, 216], strides = [1, 1]} : vector<27x216xf32> to vector<1x216xf32>
    %74 = vector.extract_strided_slice %63 {offsets = [20, 0], sizes = [1, 216], strides = [1, 1]} : vector<27x216xf32> to vector<1x216xf32>
    %75 = vector.extract_strided_slice %63 {offsets = [22, 0], sizes = [1, 216], strides = [1, 1]} : vector<27x216xf32> to vector<1x216xf32>
    %76 = vector.extract_strided_slice %63 {offsets = [24, 0], sizes = [1, 216], strides = [1, 1]} : vector<27x216xf32> to vector<1x216xf32>
    %77 = vector.extract_strided_slice %63 {offsets = [26, 0], sizes = [1, 216], strides = [1, 1]} : vector<27x216xf32> to vector<1x216xf32>
    %78 = tpu.concatenate %64, %65, %66, %67, %68, %69, %70, %71, %72, %73, %74, %75, %76, %77 in 0 : vector<1x216xf32>, vector<1x216xf32>, vector<1x216xf32>, vector<1x216xf32>, vector<1x216xf32>, vector<1x216xf32>, vector<1x216xf32>, vector<1x216xf32>, vector<1x216xf32>, vector<1x216xf32>, vector<1x216xf32>, vector<1x216xf32>, vector<1x216xf32>, vector<1x216xf32> -> vector<14x216xf32>
    %79 = vector.extract_strided_slice %78 {offsets = [0, 0], sizes = [14, 8], strides = [1, 1]} : vector<14x216xf32> to vector<14x8xf32>
    %80 = vector.extract_strided_slice %78 {offsets = [0, 16], sizes = [14, 8], strides = [1, 1]} : vector<14x216xf32> to vector<14x8xf32>
    %81 = vector.extract_strided_slice %78 {offsets = [0, 32], sizes = [14, 8], strides = [1, 1]} : vector<14x216xf32> to vector<14x8xf32>
    %82 = vector.extract_strided_slice %78 {offsets = [0, 48], sizes = [14, 8], strides = [1, 1]} : vector<14x216xf32> to vector<14x8xf32>
    %83 = vector.extract_strided_slice %78 {offsets = [0, 64], sizes = [14, 8], strides = [1, 1]} : vector<14x216xf32> to vector<14x8xf32>
    %84 = vector.extract_strided_slice %78 {offsets = [0, 80], sizes = [14, 8], strides = [1, 1]} : vector<14x216xf32> to vector<14x8xf32>
    %85 = vector.extract_strided_slice %78 {offsets = [0, 96], sizes = [14, 8], strides = [1, 1]} : vector<14x216xf32> to vector<14x8xf32>
    %86 = vector.extract_strided_slice %78 {offsets = [0, 112], sizes = [14, 8], strides = [1, 1]} : vector<14x216xf32> to vector<14x8xf32>
    %87 = vector.extract_strided_slice %78 {offsets = [0, 128], sizes = [14, 8], strides = [1, 1]} : vector<14x216xf32> to vector<14x8xf32>
    %88 = vector.extract_strided_slice %78 {offsets = [0, 144], sizes = [14, 8], strides = [1, 1]} : vector<14x216xf32> to vector<14x8xf32>
    %89 = vector.extract_strided_slice %78 {offsets = [0, 160], sizes = [14, 8], strides = [1, 1]} : vector<14x216xf32> to vector<14x8xf32>
    %90 = vector.extract_strided_slice %78 {offsets = [0, 176], sizes = [14, 8], strides = [1, 1]} : vector<14x216xf32> to vector<14x8xf32>
    %91 = vector.extract_strided_slice %78 {offsets = [0, 192], sizes = [14, 8], strides = [1, 1]} : vector<14x216xf32> to vector<14x8xf32>
    %92 = vector.extract_strided_slice %78 {offsets = [0, 208], sizes = [14, 8], strides = [1, 1]} : vector<14x216xf32> to vector<14x8xf32>
    %93 = tpu.concatenate %79, %80, %81, %82, %83, %84, %85, %86, %87, %88, %89, %90, %91, %92 in 1 : vector<14x8xf32>, vector<14x8xf32>, vector<14x8xf32>, vector<14x8xf32>, vector<14x8xf32>, vector<14x8xf32>, vector<14x8xf32>, vector<14x8xf32>, vector<14x8xf32>, vector<14x8xf32>, vector<14x8xf32>, vector<14x8xf32>, vector<14x8xf32>, vector<14x8xf32> -> vector<14x112xf32>
    %cst_35 = arith.constant 0.000000e+00 : f32
    %94 = vector.broadcast %cst_35 : f32 to vector<14x8xf32>
    %95 = tpu.concatenate %94, %93, %94 in 1 : vector<14x8xf32>, vector<14x112xf32>, vector<14x8xf32> -> vector<14x128xf32>
    %cst_36 = arith.constant 0.000000e+00 : f32
    %96 = vector.broadcast %cst_36 : f32 to vector<1x128xf32>
    %97 = tpu.concatenate %96, %95, %96 in 0 : vector<1x128xf32>, vector<14x128xf32>, vector<1x128xf32> -> vector<16x128xf32>
    %cst_37 = arith.constant 0.000000e+00 : f32
    %98 = vector.broadcast %cst_37 : f32 to vector<14x224xf32>
    %99 = vector.extract_strided_slice %97 {offsets = [0, 0], sizes = [14, 128], strides = [1, 1]} : vector<16x128xf32> to vector<14x128xf32>
    %100 = arith.truncf %99 : vector<14x128xf32> to vector<14x128xbf16>
    %c0_38 = arith.constant 0 : index
    %c0_39 = arith.constant 0 : index
    %c0_40 = arith.constant 0 : index
    %101 = vector.load %arg6[%c0_38, %c0_39, %c0_40] : memref<3x128x224xbf16, #tpu.memory_space<vmem>>, vector<1x128x224xbf16>
    %102 = vector.shape_cast %101 : vector<1x128x224xbf16> to vector<128x224xbf16>
    %cst_41 = arith.constant dense<0.000000e+00> : vector<14x224xf32>
    %103 = tpu.matmul %100, %102, %cst_41 {dimension_numbers = #tpu.dot_dimension_numbers<[1], [0], [0], [1], [0, 0, 1, 1], [], []>} : vector<14x128xbf16>, vector<128x224xbf16>, vector<14x224xf32> -> vector<14x224xf32>
    %104 = arith.addf %98, %103 : vector<14x224xf32>
    %105 = vector.extract_strided_slice %97 {offsets = [1, 0], sizes = [14, 128], strides = [1, 1]} : vector<16x128xf32> to vector<14x128xf32>
    %106 = arith.truncf %105 : vector<14x128xf32> to vector<14x128xbf16>
    %c1_42 = arith.constant 1 : index
    %c0_43 = arith.constant 0 : index
    %c0_44 = arith.constant 0 : index
    %107 = vector.load %arg6[%c1_42, %c0_43, %c0_44] : memref<3x128x224xbf16, #tpu.memory_space<vmem>>, vector<1x128x224xbf16>
    %108 = vector.shape_cast %107 : vector<1x128x224xbf16> to vector<128x224xbf16>
    %cst_45 = arith.constant dense<0.000000e+00> : vector<14x224xf32>
    %109 = tpu.matmul %106, %108, %cst_45 {dimension_numbers = #tpu.dot_dimension_numbers<[1], [0], [0], [1], [0, 0, 1, 1], [], []>} : vector<14x128xbf16>, vector<128x224xbf16>, vector<14x224xf32> -> vector<14x224xf32>
    %110 = arith.addf %104, %109 : vector<14x224xf32>
    %111 = vector.extract_strided_slice %97 {offsets = [2, 0], sizes = [14, 128], strides = [1, 1]} : vector<16x128xf32> to vector<14x128xf32>
    %112 = arith.truncf %111 : vector<14x128xf32> to vector<14x128xbf16>
    %c2_46 = arith.constant 2 : index
    %c0_47 = arith.constant 0 : index
    %c0_48 = arith.constant 0 : index
    %113 = vector.load %arg6[%c2_46, %c0_47, %c0_48] : memref<3x128x224xbf16, #tpu.memory_space<vmem>>, vector<1x128x224xbf16>
    %114 = vector.shape_cast %113 : vector<1x128x224xbf16> to vector<128x224xbf16>
    %cst_49 = arith.constant dense<0.000000e+00> : vector<14x224xf32>
    %115 = tpu.matmul %112, %114, %cst_49 {dimension_numbers = #tpu.dot_dimension_numbers<[1], [0], [0], [1], [0, 0, 1, 1], [], []>} : vector<14x128xbf16>, vector<128x224xbf16>, vector<14x224xf32> -> vector<14x224xf32>
    %116 = arith.addf %110, %115 : vector<14x224xf32>
    %c0_50 = arith.constant 0 : index
    %c0_51 = arith.constant 0 : index
    %117 = vector.load %arg7[%c0_50, %c0_51] : memref<1x224xf32, #tpu.memory_space<vmem>>, vector<1x224xf32>
    %118 = vector.broadcast %117 : vector<1x224xf32> to vector<14x224xf32>
    %119 = arith.addf %116, %118 : vector<14x224xf32>
    %cst_52 = arith.constant 0.000000e+00 : f32
    %120 = vector.broadcast %cst_52 : f32 to vector<14x224xf32>
    %121 = arith.maximumf %119, %120 : vector<14x224xf32>
    %cst_53 = arith.constant 0.000000e+00 : f32
    %122 = vector.broadcast %cst_53 : f32 to vector<14x16xf32>
    %123 = tpu.concatenate %122, %121, %122 in 1 : vector<14x16xf32>, vector<14x224xf32>, vector<14x16xf32> -> vector<14x256xf32>
    %cst_54 = arith.constant 0.000000e+00 : f32
    %124 = vector.broadcast %cst_54 : f32 to vector<1x256xf32>
    %125 = tpu.concatenate %124, %123, %124 in 0 : vector<1x256xf32>, vector<14x256xf32>, vector<1x256xf32> -> vector<16x256xf32>
    %cst_55 = arith.constant 0.000000e+00 : f32
    %126 = vector.broadcast %cst_55 : f32 to vector<14x224xf32>
    %127 = vector.extract_strided_slice %125 {offsets = [0, 0], sizes = [14, 256], strides = [1, 1]} : vector<16x256xf32> to vector<14x256xf32>
    %128 = arith.truncf %127 : vector<14x256xf32> to vector<14x256xbf16>
    %c0_56 = arith.constant 0 : index
    %c0_57 = arith.constant 0 : index
    %c0_58 = arith.constant 0 : index
    %129 = vector.load %arg8[%c0_56, %c0_57, %c0_58] : memref<3x256x224xbf16, #tpu.memory_space<vmem>>, vector<1x256x224xbf16>
    %130 = vector.shape_cast %129 : vector<1x256x224xbf16> to vector<256x224xbf16>
    %cst_59 = arith.constant dense<0.000000e+00> : vector<14x224xf32>
    %131 = tpu.matmul %128, %130, %cst_59 {dimension_numbers = #tpu.dot_dimension_numbers<[1], [0], [0], [1], [0, 0, 1, 1], [], []>} : vector<14x256xbf16>, vector<256x224xbf16>, vector<14x224xf32> -> vector<14x224xf32>
    %132 = arith.addf %126, %131 : vector<14x224xf32>
    %133 = vector.extract_strided_slice %125 {offsets = [1, 0], sizes = [14, 256], strides = [1, 1]} : vector<16x256xf32> to vector<14x256xf32>
    %134 = arith.truncf %133 : vector<14x256xf32> to vector<14x256xbf16>
    %c1_60 = arith.constant 1 : index
    %c0_61 = arith.constant 0 : index
    %c0_62 = arith.constant 0 : index
    %135 = vector.load %arg8[%c1_60, %c0_61, %c0_62] : memref<3x256x224xbf16, #tpu.memory_space<vmem>>, vector<1x256x224xbf16>
    %136 = vector.shape_cast %135 : vector<1x256x224xbf16> to vector<256x224xbf16>
    %cst_63 = arith.constant dense<0.000000e+00> : vector<14x224xf32>
    %137 = tpu.matmul %134, %136, %cst_63 {dimension_numbers = #tpu.dot_dimension_numbers<[1], [0], [0], [1], [0, 0, 1, 1], [], []>} : vector<14x256xbf16>, vector<256x224xbf16>, vector<14x224xf32> -> vector<14x224xf32>
    %138 = arith.addf %132, %137 : vector<14x224xf32>
    %139 = vector.extract_strided_slice %125 {offsets = [2, 0], sizes = [14, 256], strides = [1, 1]} : vector<16x256xf32> to vector<14x256xf32>
    %140 = arith.truncf %139 : vector<14x256xf32> to vector<14x256xbf16>
    %c2_64 = arith.constant 2 : index
    %c0_65 = arith.constant 0 : index
    %c0_66 = arith.constant 0 : index
    %141 = vector.load %arg8[%c2_64, %c0_65, %c0_66] : memref<3x256x224xbf16, #tpu.memory_space<vmem>>, vector<1x256x224xbf16>
    %142 = vector.shape_cast %141 : vector<1x256x224xbf16> to vector<256x224xbf16>
    %cst_67 = arith.constant dense<0.000000e+00> : vector<14x224xf32>
    %143 = tpu.matmul %140, %142, %cst_67 {dimension_numbers = #tpu.dot_dimension_numbers<[1], [0], [0], [1], [0, 0, 1, 1], [], []>} : vector<14x256xbf16>, vector<256x224xbf16>, vector<14x224xf32> -> vector<14x224xf32>
    %144 = arith.addf %138, %143 : vector<14x224xf32>
    %c0_68 = arith.constant 0 : index
    %c0_69 = arith.constant 0 : index
    %145 = vector.load %arg9[%c0_68, %c0_69] : memref<1x224xf32, #tpu.memory_space<vmem>>, vector<1x224xf32>
    %146 = vector.broadcast %145 : vector<1x224xf32> to vector<14x224xf32>
    %147 = arith.addf %144, %146 : vector<14x224xf32>
    %cst_70 = arith.constant 0.000000e+00 : f32
    %148 = vector.broadcast %cst_70 : f32 to vector<14x224xf32>
    %149 = arith.maximumf %147, %148 : vector<14x224xf32>
    %150 = vector.extract_strided_slice %149 {offsets = [0, 0], sizes = [13, 224], strides = [1, 1]} : vector<14x224xf32> to vector<13x224xf32>
    %151 = vector.extract_strided_slice %149 {offsets = [1, 0], sizes = [13, 224], strides = [1, 1]} : vector<14x224xf32> to vector<13x224xf32>
    %152 = arith.maximumf %150, %151 : vector<13x224xf32>
    %153 = vector.extract_strided_slice %152 {offsets = [0, 0], sizes = [13, 208], strides = [1, 1]} : vector<13x224xf32> to vector<13x208xf32>
    %154 = vector.extract_strided_slice %152 {offsets = [0, 16], sizes = [13, 208], strides = [1, 1]} : vector<13x224xf32> to vector<13x208xf32>
    %155 = arith.maximumf %153, %154 : vector<13x208xf32>
    %156 = vector.extract_strided_slice %155 {offsets = [0, 0], sizes = [1, 208], strides = [1, 1]} : vector<13x208xf32> to vector<1x208xf32>
    %157 = vector.extract_strided_slice %155 {offsets = [2, 0], sizes = [1, 208], strides = [1, 1]} : vector<13x208xf32> to vector<1x208xf32>
    %158 = vector.extract_strided_slice %155 {offsets = [4, 0], sizes = [1, 208], strides = [1, 1]} : vector<13x208xf32> to vector<1x208xf32>
    %159 = vector.extract_strided_slice %155 {offsets = [6, 0], sizes = [1, 208], strides = [1, 1]} : vector<13x208xf32> to vector<1x208xf32>
    %160 = vector.extract_strided_slice %155 {offsets = [8, 0], sizes = [1, 208], strides = [1, 1]} : vector<13x208xf32> to vector<1x208xf32>
    %161 = vector.extract_strided_slice %155 {offsets = [10, 0], sizes = [1, 208], strides = [1, 1]} : vector<13x208xf32> to vector<1x208xf32>
    %162 = vector.extract_strided_slice %155 {offsets = [12, 0], sizes = [1, 208], strides = [1, 1]} : vector<13x208xf32> to vector<1x208xf32>
    %163 = tpu.concatenate %156, %157, %158, %159, %160, %161, %162 in 0 : vector<1x208xf32>, vector<1x208xf32>, vector<1x208xf32>, vector<1x208xf32>, vector<1x208xf32>, vector<1x208xf32>, vector<1x208xf32> -> vector<7x208xf32>
    %164 = vector.extract_strided_slice %163 {offsets = [0, 0], sizes = [7, 16], strides = [1, 1]} : vector<7x208xf32> to vector<7x16xf32>
    %165 = vector.extract_strided_slice %163 {offsets = [0, 32], sizes = [7, 16], strides = [1, 1]} : vector<7x208xf32> to vector<7x16xf32>
    %166 = vector.extract_strided_slice %163 {offsets = [0, 64], sizes = [7, 16], strides = [1, 1]} : vector<7x208xf32> to vector<7x16xf32>
    %167 = vector.extract_strided_slice %163 {offsets = [0, 96], sizes = [7, 16], strides = [1, 1]} : vector<7x208xf32> to vector<7x16xf32>
    %168 = vector.extract_strided_slice %163 {offsets = [0, 128], sizes = [7, 16], strides = [1, 1]} : vector<7x208xf32> to vector<7x16xf32>
    %169 = vector.extract_strided_slice %163 {offsets = [0, 160], sizes = [7, 16], strides = [1, 1]} : vector<7x208xf32> to vector<7x16xf32>
    %170 = vector.extract_strided_slice %163 {offsets = [0, 192], sizes = [7, 16], strides = [1, 1]} : vector<7x208xf32> to vector<7x16xf32>
    %171 = tpu.concatenate %164, %165, %166, %167, %168, %169, %170 in 1 : vector<7x16xf32>, vector<7x16xf32>, vector<7x16xf32>, vector<7x16xf32>, vector<7x16xf32>, vector<7x16xf32>, vector<7x16xf32> -> vector<7x112xf32>
    %cst_71 = arith.constant 0.000000e+00 : f32
    %172 = vector.broadcast %cst_71 : f32 to vector<7x16xf32>
    %173 = tpu.concatenate %172, %171, %172 in 1 : vector<7x16xf32>, vector<7x112xf32>, vector<7x16xf32> -> vector<7x144xf32>
    %cst_72 = arith.constant 0.000000e+00 : f32
    %174 = vector.broadcast %cst_72 : f32 to vector<1x144xf32>
    %175 = tpu.concatenate %174, %173, %174 in 0 : vector<1x144xf32>, vector<7x144xf32>, vector<1x144xf32> -> vector<9x144xf32>
    %cst_73 = arith.constant 0.000000e+00 : f32
    %176 = vector.broadcast %cst_73 : f32 to vector<7x224xf32>
    %177 = vector.extract_strided_slice %175 {offsets = [0, 0], sizes = [7, 144], strides = [1, 1]} : vector<9x144xf32> to vector<7x144xf32>
    %178 = arith.truncf %177 : vector<7x144xf32> to vector<7x144xbf16>
    %c0_74 = arith.constant 0 : index
    %c0_75 = arith.constant 0 : index
    %c0_76 = arith.constant 0 : index
    %179 = vector.load %arg10[%c0_74, %c0_75, %c0_76] : memref<3x144x224xbf16, #tpu.memory_space<vmem>>, vector<1x144x224xbf16>
    %180 = vector.shape_cast %179 : vector<1x144x224xbf16> to vector<144x224xbf16>
    %cst_77 = arith.constant dense<0.000000e+00> : vector<7x224xf32>
    %181 = tpu.matmul %178, %180, %cst_77 {dimension_numbers = #tpu.dot_dimension_numbers<[1], [0], [0], [1], [0, 0, 1, 1], [], []>} : vector<7x144xbf16>, vector<144x224xbf16>, vector<7x224xf32> -> vector<7x224xf32>
    %182 = arith.addf %176, %181 : vector<7x224xf32>
    %183 = vector.extract_strided_slice %175 {offsets = [1, 0], sizes = [7, 144], strides = [1, 1]} : vector<9x144xf32> to vector<7x144xf32>
    %184 = arith.truncf %183 : vector<7x144xf32> to vector<7x144xbf16>
    %c1_78 = arith.constant 1 : index
    %c0_79 = arith.constant 0 : index
    %c0_80 = arith.constant 0 : index
    %185 = vector.load %arg10[%c1_78, %c0_79, %c0_80] : memref<3x144x224xbf16, #tpu.memory_space<vmem>>, vector<1x144x224xbf16>
    %186 = vector.shape_cast %185 : vector<1x144x224xbf16> to vector<144x224xbf16>
    %cst_81 = arith.constant dense<0.000000e+00> : vector<7x224xf32>
    %187 = tpu.matmul %184, %186, %cst_81 {dimension_numbers = #tpu.dot_dimension_numbers<[1], [0], [0], [1], [0, 0, 1, 1], [], []>} : vector<7x144xbf16>, vector<144x224xbf16>, vector<7x224xf32> -> vector<7x224xf32>
    %188 = arith.addf %182, %187 : vector<7x224xf32>
    %189 = vector.extract_strided_slice %175 {offsets = [2, 0], sizes = [7, 144], strides = [1, 1]} : vector<9x144xf32> to vector<7x144xf32>
    %190 = arith.truncf %189 : vector<7x144xf32> to vector<7x144xbf16>
    %c2_82 = arith.constant 2 : index
    %c0_83 = arith.constant 0 : index
    %c0_84 = arith.constant 0 : index
    %191 = vector.load %arg10[%c2_82, %c0_83, %c0_84] : memref<3x144x224xbf16, #tpu.memory_space<vmem>>, vector<1x144x224xbf16>
    %192 = vector.shape_cast %191 : vector<1x144x224xbf16> to vector<144x224xbf16>
    %cst_85 = arith.constant dense<0.000000e+00> : vector<7x224xf32>
    %193 = tpu.matmul %190, %192, %cst_85 {dimension_numbers = #tpu.dot_dimension_numbers<[1], [0], [0], [1], [0, 0, 1, 1], [], []>} : vector<7x144xbf16>, vector<144x224xbf16>, vector<7x224xf32> -> vector<7x224xf32>
    %194 = arith.addf %188, %193 : vector<7x224xf32>
    %c0_86 = arith.constant 0 : index
    %c0_87 = arith.constant 0 : index
    %195 = vector.load %arg11[%c0_86, %c0_87] : memref<1x224xf32, #tpu.memory_space<vmem>>, vector<1x224xf32>
    %196 = vector.broadcast %195 : vector<1x224xf32> to vector<7x224xf32>
    %197 = arith.addf %194, %196 : vector<7x224xf32>
    %cst_88 = arith.constant 0.000000e+00 : f32
    %198 = vector.broadcast %cst_88 : f32 to vector<7x224xf32>
    %199 = arith.maximumf %197, %198 : vector<7x224xf32>
    %cst_89 = arith.constant 0.000000e+00 : f32
    %200 = vector.broadcast %cst_89 : f32 to vector<7x64xf32>
    %201 = tpu.concatenate %200, %199, %200 in 1 : vector<7x64xf32>, vector<7x224xf32>, vector<7x64xf32> -> vector<7x352xf32>
    %cst_90 = arith.constant 0.000000e+00 : f32
    %202 = vector.broadcast %cst_90 : f32 to vector<2x352xf32>
    %203 = tpu.concatenate %202, %201, %202 in 0 : vector<2x352xf32>, vector<7x352xf32>, vector<2x352xf32> -> vector<11x352xf32>
    %cst_91 = arith.constant 0.000000e+00 : f32
    %204 = vector.broadcast %cst_91 : f32 to vector<4x256xf32>
    %205 = vector.extract_strided_slice %203 {offsets = [0, 0], sizes = [1, 352], strides = [1, 1]} : vector<11x352xf32> to vector<1x352xf32>
    %206 = vector.extract_strided_slice %203 {offsets = [2, 0], sizes = [1, 352], strides = [1, 1]} : vector<11x352xf32> to vector<1x352xf32>
    %207 = vector.extract_strided_slice %203 {offsets = [4, 0], sizes = [1, 352], strides = [1, 1]} : vector<11x352xf32> to vector<1x352xf32>
    %208 = vector.extract_strided_slice %203 {offsets = [6, 0], sizes = [1, 352], strides = [1, 1]} : vector<11x352xf32> to vector<1x352xf32>
    %209 = tpu.concatenate %205, %206, %207, %208 in 0 : vector<1x352xf32>, vector<1x352xf32>, vector<1x352xf32>, vector<1x352xf32> -> vector<4x352xf32>
    %210 = arith.truncf %209 : vector<4x352xf32> to vector<4x352xbf16>
    %c0_92 = arith.constant 0 : index
    %c0_93 = arith.constant 0 : index
    %c0_94 = arith.constant 0 : index
    %211 = vector.load %arg12[%c0_92, %c0_93, %c0_94] : memref<5x352x256xbf16, #tpu.memory_space<vmem>>, vector<1x352x256xbf16>
    %212 = vector.shape_cast %211 : vector<1x352x256xbf16> to vector<352x256xbf16>
    %cst_95 = arith.constant dense<0.000000e+00> : vector<4x256xf32>
    %213 = tpu.matmul %210, %212, %cst_95 {dimension_numbers = #tpu.dot_dimension_numbers<[1], [0], [0], [1], [0, 0, 1, 1], [], []>} : vector<4x352xbf16>, vector<352x256xbf16>, vector<4x256xf32> -> vector<4x256xf32>
    %214 = arith.addf %204, %213 : vector<4x256xf32>
    %215 = vector.extract_strided_slice %203 {offsets = [1, 0], sizes = [1, 352], strides = [1, 1]} : vector<11x352xf32> to vector<1x352xf32>
    %216 = vector.extract_strided_slice %203 {offsets = [3, 0], sizes = [1, 352], strides = [1, 1]} : vector<11x352xf32> to vector<1x352xf32>
    %217 = vector.extract_strided_slice %203 {offsets = [5, 0], sizes = [1, 352], strides = [1, 1]} : vector<11x352xf32> to vector<1x352xf32>
    %218 = vector.extract_strided_slice %203 {offsets = [7, 0], sizes = [1, 352], strides = [1, 1]} : vector<11x352xf32> to vector<1x352xf32>
    %219 = tpu.concatenate %215, %216, %217, %218 in 0 : vector<1x352xf32>, vector<1x352xf32>, vector<1x352xf32>, vector<1x352xf32> -> vector<4x352xf32>
    %220 = arith.truncf %219 : vector<4x352xf32> to vector<4x352xbf16>
    %c1_96 = arith.constant 1 : index
    %c0_97 = arith.constant 0 : index
    %c0_98 = arith.constant 0 : index
    %221 = vector.load %arg12[%c1_96, %c0_97, %c0_98] : memref<5x352x256xbf16, #tpu.memory_space<vmem>>, vector<1x352x256xbf16>
    %222 = vector.shape_cast %221 : vector<1x352x256xbf16> to vector<352x256xbf16>
    %cst_99 = arith.constant dense<0.000000e+00> : vector<4x256xf32>
    %223 = tpu.matmul %220, %222, %cst_99 {dimension_numbers = #tpu.dot_dimension_numbers<[1], [0], [0], [1], [0, 0, 1, 1], [], []>} : vector<4x352xbf16>, vector<352x256xbf16>, vector<4x256xf32> -> vector<4x256xf32>
    %224 = arith.addf %214, %223 : vector<4x256xf32>
    %225 = vector.extract_strided_slice %203 {offsets = [2, 0], sizes = [1, 352], strides = [1, 1]} : vector<11x352xf32> to vector<1x352xf32>
    %226 = vector.extract_strided_slice %203 {offsets = [4, 0], sizes = [1, 352], strides = [1, 1]} : vector<11x352xf32> to vector<1x352xf32>
    %227 = vector.extract_strided_slice %203 {offsets = [6, 0], sizes = [1, 352], strides = [1, 1]} : vector<11x352xf32> to vector<1x352xf32>
    %228 = vector.extract_strided_slice %203 {offsets = [8, 0], sizes = [1, 352], strides = [1, 1]} : vector<11x352xf32> to vector<1x352xf32>
    %229 = tpu.concatenate %225, %226, %227, %228 in 0 : vector<1x352xf32>, vector<1x352xf32>, vector<1x352xf32>, vector<1x352xf32> -> vector<4x352xf32>
    %230 = arith.truncf %229 : vector<4x352xf32> to vector<4x352xbf16>
    %c2_100 = arith.constant 2 : index
    %c0_101 = arith.constant 0 : index
    %c0_102 = arith.constant 0 : index
    %231 = vector.load %arg12[%c2_100, %c0_101, %c0_102] : memref<5x352x256xbf16, #tpu.memory_space<vmem>>, vector<1x352x256xbf16>
    %232 = vector.shape_cast %231 : vector<1x352x256xbf16> to vector<352x256xbf16>
    %cst_103 = arith.constant dense<0.000000e+00> : vector<4x256xf32>
    %233 = tpu.matmul %230, %232, %cst_103 {dimension_numbers = #tpu.dot_dimension_numbers<[1], [0], [0], [1], [0, 0, 1, 1], [], []>} : vector<4x352xbf16>, vector<352x256xbf16>, vector<4x256xf32> -> vector<4x256xf32>
    %234 = arith.addf %224, %233 : vector<4x256xf32>
    %235 = vector.extract_strided_slice %203 {offsets = [3, 0], sizes = [1, 352], strides = [1, 1]} : vector<11x352xf32> to vector<1x352xf32>
    %236 = vector.extract_strided_slice %203 {offsets = [5, 0], sizes = [1, 352], strides = [1, 1]} : vector<11x352xf32> to vector<1x352xf32>
    %237 = vector.extract_strided_slice %203 {offsets = [7, 0], sizes = [1, 352], strides = [1, 1]} : vector<11x352xf32> to vector<1x352xf32>
    %238 = vector.extract_strided_slice %203 {offsets = [9, 0], sizes = [1, 352], strides = [1, 1]} : vector<11x352xf32> to vector<1x352xf32>
    %239 = tpu.concatenate %235, %236, %237, %238 in 0 : vector<1x352xf32>, vector<1x352xf32>, vector<1x352xf32>, vector<1x352xf32> -> vector<4x352xf32>
    %240 = arith.truncf %239 : vector<4x352xf32> to vector<4x352xbf16>
    %c3 = arith.constant 3 : index
    %c0_104 = arith.constant 0 : index
    %c0_105 = arith.constant 0 : index
    %241 = vector.load %arg12[%c3, %c0_104, %c0_105] : memref<5x352x256xbf16, #tpu.memory_space<vmem>>, vector<1x352x256xbf16>
    %242 = vector.shape_cast %241 : vector<1x352x256xbf16> to vector<352x256xbf16>
    %cst_106 = arith.constant dense<0.000000e+00> : vector<4x256xf32>
    %243 = tpu.matmul %240, %242, %cst_106 {dimension_numbers = #tpu.dot_dimension_numbers<[1], [0], [0], [1], [0, 0, 1, 1], [], []>} : vector<4x352xbf16>, vector<352x256xbf16>, vector<4x256xf32> -> vector<4x256xf32>
    %244 = arith.addf %234, %243 : vector<4x256xf32>
    %245 = vector.extract_strided_slice %203 {offsets = [4, 0], sizes = [1, 352], strides = [1, 1]} : vector<11x352xf32> to vector<1x352xf32>
    %246 = vector.extract_strided_slice %203 {offsets = [6, 0], sizes = [1, 352], strides = [1, 1]} : vector<11x352xf32> to vector<1x352xf32>
    %247 = vector.extract_strided_slice %203 {offsets = [8, 0], sizes = [1, 352], strides = [1, 1]} : vector<11x352xf32> to vector<1x352xf32>
    %248 = vector.extract_strided_slice %203 {offsets = [10, 0], sizes = [1, 352], strides = [1, 1]} : vector<11x352xf32> to vector<1x352xf32>
    %249 = tpu.concatenate %245, %246, %247, %248 in 0 : vector<1x352xf32>, vector<1x352xf32>, vector<1x352xf32>, vector<1x352xf32> -> vector<4x352xf32>
    %250 = arith.truncf %249 : vector<4x352xf32> to vector<4x352xbf16>
    %c4 = arith.constant 4 : index
    %c0_107 = arith.constant 0 : index
    %c0_108 = arith.constant 0 : index
    %251 = vector.load %arg12[%c4, %c0_107, %c0_108] : memref<5x352x256xbf16, #tpu.memory_space<vmem>>, vector<1x352x256xbf16>
    %252 = vector.shape_cast %251 : vector<1x352x256xbf16> to vector<352x256xbf16>
    %cst_109 = arith.constant dense<0.000000e+00> : vector<4x256xf32>
    %253 = tpu.matmul %250, %252, %cst_109 {dimension_numbers = #tpu.dot_dimension_numbers<[1], [0], [0], [1], [0, 0, 1, 1], [], []>} : vector<4x352xbf16>, vector<352x256xbf16>, vector<4x256xf32> -> vector<4x256xf32>
    %254 = arith.addf %244, %253 : vector<4x256xf32>
    %c0_110 = arith.constant 0 : index
    %c0_111 = arith.constant 0 : index
    %255 = vector.load %arg13[%c0_110, %c0_111] : memref<1x256xf32, #tpu.memory_space<vmem>>, vector<1x256xf32>
    %256 = vector.broadcast %255 : vector<1x256xf32> to vector<4x256xf32>
    %257 = arith.addf %254, %256 : vector<4x256xf32>
    %cst_112 = arith.constant 0.000000e+00 : f32
    %258 = vector.broadcast %cst_112 : f32 to vector<4x256xf32>
    %259 = arith.maximumf %257, %258 : vector<4x256xf32>
    %c0_113 = arith.constant 0 : index
    %c0_114 = arith.constant 0 : index
    %260 = vector.load %arg15[%c0_113, %c0_114] : memref<1x16xf32, #tpu.memory_space<vmem>>, vector<1x16xf32>
    %261 = vector.extract_strided_slice %259 {offsets = [0, 0], sizes = [1, 256], strides = [1, 1]} : vector<4x256xf32> to vector<1x256xf32>
    %262 = arith.truncf %261 : vector<1x256xf32> to vector<1x256xbf16>
    %c0_115 = arith.constant 0 : index
    %c0_116 = arith.constant 0 : index
    %c0_117 = arith.constant 0 : index
    %263 = vector.load %arg14[%c0_115, %c0_116, %c0_117] : memref<4x256x16xbf16, #tpu.memory_space<vmem>>, vector<1x256x16xbf16>
    %264 = vector.shape_cast %263 : vector<1x256x16xbf16> to vector<256x16xbf16>
    %cst_118 = arith.constant dense<0.000000e+00> : vector<1x16xf32>
    %265 = tpu.matmul %262, %264, %cst_118 {dimension_numbers = #tpu.dot_dimension_numbers<[1], [0], [0], [1], [0, 0, 1, 1], [], []>} : vector<1x256xbf16>, vector<256x16xbf16>, vector<1x16xf32> -> vector<1x16xf32>
    %266 = arith.addf %260, %265 : vector<1x16xf32>
    %267 = vector.extract_strided_slice %259 {offsets = [1, 0], sizes = [1, 256], strides = [1, 1]} : vector<4x256xf32> to vector<1x256xf32>
    %268 = arith.truncf %267 : vector<1x256xf32> to vector<1x256xbf16>
    %c1_119 = arith.constant 1 : index
    %c0_120 = arith.constant 0 : index
    %c0_121 = arith.constant 0 : index
    %269 = vector.load %arg14[%c1_119, %c0_120, %c0_121] : memref<4x256x16xbf16, #tpu.memory_space<vmem>>, vector<1x256x16xbf16>
    %270 = vector.shape_cast %269 : vector<1x256x16xbf16> to vector<256x16xbf16>
    %cst_122 = arith.constant dense<0.000000e+00> : vector<1x16xf32>
    %271 = tpu.matmul %268, %270, %cst_122 {dimension_numbers = #tpu.dot_dimension_numbers<[1], [0], [0], [1], [0, 0, 1, 1], [], []>} : vector<1x256xbf16>, vector<256x16xbf16>, vector<1x16xf32> -> vector<1x16xf32>
    %272 = arith.addf %266, %271 : vector<1x16xf32>
    %273 = vector.extract_strided_slice %259 {offsets = [2, 0], sizes = [1, 256], strides = [1, 1]} : vector<4x256xf32> to vector<1x256xf32>
    %274 = arith.truncf %273 : vector<1x256xf32> to vector<1x256xbf16>
    %c2_123 = arith.constant 2 : index
    %c0_124 = arith.constant 0 : index
    %c0_125 = arith.constant 0 : index
    %275 = vector.load %arg14[%c2_123, %c0_124, %c0_125] : memref<4x256x16xbf16, #tpu.memory_space<vmem>>, vector<1x256x16xbf16>
    %276 = vector.shape_cast %275 : vector<1x256x16xbf16> to vector<256x16xbf16>
    %cst_126 = arith.constant dense<0.000000e+00> : vector<1x16xf32>
    %277 = tpu.matmul %274, %276, %cst_126 {dimension_numbers = #tpu.dot_dimension_numbers<[1], [0], [0], [1], [0, 0, 1, 1], [], []>} : vector<1x256xbf16>, vector<256x16xbf16>, vector<1x16xf32> -> vector<1x16xf32>
    %278 = arith.addf %272, %277 : vector<1x16xf32>
    %279 = vector.extract_strided_slice %259 {offsets = [3, 0], sizes = [1, 256], strides = [1, 1]} : vector<4x256xf32> to vector<1x256xf32>
    %280 = arith.truncf %279 : vector<1x256xf32> to vector<1x256xbf16>
    %c3_127 = arith.constant 3 : index
    %c0_128 = arith.constant 0 : index
    %c0_129 = arith.constant 0 : index
    %281 = vector.load %arg14[%c3_127, %c0_128, %c0_129] : memref<4x256x16xbf16, #tpu.memory_space<vmem>>, vector<1x256x16xbf16>
    %282 = vector.shape_cast %281 : vector<1x256x16xbf16> to vector<256x16xbf16>
    %cst_130 = arith.constant dense<0.000000e+00> : vector<1x16xf32>
    %283 = tpu.matmul %280, %282, %cst_130 {dimension_numbers = #tpu.dot_dimension_numbers<[1], [0], [0], [1], [0, 0, 1, 1], [], []>} : vector<1x256xbf16>, vector<256x16xbf16>, vector<1x16xf32> -> vector<1x16xf32>
    %284 = arith.addf %278, %283 : vector<1x16xf32>
    %c0_131 = arith.constant 0 : index
    %c0_132 = arith.constant 0 : index
    %c0_133 = arith.constant 0 : index
    %285 = vector.load %arg16[%c0_131, %c0_132, %c0_133] : memref<1x1x16xf32, #tpu.memory_space<vmem>>, vector<1x1x16xf32>
    %286 = vector.shape_cast %285 : vector<1x1x16xf32> to vector<1x16xf32>
    %287 = vector.shape_cast %284 : vector<1x16xf32> to vector<1x1x16xf32>
    tpu.vector_store %arg16[%c0_131, %c0_132, %c0_133], %287 {strides = array<i32>} : memref<1x1x16xf32, #tpu.memory_space<vmem>>, vector<1x1x16xf32>,
    return
  }
  func.func @transform_0(%arg0: i32) -> (i32, i32, i32) {
    %c0_i32 = arith.constant 0 : i32
    %c0_i32_0 = arith.constant 0 : i32
    %c0_i32_1 = arith.constant 0 : i32
    return %arg0, %c0_i32, %c0_i32_0 : i32, i32, i32
  }
  func.func @transform_1(%arg0: i32) -> (i32, i32, i32) {
    %c0_i32 = arith.constant 0 : i32
    %c0_i32_0 = arith.constant 0 : i32
    %c0_i32_1 = arith.constant 0 : i32
    %c0_i32_2 = arith.constant 0 : i32
    return %c0_i32, %c0_i32_0, %c0_i32_1 : i32, i32, i32
  }
  func.func @transform_2(%arg0: i32) -> (i32, i32) {
    %c0_i32 = arith.constant 0 : i32
    %c0_i32_0 = arith.constant 0 : i32
    %c0_i32_1 = arith.constant 0 : i32
    return %c0_i32, %c0_i32_0 : i32, i32
  }
  func.func @transform_3(%arg0: i32) -> (i32, i32, i32) {
    %c0_i32 = arith.constant 0 : i32
    %c0_i32_0 = arith.constant 0 : i32
    %c0_i32_1 = arith.constant 0 : i32
    %c0_i32_2 = arith.constant 0 : i32
    return %c0_i32, %c0_i32_0, %c0_i32_1 : i32, i32, i32
  }
  func.func @transform_4(%arg0: i32) -> (i32, i32) {
    %c0_i32 = arith.constant 0 : i32
    %c0_i32_0 = arith.constant 0 : i32
    %c0_i32_1 = arith.constant 0 : i32
    return %c0_i32, %c0_i32_0 : i32, i32
  }
  func.func @transform_5(%arg0: i32) -> (i32, i32, i32) {
    %c0_i32 = arith.constant 0 : i32
    %c0_i32_0 = arith.constant 0 : i32
    %c0_i32_1 = arith.constant 0 : i32
    %c0_i32_2 = arith.constant 0 : i32
    return %c0_i32, %c0_i32_0, %c0_i32_1 : i32, i32, i32
  }
  func.func @transform_6(%arg0: i32) -> (i32, i32) {
    %c0_i32 = arith.constant 0 : i32
    %c0_i32_0 = arith.constant 0 : i32
    %c0_i32_1 = arith.constant 0 : i32
    return %c0_i32, %c0_i32_0 : i32, i32
  }
  func.func @transform_7(%arg0: i32) -> (i32, i32, i32) {
    %c0_i32 = arith.constant 0 : i32
    %c0_i32_0 = arith.constant 0 : i32
    %c0_i32_1 = arith.constant 0 : i32
    %c0_i32_2 = arith.constant 0 : i32
    return %c0_i32, %c0_i32_0, %c0_i32_1 : i32, i32, i32
  }
  func.func @transform_8(%arg0: i32) -> (i32, i32) {
    %c0_i32 = arith.constant 0 : i32
    %c0_i32_0 = arith.constant 0 : i32
    %c0_i32_1 = arith.constant 0 : i32
    return %c0_i32, %c0_i32_0 : i32, i32
  }
  func.func @transform_9(%arg0: i32) -> (i32, i32, i32) {
    %c0_i32 = arith.constant 0 : i32
    %c0_i32_0 = arith.constant 0 : i32
    %c0_i32_1 = arith.constant 0 : i32
    %c0_i32_2 = arith.constant 0 : i32
    return %c0_i32, %c0_i32_0, %c0_i32_1 : i32, i32, i32
  }
  func.func @transform_10(%arg0: i32) -> (i32, i32) {
    %c0_i32 = arith.constant 0 : i32
    %c0_i32_0 = arith.constant 0 : i32
    %c0_i32_1 = arith.constant 0 : i32
    return %c0_i32, %c0_i32_0 : i32, i32
  }
  func.func @transform_11(%arg0: i32) -> (i32, i32, i32) {
    %c0_i32 = arith.constant 0 : i32
    %c0_i32_0 = arith.constant 0 : i32
    %c0_i32_1 = arith.constant 0 : i32
    %c0_i32_2 = arith.constant 0 : i32
    return %c0_i32, %c0_i32_0, %c0_i32_1 : i32, i32, i32
  }
  func.func @transform_12(%arg0: i32) -> (i32, i32) {
    %c0_i32 = arith.constant 0 : i32
    %c0_i32_0 = arith.constant 0 : i32
    %c0_i32_1 = arith.constant 0 : i32
    return %c0_i32, %c0_i32_0 : i32, i32
  }
  func.func @transform_13(%arg0: i32) -> (i32, i32, i32) {
    %c0_i32 = arith.constant 0 : i32
    %c0_i32_0 = arith.constant 0 : i32
    %c0_i32_1 = arith.constant 0 : i32
    %c0_i32_2 = arith.constant 0 : i32
    return %c0_i32, %c0_i32_0, %c0_i32_1 : i32, i32, i32
  }
  func.func @transform_14(%arg0: i32) -> (i32, i32) {
    %c0_i32 = arith.constant 0 : i32
    %c0_i32_0 = arith.constant 0 : i32
    %c0_i32_1 = arith.constant 0 : i32
    return %c0_i32, %c0_i32_0 : i32, i32
  }
  func.func @transform_15(%arg0: i32) -> (i32, i32, i32) {
    %c0_i32 = arith.constant 0 : i32
    %c0_i32_0 = arith.constant 0 : i32
    %c0_i32_1 = arith.constant 0 : i32
    return %arg0, %c0_i32, %c0_i32_0 : i32, i32, i32
  }
}

</mosaic_0001>

<llo_original>
// kernel: tile.34
$region0: #{tile.34}
  %s0 = inlined_call_operand.vmem [shape: f32[28,8], index: 0, kind: input, shape index: {}]
  %s1 = inlined_call_operand.vmem [shape: f32[1,224], index: 1, kind: output, shape index: {}]
  $region1: #{tile.34} parent=0
    #allocation0 [shape = 'u8[8192]{0}', space=vmem, size = 0x2000, scoped, tag = 'scoped mem for output reshape']
    %s2 = smov 3
    %v3 = vld [vmem:[%s0] ss:$16 sm:%s2]
    %vm4 = vcmask 64512
    %5 = vst.msk [vmem:[#allocation0] ss:$8 sm:$0x3] %vm4, %v3
    %s6 = scalar_lea.vmem %s0, 15
    %v7 = vld [vmem:[%s6] sm:$0x1]
    %8 = vrot.lane.b32.xlu0 %v7, 120
    %v9 = vpop.permute.xlu0 %8
    %vm10 = vcmask 1048512
    %11 = vst.msk [vmem:[#allocation0] sm:$0x1] %vm10, %v9
    %s12 = scalar_lea.vmem %s0, 14
    %v13 = vld [vmem:[%s12] sm:$0x1]
    %14 = vrot.lane.b32.xlu0 %v13, 112
    %v15 = vpop.permute.xlu0 %14
    %vm16 = vcmask 982912
    %17 = vst.msk [vmem:[#allocation0] sm:$0x1] %vm16, %v15
    %s18 = scalar_lea.vmem %s0, 13
    %v19 = vld [vmem:[%s18] sm:$0x1]
    %20 = vrot.lane.b32.xlu0 %v19, 104
    %v21 = vpop.permute.xlu0 %20
    %vm22 = vcmask 917312
    %23 = vst.msk [vmem:[#allocation0] sm:$0x1] %vm22, %v21
    %s24 = scalar_lea.vmem %s0, 12
    %v25 = vld [vmem:[%s24] sm:$0x1]
    %26 = vrot.lane.b32.xlu0 %v25, 96
    %v27 = vpop.permute.xlu0 %26
    %vm28 = vcmask 851712
    %29 = vst.msk [vmem:[#allocation0] sm:$0x1] %vm28, %v27
    %s30 = scalar_lea.vmem %s0, 11
    %s31 = smov 3
    %v32 = vld [vmem:[%s30] ss:$16 sm:%s31]
    %33 = vrot.lane.b32.xlu0 %v32, 88
    %v34 = vpop.permute.xlu0 %33
    %vm35 = vcmask 786112
    %36 = vst.msk [vmem:[#allocation0] ss:$8 sm:$0x3] %vm35, %v34
    %s37 = scalar_lea.vmem %s0, 10
    %s38 = smov 3
    %v39 = vld [vmem:[%s37] ss:$16 sm:%s38]
    %40 = vrot.lane.b32.xlu0 %v39, 80
    %v41 = vpop.permute.xlu0 %40
    %vm42 = vcmask 720512
    %43 = vst.msk [vmem:[#allocation0] ss:$8 sm:$0x3] %vm42, %v41
    %s44 = scalar_lea.vmem %s0, 9
    %s45 = smov 3
    %v46 = vld [vmem:[%s44] ss:$16 sm:%s45]
    %47 = vrot.lane.b32.xlu0 %v46, 72
    %v48 = vpop.permute.xlu0 %47
    %vm49 = vcmask 654912
    %50 = vst.msk [vmem:[#allocation0] ss:$8 sm:$0x3] %vm49, %v48
    %s51 = scalar_lea.vmem %s0, 8
    %s52 = smov 3
    %v53 = vld [vmem:[%s51] ss:$16 sm:%s52]
    %54 = vrot.lane.b32.xlu0 %v53, 64
    %v55 = vpop.permute.xlu0 %54
    %vm56 = vcmask 589312
    %57 = vst.msk [vmem:[#allocation0] ss:$8 sm:$0x3] %vm56, %v55
    %s58 = scalar_lea.vmem %s0, 7
    %s59 = smov 3
    %v60 = vld [vmem:[%s58] ss:$16 sm:%s59]
    %61 = vrot.lane.b32.xlu0 %v60, 56
    %v62 = vpop.permute.xlu0 %61
    %vm63 = vcmask 523712
    %64 = vst.msk [vmem:[#allocation0] ss:$8 sm:$0x3] %vm63, %v62
    %s65 = scalar_lea.vmem %s0, 6
    %s66 = smov 3
    %v67 = vld [vmem:[%s65] ss:$16 sm:%s66]
    %68 = vrot.lane.b32.xlu0 %v67, 48
    %v69 = vpop.permute.xlu0 %68
    %vm70 = vcmask 458112
    %71 = vst.msk [vmem:[#allocation0] ss:$8 sm:$0x3] %vm70, %v69
    %s72 = scalar_lea.vmem %s0, 5
    %s73 = smov 3
    %v74 = vld [vmem:[%s72] ss:$16 sm:%s73]
    %75 = vrot.lane.b32.xlu0 %v74, 40
    %v76 = vpop.permute.xlu0 %75
    %vm77 = vcmask 392512
    %78 = vst.msk [vmem:[#allocation0] ss:$8 sm:$0x3] %vm77, %v76
    %s79 = scalar_lea.vmem %s0, 4
    %s80 = smov 3
    %v81 = vld [vmem:[%s79] ss:$16 sm:%s80]
    %82 = vrot.lane.b32.xlu0 %v81, 32
    %v83 = vpop.permute.xlu0 %82
    %vm84 = vcmask 326912
    %85 = vst.msk [vmem:[#allocation0] ss:$8 sm:$0x3] %vm84, %v83
    %s86 = scalar_lea.vmem %s0, 3
    %s87 = smov 3
    %v88 = vld [vmem:[%s86] ss:$16 sm:%s87]
    %89 = vrot.lane.b32.xlu0 %v88, 24
    %v90 = vpop.permute.xlu0 %89
    %vm91 = vcmask 261312
    %92 = vst.msk [vmem:[#allocation0] ss:$8 sm:$0x3] %vm91, %v90
    %s93 = scalar_lea.vmem %s0, 2
    %s94 = smov 3
    %v95 = vld [vmem:[%s93] ss:$16 sm:%s94]
    %96 = vrot.lane.b32.xlu0 %v95, 16
    %v97 = vpop.permute.xlu0 %96
    %vm98 = vcmask 195712
    %99 = vst.msk [vmem:[#allocation0] ss:$8 sm:$0x3] %vm98, %v97
    %s100 = scalar_lea.vmem %s0, 1
    %s101 = smov 3
    %v102 = vld [vmem:[%s100] ss:$16 sm:%s101]
    %103 = vrot.lane.b32.xlu0 %v102, 8
    %v104 = vpop.permute.xlu0 %103
    %vm105 = vcmask 130112
    %106 = vst.msk [vmem:[#allocation0] ss:$8 sm:$0x3] %vm105, %v104
    %s108 = sshllo.u32 0, 1
    %v110 = vld [vmem:[#allocation0] sm:%s108]
    %s111 = sshllo.u32 0, 1
    %112 = vst [vmem:[%s1] sm:%s111] %v110
    %s113 = scalar_lea.vmem [#allocation0], 8
    %v114 = vld [vmem:[%s113] sm:%s108]
    %s115 = sshllo.u32 0, 1
    %s116 = scalar_lea.vmem %s1, 1
    %117 = vst [vmem:[%s116] sm:%s115] %v114

// kernel: tile.43
$region0: #{tile.43}
  #allocation0 [shape = 's32[1]{0}', space=sflag, size = 0x4, scoped, tag = 'scoped memory for tile.43']
  %s0 = inlined_call_operand.vmem [shape: f32[16], index: 0, kind: input, shape index: {}]
  %s1 = inlined_call_operand.vmem [shape: f32[14,16], index: 1, kind: output, shape index: {}]
  // Predicated region
  $region2: #{tile.43} parent=0 // pred_check
    _
  $region3: #{tile.43} parent=0 // pred_check_branch
    %3 = sbr.rel (0) target = $region5
  $region4: #{tile.43} parent=0 // pred_region
    _
  $region5: #{tile.43} parent=0 // pred_fallthru
    _
  %v4 = vld [vmem:[%s0] ss:$0 sm:$0xff]
  %5 = vst [vmem:[%s1] sm:$0xff] %v4
  %s6 = scalar_lea.vmem %s1, 8
  %7 = vst [vmem:[%s6] sm:$0xff] %v4

// kernel: tile.44
$region0: #{tile.44}
  %s0 = inlined_call_operand.vmem [shape: f32[14,16], index: 0, kind: input, shape index: {}]
  %s1 = inlined_call_operand.vmem [shape: f32[1,224], index: 1, kind: output, shape index: {}]
  $region1: #{tile.44} parent=0
    #allocation0 [shape = 'u8[8192]{0}', space=vmem, size = 0x2000, scoped, tag = 'scoped mem for output reshape']
    %s2 = smov 3
    %v3 = vld [vmem:[%s0] ss:$8 sm:%s2]
    %vm4 = vcmask 130048
    %5 = vst.msk [vmem:[#allocation0] ss:$8 sm:$0x3] %vm4, %v3
    %s6 = scalar_lea.vmem %s0, 7
    %v7 = vld [vmem:[%s6] sm:$0x1]
    %8 = vrot.lane.b32.xlu0 %v7, 112
    %v9 = vpop.permute.xlu0 %8
    %vm10 = vcmask 1048448
    %11 = vst.msk [vmem:[#allocation0] sm:$0x1] %vm10, %v9
    %s12 = scalar_lea.vmem %s0, 6
    %v13 = vld [vmem:[%s12] sm:$0x1]
    %14 = vrot.lane.b32.xlu0 %v13, 96
    %v15 = vpop.permute.xlu0 %14
    %vm16 = vcmask 917248
    %17 = vst.msk [vmem:[#allocation0] sm:$0x1] %vm16, %v15
    %s18 = scalar_lea.vmem %s0, 5
    %s19 = smov 3
    %v20 = vld [vmem:[%s18] ss:$8 sm:%s19]
    %21 = vrot.lane.b32.xlu0 %v20, 80
    %v22 = vpop.permute.xlu0 %21
    %vm23 = vcmask 786048
    %24 = vst.msk [vmem:[#allocation0] ss:$8 sm:$0x3] %vm23, %v22
    %s25 = scalar_lea.vmem %s0, 4
    %s26 = smov 3
    %v27 = vld [vmem:[%s25] ss:$8 sm:%s26]
    %28 = vrot.lane.b32.xlu0 %v27, 64
    %v29 = vpop.permute.xlu0 %28
    %vm30 = vcmask 654848
    %31 = vst.msk [vmem:[#allocation0] ss:$8 sm:$0x3] %vm30, %v29
    %s32 = scalar_lea.vmem %s0, 3
    %s33 = smov 3
    %v34 = vld [vmem:[%s32] ss:$8 sm:%s33]
    %35 = vrot.lane.b32.xlu0 %v34, 48
    %v36 = vpop.permute.xlu0 %35
    %vm37 = vcmask 523648
    %38 = vst.msk [vmem:[#allocation0] ss:$8 sm:$0x3] %vm37, %v36
    %s39 = scalar_lea.vmem %s0, 2
    %s40 = smov 3
    %v41 = vld [vmem:[%s39] ss:$8 sm:%s40]
    %42 = vrot.lane.b32.xlu0 %v41, 32
    %v43 = vpop.permute.xlu0 %42
    %vm44 = vcmask 392448
    %45 = vst.msk [vmem:[#allocation0] ss:$8 sm:$0x3] %vm44, %v43
    %s46 = scalar_lea.vmem %s0, 1
    %s47 = smov 3
    %v48 = vld [vmem:[%s46] ss:$8 sm:%s47]
    %49 = vrot.lane.b32.xlu0 %v48, 16
    %v50 = vpop.permute.xlu0 %49
    %vm51 = vcmask 261248
    %52 = vst.msk [vmem:[#allocation0] ss:$8 sm:$0x3] %vm51, %v50
    %s54 = sshllo.u32 0, 1
    %v56 = vld [vmem:[#allocation0] sm:%s54]
    %s57 = sshllo.u32 0, 1
    %58 = vst [vmem:[%s1] sm:%s57] %v56
    %s59 = scalar_lea.vmem [#allocation0], 8
    %v60 = vld [vmem:[%s59] sm:%s54]
    %s61 = sshllo.u32 0, 1
    %s62 = scalar_lea.vmem %s1, 1
    %63 = vst [vmem:[%s62] sm:%s61] %v60

// kernel: tile.53
$region0: #{tile.53}
  #allocation0 [shape = 's32[1]{0}', space=sflag, size = 0x4, scoped, tag = 'scoped memory for tile.53']
  %s0 = inlined_call_operand.vmem [shape: f32[32], index: 0, kind: input, shape index: {}]
  %s1 = inlined_call_operand.vmem [shape: f32[7,32], index: 1, kind: output, shape index: {}]
  // Predicated region
  $region2: #{tile.53} parent=0 // pred_check
    _
  $region3: #{tile.53} parent=0 // pred_check_branch
    %3 = sbr.rel (0) target = $region5
  $region4: #{tile.53} parent=0 // pred_region
    _
  $region5: #{tile.53} parent=0 // pred_fallthru
    _
  %v4 = vld [vmem:[%s0] ss:$0 sm:$0xff]
  %5 = vst [vmem:[%s1] sm:$0xff] %v4

// kernel: tile.54
$region0: #{tile.54}
  %s0 = inlined_call_operand.vmem [shape: f32[7,32], index: 0, kind: input, shape index: {}]
  %s1 = inlined_call_operand.vmem [shape: f32[1,224], index: 1, kind: output, shape index: {}]
  $region1: #{tile.54} parent=0
    #allocation0 [shape = 'u8[8192]{0}', space=vmem, size = 0x2000, scoped, tag = 'scoped mem for output reshape']
    %s2 = smov 3
    %v3 = vld [vmem:[%s0] ss:$4 sm:%s2]
    %vm4 = vcmask 261120
    %5 = vst.msk [vmem:[#allocation0] ss:$8 sm:$0x3] %vm4, %v3
    %s6 = scalar_lea.vmem %s0, 3
    %v7 = vld [vmem:[%s6] sm:$0x1]
    %8 = vrot.lane.b32.xlu0 %v7, 96
    %v9 = vpop.permute.xlu0 %8
    %vm10 = vcmask 1048320
    %11 = vst.msk [vmem:[#allocation0] sm:$0x1] %vm10, %v9
    %s12 = scalar_lea.vmem %s0, 2
    %s13 = smov 3
    %v14 = vld [vmem:[%s12] ss:$4 sm:%s13]
    %15 = vrot.lane.b32.xlu0 %v14, 64
    %v16 = vpop.permute.xlu0 %15
    %vm17 = vcmask 785920
    %18 = vst.msk [vmem:[#allocation0] ss:$8 sm:$0x3] %vm17, %v16
    %s19 = scalar_lea.vmem %s0, 1
    %s20 = smov 3
    %v21 = vld [vmem:[%s19] ss:$4 sm:%s20]
    %22 = vrot.lane.b32.xlu0 %v21, 32
    %v23 = vpop.permute.xlu0 %22
    %vm24 = vcmask 523520
    %25 = vst.msk [vmem:[#allocation0] ss:$8 sm:$0x3] %vm24, %v23
    %s27 = sshllo.u32 0, 1
    %v29 = vld [vmem:[#allocation0] sm:%s27]
    %s30 = sshllo.u32 0, 1
    %31 = vst [vmem:[%s1] sm:%s30] %v29
    %s32 = scalar_lea.vmem [#allocation0], 8
    %v33 = vld [vmem:[%s32] sm:%s27]
    %s34 = sshllo.u32 0, 1
    %s35 = scalar_lea.vmem %s1, 1
    %36 = vst [vmem:[%s35] sm:%s34] %v33

// kernel: tile.58
$region0: #{tile.58}
  #allocation0 [shape = 's32[1]{0}', space=sflag, size = 0x4, scoped, tag = 'scoped memory for tile.58']
  %s0 = inlined_call_operand.vmem [shape: f32[64], index: 0, kind: input, shape index: {}]
  %s1 = inlined_call_operand.vmem [shape: f32[4,64], index: 1, kind: output, shape index: {}]
  // Predicated region
  $region2: #{tile.58} parent=0 // pred_check
    _
  $region3: #{tile.58} parent=0 // pred_check_branch
    %3 = sbr.rel (0) target = $region5
  $region4: #{tile.58} parent=0 // pred_region
    _
  $region5: #{tile.58} parent=0 // pred_fallthru
    _
  %v4 = vld [vmem:[%s0] ss:$0 sm:$0xff]
  %5 = vst [vmem:[%s1] sm:$0xf] %v4

// kernel: tile.59
$region0: #{tile.59}
  %s0 = inlined_call_operand.vmem [shape: f32[4,64], index: 0, kind: input, shape index: {}]
  %s1 = inlined_call_operand.vmem [shape: f32[1,256], index: 1, kind: output, shape index: {}]
  $region1: #{tile.59} parent=0
    #allocation0 [shape = 'u8[8192]{0}', space=vmem, size = 0x2000, scoped, tag = 'scoped mem for output reshape']
    #allocation1 [shape = 'u8[4096]{0}', space=vmem, size = 0x1000, scoped, tag = 'scoped mem for input reshape']
    %s3 = sshllo.u32 0, 4
    %v4 = vld [vmem:[%s0] sm:%s3]
    %5 = vst [vmem:[#allocation1] sm:%s3] %v4
    %s6 = smov 3
    %v7 = vld [vmem:[#allocation1] ss:$2 sm:%s6]
    %vm8 = vcmask 523264
    %9 = vst.msk [vmem:[#allocation0] ss:$8 sm:$0x3] %vm8, %v7
    %s10 = scalar_lea.vmem [#allocation1], 1
    %s11 = smov 3
    %v12 = vld [vmem:[%s10] ss:$2 sm:%s11]
    %13 = vrot.lane.b32.xlu0 %v12, 64
    %v14 = vpop.permute.xlu0 %13
    %vm15 = vcmask 1048064
    %16 = vst.msk [vmem:[#allocation0] ss:$8 sm:$0x3] %vm15, %v14
    %s18 = sshllo.u32 0, 1
    %v20 = vld [vmem:[#allocation0] sm:%s18]
    %s21 = sshllo.u32 0, 1
    %22 = vst [vmem:[%s1] sm:%s21] %v20
    %s23 = scalar_lea.vmem [#allocation0], 8
    %v24 = vld [vmem:[%s23] sm:%s18]
    %s25 = sshllo.u32 0, 1
    %s26 = scalar_lea.vmem %s1, 1
    %27 = vst [vmem:[%s26] sm:%s25] %v24

// kernel: vae_encoder_forward.1
$region0: #{vae_encoder_forward.1}
  #allocation0 [shape = 'u32[]', space=smem, size = 0x4, offset = 0x4, fixed_abs, tag = 'smem constant byte address 0x4 - core index']
  #allocation1 [shape = 'u32[144,128]{1,0:T(1,128)}', space=vmem, size = 0x12000, scoped, tag = 'internal scratch']
  %s0 = inlined_call_operand.vmem [shape: f32[2,28,28], index: 0, kind: input, shape index: {}]
  %s1 = inlined_call_operand.vmem [shape: bf16[3,30,224], index: 1, kind: input, shape index: {}]
  %s2 = inlined_call_operand.vmem [shape: f32[1,224], index: 2, kind: input, shape index: {}]
  %s3 = inlined_call_operand.vmem [shape: bf16[3,240,224], index: 3, kind: input, shape index: {}]
  %s4 = inlined_call_operand.vmem [shape: f32[1,224], index: 4, kind: input, shape index: {}]
  %s5 = inlined_call_operand.vmem [shape: bf16[3,128,224], index: 5, kind: input, shape index: {}]
  %s6 = inlined_call_operand.vmem [shape: f32[1,224], index: 6, kind: input, shape index: {}]
  %s7 = inlined_call_operand.vmem [shape: bf16[3,256,224], index: 7, kind: input, shape index: {}]
  %s8 = inlined_call_operand.vmem [shape: f32[1,224], index: 8, kind: input, shape index: {}]
  %s9 = inlined_call_operand.vmem [shape: bf16[3,144,224], index: 9, kind: input, shape index: {}]
  %s10 = inlined_call_operand.vmem [shape: f32[1,224], index: 10, kind: input, shape index: {}]
  %s11 = inlined_call_operand.vmem [shape: bf16[5,352,256], index: 11, kind: input, shape index: {}]
  %s12 = inlined_call_operand.vmem [shape: f32[1,256], index: 12, kind: input, shape index: {}]
  %s13 = inlined_call_operand.vmem [shape: bf16[4,256,16], index: 13, kind: input, shape index: {}]
  %s14 = inlined_call_operand.vmem [shape: f32[1,16], index: 14, kind: input, shape index: {}]
  %s15 = inlined_call_operand.hbm [shape: f32[2,1,16], index: 15, kind: output, shape index: {}]
  %s16 = sld [smem:[#allocation0]]
  $region93: #{vae_encoder_forward.1} parent=0
    _
  %s18 = ssub.s32 1, %s16
  %s19 = scalar_select 0, %s18, %s16
  $region1: #{vae_encoder_forward.1} parent=0
    #allocation2 [shape = 'u8[1024]{0}', space=vmem, size = 0x400, scoped, tag = 'output window, operand 0']
    #allocation3 [shape = 's32[2]{0}', space=sflag, size = 0x8, scoped, tag = 'scoped memory for vae_encoder_forward.1']
    %20 = vsyncpa [#allocation3], 0
    %s21 = scalar_lea.sflag [#allocation3], 1
    %22 = vsyncpa %s21, 0
    loop: start=0, step=1, limit=4
    $region2: #{vae_encoder_forward.1} parent=1 // loop_pre_header
      _
    $region3: #{vae_encoder_forward.1} parent=1 // loop_header
      %s24 = sphi 0, %s28
      %p25 = scmp.ge.s32.totalorder %s24, 4
      %s34 = sphi 0, %s36
      %s37 = sphi 0, %s34
      %s38 = sphi 0, %s37
      %s54 = sphi 0, %s38
      %s58 = sphi 0, %s58
      %s60 = sphi 0, %s58
      %s61 = sphi 0, %s60
      %s75 = sphi 0, %s61
      %s79 = sphi 0, %s79
      %s81 = sphi 0, %s79
      %s82 = sphi 0, %s81
      %s96 = sphi 0, %s82
      %s100 = sphi 0, %s100
      %s102 = sphi 0, %s100
      %s103 = sphi 0, %s102
      %s117 = sphi 0, %s103
      %s121 = sphi 0, %s121
      %s123 = sphi 0, %s121
      %s124 = sphi 0, %s123
      %s138 = sphi 0, %s124
      %s142 = sphi 0, %s142
      %s144 = sphi 0, %s142
      %s145 = sphi 0, %s144
      %s159 = sphi 0, %s145
      %s163 = sphi 0, %s163
      %s165 = sphi 0, %s163
      %s166 = sphi 0, %s165
      %s180 = sphi 0, %s166
      %s184 = sphi 0, %s184
      %s186 = sphi 0, %s184
      %s187 = sphi 0, %s186
      %s201 = sphi 0, %s187
      %s205 = sphi 0, %s205
      %s207 = sphi 0, %s205
      %s208 = sphi 0, %s207
      %s222 = sphi 0, %s208
      %s226 = sphi 0, %s226
      %s228 = sphi 0, %s226
      %s229 = sphi 0, %s228
      %s243 = sphi 0, %s229
      %s247 = sphi 0, %s247
      %s249 = sphi 0, %s247
      %s250 = sphi 0, %s249
      %s264 = sphi 0, %s250
      %s268 = sphi 0, %s268
      %s270 = sphi 0, %s268
      %s271 = sphi 0, %s270
      %s285 = sphi 0, %s271
      %s289 = sphi 0, %s289
      %s291 = sphi 0, %s289
      %s292 = sphi 0, %s291
      %s306 = sphi 0, %s292
      %s310 = sphi 0, %s310
      %s312 = sphi 0, %s310
      %s313 = sphi 0, %s312
      %s327 = sphi 0, %s313
      %s331 = sphi 0, %s331
      %s333 = sphi 0, %s331
      %s334 = sphi 0, %s333
      %s348 = sphi 0, %s334
      %s354 = sphi 0, %s356
      %s357 = sphi 0, %s354
      %s358 = sphi 0, %s357
      %s374 = sphi 0, %s358
    $region4: #{vae_encoder_forward.1} parent=1 // loop_header_branch
      %27 = sbr.rel (%p25) target = $region8
    $region5: #{vae_encoder_forward.1} parent=1 // loop_body
      %s29 = ssub.s32 %s24, 1
      %s30 = ssub.s32 %s24, 2
      %s31 = sadd.s32 %s24, 1
      %s32 = ssub.s32 %s24, %s31
      %p33 = scmp.eq.s32.totalorder %s32, 0
      %s35 = sadd.s32 %s34, 1
      %s36 = scalar_select %p33, %s34, %s35
      %p39 = pneg %p33
      %p40 = scmp.eq.s32.totalorder %s24, 1
      %p41 = por %p39, %p40
      %p42 = scmp.ne.s32.totalorder %s34, %s37
      %p43 = scmp.eq.s32.totalorder %s24, 0
      %p44 = por %p42, %p43
      %p45 = scmp.ne.s32.totalorder %s34, %s37
      %p46 = scmp.eq.s32.totalorder %s29, 1
      %p47 = por %p45, %p46
      %p48 = scmp.ne.s32.totalorder %s37, %s38
      %p49 = scmp.eq.s32.totalorder %s29, 0
      %p50 = por %p48, %p49
      %p51 = scmp.ne.s32.totalorder %s37, %s38
      %p52 = scmp.eq.s32.totalorder %s30, 1
      %p53 = por %p51, %p52
      %p55 = scmp.ne.s32.totalorder %s38, %s54
      %p56 = scmp.eq.s32.totalorder %s30, 0
      %p57 = por %p55, %p56
      %s59 = sadd.s32 %s58, 1
      %p62 = scmp.eq.s32.totalorder %s24, 1
      %p63 = scmp.ne.s32.totalorder %s58, %s60
      %p64 = scmp.eq.s32.totalorder %s24, 0
      %p65 = por %p63, %p64
      %p66 = scmp.ne.s32.totalorder %s58, %s60
      %p67 = scmp.eq.s32.totalorder %s29, 1
      %p68 = por %p66, %p67
      %p69 = scmp.ne.s32.totalorder %s60, %s61
      %p70 = scmp.eq.s32.totalorder %s29, 0
      %p71 = por %p69, %p70
      %p72 = scmp.ne.s32.totalorder %s60, %s61
      %p73 = scmp.eq.s32.totalorder %s30, 1
      %p74 = por %p72, %p73
      %p76 = scmp.ne.s32.totalorder %s61, %s75
      %p77 = scmp.eq.s32.totalorder %s30, 0
      %p78 = por %p76, %p77
      %s80 = sadd.s32 %s79, 1
      %p83 = scmp.eq.s32.totalorder %s24, 1
      %p84 = scmp.ne.s32.totalorder %s79, %s81
      %p85 = scmp.eq.s32.totalorder %s24, 0
      %p86 = por %p84, %p85
      %p87 = scmp.ne.s32.totalorder %s79, %s81
      %p88 = scmp.eq.s32.totalorder %s29, 1
      %p89 = por %p87, %p88
      %p90 = scmp.ne.s32.totalorder %s81, %s82
      %p91 = scmp.eq.s32.totalorder %s29, 0
      %p92 = por %p90, %p91
      %p93 = scmp.ne.s32.totalorder %s81, %s82
      %p94 = scmp.eq.s32.totalorder %s30, 1
      %p95 = por %p93, %p94
      %p97 = scmp.ne.s32.totalorder %s82, %s96
      %p98 = scmp.eq.s32.totalorder %s30, 0
      %p99 = por %p97, %p98
      %s101 = sadd.s32 %s100, 1
      %p104 = scmp.eq.s32.totalorder %s24, 1
      %p105 = scmp.ne.s32.totalorder %s100, %s102
      %p106 = scmp.eq.s32.totalorder %s24, 0
      %p107 = por %p105, %p106
      %p108 = scmp.ne.s32.totalorder %s100, %s102
      %p109 = scmp.eq.s32.totalorder %s29, 1
      %p110 = por %p108, %p109
      %p111 = scmp.ne.s32.totalorder %s102, %s103
      %p112 = scmp.eq.s32.totalorder %s29, 0
      %p113 = por %p111, %p112
      %p114 = scmp.ne.s32.totalorder %s102, %s103
      %p115 = scmp.eq.s32.totalorder %s30, 1
      %p116 = por %p114, %p115
      %p118 = scmp.ne.s32.totalorder %s103, %s117
      %p119 = scmp.eq.s32.totalorder %s30, 0
      %p120 = por %p118, %p119
      %s122 = sadd.s32 %s121, 1
      %p125 = scmp.eq.s32.totalorder %s24, 1
      %p126 = scmp.ne.s32.totalorder %s121, %s123
      %p127 = scmp.eq.s32.totalorder %s24, 0
      %p128 = por %p126, %p127
      %p129 = scmp.ne.s32.totalorder %s121, %s123
      %p130 = scmp.eq.s32.totalorder %s29, 1
      %p131 = por %p129, %p130
      %p132 = scmp.ne.s32.totalorder %s123, %s124
      %p133 = scmp.eq.s32.totalorder %s29, 0
      %p134 = por %p132, %p133
      %p135 = scmp.ne.s32.totalorder %s123, %s124
      %p136 = scmp.eq.s32.totalorder %s30, 1
      %p137 = por %p135, %p136
      %p139 = scmp.ne.s32.totalorder %s124, %s138
      %p140 = scmp.eq.s32.totalorder %s30, 0
      %p141 = por %p139, %p140
      %s143 = sadd.s32 %s142, 1
      %p146 = scmp.eq.s32.totalorder %s24, 1
      %p147 = scmp.ne.s32.totalorder %s142, %s144
      %p148 = scmp.eq.s32.totalorder %s24, 0
      %p149 = por %p147, %p148
      %p150 = scmp.ne.s32.totalorder %s142, %s144
      %p151 = scmp.eq.s32.totalorder %s29, 1
      %p152 = por %p150, %p151
      %p153 = scmp.ne.s32.totalorder %s144, %s145
      %p154 = scmp.eq.s32.totalorder %s29, 0
      %p155 = por %p153, %p154
      %p156 = scmp.ne.s32.totalorder %s144, %s145
      %p157 = scmp.eq.s32.totalorder %s30, 1
      %p158 = por %p156, %p157
      %p160 = scmp.ne.s32.totalorder %s145, %s159
      %p161 = scmp.eq.s32.totalorder %s30, 0
      %p162 = por %p160, %p161
      %s164 = sadd.s32 %s163, 1
      %p167 = scmp.eq.s32.totalorder %s24, 1
      %p168 = scmp.ne.s32.totalorder %s163, %s165
      %p169 = scmp.eq.s32.totalorder %s24, 0
      %p170 = por %p168, %p169
      %p171 = scmp.ne.s32.totalorder %s163, %s165
      %p172 = scmp.eq.s32.totalorder %s29, 1
      %p173 = por %p171, %p172
      %p174 = scmp.ne.s32.totalorder %s165, %s166
      %p175 = scmp.eq.s32.totalorder %s29, 0
      %p176 = por %p174, %p175
      %p177 = scmp.ne.s32.totalorder %s165, %s166
      %p178 = scmp.eq.s32.totalorder %s30, 1
      %p179 = por %p177, %p178
      %p181 = scmp.ne.s32.totalorder %s166, %s180
      %p182 = scmp.eq.s32.totalorder %s30, 0
      %p183 = por %p181, %p182
      %s185 = sadd.s32 %s184, 1
      %p188 = scmp.eq.s32.totalorder %s24, 1
      %p189 = scmp.ne.s32.totalorder %s184, %s186
      %p190 = scmp.eq.s32.totalorder %s24, 0
      %p191 = por %p189, %p190
      %p192 = scmp.ne.s32.totalorder %s184, %s186
      %p193 = scmp.eq.s32.totalorder %s29, 1
      %p194 = por %p192, %p193
      %p195 = scmp.ne.s32.totalorder %s186, %s187
      %p196 = scmp.eq.s32.totalorder %s29, 0
      %p197 = por %p195, %p196
      %p198 = scmp.ne.s32.totalorder %s186, %s187
      %p199 = scmp.eq.s32.totalorder %s30, 1
      %p200 = por %p198, %p199
      %p202 = scmp.ne.s32.totalorder %s187, %s201
      %p203 = scmp.eq.s32.totalorder %s30, 0
      %p204 = por %p202, %p203
      %s206 = sadd.s32 %s205, 1
      %p209 = scmp.eq.s32.totalorder %s24, 1
      %p210 = scmp.ne.s32.totalorder %s205, %s207
      %p211 = scmp.eq.s32.totalorder %s24, 0
      %p212 = por %p210, %p211
      %p213 = scmp.ne.s32.totalorder %s205, %s207
      %p214 = scmp.eq.s32.totalorder %s29, 1
      %p215 = por %p213, %p214
      %p216 = scmp.ne.s32.totalorder %s207, %s208
      %p217 = scmp.eq.s32.totalorder %s29, 0
      %p218 = por %p216, %p217
      %p219 = scmp.ne.s32.totalorder %s207, %s208
      %p220 = scmp.eq.s32.totalorder %s30, 1
      %p221 = por %p219, %p220
      %p223 = scmp.ne.s32.totalorder %s208, %s222
      %p224 = scmp.eq.s32.totalorder %s30, 0
      %p225 = por %p223, %p224
      %s227 = sadd.s32 %s226, 1
      %p230 = scmp.eq.s32.totalorder %s24, 1
      %p231 = scmp.ne.s32.totalorder %s226, %s228
      %p232 = scmp.eq.s32.totalorder %s24, 0
      %p233 = por %p231, %p232
      %p234 = scmp.ne.s32.totalorder %s226, %s228
      %p235 = scmp.eq.s32.totalorder %s29, 1
      %p236 = por %p234, %p235
      %p237 = scmp.ne.s32.totalorder %s228, %s229
      %p238 = scmp.eq.s32.totalorder %s29, 0
      %p239 = por %p237, %p238
      %p240 = scmp.ne.s32.totalorder %s228, %s229
      %p241 = scmp.eq.s32.totalorder %s30, 1
      %p242 = por %p240, %p241
      %p244 = scmp.ne.s32.totalorder %s229, %s243
      %p245 = scmp.eq.s32.totalorder %s30, 0
      %p246 = por %p244, %p245
      %s248 = sadd.s32 %s247, 1
      %p251 = scmp.eq.s32.totalorder %s24, 1
      %p252 = scmp.ne.s32.totalorder %s247, %s249
      %p253 = scmp.eq.s32.totalorder %s24, 0
      %p254 = por %p252, %p253
      %p255 = scmp.ne.s32.totalorder %s247, %s249
      %p256 = scmp.eq.s32.totalorder %s29, 1
      %p257 = por %p255, %p256
      %p258 = scmp.ne.s32.totalorder %s249, %s250
      %p259 = scmp.eq.s32.totalorder %s29, 0
      %p260 = por %p258, %p259
      %p261 = scmp.ne.s32.totalorder %s249, %s250
      %p262 = scmp.eq.s32.totalorder %s30, 1
      %p263 = por %p261, %p262
      %p265 = scmp.ne.s32.totalorder %s250, %s264
      %p266 = scmp.eq.s32.totalorder %s30, 0
      %p267 = por %p265, %p266
      %s269 = sadd.s32 %s268, 1
      %p272 = scmp.eq.s32.totalorder %s24, 1
      %p273 = scmp.ne.s32.totalorder %s268, %s270
      %p274 = scmp.eq.s32.totalorder %s24, 0
      %p275 = por %p273, %p274
      %p276 = scmp.ne.s32.totalorder %s268, %s270
      %p277 = scmp.eq.s32.totalorder %s29, 1
      %p278 = por %p276, %p277
      %p279 = scmp.ne.s32.totalorder %s270, %s271
      %p280 = scmp.eq.s32.totalorder %s29, 0
      %p281 = por %p279, %p280
      %p282 = scmp.ne.s32.totalorder %s270, %s271
      %p283 = scmp.eq.s32.totalorder %s30, 1
      %p284 = por %p282, %p283
      %p286 = scmp.ne.s32.totalorder %s271, %s285
      %p287 = scmp.eq.s32.totalorder %s30, 0
      %p288 = por %p286, %p287
      %s290 = sadd.s32 %s289, 1
      %p293 = scmp.eq.s32.totalorder %s24, 1
      %p294 = scmp.ne.s32.totalorder %s289, %s291
      %p295 = scmp.eq.s32.totalorder %s24, 0
      %p296 = por %p294, %p295
      %p297 = scmp.ne.s32.totalorder %s289, %s291
      %p298 = scmp.eq.s32.totalorder %s29, 1
      %p299 = por %p297, %p298
      %p300 = scmp.ne.s32.totalorder %s291, %s292
      %p301 = scmp.eq.s32.totalorder %s29, 0
      %p302 = por %p300, %p301
      %p303 = scmp.ne.s32.totalorder %s291, %s292
      %p304 = scmp.eq.s32.totalorder %s30, 1
      %p305 = por %p303, %p304
      %p307 = scmp.ne.s32.totalorder %s292, %s306
      %p308 = scmp.eq.s32.totalorder %s30, 0
      %p309 = por %p307, %p308
      %s311 = sadd.s32 %s310, 1
      %p314 = scmp.eq.s32.totalorder %s24, 1
      %p315 = scmp.ne.s32.totalorder %s310, %s312
      %p316 = scmp.eq.s32.totalorder %s24, 0
      %p317 = por %p315, %p316
      %p318 = scmp.ne.s32.totalorder %s310, %s312
      %p319 = scmp.eq.s32.totalorder %s29, 1
      %p320 = por %p318, %p319
      %p321 = scmp.ne.s32.totalorder %s312, %s313
      %p322 = scmp.eq.s32.totalorder %s29, 0
      %p323 = por %p321, %p322
      %p324 = scmp.ne.s32.totalorder %s312, %s313
      %p325 = scmp.eq.s32.totalorder %s30, 1
      %p326 = por %p324, %p325
      %p328 = scmp.ne.s32.totalorder %s313, %s327
      %p329 = scmp.eq.s32.totalorder %s30, 0
      %p330 = por %p328, %p329
      %s332 = sadd.s32 %s331, 1
      %p335 = scmp.eq.s32.totalorder %s24, 1
      %p336 = scmp.ne.s32.totalorder %s331, %s333
      %p337 = scmp.eq.s32.totalorder %s24, 0
      %p338 = por %p336, %p337
      %p339 = scmp.ne.s32.totalorder %s331, %s333
      %p340 = scmp.eq.s32.totalorder %s29, 1
      %p341 = por %p339, %p340
      %p342 = scmp.ne.s32.totalorder %s333, %s334
      %p343 = scmp.eq.s32.totalorder %s29, 0
      %p344 = por %p342, %p343
      %p345 = scmp.ne.s32.totalorder %s333, %s334
      %p346 = scmp.eq.s32.totalorder %s30, 1
      %p347 = por %p345, %p346
      %p349 = scmp.ne.s32.totalorder %s334, %s348
      %p350 = scmp.eq.s32.totalorder %s30, 0
      %p351 = por %p349, %p350
      %s352 = ssub.s32 %s24, %s31
      %p353 = scmp.eq.s32.totalorder %s352, 0
      %s355 = sadd.s32 %s354, 1
      %s356 = scalar_select %p353, %s354, %s355
      %p359 = pneg %p353
      %p360 = scmp.eq.s32.totalorder %s24, 1
      %p361 = por %p359, %p360
      %p362 = scmp.ne.s32.totalorder %s354, %s357
      %p363 = scmp.eq.s32.totalorder %s24, 0
      %p364 = por %p362, %p363
      %p365 = scmp.ne.s32.totalorder %s354, %s357
      %p366 = scmp.eq.s32.totalorder %s29, 1
      %p367 = por %p365, %p366
      %p368 = scmp.ne.s32.totalorder %s357, %s358
      %p369 = scmp.eq.s32.totalorder %s29, 0
      %p370 = por %p368, %p369
      %p371 = scmp.ne.s32.totalorder %s357, %s358
      %p372 = scmp.eq.s32.totalorder %s30, 1
      %p373 = por %p371, %p372
      %p375 = scmp.ne.s32.totalorder %s358, %s374
      %p376 = scmp.eq.s32.totalorder %s30, 0
      %p377 = por %p375, %p376
      %p378 = scmp.le.s32.totalorder 1, %s24
      %p379 = scmp.lt.s32.totalorder %s24, 3
      %p380 = pnand %p378, %p379
      %p381 = pneg %p380
      // Predicated region
      $region9: #{vae_encoder_forward.1} parent=5 // pred_check
        _
      $region10: #{vae_encoder_forward.1} parent=5 // pred_check_branch
        %383 = sbr.rel (%p380) target = $region12
      $region11: #{vae_encoder_forward.1} parent=5 // pred_region
        %s384 = ssub.s32 %s24, 1
        // Predicated region
        $region13: #{vae_encoder_forward.1} parent=11 // pred_check
          %p385 = pneg %p71
        $region14: #{vae_encoder_forward.1} parent=11 // pred_check_branch
          %387 = sbr.rel (%p385) target = $region16
        $region15: #{vae_encoder_forward.1} parent=11 // pred_region
          _
        $region16: #{vae_encoder_forward.1} parent=11 // pred_fallthru
          _
        // Predicated region
        $region17: #{vae_encoder_forward.1} parent=11 // pred_check
          %p388 = pneg %p92
        $region18: #{vae_encoder_forward.1} parent=11 // pred_check_branch
          %390 = sbr.rel (%p388) target = $region20
        $region19: #{vae_encoder_forward.1} parent=11 // pred_region
          _
        $region20: #{vae_encoder_forward.1} parent=11 // pred_fallthru
          _
        // Predicated region
        $region21: #{vae_encoder_forward.1} parent=11 // pred_check
          %p391 = pneg %p113
        $region22: #{vae_encoder_forward.1} parent=11 // pred_check_branch
          %393 = sbr.rel (%p391) target = $region24
        $region23: #{vae_encoder_forward.1} parent=11 // pred_region
          _
        $region24: #{vae_encoder_forward.1} parent=11 // pred_fallthru
          _
        // Predicated region
        $region25: #{vae_encoder_forward.1} parent=11 // pred_check
          %p394 = pneg %p134
        $region26: #{vae_encoder_forward.1} parent=11 // pred_check_branch
          %396 = sbr.rel (%p394) target = $region28
        $region27: #{vae_encoder_forward.1} parent=11 // pred_region
          _
        $region28: #{vae_encoder_forward.1} parent=11 // pred_fallthru
          _
        // Predicated region
        $region29: #{vae_encoder_forward.1} parent=11 // pred_check
          %p397 = pneg %p155
        $region30: #{vae_encoder_forward.1} parent=11 // pred_check_branch
          %399 = sbr.rel (%p397) target = $region32
        $region31: #{vae_encoder_forward.1} parent=11 // pred_region
          _
        $region32: #{vae_encoder_forward.1} parent=11 // pred_fallthru
          _
        // Predicated region
        $region33: #{vae_encoder_forward.1} parent=11 // pred_check
          %p400 = pneg %p176
        $region34: #{vae_encoder_forward.1} parent=11 // pred_check_branch
          %402 = sbr.rel (%p400) target = $region36
        $region35: #{vae_encoder_forward.1} parent=11 // pred_region
          _
        $region36: #{vae_encoder_forward.1} parent=11 // pred_fallthru
          _
        // Predicated region
        $region37: #{vae_encoder_forward.1} parent=11 // pred_check
          %p403 = pneg %p197
        $region38: #{vae_encoder_forward.1} parent=11 // pred_check_branch
          %405 = sbr.rel (%p403) target = $region40
        $region39: #{vae_encoder_forward.1} parent=11 // pred_region
          _
        $region40: #{vae_encoder_forward.1} parent=11 // pred_fallthru
          _
        // Predicated region
        $region41: #{vae_encoder_forward.1} parent=11 // pred_check
          %p406 = pneg %p218
        $region42: #{vae_encoder_forward.1} parent=11 // pred_check_branch
          %408 = sbr.rel (%p406) target = $region44
        $region43: #{vae_encoder_forward.1} parent=11 // pred_region
          _
        $region44: #{vae_encoder_forward.1} parent=11 // pred_fallthru
          _
        // Predicated region
        $region45: #{vae_encoder_forward.1} parent=11 // pred_check
          %p409 = pneg %p239
        $region46: #{vae_encoder_forward.1} parent=11 // pred_check_branch
          %411 = sbr.rel (%p409) target = $region48
        $region47: #{vae_encoder_forward.1} parent=11 // pred_region
          _
        $region48: #{vae_encoder_forward.1} parent=11 // pred_fallthru
          _
        // Predicated region
        $region49: #{vae_encoder_forward.1} parent=11 // pred_check
          %p412 = pneg %p260
        $region50: #{vae_encoder_forward.1} parent=11 // pred_check_branch
          %414 = sbr.rel (%p412) target = $region52
        $region51: #{vae_encoder_forward.1} parent=11 // pred_region
          _
        $region52: #{vae_encoder_forward.1} parent=11 // pred_fallthru
          _
        // Predicated region
        $region53: #{vae_encoder_forward.1} parent=11 // pred_check
          %p415 = pneg %p281
        $region54: #{vae_encoder_forward.1} parent=11 // pred_check_branch
          %417 = sbr.rel (%p415) target = $region56
        $region55: #{vae_encoder_forward.1} parent=11 // pred_region
          _
        $region56: #{vae_encoder_forward.1} parent=11 // pred_fallthru
          _
        // Predicated region
        $region57: #{vae_encoder_forward.1} parent=11 // pred_check
          %p418 = pneg %p302
        $region58: #{vae_encoder_forward.1} parent=11 // pred_check_branch
          %420 = sbr.rel (%p418) target = $region60
        $region59: #{vae_encoder_forward.1} parent=11 // pred_region
          _
        $region60: #{vae_encoder_forward.1} parent=11 // pred_fallthru
          _
        // Predicated region
        $region61: #{vae_encoder_forward.1} parent=11 // pred_check
          %p421 = pneg %p323
        $region62: #{vae_encoder_forward.1} parent=11 // pred_check_branch
          %423 = sbr.rel (%p421) target = $region64
        $region63: #{vae_encoder_forward.1} parent=11 // pred_region
          _
        $region64: #{vae_encoder_forward.1} parent=11 // pred_fallthru
          _
        // Predicated region
        $region65: #{vae_encoder_forward.1} parent=11 // pred_check
          %p424 = pneg %p344
        $region66: #{vae_encoder_forward.1} parent=11 // pred_check_branch
          %426 = sbr.rel (%p424) target = $region68
        $region67: #{vae_encoder_forward.1} parent=11 // pred_region
          _
        $region68: #{vae_encoder_forward.1} parent=11 // pred_fallthru
          _
      $region12: #{vae_encoder_forward.1} parent=5 // pred_fallthru
        _
      %p427 = scmp.lt.s32.totalorder %s24, 2
      // Predicated region
      $region69: #{vae_encoder_forward.1} parent=5 // pred_check
        %p428 = pneg %p427
      $region70: #{vae_encoder_forward.1} parent=5 // pred_check_branch
        %430 = sbr.rel (%p428) target = $region72
      $region71: #{vae_encoder_forward.1} parent=5 // pred_region
        // Predicated region
        $region73: #{vae_encoder_forward.1} parent=71 // pred_check
          %p431 = pneg %p44
        $region74: #{vae_encoder_forward.1} parent=71 // pred_check_branch
          %433 = sbr.rel (%p431) target = $region76
        $region75: #{vae_encoder_forward.1} parent=71 // pred_region
          %p434 = scmp.lt.s32.totalorder %s24, 1
          %s435 = scalar_select %p434, %s24, 1
          %s436 = smul.addr %s435, 4
          %s437 = smul.addr %s436, 8
          %s438 = scalar_lea.vmem %s0, %s437
        $region76: #{vae_encoder_forward.1} parent=71 // pred_fallthru
          _
      $region72: #{vae_encoder_forward.1} parent=5 // pred_fallthru
        _
      %p439 = scmp.le.s32.totalorder 1, %s24
      %p440 = scmp.lt.s32.totalorder %s24, 3
      %p441 = pnand %p439, %p440
      %p442 = pneg %p441
      // Predicated region
      $region77: #{vae_encoder_forward.1} parent=5 // pred_check
        _
      $region78: #{vae_encoder_forward.1} parent=5 // pred_check_branch
        %444 = sbr.rel (%p441) target = $region80
      $region79: #{vae_encoder_forward.1} parent=5 // pred_region
        %s445 = ssub.s32 %s24, 1
        %p446 = scmp.lt.s32.totalorder %s29, 1
        %s447 = scalar_select %p446, %s29, 1
        %s448 = smul.addr %s447, 4
        %s449 = smul.addr %s448, 8
        %s450 = scalar_lea.vmem %s0, %s449
        %p451 = pneg %p50
        %p452 = pneg %p47
        %p453 = pneg %p71
        %p454 = pneg %p68
        %p455 = pneg %p92
        %p456 = pneg %p89
        %p457 = pneg %p113
        %p458 = pneg %p110
        %p459 = pneg %p134
        %p460 = pneg %p131
        %p461 = pneg %p155
        %p462 = pneg %p152
        %p463 = pneg %p176
        %p464 = pneg %p173
        %p465 = pneg %p197
        %p466 = pneg %p194
        %p467 = pneg %p218
        %p468 = pneg %p215
        %p469 = pneg %p239
        %p470 = pneg %p236
        %p471 = pneg %p260
        %p472 = pneg %p257
        %p473 = pneg %p281
        %p474 = pneg %p278
        %p475 = pneg %p302
        %p476 = pneg %p299
        %p477 = pneg %p323
        %p478 = pneg %p320
        %p479 = pneg %p344
        %p480 = pneg %p341
        %p481 = pneg %p370
        %p482 = pneg %p367
        %s483 = sand.u32 %s357, 1
        %s484 = scalar_lea.sflag [#allocation3], %s483
        %s485 = sand.u32 %s357, 1
        %s486 = scalar_lea.vmem [#allocation2], %s485
        %p487 = scmp.lt.s32.totalorder %s29, 1
        %s488 = scalar_select %p487, %s29, 1
        %s489 = smul.addr %s488, 4
        %s490 = smul.addr %s489, 8
        %s491 = scalar_lea.vmem %s0, %s490
        %v493 = vld [vmem:[%s491] sm:$0xff]
        %v494 = vld [vmem:[%s491 + $0x8] sm:$0xff]
        %v495 = vld [vmem:[%s491 + $0x10] sm:$0xff]
        %v496 = vld [vmem:[%s491 + $0x18] sm:$0xf]
        %501 = vrot.lane.b32.xlu0 %v493, 1
        %v502 = vpop.permute.xlu0 %501
        %503 = vrot.lane.b32.xlu0 %v494, 1
        %v504 = vpop.permute.xlu0 %503
        %505 = vrot.lane.b32.xlu0 %v495, 1
        %v506 = vpop.permute.xlu0 %505
        %507 = vrot.lane.b32.xlu0 %v496, 1
        %v508 = vpop.permute.xlu0 %507
        %vm513 = vcmask 7168
        %v514 = vsel %vm513, 0.0, %v502
        %v515 = vsel %vm513, 0.0, %v504
        %v516 = vsel %vm513, 0.0, %v506
        %v517 = vsel %vm513, 0.0, %v508
        %vm518 = vcmask 236544
        %v519 = vsel %vm518, %v514, 0.0
        %v520 = vsel %vm518, %v515, 0.0
        %v521 = vsel %vm518, %v516, 0.0
        %v522 = vsel %vm518, %v517, 0.0
        %vm527 = vcmask 1040384
        %v528 = vrot.slane %v519, 7
        %v529 = vrot.slane %v520, 7
        %v530 = vsel %vm527, %v528, %v529
        %v531 = vrot.slane %v521, 7
        %v532 = vsel %vm527, %v529, %v531
        %v533 = vrot.slane %v522, 7
        %v534 = vsel %vm527, %v531, %v533
        %v539 = vsel %vm527, 0.0, %v528
        %vm540 = vcmask 1044480
        %v541 = vsel %vm540, %v534, 0.0
        %v542 = vpack.c.bf16 %v530, %v539
        %v543 = vpack.c.bf16 %v541, %v532
        %v544 = vld [vmem:[%s1] sm:$0xff]
        %v545 = vld [vmem:[%s1 + $0x8] sm:$0xff]
        %v546 = vld [vmem:[%s1 + $0x10] sm:$0xff]
        %v547 = vld [vmem:[%s1 + $0x18] sm:$0x77]
        %s548 = scalar_lea.vmem %s1, 32
        %v549 = vld [vmem:[%s548] sm:$0xff]
        %v550 = vld [vmem:[%s548 + $0x8] sm:$0xff]
        %v551 = vld [vmem:[%s548 + $0x10] sm:$0xff]
        %v552 = vld [vmem:[%s548 + $0x18] sm:$0x77]
        %vm553 = vsmask.f32 7424
        %v555 = vshrl.u32 %v542, 16
        %v557 = vshll.u32 %v542, 16
        %v559 = vrot.slane %v557, 1
        %v560 = vor.u32 %v555, %v559
        %v562 = vshll.u32 %v543, 16
        %v564 = vrot.slane %v562, 1
        %v565 = vsel %vm553, %v560, %v564
        %v566 = vshrl.u32 %v543, 16
        %v568 = vor.u32 %v566, %v564
        %v573 = vunpack.c.l.b16 %v549
        %v574 = vunpack.c.h.b16 %v549
        %v575 = vunpack.c.l.b16 %v550
        %v576 = vunpack.c.h.b16 %v550
        %v577 = vunpack.c.l.b16 %v551
        %v578 = vunpack.c.h.b16 %v551
        %v579 = vunpack.c.l.b16 %v552
        %v580 = vunpack.c.h.b16 %v552
        %v581 = vpack.c.b16 %v575, %v573
        %v582 = vpack.c.b16 %v576, %v574
        %v583 = vpack.c.b16 %v579, %v577
        %v584 = vpack.c.b16 %v580, %v578
        %vm587 = vcmask 244736
        %v589 = vsel %vm587, %v565, 0
        %v592 = vsel %vm587, %v568, 0
        %vm594 = vcmask 1046528
        %v596 = vsel %vm594, %v583, 0
        %v599 = vsel %vm594, %v584, 0
        %601 = vmatprep.subr.bf16.mxu0 %v582
        %602 = vmatpush1.bf16.msra.mxu0 %v581
        %603 = vmatprep.subr.bf16.mxu0 %v599
        %604 = vmatpush1.bf16.msra.mxu0 %v596
        %605 = vmatprep.subr.bf16.mxu0 0
        %606 = vmatpush1.bf16.msra.mxu0 0
        %607 = vmatprep.subr.bf16.mxu0 0
        %608 = vmatpush1.bf16.msra.mxu0 0
        %609 = vmatprep.subr.bf16.mxu0 0
        %610 = vmatpush1.bf16.msra.mxu0 0
        %611 = vmatprep.subr.bf16.mxu0 0
        %612 = vmatpush1.bf16.msra.mxu0 0
        %613 = vmatprep.subr.bf16.mxu0 0
        %614 = vmatpush1.bf16.msra.mxu0 0
        %615 = vmatprep.subr.bf16.mxu0 0
        %616 = vmatpush1.bf16.msra.mxu0 0
        %617 = vmatprep.subr.bf16.mxu0 0
        %618 = vmatpush1.bf16.msra.mxu0 0
        %619 = vmatprep.subr.bf16.mxu0 0
        %620 = vmatpush1.bf16.msra.mxu0 0
        %621 = vmatprep.subr.bf16.mxu0 0
        %622 = vmatpush1.bf16.msra.mxu0 0
        %623 = vmatprep.subr.bf16.mxu0 0
        %624 = vmatpush1.bf16.msra.mxu0 0
        %625 = vmatprep.subr.bf16.mxu0 0
        %626 = vmatpush1.bf16.msra.mxu0 0
        %627 = vmatprep.subr.bf16.mxu0 0
        %628 = vmatpush1.bf16.msra.mxu0 0
        %629 = vmatprep.subr.bf16.mxu0 0
        %630 = vmatpush1.bf16.msra.mxu0 0
        %631 = vmatprep.subr.bf16.mxu0 0
        %632 = vmatpush1.bf16.msra.mxu0 0
        %633 = vmatprep.mubr.bf16.mxu0 0
        %634 = vmatmul.mubr.bf16.gmra.mrb[0].mxu0 %v589
        %v635 = vpop.f32.mrb[0].mxu0
        %v636 = vadd.f32 0.0, %v635
        %v637 = vpop.f32.mrb[0].mxu0
        %v638 = vadd.f32 0.0, %v637
        %v639 = vpop.f32.mrb[0].mxu0
        %v640 = vadd.f32 0.0, %v639
        %v641 = vpop.f32.mrb[0].mxu0
        %v642 = vadd.f32 0.0, %v641
        %643 = vmatprep.mubr.bf16.mxu0 0
        %644 = vmatmul.mubr.bf16.gmra.mrb[0].mxu0 %v592
        %v645 = vpop.f32.mrb[0].mxu0
        %v646 = vadd.f32 0.0, %v645
        %v647 = vpop.f32.mrb[0].mxu0
        %v648 = vadd.f32 0.0, %v647
        %v649 = vpop.f32.mrb[0].mxu0
        %v650 = vadd.f32 0.0, %v649
        %v651 = vpop.f32.mrb[0].mxu0
        %v652 = vadd.f32 0.0, %v651
        %653 = vdwg.mxu0
        %v658 = vunpack.c.l.b16 %v544
        %v659 = vunpack.c.h.b16 %v544
        %v660 = vunpack.c.l.b16 %v545
        %v661 = vunpack.c.h.b16 %v545
        %v662 = vunpack.c.l.b16 %v546
        %v663 = vunpack.c.h.b16 %v546
        %v664 = vunpack.c.l.b16 %v547
        %v665 = vunpack.c.h.b16 %v547
        %v666 = vpack.c.b16 %v660, %v658
        %v667 = vpack.c.b16 %v661, %v659
        %v668 = vpack.c.b16 %v664, %v662
        %v669 = vpack.c.b16 %v665, %v663
        %v672 = vsel %vm587, %v542, 0
        %v674 = vsel %vm587, %v543, 0
        %v677 = vsel %vm594, %v668, 0
        %v680 = vsel %vm594, %v669, 0
        %682 = vmatprep.subr.bf16.mxu0 %v667
        %683 = vmatpush1.bf16.msra.mxu0 %v666
        %684 = vmatprep.subr.bf16.mxu0 %v680
        %685 = vmatpush1.bf16.msra.mxu0 %v677
        %686 = vmatprep.subr.bf16.mxu0 0
        %687 = vmatpush1.bf16.msra.mxu0 0
        %688 = vmatprep.subr.bf16.mxu0 0
        %689 = vmatpush1.bf16.msra.mxu0 0
        %690 = vmatprep.subr.bf16.mxu0 0
        %691 = vmatpush1.bf16.msra.mxu0 0
        %692 = vmatprep.subr.bf16.mxu0 0
        %693 = vmatpush1.bf16.msra.mxu0 0
        %694 = vmatprep.subr.bf16.mxu0 0
        %695 = vmatpush1.bf16.msra.mxu0 0
        %696 = vmatprep.subr.bf16.mxu0 0
        %697 = vmatpush1.bf16.msra.mxu0 0
        %698 = vmatprep.subr.bf16.mxu0 0
        %699 = vmatpush1.bf16.msra.mxu0 0
        %700 = vmatprep.subr.bf16.mxu0 0
        %701 = vmatpush1.bf16.msra.mxu0 0
        %702 = vmatprep.subr.bf16.mxu0 0
        %703 = vmatpush1.bf16.msra.mxu0 0
        %704 = vmatprep.subr.bf16.mxu0 0
        %705 = vmatpush1.bf16.msra.mxu0 0
        %706 = vmatprep.subr.bf16.mxu0 0
        %707 = vmatpush1.bf16.msra.mxu0 0
        %708 = vmatprep.subr.bf16.mxu0 0
        %709 = vmatpush1.bf16.msra.mxu0 0
        %710 = vmatprep.subr.bf16.mxu0 0
        %711 = vmatpush1.bf16.msra.mxu0 0
        %712 = vmatprep.subr.bf16.mxu0 0
        %713 = vmatpush1.bf16.msra.mxu0 0
        %714 = vmatprep.mubr.bf16.mxu0 0
        %715 = vmatmul.mubr.bf16.gmra.mrb[0].mxu0 %v672
        %v716 = vpop.f32.mrb[0].mxu0
        %v717 = vadd.f32 %v636, %v716
        %v718 = vpop.f32.mrb[0].mxu0
        %v719 = vadd.f32 %v638, %v718
        %v720 = vpop.f32.mrb[0].mxu0
        %v721 = vadd.f32 %v640, %v720
        %v722 = vpop.f32.mrb[0].mxu0
        %v723 = vadd.f32 %v642, %v722
        %724 = vmatprep.mubr.bf16.mxu0 0
        %725 = vmatmul.mubr.bf16.gmra.mrb[0].mxu0 %v674
        %v726 = vpop.f32.mrb[0].mxu0
        %v727 = vadd.f32 %v646, %v726
        %v728 = vpop.f32.mrb[0].mxu0
        %v729 = vadd.f32 %v648, %v728
        %v730 = vpop.f32.mrb[0].mxu0
        %v731 = vadd.f32 %v650, %v730
        %v732 = vpop.f32.mrb[0].mxu0
        %v733 = vadd.f32 %v652, %v732
        %734 = vdwg.mxu0
        %s735 = scalar_lea.vmem %s1, 64
        %v736 = vld [vmem:[%s735] sm:$0xff]
        %v737 = vld [vmem:[%s735 + $0x8] sm:$0xff]
        %v738 = vld [vmem:[%s735 + $0x10] sm:$0xff]
        %v739 = vld [vmem:[%s735 + $0x18] sm:$0x77]
        %vm742 = vcmask 1046528
        %v743 = vrot.slane %v542, 1
        %v744 = vrot.slane %v543, 1
        %v745 = vsel %vm742, %v743, %v744
        %v750 = vunpack.c.l.b16 %v736
        %v751 = vunpack.c.h.b16 %v736
        %v752 = vunpack.c.l.b16 %v737
        %v753 = vunpack.c.h.b16 %v737
        %v754 = vunpack.c.l.b16 %v738
        %v755 = vunpack.c.h.b16 %v738
        %v756 = vunpack.c.l.b16 %v739
        %v757 = vunpack.c.h.b16 %v739
        %v758 = vpack.c.b16 %v752, %v750
        %v759 = vpack.c.b16 %v753, %v751
        %v760 = vpack.c.b16 %v756, %v754
        %v761 = vpack.c.b16 %v757, %v755
        %v765 = vsel %vm587, %v745, 0
        %v768 = vsel %vm587, %v744, 0
        %v771 = vsel %vm594, %v760, 0
        %v774 = vsel %vm594, %v761, 0
        %776 = vmatprep.subr.bf16.mxu0 %v759
        %777 = vmatpush1.bf16.msra.mxu0 %v758
        %778 = vmatprep.subr.bf16.mxu0 %v774
        %779 = vmatpush1.bf16.msra.mxu0 %v771
        %780 = vmatprep.subr.bf16.mxu0 0
        %781 = vmatpush1.bf16.msra.mxu0 0
        %782 = vmatprep.subr.bf16.mxu0 0
        %783 = vmatpush1.bf16.msra.mxu0 0
        %784 = vmatprep.subr.bf16.mxu0 0
        %785 = vmatpush1.bf16.msra.mxu0 0
        %786 = vmatprep.subr.bf16.mxu0 0
        %787 = vmatpush1.bf16.msra.mxu0 0
        %788 = vmatprep.subr.bf16.mxu0 0
        %789 = vmatpush1.bf16.msra.mxu0 0
        %790 = vmatprep.subr.bf16.mxu0 0
        %791 = vmatpush1.bf16.msra.mxu0 0
        %792 = vmatprep.subr.bf16.mxu0 0
        %793 = vmatpush1.bf16.msra.mxu0 0
        %794 = vmatprep.subr.bf16.mxu0 0
        %795 = vmatpush1.bf16.msra.mxu0 0
        %796 = vmatprep.subr.bf16.mxu0 0
        %797 = vmatpush1.bf16.msra.mxu0 0
        %798 = vmatprep.subr.bf16.mxu0 0
        %799 = vmatpush1.bf16.msra.mxu0 0
        %800 = vmatprep.subr.bf16.mxu0 0
        %801 = vmatpush1.bf16.msra.mxu0 0
        %802 = vmatprep.subr.bf16.mxu0 0
        %803 = vmatpush1.bf16.msra.mxu0 0
        %804 = vmatprep.subr.bf16.mxu0 0
        %805 = vmatpush1.bf16.msra.mxu0 0
        %806 = vmatprep.subr.bf16.mxu0 0
        %807 = vmatpush1.bf16.msra.mxu0 0
        %808 = vmatprep.mubr.bf16.mxu0 0
        %809 = vmatmul.mubr.bf16.gmra.mrb[0].mxu0 %v765
        %v810 = vpop.f32.mrb[0].mxu0
        %v811 = vadd.f32 0.0, %v810
        %v812 = vpop.f32.mrb[0].mxu0
        %v813 = vadd.f32 0.0, %v812
        %v814 = vpop.f32.mrb[0].mxu0
        %v815 = vadd.f32 0.0, %v814
        %v816 = vpop.f32.mrb[0].mxu0
        %v817 = vadd.f32 0.0, %v816
        %818 = vmatprep.mubr.bf16.mxu0 0
        %819 = vmatmul.mubr.bf16.gmra.mrb[0].mxu0 %v768
        %v820 = vpop.f32.mrb[0].mxu0
        %v821 = vadd.f32 0.0, %v820
        %v822 = vpop.f32.mrb[0].mxu0
        %v823 = vadd.f32 0.0, %v822
        %v824 = vpop.f32.mrb[0].mxu0
        %v825 = vadd.f32 0.0, %v824
        %v826 = vpop.f32.mrb[0].mxu0
        %v827 = vadd.f32 0.0, %v826
        %828 = vdwg.mxu0
        %v829 = vadd.f32 %v717, %v811
        %v830 = vadd.f32 %v719, %v813
        %v831 = vadd.f32 %v721, %v815
        %v832 = vadd.f32 %v723, %v817
        %v833 = vadd.f32 %v727, %v821
        %v834 = vadd.f32 %v729, %v823
        %v835 = vadd.f32 %v731, %v825
        %v836 = vadd.f32 %v733, %v827
        %v837 = vld [vmem:[%s2] sm:$0x3]
        %v839 = vlaneseq
        %v840 = vshrl.u32 %v839, 7
        %v841 = vsub.s32 0, %v840
        %v842 = vrot.slane %v837, %v841
        %v843 = vlaneseq
        %v844 = vshrl.u32 %v843, 7
        %v845 = vsub.s32 1, %v844
        %v846 = vrot.slane %v837, %v845
        %v849 = vadd.f32 %v829, %v842
        %v850 = vadd.f32 %v830, %v846
        %v851 = vadd.f32 %v831, %v842
        %v852 = vadd.f32 %v832, %v846
        %v853 = vadd.f32 %v833, %v842
        %v854 = vadd.f32 %v834, %v846
        %v855 = vadd.f32 %v835, %v842
        %v856 = vadd.f32 %v836, %v846
        %v857 = vmax.f32 %v849, 0.0
        %v858 = vmax.f32 %v850, 0.0
        %v859 = vmax.f32 %v851, 0.0
        %v860 = vmax.f32 %v852, 0.0
        %v861 = vmax.f32 %v853, 0.0
        %v862 = vmax.f32 %v854, 0.0
        %v863 = vmax.f32 %v855, 0.0
        %v864 = vmax.f32 %v856, 0.0
        %873 = vrot.lane.b32.xlu0 %v857, 8
        %v874 = vpop.permute.xlu0 %873
        %875 = vrot.lane.b32.xlu0 %v858, 8
        %v876 = vpop.permute.xlu0 %875
        %877 = vrot.lane.b32.xlu0 %v859, 8
        %v878 = vpop.permute.xlu0 %877
        %879 = vrot.lane.b32.xlu0 %v860, 8
        %v880 = vpop.permute.xlu0 %879
        %881 = vrot.lane.b32.xlu0 %v861, 8
        %v882 = vpop.permute.xlu0 %881
        %883 = vrot.lane.b32.xlu0 %v862, 8
        %v884 = vpop.permute.xlu0 %883
        %885 = vrot.lane.b32.xlu0 %v863, 8
        %v886 = vpop.permute.xlu0 %885
        %887 = vrot.lane.b32.xlu0 %v864, 8
        %v888 = vpop.permute.xlu0 %887
        %vm889 = vcmask 64512
        %v890 = vsel %vm889, %v874, %v876
        %v891 = vsel %vm889, %v878, %v880
        %v892 = vsel %vm889, %v882, %v884
        %v893 = vsel %vm889, %v886, %v888
        %v902 = vsel %vm889, 0.0, %v874
        %v903 = vsel %vm889, 0.0, %v878
        %v904 = vsel %vm889, 0.0, %v882
        %v905 = vsel %vm889, 0.0, %v886
        %vm906 = vcmask 850944
        %v907 = vsel %vm906, %v890, 0.0
        %v908 = vsel %vm906, %v891, 0.0
        %v909 = vsel %vm906, %v892, 0.0
        %v910 = vsel %vm906, %v893, 0.0
        %v919 = vrot.slane %v902, 7
        %v920 = vrot.slane %v907, 7
        %v921 = vrot.slane %v903, 7
        %v922 = vsel %vm527, %v919, %v921
        %v923 = vrot.slane %v908, 7
        %v924 = vsel %vm527, %v920, %v923
        %v925 = vrot.slane %v904, 7
        %v926 = vsel %vm527, %v921, %v925
        %v927 = vrot.slane %v909, 7
        %v928 = vsel %vm527, %v923, %v927
        %v929 = vrot.slane %v905, 7
        %v930 = vsel %vm527, %v925, %v929
        %v931 = vrot.slane %v910, 7
        %v932 = vsel %vm527, %v927, %v931
        %v941 = vsel %vm527, 0.0, %v919
        %v942 = vsel %vm527, 0.0, %v920
        %v943 = vsel %vm540, %v930, 0.0
        %v944 = vsel %vm540, %v932, 0.0
        %v945 = vpack.c.bf16 %v922, %v941
        %v946 = vpack.c.bf16 %v924, %v942
        %v947 = vpack.c.bf16 %v943, %v926
        %v948 = vpack.c.bf16 %v944, %v928
        %v949 = vld [vmem:[%s3] sm:$0xff]
        %v950 = vld [vmem:[%s3 + $0x8] sm:$0xff]
        %v951 = vld [vmem:[%s3 + $0x10] sm:$0xff]
        %v952 = vld [vmem:[%s3 + $0x18] sm:$0xff]
        %v953 = vld [vmem:[%s3 + $0x20] sm:$0xff]
        %v954 = vld [vmem:[%s3 + $0x28] sm:$0xff]
        %v955 = vld [vmem:[%s3 + $0x30] sm:$0xff]
        %v956 = vld [vmem:[%s3 + $0x38] sm:$0xff]
        %v957 = vld [vmem:[%s3 + $0x40] sm:$0xff]
        %v958 = vld [vmem:[%s3 + $0x48] sm:$0xff]
        %v959 = vld [vmem:[%s3 + $0x50] sm:$0xff]
        %v960 = vld [vmem:[%s3 + $0x58] sm:$0xff]
        %v961 = vld [vmem:[%s3 + $0x60] sm:$0xff]
        %v962 = vld [vmem:[%s3 + $0x68] sm:$0xff]
        %v963 = vld [vmem:[%s3 + $0x70] sm:$0xff]
        %v964 = vld [vmem:[%s3 + $0x78] sm:$0xff]
        %v965 = vld [vmem:[%s3 + $0x80] sm:$0xff]
        %v966 = vld [vmem:[%s3 + $0x88] sm:$0xff]
        %v967 = vld [vmem:[%s3 + $0x90] sm:$0xff]
        %v968 = vld [vmem:[%s3 + $0x98] sm:$0xff]
        %v969 = vld [vmem:[%s3 + $0xa0] sm:$0xff]
        %v970 = vld [vmem:[%s3 + $0xa8] sm:$0xff]
        %v971 = vld [vmem:[%s3 + $0xb0] sm:$0xff]
        %v972 = vld [vmem:[%s3 + $0xb8] sm:$0xff]
        %v973 = vld [vmem:[%s3 + $0xc0] sm:$0xff]
        %v974 = vld [vmem:[%s3 + $0xc8] sm:$0xff]
        %v975 = vld [vmem:[%s3 + $0xd0] sm:$0xff]
        %v976 = vld [vmem:[%s3 + $0xd8] sm:$0xff]
        %v977 = vld [vmem:[%s3 + $0xe0] sm:$0xff]
        %v978 = vld [vmem:[%s3 + $0xe8] sm:$0xff]
        %s979 = scalar_lea.vmem %s3, 240
        %v980 = vld [vmem:[%s979] sm:$0xff]
        %v981 = vld [vmem:[%s979 + $0x8] sm:$0xff]
        %v982 = vld [vmem:[%s979 + $0x10] sm:$0xff]
        %v983 = vld [vmem:[%s979 + $0x18] sm:$0xff]
        %v984 = vld [vmem:[%s979 + $0x20] sm:$0xff]
        %v985 = vld [vmem:[%s979 + $0x28] sm:$0xff]
        %v986 = vld [vmem:[%s979 + $0x30] sm:$0xff]
        %v987 = vld [vmem:[%s979 + $0x38] sm:$0xff]
        %v988 = vld [vmem:[%s979 + $0x40] sm:$0xff]
        %v989 = vld [vmem:[%s979 + $0x48] sm:$0xff]
        %v990 = vld [vmem:[%s979 + $0x50] sm:$0xff]
        %v991 = vld [vmem:[%s979 + $0x58] sm:$0xff]
        %v992 = vld [vmem:[%s979 + $0x60] sm:$0xff]
        %v993 = vld [vmem:[%s979 + $0x68] sm:$0xff]
        %v994 = vld [vmem:[%s979 + $0x70] sm:$0xff]
        %v995 = vld [vmem:[%s979 + $0x78] sm:$0xff]
        %v996 = vld [vmem:[%s979 + $0x80] sm:$0xff]
        %v997 = vld [vmem:[%s979 + $0x88] sm:$0xff]
        %v998 = vld [vmem:[%s979 + $0x90] sm:$0xff]
        %v999 = vld [vmem:[%s979 + $0x98] sm:$0xff]
        %v1000 = vld [vmem:[%s979 + $0xa0] sm:$0xff]
        %v1001 = vld [vmem:[%s979 + $0xa8] sm:$0xff]
        %v1002 = vld [vmem:[%s979 + $0xb0] sm:$0xff]
        %v1003 = vld [vmem:[%s979 + $0xb8] sm:$0xff]
        %v1004 = vld [vmem:[%s979 + $0xc0] sm:$0xff]
        %v1005 = vld [vmem:[%s979 + $0xc8] sm:$0xff]
        %v1006 = vld [vmem:[%s979 + $0xd0] sm:$0xff]
        %v1007 = vld [vmem:[%s979 + $0xd8] sm:$0xff]
        %v1008 = vld [vmem:[%s979 + $0xe0] sm:$0xff]
        %v1009 = vld [vmem:[%s979 + $0xe8] sm:$0xff]
        %v1011 = vshrl.u32 %v945, 16
        %v1013 = vshll.u32 %v945, 16
        %v1015 = vrot.slane %v1013, 1
        %v1016 = vor.u32 %v1011, %v1015
        %v1018 = vshll.u32 %v947, 16
        %v1020 = vrot.slane %v1018, 1
        %v1021 = vsel %vm553, %v1016, %v1020
        %v1023 = vshrl.u32 %v946, 16
        %v1025 = vshll.u32 %v946, 16
        %v1027 = vrot.slane %v1025, 1
        %v1028 = vor.u32 %v1023, %v1027
        %v1030 = vshll.u32 %v948, 16
        %v1032 = vrot.slane %v1030, 1
        %v1033 = vsel %vm553, %v1028, %v1032
        %v1034 = vshrl.u32 %v947, 16
        %v1036 = vor.u32 %v1034, %v1020
        %v1037 = vshrl.u32 %v948, 16
        %v1039 = vor.u32 %v1037, %v1032
        %v1072 = vunpack.c.l.b16 %v980
        %v1073 = vunpack.c.h.b16 %v980
        %v1074 = vunpack.c.l.b16 %v981
        %v1075 = vunpack.c.h.b16 %v981
        %v1076 = vunpack.c.l.b16 %v982
        %v1077 = vunpack.c.h.b16 %v982
        %v1078 = vunpack.c.l.b16 %v983
        %v1079 = vunpack.c.h.b16 %v983
        %v1080 = vunpack.c.l.b16 %v984
        %v1081 = vunpack.c.h.b16 %v984
        %v1082 = vunpack.c.l.b16 %v985
        %v1083 = vunpack.c.h.b16 %v985
        %v1084 = vunpack.c.l.b16 %v986
        %v1085 = vunpack.c.h.b16 %v986
        %v1086 = vunpack.c.l.b16 %v987
        %v1087 = vunpack.c.h.b16 %v987
        %v1088 = vunpack.c.l.b16 %v988
        %v1089 = vunpack.c.h.b16 %v988
        %v1090 = vunpack.c.l.b16 %v989
        %v1091 = vunpack.c.h.b16 %v989
        %v1092 = vunpack.c.l.b16 %v990
        %v1093 = vunpack.c.h.b16 %v990
        %v1094 = vunpack.c.l.b16 %v991
        %v1095 = vunpack.c.h.b16 %v991
        %v1096 = vunpack.c.l.b16 %v992
        %v1097 = vunpack.c.h.b16 %v992
        %v1098 = vunpack.c.l.b16 %v993
        %v1099 = vunpack.c.h.b16 %v993
        %v1100 = vunpack.c.l.b16 %v994
        %v1101 = vunpack.c.h.b16 %v994
        %v1102 = vunpack.c.l.b16 %v995
        %v1103 = vunpack.c.h.b16 %v995
        %v1104 = vunpack.c.l.b16 %v996
        %v1105 = vunpack.c.h.b16 %v996
        %v1106 = vunpack.c.l.b16 %v997
        %v1107 = vunpack.c.h.b16 %v997
        %v1108 = vunpack.c.l.b16 %v998
        %v1109 = vunpack.c.h.b16 %v998
        %v1110 = vunpack.c.l.b16 %v999
        %v1111 = vunpack.c.h.b16 %v999
        %v1112 = vunpack.c.l.b16 %v1000
        %v1113 = vunpack.c.h.b16 %v1000
        %v1114 = vunpack.c.l.b16 %v1001
        %v1115 = vunpack.c.h.b16 %v1001
        %v1116 = vunpack.c.l.b16 %v1002
        %v1117 = vunpack.c.h.b16 %v1002
        %v1118 = vunpack.c.l.b16 %v1003
        %v1119 = vunpack.c.h.b16 %v1003
        %v1120 = vunpack.c.l.b16 %v1004
        %v1121 = vunpack.c.h.b16 %v1004
        %v1122 = vunpack.c.l.b16 %v1005
        %v1123 = vunpack.c.h.b16 %v1005
        %v1124 = vunpack.c.l.b16 %v1006
        %v1125 = vunpack.c.h.b16 %v1006
        %v1126 = vunpack.c.l.b16 %v1007
        %v1127 = vunpack.c.h.b16 %v1007
        %v1128 = vunpack.c.l.b16 %v1008
        %v1129 = vunpack.c.h.b16 %v1008
        %v1130 = vunpack.c.l.b16 %v1009
        %v1131 = vunpack.c.h.b16 %v1009
        %v1132 = vpack.c.b16 %v1074, %v1072
        %v1133 = vpack.c.b16 %v1075, %v1073
        %v1134 = vpack.c.b16 %v1078, %v1076
        %v1135 = vpack.c.b16 %v1079, %v1077
        %v1136 = vpack.c.b16 %v1082, %v1080
        %v1137 = vpack.c.b16 %v1083, %v1081
        %v1138 = vpack.c.b16 %v1086, %v1084
        %v1139 = vpack.c.b16 %v1087, %v1085
        %v1140 = vpack.c.b16 %v1090, %v1088
        %v1141 = vpack.c.b16 %v1091, %v1089
        %v1142 = vpack.c.b16 %v1094, %v1092
        %v1143 = vpack.c.b16 %v1095, %v1093
        %v1144 = vpack.c.b16 %v1098, %v1096
        %v1145 = vpack.c.b16 %v1099, %v1097
        %v1146 = vpack.c.b16 %v1102, %v1100
        %v1147 = vpack.c.b16 %v1103, %v1101
        %v1148 = vpack.c.b16 %v1106, %v1104
        %v1149 = vpack.c.b16 %v1107, %v1105
        %v1150 = vpack.c.b16 %v1110, %v1108
        %v1151 = vpack.c.b16 %v1111, %v1109
        %v1152 = vpack.c.b16 %v1114, %v1112
        %v1153 = vpack.c.b16 %v1115, %v1113
        %v1154 = vpack.c.b16 %v1118, %v1116
        %v1155 = vpack.c.b16 %v1119, %v1117
        %v1156 = vpack.c.b16 %v1122, %v1120
        %v1157 = vpack.c.b16 %v1123, %v1121
        %v1158 = vpack.c.b16 %v1126, %v1124
        %v1159 = vpack.c.b16 %v1127, %v1125
        %v1160 = vpack.c.b16 %v1130, %v1128
        %v1161 = vpack.c.b16 %v1131, %v1129
        %vm1192 = vcmask 916480
        %v1194 = vsel %vm1192, %v1033, 0
        %v1197 = vsel %vm1192, %v1039, 0
        %1199 = vmatprep.subr.bf16.mxu0 %v1133
        %1200 = vmatpush1.bf16.msra.mxu0 %v1132
        %1201 = vmatprep.subr.bf16.mxu0 %v1135
        %1202 = vmatpush1.bf16.msra.mxu0 %v1134
        %1203 = vmatprep.subr.bf16.mxu0 %v1137
        %1204 = vmatpush1.bf16.msra.mxu0 %v1136
        %1205 = vmatprep.subr.bf16.mxu0 %v1139
        %1206 = vmatpush1.bf16.msra.mxu0 %v1138
        %1207 = vmatprep.subr.bf16.mxu0 %v1141
        %1208 = vmatpush1.bf16.msra.mxu0 %v1140
        %1209 = vmatprep.subr.bf16.mxu0 %v1143
        %1210 = vmatpush1.bf16.msra.mxu0 %v1142
        %1211 = vmatprep.subr.bf16.mxu0 %v1145
        %1212 = vmatpush1.bf16.msra.mxu0 %v1144
        %1213 = vmatprep.subr.bf16.mxu0 %v1147
        %1214 = vmatpush1.bf16.msra.mxu0 %v1146
        %1215 = vmatprep.subr.bf16.mxu0 %v1149
        %1216 = vmatpush1.bf16.msra.mxu0 %v1148
        %1217 = vmatprep.subr.bf16.mxu0 %v1151
        %1218 = vmatpush1.bf16.msra.mxu0 %v1150
        %1219 = vmatprep.subr.bf16.mxu0 %v1153
        %1220 = vmatpush1.bf16.msra.mxu0 %v1152
        %1221 = vmatprep.subr.bf16.mxu0 %v1155
        %1222 = vmatpush1.bf16.msra.mxu0 %v1154
        %1223 = vmatprep.subr.bf16.mxu0 %v1157
        %1224 = vmatpush1.bf16.msra.mxu0 %v1156
        %1225 = vmatprep.subr.bf16.mxu0 %v1159
        %1226 = vmatpush1.bf16.msra.mxu0 %v1158
        %1227 = vmatprep.subr.bf16.mxu0 %v1161
        %1228 = vmatpush1.bf16.msra.mxu0 %v1160
        %1229 = vmatprep.subr.bf16.mxu0 0
        %1230 = vmatpush1.bf16.msra.mxu0 0
        %1231 = vmatprep.mubr.bf16.mxu0 %v1194
        %1232 = vmatmul.mubr.bf16.gmra.mrb[0].mxu0 %v1021
        %v1233 = vpop.f32.mrb[0].mxu0
        %v1234 = vadd.f32 0.0, %v1233
        %v1235 = vpop.f32.mrb[0].mxu0
        %v1236 = vadd.f32 0.0, %v1235
        %v1237 = vpop.f32.mrb[0].mxu0
        %v1238 = vadd.f32 0.0, %v1237
        %v1239 = vpop.f32.mrb[0].mxu0
        %v1240 = vadd.f32 0.0, %v1239
        %1241 = vmatprep.mubr.bf16.mxu0 %v1197
        %1242 = vmatmul.mubr.bf16.gmra.mrb[0].mxu0 %v1036
        %v1243 = vpop.f32.mrb[0].mxu0
        %v1244 = vadd.f32 0.0, %v1243
        %v1245 = vpop.f32.mrb[0].mxu0
        %v1246 = vadd.f32 0.0, %v1245
        %v1247 = vpop.f32.mrb[0].mxu0
        %v1248 = vadd.f32 0.0, %v1247
        %v1249 = vpop.f32.mrb[0].mxu0
        %v1250 = vadd.f32 0.0, %v1249
        %1251 = vdwg.mxu0
        %v1282 = vunpack.c.l.b16 %v949
        %v1283 = vunpack.c.h.b16 %v949
        %v1284 = vunpack.c.l.b16 %v950
        %v1285 = vunpack.c.h.b16 %v950
        %v1286 = vunpack.c.l.b16 %v951
        %v1287 = vunpack.c.h.b16 %v951
        %v1288 = vunpack.c.l.b16 %v952
        %v1289 = vunpack.c.h.b16 %v952
        %v1290 = vunpack.c.l.b16 %v953
        %v1291 = vunpack.c.h.b16 %v953
        %v1292 = vunpack.c.l.b16 %v954
        %v1293 = vunpack.c.h.b16 %v954
        %v1294 = vunpack.c.l.b16 %v955
        %v1295 = vunpack.c.h.b16 %v955
        %v1296 = vunpack.c.l.b16 %v956
        %v1297 = vunpack.c.h.b16 %v956
        %v1298 = vunpack.c.l.b16 %v957
        %v1299 = vunpack.c.h.b16 %v957
        %v1300 = vunpack.c.l.b16 %v958
        %v1301 = vunpack.c.h.b16 %v958
        %v1302 = vunpack.c.l.b16 %v959
        %v1303 = vunpack.c.h.b16 %v959
        %v1304 = vunpack.c.l.b16 %v960
        %v1305 = vunpack.c.h.b16 %v960
        %v1306 = vunpack.c.l.b16 %v961
        %v1307 = vunpack.c.h.b16 %v961
        %v1308 = vunpack.c.l.b16 %v962
        %v1309 = vunpack.c.h.b16 %v962
        %v1310 = vunpack.c.l.b16 %v963
        %v1311 = vunpack.c.h.b16 %v963
        %v1312 = vunpack.c.l.b16 %v964
        %v1313 = vunpack.c.h.b16 %v964
        %v1314 = vunpack.c.l.b16 %v965
        %v1315 = vunpack.c.h.b16 %v965
        %v1316 = vunpack.c.l.b16 %v966
        %v1317 = vunpack.c.h.b16 %v966
        %v1318 = vunpack.c.l.b16 %v967
        %v1319 = vunpack.c.h.b16 %v967
        %v1320 = vunpack.c.l.b16 %v968
        %v1321 = vunpack.c.h.b16 %v968
        %v1322 = vunpack.c.l.b16 %v969
        %v1323 = vunpack.c.h.b16 %v969
        %v1324 = vunpack.c.l.b16 %v970
        %v1325 = vunpack.c.h.b16 %v970
        %v1326 = vunpack.c.l.b16 %v971
        %v1327 = vunpack.c.h.b16 %v971
        %v1328 = vunpack.c.l.b16 %v972
        %v1329 = vunpack.c.h.b16 %v972
        %v1330 = vunpack.c.l.b16 %v973
        %v1331 = vunpack.c.h.b16 %v973
        %v1332 = vunpack.c.l.b16 %v974
        %v1333 = vunpack.c.h.b16 %v974
        %v1334 = vunpack.c.l.b16 %v975
        %v1335 = vunpack.c.h.b16 %v975
        %v1336 = vunpack.c.l.b16 %v976
        %v1337 = vunpack.c.h.b16 %v976
        %v1338 = vunpack.c.l.b16 %v977
        %v1339 = vunpack.c.h.b16 %v977
        %v1340 = vunpack.c.l.b16 %v978
        %v1341 = vunpack.c.h.b16 %v978
        %v1342 = vpack.c.b16 %v1284, %v1282
        %v1343 = vpack.c.b16 %v1285, %v1283
        %v1344 = vpack.c.b16 %v1288, %v1286
        %v1345 = vpack.c.b16 %v1289, %v1287
        %v1346 = vpack.c.b16 %v1292, %v1290
        %v1347 = vpack.c.b16 %v1293, %v1291
        %v1348 = vpack.c.b16 %v1296, %v1294
        %v1349 = vpack.c.b16 %v1297, %v1295
        %v1350 = vpack.c.b16 %v1300, %v1298
        %v1351 = vpack.c.b16 %v1301, %v1299
        %v1352 = vpack.c.b16 %v1304, %v1302
        %v1353 = vpack.c.b16 %v1305, %v1303
        %v1354 = vpack.c.b16 %v1308, %v1306
        %v1355 = vpack.c.b16 %v1309, %v1307
        %v1356 = vpack.c.b16 %v1312, %v1310
        %v1357 = vpack.c.b16 %v1313, %v1311
        %v1358 = vpack.c.b16 %v1316, %v1314
        %v1359 = vpack.c.b16 %v1317, %v1315
        %v1360 = vpack.c.b16 %v1320, %v1318
        %v1361 = vpack.c.b16 %v1321, %v1319
        %v1362 = vpack.c.b16 %v1324, %v1322
        %v1363 = vpack.c.b16 %v1325, %v1323
        %v1364 = vpack.c.b16 %v1328, %v1326
        %v1365 = vpack.c.b16 %v1329, %v1327
        %v1366 = vpack.c.b16 %v1332, %v1330
        %v1367 = vpack.c.b16 %v1333, %v1331
        %v1368 = vpack.c.b16 %v1336, %v1334
        %v1369 = vpack.c.b16 %v1337, %v1335
        %v1370 = vpack.c.b16 %v1340, %v1338
        %v1371 = vpack.c.b16 %v1341, %v1339
        %v1402 = vsel %vm1192, %v946, 0
        %v1404 = vsel %vm1192, %v948, 0
        %1406 = vmatprep.subr.bf16.mxu0 %v1343
        %1407 = vmatpush1.bf16.msra.mxu0 %v1342
        %1408 = vmatprep.subr.bf16.mxu0 %v1345
        %1409 = vmatpush1.bf16.msra.mxu0 %v1344
        %1410 = vmatprep.subr.bf16.mxu0 %v1347
        %1411 = vmatpush1.bf16.msra.mxu0 %v1346
        %1412 = vmatprep.subr.bf16.mxu0 %v1349
        %1413 = vmatpush1.bf16.msra.mxu0 %v1348
        %1414 = vmatprep.subr.bf16.mxu0 %v1351
        %1415 = vmatpush1.bf16.msra.mxu0 %v1350
        %1416 = vmatprep.subr.bf16.mxu0 %v1353
        %1417 = vmatpush1.bf16.msra.mxu0 %v1352
        %1418 = vmatprep.subr.bf16.mxu0 %v1355
        %1419 = vmatpush1.bf16.msra.mxu0 %v1354
        %1420 = vmatprep.subr.bf16.mxu0 %v1357
        %1421 = vmatpush1.bf16.msra.mxu0 %v1356
        %1422 = vmatprep.subr.bf16.mxu0 %v1359
        %1423 = vmatpush1.bf16.msra.mxu0 %v1358
        %1424 = vmatprep.subr.bf16.mxu0 %v1361
        %1425 = vmatpush1.bf16.msra.mxu0 %v1360
        %1426 = vmatprep.subr.bf16.mxu0 %v1363
        %1427 = vmatpush1.bf16.msra.mxu0 %v1362
        %1428 = vmatprep.subr.bf16.mxu0 %v1365
        %1429 = vmatpush1.bf16.msra.mxu0 %v1364
        %1430 = vmatprep.subr.bf16.mxu0 %v1367
        %1431 = vmatpush1.bf16.msra.mxu0 %v1366
        %1432 = vmatprep.subr.bf16.mxu0 %v1369
        %1433 = vmatpush1.bf16.msra.mxu0 %v1368
        %1434 = vmatprep.subr.bf16.mxu0 %v1371
        %1435 = vmatpush1.bf16.msra.mxu0 %v1370
        %1436 = vmatprep.subr.bf16.mxu0 0
        %1437 = vmatpush1.bf16.msra.mxu0 0
        %1438 = vmatprep.mubr.bf16.mxu0 %v1402
        %1439 = vmatmul.mubr.bf16.gmra.mrb[0].mxu0 %v945
        %v1440 = vpop.f32.mrb[0].mxu0
        %v1441 = vadd.f32 %v1234, %v1440
        %v1442 = vpop.f32.mrb[0].mxu0
        %v1443 = vadd.f32 %v1236, %v1442
        %v1444 = vpop.f32.mrb[0].mxu0
        %v1445 = vadd.f32 %v1238, %v1444
        %v1446 = vpop.f32.mrb[0].mxu0
        %v1447 = vadd.f32 %v1240, %v1446
        %1448 = vmatprep.mubr.bf16.mxu0 %v1404
        %1449 = vmatmul.mubr.bf16.gmra.mrb[0].mxu0 %v947
        %v1450 = vpop.f32.mrb[0].mxu0
        %v1451 = vadd.f32 %v1244, %v1450
        %v1452 = vpop.f32.mrb[0].mxu0
        %v1453 = vadd.f32 %v1246, %v1452
        %v1454 = vpop.f32.mrb[0].mxu0
        %v1455 = vadd.f32 %v1248, %v1454
        %v1456 = vpop.f32.mrb[0].mxu0
        %v1457 = vadd.f32 %v1250, %v1456
        %1458 = vdwg.mxu0
        %s1459 = scalar_lea.vmem %s3, 480
        %v1460 = vld [vmem:[%s1459] sm:$0xff]
        %v1461 = vld [vmem:[%s1459 + $0x8] sm:$0xff]
        %v1462 = vld [vmem:[%s1459 + $0x10] sm:$0xff]
        %v1463 = vld [vmem:[%s1459 + $0x18] sm:$0xff]
        %v1464 = vld [vmem:[%s1459 + $0x20] sm:$0xff]
        %v1465 = vld [vmem:[%s1459 + $0x28] sm:$0xff]
        %v1466 = vld [vmem:[%s1459 + $0x30] sm:$0xff]
        %v1467 = vld [vmem:[%s1459 + $0x38] sm:$0xff]
        %v1468 = vld [vmem:[%s1459 + $0x40] sm:$0xff]
        %v1469 = vld [vmem:[%s1459 + $0x48] sm:$0xff]
        %v1470 = vld [vmem:[%s1459 + $0x50] sm:$0xff]
        %v1471 = vld [vmem:[%s1459 + $0x58] sm:$0xff]
        %v1472 = vld [vmem:[%s1459 + $0x60] sm:$0xff]
        %v1473 = vld [vmem:[%s1459 + $0x68] sm:$0xff]
        %v1474 = vld [vmem:[%s1459 + $0x70] sm:$0xff]
        %v1475 = vld [vmem:[%s1459 + $0x78] sm:$0xff]
        %v1476 = vld [vmem:[%s1459 + $0x80] sm:$0xff]
        %v1477 = vld [vmem:[%s1459 + $0x88] sm:$0xff]
        %v1478 = vld [vmem:[%s1459 + $0x90] sm:$0xff]
        %v1479 = vld [vmem:[%s1459 + $0x98] sm:$0xff]
        %v1480 = vld [vmem:[%s1459 + $0xa0] sm:$0xff]
        %v1481 = vld [vmem:[%s1459 + $0xa8] sm:$0xff]
        %v1482 = vld [vmem:[%s1459 + $0xb0] sm:$0xff]
        %v1483 = vld [vmem:[%s1459 + $0xb8] sm:$0xff]
        %v1484 = vld [vmem:[%s1459 + $0xc0] sm:$0xff]
        %v1485 = vld [vmem:[%s1459 + $0xc8] sm:$0xff]
        %v1486 = vld [vmem:[%s1459 + $0xd0] sm:$0xff]
        %v1487 = vld [vmem:[%s1459 + $0xd8] sm:$0xff]
        %v1488 = vld [vmem:[%s1459 + $0xe0] sm:$0xff]
        %v1489 = vld [vmem:[%s1459 + $0xe8] sm:$0xff]
        %v1494 = vrot.slane %v945, 1
        %v1495 = vrot.slane %v947, 1
        %v1496 = vsel %vm742, %v1494, %v1495
        %v1497 = vrot.slane %v946, 1
        %v1498 = vrot.slane %v948, 1
        %v1499 = vsel %vm742, %v1497, %v1498
        %v1532 = vunpack.c.l.b16 %v1460
        %v1533 = vunpack.c.h.b16 %v1460
        %v1534 = vunpack.c.l.b16 %v1461
        %v1535 = vunpack.c.h.b16 %v1461
        %v1536 = vunpack.c.l.b16 %v1462
        %v1537 = vunpack.c.h.b16 %v1462
        %v1538 = vunpack.c.l.b16 %v1463
        %v1539 = vunpack.c.h.b16 %v1463
        %v1540 = vunpack.c.l.b16 %v1464
        %v1541 = vunpack.c.h.b16 %v1464
        %v1542 = vunpack.c.l.b16 %v1465
        %v1543 = vunpack.c.h.b16 %v1465
        %v1544 = vunpack.c.l.b16 %v1466
        %v1545 = vunpack.c.h.b16 %v1466
        %v1546 = vunpack.c.l.b16 %v1467
        %v1547 = vunpack.c.h.b16 %v1467
        %v1548 = vunpack.c.l.b16 %v1468
        %v1549 = vunpack.c.h.b16 %v1468
        %v1550 = vunpack.c.l.b16 %v1469
        %v1551 = vunpack.c.h.b16 %v1469
        %v1552 = vunpack.c.l.b16 %v1470
        %v1553 = vunpack.c.h.b16 %v1470
        %v1554 = vunpack.c.l.b16 %v1471
        %v1555 = vunpack.c.h.b16 %v1471
        %v1556 = vunpack.c.l.b16 %v1472
        %v1557 = vunpack.c.h.b16 %v1472
        %v1558 = vunpack.c.l.b16 %v1473
        %v1559 = vunpack.c.h.b16 %v1473
        %v1560 = vunpack.c.l.b16 %v1474
        %v1561 = vunpack.c.h.b16 %v1474
        %v1562 = vunpack.c.l.b16 %v1475
        %v1563 = vunpack.c.h.b16 %v1475
        %v1564 = vunpack.c.l.b16 %v1476
        %v1565 = vunpack.c.h.b16 %v1476
        %v1566 = vunpack.c.l.b16 %v1477
        %v1567 = vunpack.c.h.b16 %v1477
        %v1568 = vunpack.c.l.b16 %v1478
        %v1569 = vunpack.c.h.b16 %v1478
        %v1570 = vunpack.c.l.b16 %v1479
        %v1571 = vunpack.c.h.b16 %v1479
        %v1572 = vunpack.c.l.b16 %v1480
        %v1573 = vunpack.c.h.b16 %v1480
        %v1574 = vunpack.c.l.b16 %v1481
        %v1575 = vunpack.c.h.b16 %v1481
        %v1576 = vunpack.c.l.b16 %v1482
        %v1577 = vunpack.c.h.b16 %v1482
        %v1578 = vunpack.c.l.b16 %v1483
        %v1579 = vunpack.c.h.b16 %v1483
        %v1580 = vunpack.c.l.b16 %v1484
        %v1581 = vunpack.c.h.b16 %v1484
        %v1582 = vunpack.c.l.b16 %v1485
        %v1583 = vunpack.c.h.b16 %v1485
        %v1584 = vunpack.c.l.b16 %v1486
        %v1585 = vunpack.c.h.b16 %v1486
        %v1586 = vunpack.c.l.b16 %v1487
        %v1587 = vunpack.c.h.b16 %v1487
        %v1588 = vunpack.c.l.b16 %v1488
        %v1589 = vunpack.c.h.b16 %v1488
        %v1590 = vunpack.c.l.b16 %v1489
        %v1591 = vunpack.c.h.b16 %v1489
        %v1592 = vpack.c.b16 %v1534, %v1532
        %v1593 = vpack.c.b16 %v1535, %v1533
        %v1594 = vpack.c.b16 %v1538, %v1536
        %v1595 = vpack.c.b16 %v1539, %v1537
        %v1596 = vpack.c.b16 %v1542, %v1540
        %v1597 = vpack.c.b16 %v1543, %v1541
        %v1598 = vpack.c.b16 %v1546, %v1544
        %v1599 = vpack.c.b16 %v1547, %v1545
        %v1600 = vpack.c.b16 %v1550, %v1548
        %v1601 = vpack.c.b16 %v1551, %v1549
        %v1602 = vpack.c.b16 %v1554, %v1552
        %v1603 = vpack.c.b16 %v1555, %v1553
        %v1604 = vpack.c.b16 %v1558, %v1556
        %v1605 = vpack.c.b16 %v1559, %v1557
        %v1606 = vpack.c.b16 %v1562, %v1560
        %v1607 = vpack.c.b16 %v1563, %v1561
        %v1608 = vpack.c.b16 %v1566, %v1564
        %v1609 = vpack.c.b16 %v1567, %v1565
        %v1610 = vpack.c.b16 %v1570, %v1568
        %v1611 = vpack.c.b16 %v1571, %v1569
        %v1612 = vpack.c.b16 %v1574, %v1572
        %v1613 = vpack.c.b16 %v1575, %v1573
        %v1614 = vpack.c.b16 %v1578, %v1576
        %v1615 = vpack.c.b16 %v1579, %v1577
        %v1616 = vpack.c.b16 %v1582, %v1580
        %v1617 = vpack.c.b16 %v1583, %v1581
        %v1618 = vpack.c.b16 %v1586, %v1584
        %v1619 = vpack.c.b16 %v1587, %v1585
        %v1620 = vpack.c.b16 %v1590, %v1588
        %v1621 = vpack.c.b16 %v1591, %v1589
        %v1653 = vsel %vm1192, %v1499, 0
        %v1656 = vsel %vm1192, %v1498, 0
        %1658 = vmatprep.subr.bf16.mxu0 %v1593
        %1659 = vmatpush1.bf16.msra.mxu0 %v1592
        %1660 = vmatprep.subr.bf16.mxu0 %v1595
        %1661 = vmatpush1.bf16.msra.mxu0 %v1594
        %1662 = vmatprep.subr.bf16.mxu0 %v1597
        %1663 = vmatpush1.bf16.msra.mxu0 %v1596
        %1664 = vmatprep.subr.bf16.mxu0 %v1599
        %1665 = vmatpush1.bf16.msra.mxu0 %v1598
        %1666 = vmatprep.subr.bf16.mxu0 %v1601
        %1667 = vmatpush1.bf16.msra.mxu0 %v1600
        %1668 = vmatprep.subr.bf16.mxu0 %v1603
        %1669 = vmatpush1.bf16.msra.mxu0 %v1602
        %1670 = vmatprep.subr.bf16.mxu0 %v1605
        %1671 = vmatpush1.bf16.msra.mxu0 %v1604
        %1672 = vmatprep.subr.bf16.mxu0 %v1607
        %1673 = vmatpush1.bf16.msra.mxu0 %v1606
        %1674 = vmatprep.subr.bf16.mxu0 %v1609
        %1675 = vmatpush1.bf16.msra.mxu0 %v1608
        %1676 = vmatprep.subr.bf16.mxu0 %v1611
        %1677 = vmatpush1.bf16.msra.mxu0 %v1610
        %1678 = vmatprep.subr.bf16.mxu0 %v1613
        %1679 = vmatpush1.bf16.msra.mxu0 %v1612
        %1680 = vmatprep.subr.bf16.mxu0 %v1615
        %1681 = vmatpush1.bf16.msra.mxu0 %v1614
        %1682 = vmatprep.subr.bf16.mxu0 %v1617
        %1683 = vmatpush1.bf16.msra.mxu0 %v1616
        %1684 = vmatprep.subr.bf16.mxu0 %v1619
        %1685 = vmatpush1.bf16.msra.mxu0 %v1618
        %1686 = vmatprep.subr.bf16.mxu0 %v1621
        %1687 = vmatpush1.bf16.msra.mxu0 %v1620
        %1688 = vmatprep.subr.bf16.mxu0 0
        %1689 = vmatpush1.bf16.msra.mxu0 0
        %1690 = vmatprep.mubr.bf16.mxu0 %v1653
        %1691 = vmatmul.mubr.bf16.gmra.mrb[0].mxu0 %v1496
        %v1692 = vpop.f32.mrb[0].mxu0
        %v1693 = vadd.f32 0.0, %v1692
        %v1694 = vpop.f32.mrb[0].mxu0
        %v1695 = vadd.f32 0.0, %v1694
        %v1696 = vpop.f32.mrb[0].mxu0
        %v1697 = vadd.f32 0.0, %v1696
        %v1698 = vpop.f32.mrb[0].mxu0
        %v1699 = vadd.f32 0.0, %v1698
        %1700 = vmatprep.mubr.bf16.mxu0 %v1656
        %1701 = vmatmul.mubr.bf16.gmra.mrb[0].mxu0 %v1495
        %v1702 = vpop.f32.mrb[0].mxu0
        %v1703 = vadd.f32 0.0, %v1702
        %v1704 = vpop.f32.mrb[0].mxu0
        %v1705 = vadd.f32 0.0, %v1704
        %v1706 = vpop.f32.mrb[0].mxu0
        %v1707 = vadd.f32 0.0, %v1706
        %v1708 = vpop.f32.mrb[0].mxu0
        %v1709 = vadd.f32 0.0, %v1708
        %1710 = vdwg.mxu0
        %v1711 = vadd.f32 %v1441, %v1693
        %v1712 = vadd.f32 %v1443, %v1695
        %v1713 = vadd.f32 %v1445, %v1697
        %v1714 = vadd.f32 %v1447, %v1699
        %v1715 = vadd.f32 %v1451, %v1703
        %v1716 = vadd.f32 %v1453, %v1705
        %v1717 = vadd.f32 %v1455, %v1707
        %v1718 = vadd.f32 %v1457, %v1709
        %v1719 = vld [vmem:[%s4] sm:$0x3]
        %v1721 = vlaneseq
        %v1722 = vshrl.u32 %v1721, 7
        %v1723 = vsub.s32 0, %v1722
        %v1724 = vrot.slane %v1719, %v1723
        %v1725 = vlaneseq
        %v1726 = vshrl.u32 %v1725, 7
        %v1727 = vsub.s32 1, %v1726
        %v1728 = vrot.slane %v1719, %v1727
        %v1731 = vadd.f32 %v1711, %v1724
        %v1732 = vadd.f32 %v1712, %v1728
        %v1733 = vadd.f32 %v1713, %v1724
        %v1734 = vadd.f32 %v1714, %v1728
        %v1735 = vadd.f32 %v1715, %v1724
        %v1736 = vadd.f32 %v1716, %v1728
        %v1737 = vadd.f32 %v1717, %v1724
        %v1738 = vadd.f32 %v1718, %v1728
        %v1739 = vmax.f32 %v1731, 0.0
        %v1740 = vmax.f32 %v1732, 0.0
        %v1741 = vmax.f32 %v1733, 0.0
        %v1742 = vmax.f32 %v1734, 0.0
        %v1743 = vmax.f32 %v1735, 0.0
        %v1744 = vmax.f32 %v1736, 0.0
        %v1745 = vmax.f32 %v1737, 0.0
        %v1746 = vmax.f32 %v1738, 0.0
        %v1755 = vrot.slane %v1739, 1
        %v1756 = vrot.slane %v1741, 1
        %v1757 = vsel %vm594, %v1755, %v1756
        %v1758 = vrot.slane %v1740, 1
        %v1759 = vrot.slane %v1742, 1
        %v1760 = vsel %vm594, %v1758, %v1759
        %v1761 = vrot.slane %v1743, 1
        %v1762 = vsel %vm594, %v1756, %v1761
        %v1763 = vrot.slane %v1744, 1
        %v1764 = vsel %vm594, %v1759, %v1763
        %v1765 = vrot.slane %v1745, 1
        %v1766 = vsel %vm594, %v1761, %v1765
        %v1767 = vrot.slane %v1746, 1
        %v1768 = vsel %vm594, %v1763, %v1767
        %v1777 = vmax.f32 %v1739, %v1757
        %v1778 = vmax.f32 %v1740, %v1760
        %v1779 = vmax.f32 %v1741, %v1762
        %v1780 = vmax.f32 %v1742, %v1764
        %v1781 = vmax.f32 %v1743, %v1766
        %v1782 = vmax.f32 %v1744, %v1768
        %v1783 = vmax.f32 %v1745, %v1765
        %v1784 = vmax.f32 %v1746, %v1767
        %1793 = vrot.lane.b32.xlu0 %v1777, 120
        %v1794 = vpop.permute.xlu0 %1793
        %1795 = vrot.lane.b32.xlu0 %v1778, 120
        %v1796 = vpop.permute.xlu0 %1795
        %1797 = vrot.lane.b32.xlu0 %v1779, 120
        %v1798 = vpop.permute.xlu0 %1797
        %1799 = vrot.lane.b32.xlu0 %v1780, 120
        %v1800 = vpop.permute.xlu0 %1799
        %1801 = vrot.lane.b32.xlu0 %v1781, 120
        %v1802 = vpop.permute.xlu0 %1801
        %1803 = vrot.lane.b32.xlu0 %v1782, 120
        %v1804 = vpop.permute.xlu0 %1803
        %1805 = vrot.lane.b32.xlu0 %v1783, 120
        %v1806 = vpop.permute.xlu0 %1805
        %1807 = vrot.lane.b32.xlu0 %v1784, 120
        %v1808 = vpop.permute.xlu0 %1807
        %vm1809 = vcmask 982016
        %v1810 = vsel %vm1809, %v1794, %v1796
        %v1811 = vsel %vm1809, %v1798, %v1800
        %v1812 = vsel %vm1809, %v1802, %v1804
        %v1813 = vsel %vm1809, %v1806, %v1808
        %v1822 = vmax.f32 %v1777, %v1810
        %v1823 = vmax.f32 %v1778, %v1796
        %v1824 = vmax.f32 %v1779, %v1811
        %v1825 = vmax.f32 %v1780, %v1800
        %v1826 = vmax.f32 %v1781, %v1812
        %v1827 = vmax.f32 %v1782, %v1804
        %v1828 = vmax.f32 %v1783, %v1813
        %v1829 = vmax.f32 %v1784, %v1808
        %v1832 = vrot.slane %v1822, 1
        %v1833 = vrot.slane %v1823, 1
        %v1836 = vrot.slane %v1822, 2
        %v1837 = vrot.slane %v1823, 2
        %v1840 = vrot.slane %v1822, 3
        %v1841 = vrot.slane %v1823, 3
        %v1846 = vrot.slane %v1824, 4
        %v1847 = vrot.slane %v1825, 4
        %v1850 = vrot.slane %v1824, 5
        %v1851 = vrot.slane %v1825, 5
        %v1854 = vrot.slane %v1824, 6
        %v1855 = vrot.slane %v1825, 6
        %v1858 = vrot.slane %v1824, 7
        %v1859 = vrot.slane %v1825, 7
        %v1864 = vrot.slane %v1826, 1
        %v1865 = vrot.slane %v1827, 1
        %v1868 = vrot.slane %v1826, 2
        %v1869 = vrot.slane %v1827, 2
        %v1872 = vrot.slane %v1826, 3
        %v1873 = vrot.slane %v1827, 3
        %v1878 = vrot.slane %v1828, 4
        %v1879 = vrot.slane %v1829, 4
        %v1882 = vrot.slane %v1828, 5
        %v1883 = vrot.slane %v1829, 5
        %v1886 = vsel %vm527, %v1822, %v1832
        %v1887 = vsel %vm527, %v1823, %v1833
        %vm1888 = vcmask 1041408
        %v1889 = vsel %vm1888, %v1886, %v1836
        %v1890 = vsel %vm1888, %v1887, %v1837
        %vm1891 = vcmask 1042432
        %v1892 = vsel %vm1891, %v1889, %v1840
        %v1893 = vsel %vm1891, %v1890, %v1841
        %vm1894 = vcmask 1043456
        %v1895 = vsel %vm1894, %v1892, %v1846
        %v1896 = vsel %vm1894, %v1893, %v1847
        %v1897 = vsel %vm540, %v1895, %v1850
        %v1898 = vsel %vm540, %v1896, %v1851
        %vm1899 = vcmask 1045504
        %v1900 = vsel %vm1899, %v1897, %v1854
        %v1901 = vsel %vm1899, %v1898, %v1855
        %v1902 = vsel %vm594, %v1900, %v1858
        %v1903 = vsel %vm594, %v1901, %v1859
        %v1904 = vsel %vm527, %v1826, %v1864
        %v1905 = vsel %vm527, %v1827, %v1865
        %v1906 = vsel %vm1888, %v1904, %v1868
        %v1907 = vsel %vm1888, %v1905, %v1869
        %v1908 = vsel %vm1891, %v1906, %v1872
        %v1909 = vsel %vm1891, %v1907, %v1873
        %v1910 = vsel %vm1894, %v1908, %v1878
        %v1911 = vsel %vm1894, %v1909, %v1879
        %v1912 = vsel %vm540, %v1910, %v1882
        %v1913 = vsel %vm540, %v1911, %v1883
        %1916 = vrot.lane.b32.xlu0 %v1902, 120
        %v1917 = vpop.permute.xlu0 %1916
        %1918 = vrot.lane.b32.xlu0 %v1912, 120
        %v1919 = vpop.permute.xlu0 %1918
        %1922 = vrot.lane.b32.xlu0 %v1902, 112
        %v1923 = vpop.permute.xlu0 %1922
        %1924 = vrot.lane.b32.xlu0 %v1912, 112
        %v1925 = vpop.permute.xlu0 %1924
        %1928 = vrot.lane.b32.xlu0 %v1902, 104
        %v1929 = vpop.permute.xlu0 %1928
        %1930 = vrot.lane.b32.xlu0 %v1912, 104
        %v1931 = vpop.permute.xlu0 %1930
        %1934 = vrot.lane.b32.xlu0 %v1902, 96
        %v1935 = vpop.permute.xlu0 %1934
        %1936 = vrot.lane.b32.xlu0 %v1912, 96
        %v1937 = vpop.permute.xlu0 %1936
        %1940 = vrot.lane.b32.xlu0 %v1902, 88
        %v1941 = vpop.permute.xlu0 %1940
        %1942 = vrot.lane.b32.xlu0 %v1912, 88
        %v1943 = vpop.permute.xlu0 %1942
        %1946 = vrot.lane.b32.xlu0 %v1902, 80
        %v1947 = vpop.permute.xlu0 %1946
        %1948 = vrot.lane.b32.xlu0 %v1912, 80
        %v1949 = vpop.permute.xlu0 %1948
        %1952 = vrot.lane.b32.xlu0 %v1902, 72
        %v1953 = vpop.permute.xlu0 %1952
        %1954 = vrot.lane.b32.xlu0 %v1912, 72
        %v1955 = vpop.permute.xlu0 %1954
        %1960 = vrot.lane.b32.xlu0 %v1903, 64
        %v1961 = vpop.permute.xlu0 %1960
        %1962 = vrot.lane.b32.xlu0 %v1913, 64
        %v1963 = vpop.permute.xlu0 %1962
        %1966 = vrot.lane.b32.xlu0 %v1903, 56
        %v1967 = vpop.permute.xlu0 %1966
        %1968 = vrot.lane.b32.xlu0 %v1913, 56
        %v1969 = vpop.permute.xlu0 %1968
        %1972 = vrot.lane.b32.xlu0 %v1903, 48
        %v1973 = vpop.permute.xlu0 %1972
        %1974 = vrot.lane.b32.xlu0 %v1913, 48
        %v1975 = vpop.permute.xlu0 %1974
        %1978 = vrot.lane.b32.xlu0 %v1903, 40
        %v1979 = vpop.permute.xlu0 %1978
        %1980 = vrot.lane.b32.xlu0 %v1913, 40
        %v1981 = vpop.permute.xlu0 %1980
        %1984 = vrot.lane.b32.xlu0 %v1903, 32
        %v1985 = vpop.permute.xlu0 %1984
        %1986 = vrot.lane.b32.xlu0 %v1913, 32
        %v1987 = vpop.permute.xlu0 %1986
        %1990 = vrot.lane.b32.xlu0 %v1903, 24
        %v1991 = vpop.permute.xlu0 %1990
        %1992 = vrot.lane.b32.xlu0 %v1913, 24
        %v1993 = vpop.permute.xlu0 %1992
        %v1996 = vsel %vm889, %v1902, %v1917
        %v1997 = vsel %vm889, %v1912, %v1919
        %vm1998 = vcmask 130048
        %v1999 = vsel %vm1998, %v1996, %v1923
        %v2000 = vsel %vm1998, %v1997, %v1925
        %vm2001 = vcmask 195584
        %v2002 = vsel %vm2001, %v1999, %v1929
        %v2003 = vsel %vm2001, %v2000, %v1931
        %vm2004 = vcmask 261120
        %v2005 = vsel %vm2004, %v2002, %v1935
        %v2006 = vsel %vm2004, %v2003, %v1937
        %vm2007 = vcmask 326656
        %v2008 = vsel %vm2007, %v2005, %v1941
        %v2009 = vsel %vm2007, %v2006, %v1943
        %vm2010 = vcmask 392192
        %v2011 = vsel %vm2010, %v2008, %v1947
        %v2012 = vsel %vm2010, %v2009, %v1949
        %vm2013 = vcmask 457728
        %v2014 = vsel %vm2013, %v2011, %v1953
        %v2015 = vsel %vm2013, %v2012, %v1955
        %vm2016 = vcmask 523264
        %v2017 = vsel %vm2016, %v2014, %v1961
        %v2018 = vsel %vm2016, %v2015, %v1963
        %vm2019 = vcmask 588800
        %v2020 = vsel %vm2019, %v2017, %v1967
        %v2021 = vsel %vm2019, %v2018, %v1969
        %vm2022 = vcmask 654336
        %v2023 = vsel %vm2022, %v2020, %v1973
        %v2024 = vsel %vm2022, %v2021, %v1975
        %vm2025 = vcmask 719872
        %v2026 = vsel %vm2025, %v2023, %v1979
        %v2027 = vsel %vm2025, %v2024, %v1981
        %vm2028 = vcmask 785408
        %v2029 = vsel %vm2028, %v2026, %v1985
        %v2030 = vsel %vm2028, %v2027, %v1987
        %v2031 = vsel %vm906, %v2029, %v1991
        %v2032 = vsel %vm906, %v2030, %v1993
        %2035 = vrot.lane.b32.xlu0 %v2031, 8
        %v2036 = vpop.permute.xlu0 %2035
        %2037 = vrot.lane.b32.xlu0 %v2032, 8
        %v2038 = vpop.permute.xlu0 %2037
        %v2041 = vsel %vm889, 0.0, %v2036
        %v2042 = vsel %vm889, 0.0, %v2038
        %v2043 = vsel %vm1809, %v2041, 0.0
        %v2044 = vsel %vm1809, %v2042, 0.0
        %v2047 = vrot.slane %v2043, 7
        %v2048 = vrot.slane %v2044, 7
        %v2049 = vsel %vm527, %v2047, %v2048
        %v2052 = vsel %vm527, 0.0, %v2047
        %v2053 = vsel %vm594, %v2049, 0.0
        %v2054 = vpack.c.bf16 %v2053, %v2052
        %v2055 = vld [vmem:[%s5] sm:$0xff]
        %v2056 = vld [vmem:[%s5 + $0x8] sm:$0xff]
        %v2057 = vld [vmem:[%s5 + $0x10] sm:$0xff]
        %v2058 = vld [vmem:[%s5 + $0x18] sm:$0xff]
        %v2059 = vld [vmem:[%s5 + $0x20] sm:$0xff]
        %v2060 = vld [vmem:[%s5 + $0x28] sm:$0xff]
        %v2061 = vld [vmem:[%s5 + $0x30] sm:$0xff]
        %v2062 = vld [vmem:[%s5 + $0x38] sm:$0xff]
        %v2063 = vld [vmem:[%s5 + $0x40] sm:$0xff]
        %v2064 = vld [vmem:[%s5 + $0x48] sm:$0xff]
        %v2065 = vld [vmem:[%s5 + $0x50] sm:$0xff]
        %v2066 = vld [vmem:[%s5 + $0x58] sm:$0xff]
        %v2067 = vld [vmem:[%s5 + $0x60] sm:$0xff]
        %v2068 = vld [vmem:[%s5 + $0x68] sm:$0xff]
        %v2069 = vld [vmem:[%s5 + $0x70] sm:$0xff]
        %v2070 = vld [vmem:[%s5 + $0x78] sm:$0xff]
        %s2071 = scalar_lea.vmem %s5, 128
        %v2072 = vld [vmem:[%s2071] sm:$0xff]
        %v2073 = vld [vmem:[%s2071 + $0x8] sm:$0xff]
        %v2074 = vld [vmem:[%s2071 + $0x10] sm:$0xff]
        %v2075 = vld [vmem:[%s2071 + $0x18] sm:$0xff]
        %v2076 = vld [vmem:[%s2071 + $0x20] sm:$0xff]
        %v2077 = vld [vmem:[%s2071 + $0x28] sm:$0xff]
        %v2078 = vld [vmem:[%s2071 + $0x30] sm:$0xff]
        %v2079 = vld [vmem:[%s2071 + $0x38] sm:$0xff]
        %v2080 = vld [vmem:[%s2071 + $0x40] sm:$0xff]
        %v2081 = vld [vmem:[%s2071 + $0x48] sm:$0xff]
        %v2082 = vld [vmem:[%s2071 + $0x50] sm:$0xff]
        %v2083 = vld [vmem:[%s2071 + $0x58] sm:$0xff]
        %v2084 = vld [vmem:[%s2071 + $0x60] sm:$0xff]
        %v2085 = vld [vmem:[%s2071 + $0x68] sm:$0xff]
        %v2086 = vld [vmem:[%s2071 + $0x70] sm:$0xff]
        %v2087 = vld [vmem:[%s2071 + $0x78] sm:$0xff]
        %v2089 = vshrl.u32 %v2054, 16
        %v2091 = vshll.u32 %v2054, 16
        %v2093 = vrot.slane %v2091, 1
        %v2094 = vor.u32 %v2089, %v2093
        %v2112 = vunpack.c.l.b16 %v2072
        %v2113 = vunpack.c.h.b16 %v2072
        %v2114 = vunpack.c.l.b16 %v2073
        %v2115 = vunpack.c.h.b16 %v2073
        %v2116 = vunpack.c.l.b16 %v2074
        %v2117 = vunpack.c.h.b16 %v2074
        %v2118 = vunpack.c.l.b16 %v2075
        %v2119 = vunpack.c.h.b16 %v2075
        %v2120 = vunpack.c.l.b16 %v2076
        %v2121 = vunpack.c.h.b16 %v2076
        %v2122 = vunpack.c.l.b16 %v2077
        %v2123 = vunpack.c.h.b16 %v2077
        %v2124 = vunpack.c.l.b16 %v2078
        %v2125 = vunpack.c.h.b16 %v2078
        %v2126 = vunpack.c.l.b16 %v2079
        %v2127 = vunpack.c.h.b16 %v2079
        %v2128 = vunpack.c.l.b16 %v2080
        %v2129 = vunpack.c.h.b16 %v2080
        %v2130 = vunpack.c.l.b16 %v2081
        %v2131 = vunpack.c.h.b16 %v2081
        %v2132 = vunpack.c.l.b16 %v2082
        %v2133 = vunpack.c.h.b16 %v2082
        %v2134 = vunpack.c.l.b16 %v2083
        %v2135 = vunpack.c.h.b16 %v2083
        %v2136 = vunpack.c.l.b16 %v2084
        %v2137 = vunpack.c.h.b16 %v2084
        %v2138 = vunpack.c.l.b16 %v2085
        %v2139 = vunpack.c.h.b16 %v2085
        %v2140 = vunpack.c.l.b16 %v2086
        %v2141 = vunpack.c.h.b16 %v2086
        %v2142 = vunpack.c.l.b16 %v2087
        %v2143 = vunpack.c.h.b16 %v2087
        %v2144 = vpack.c.b16 %v2114, %v2112
        %v2145 = vpack.c.b16 %v2115, %v2113
        %v2146 = vpack.c.b16 %v2118, %v2116
        %v2147 = vpack.c.b16 %v2119, %v2117
        %v2148 = vpack.c.b16 %v2122, %v2120
        %v2149 = vpack.c.b16 %v2123, %v2121
        %v2150 = vpack.c.b16 %v2126, %v2124
        %v2151 = vpack.c.b16 %v2127, %v2125
        %v2152 = vpack.c.b16 %v2130, %v2128
        %v2153 = vpack.c.b16 %v2131, %v2129
        %v2154 = vpack.c.b16 %v2134, %v2132
        %v2155 = vpack.c.b16 %v2135, %v2133
        %v2156 = vpack.c.b16 %v2138, %v2136
        %v2157 = vpack.c.b16 %v2139, %v2137
        %v2158 = vpack.c.b16 %v2142, %v2140
        %v2159 = vpack.c.b16 %v2143, %v2141
        %2176 = vmatprep.subr.bf16.mxu0 %v2145
        %2177 = vmatpush1.bf16.msra.mxu0 %v2144
        %2178 = vmatprep.subr.bf16.mxu0 %v2147
        %2179 = vmatpush1.bf16.msra.mxu0 %v2146
        %2180 = vmatprep.subr.bf16.mxu0 %v2149
        %2181 = vmatpush1.bf16.msra.mxu0 %v2148
        %2182 = vmatprep.subr.bf16.mxu0 %v2151
        %2183 = vmatpush1.bf16.msra.mxu0 %v2150
        %2184 = vmatprep.subr.bf16.mxu0 %v2153
        %2185 = vmatpush1.bf16.msra.mxu0 %v2152
        %2186 = vmatprep.subr.bf16.mxu0 %v2155
        %2187 = vmatpush1.bf16.msra.mxu0 %v2154
        %2188 = vmatprep.subr.bf16.mxu0 %v2157
        %2189 = vmatpush1.bf16.msra.mxu0 %v2156
        %2190 = vmatprep.subr.bf16.mxu0 %v2159
        %2191 = vmatpush1.bf16.msra.mxu0 %v2158
        %2192 = vmatprep.subr.bf16.mxu0 0
        %2193 = vmatpush1.bf16.msra.mxu0 0
        %2194 = vmatprep.subr.bf16.mxu0 0
        %2195 = vmatpush1.bf16.msra.mxu0 0
        %2196 = vmatprep.subr.bf16.mxu0 0
        %2197 = vmatpush1.bf16.msra.mxu0 0
        %2198 = vmatprep.subr.bf16.mxu0 0
        %2199 = vmatpush1.bf16.msra.mxu0 0
        %2200 = vmatprep.subr.bf16.mxu0 0
        %2201 = vmatpush1.bf16.msra.mxu0 0
        %2202 = vmatprep.subr.bf16.mxu0 0
        %2203 = vmatpush1.bf16.msra.mxu0 0
        %2204 = vmatprep.subr.bf16.mxu0 0
        %2205 = vmatpush1.bf16.msra.mxu0 0
        %2206 = vmatprep.subr.bf16.mxu0 0
        %2207 = vmatpush1.bf16.msra.mxu0 0
        %2208 = vmatprep.mubr.bf16.mxu0 0
        %2209 = vmatmul.mubr.bf16.gmra.mrb[0].mxu0 %v2094
        %v2210 = vpop.f32.mrb[0].mxu0
        %v2211 = vadd.f32 0.0, %v2210
        %v2212 = vpop.f32.mrb[0].mxu0
        %v2213 = vadd.f32 0.0, %v2212
        %v2214 = vpop.f32.mrb[0].mxu0
        %v2215 = vadd.f32 0.0, %v2214
        %v2216 = vpop.f32.mrb[0].mxu0
        %v2217 = vadd.f32 0.0, %v2216
        %2218 = vdwg.mxu0
        %v2235 = vunpack.c.l.b16 %v2055
        %v2236 = vunpack.c.h.b16 %v2055
        %v2237 = vunpack.c.l.b16 %v2056
        %v2238 = vunpack.c.h.b16 %v2056
        %v2239 = vunpack.c.l.b16 %v2057
        %v2240 = vunpack.c.h.b16 %v2057
        %v2241 = vunpack.c.l.b16 %v2058
        %v2242 = vunpack.c.h.b16 %v2058
        %v2243 = vunpack.c.l.b16 %v2059
        %v2244 = vunpack.c.h.b16 %v2059
        %v2245 = vunpack.c.l.b16 %v2060
        %v2246 = vunpack.c.h.b16 %v2060
        %v2247 = vunpack.c.l.b16 %v2061
        %v2248 = vunpack.c.h.b16 %v2061
        %v2249 = vunpack.c.l.b16 %v2062
        %v2250 = vunpack.c.h.b16 %v2062
        %v2251 = vunpack.c.l.b16 %v2063
        %v2252 = vunpack.c.h.b16 %v2063
        %v2253 = vunpack.c.l.b16 %v2064
        %v2254 = vunpack.c.h.b16 %v2064
        %v2255 = vunpack.c.l.b16 %v2065
        %v2256 = vunpack.c.h.b16 %v2065
        %v2257 = vunpack.c.l.b16 %v2066
        %v2258 = vunpack.c.h.b16 %v2066
        %v2259 = vunpack.c.l.b16 %v2067
        %v2260 = vunpack.c.h.b16 %v2067
        %v2261 = vunpack.c.l.b16 %v2068
        %v2262 = vunpack.c.h.b16 %v2068
        %v2263 = vunpack.c.l.b16 %v2069
        %v2264 = vunpack.c.h.b16 %v2069
        %v2265 = vunpack.c.l.b16 %v2070
        %v2266 = vunpack.c.h.b16 %v2070
        %v2267 = vpack.c.b16 %v2237, %v2235
        %v2268 = vpack.c.b16 %v2238, %v2236
        %v2269 = vpack.c.b16 %v2241, %v2239
        %v2270 = vpack.c.b16 %v2242, %v2240
        %v2271 = vpack.c.b16 %v2245, %v2243
        %v2272 = vpack.c.b16 %v2246, %v2244
        %v2273 = vpack.c.b16 %v2249, %v2247
        %v2274 = vpack.c.b16 %v2250, %v2248
        %v2275 = vpack.c.b16 %v2253, %v2251
        %v2276 = vpack.c.b16 %v2254, %v2252
        %v2277 = vpack.c.b16 %v2257, %v2255
        %v2278 = vpack.c.b16 %v2258, %v2256
        %v2279 = vpack.c.b16 %v2261, %v2259
        %v2280 = vpack.c.b16 %v2262, %v2260
        %v2281 = vpack.c.b16 %v2265, %v2263
        %v2282 = vpack.c.b16 %v2266, %v2264
        %2299 = vmatprep.subr.bf16.mxu0 %v2268
        %2300 = vmatpush1.bf16.msra.mxu0 %v2267
        %2301 = vmatprep.subr.bf16.mxu0 %v2270
        %2302 = vmatpush1.bf16.msra.mxu0 %v2269
        %2303 = vmatprep.subr.bf16.mxu0 %v2272
        %2304 = vmatpush1.bf16.msra.mxu0 %v2271
        %2305 = vmatprep.subr.bf16.mxu0 %v2274
        %2306 = vmatpush1.bf16.msra.mxu0 %v2273
        %2307 = vmatprep.subr.bf16.mxu0 %v2276
        %2308 = vmatpush1.bf16.msra.mxu0 %v2275
        %2309 = vmatprep.subr.bf16.mxu0 %v2278
        %2310 = vmatpush1.bf16.msra.mxu0 %v2277
        %2311 = vmatprep.subr.bf16.mxu0 %v2280
        %2312 = vmatpush1.bf16.msra.mxu0 %v2279
        %2313 = vmatprep.subr.bf16.mxu0 %v2282
        %2314 = vmatpush1.bf16.msra.mxu0 %v2281
        %2315 = vmatprep.subr.bf16.mxu0 0
        %2316 = vmatpush1.bf16.msra.mxu0 0
        %2317 = vmatprep.subr.bf16.mxu0 0
        %2318 = vmatpush1.bf16.msra.mxu0 0
        %2319 = vmatprep.subr.bf16.mxu0 0
        %2320 = vmatpush1.bf16.msra.mxu0 0
        %2321 = vmatprep.subr.bf16.mxu0 0
        %2322 = vmatpush1.bf16.msra.mxu0 0
        %2323 = vmatprep.subr.bf16.mxu0 0
        %2324 = vmatpush1.bf16.msra.mxu0 0
        %2325 = vmatprep.subr.bf16.mxu0 0
        %2326 = vmatpush1.bf16.msra.mxu0 0
        %2327 = vmatprep.subr.bf16.mxu0 0
        %2328 = vmatpush1.bf16.msra.mxu0 0
        %2329 = vmatprep.subr.bf16.mxu0 0
        %2330 = vmatpush1.bf16.msra.mxu0 0
        %2331 = vmatprep.mubr.bf16.mxu0 0
        %2332 = vmatmul.mubr.bf16.gmra.mrb[0].mxu0 %v2054
        %v2333 = vpop.f32.mrb[0].mxu0
        %v2334 = vadd.f32 %v2211, %v2333
        %v2335 = vpop.f32.mrb[0].mxu0
        %v2336 = vadd.f32 %v2213, %v2335
        %v2337 = vpop.f32.mrb[0].mxu0
        %v2338 = vadd.f32 %v2215, %v2337
        %v2339 = vpop.f32.mrb[0].mxu0
        %v2340 = vadd.f32 %v2217, %v2339
        %2341 = vdwg.mxu0
        %s2342 = scalar_lea.vmem %s5, 256
        %v2343 = vld [vmem:[%s2342] sm:$0xff]
        %v2344 = vld [vmem:[%s2342 + $0x8] sm:$0xff]
        %v2345 = vld [vmem:[%s2342 + $0x10] sm:$0xff]
        %v2346 = vld [vmem:[%s2342 + $0x18] sm:$0xff]
        %v2347 = vld [vmem:[%s2342 + $0x20] sm:$0xff]
        %v2348 = vld [vmem:[%s2342 + $0x28] sm:$0xff]
        %v2349 = vld [vmem:[%s2342 + $0x30] sm:$0xff]
        %v2350 = vld [vmem:[%s2342 + $0x38] sm:$0xff]
        %v2351 = vld [vmem:[%s2342 + $0x40] sm:$0xff]
        %v2352 = vld [vmem:[%s2342 + $0x48] sm:$0xff]
        %v2353 = vld [vmem:[%s2342 + $0x50] sm:$0xff]
        %v2354 = vld [vmem:[%s2342 + $0x58] sm:$0xff]
        %v2355 = vld [vmem:[%s2342 + $0x60] sm:$0xff]
        %v2356 = vld [vmem:[%s2342 + $0x68] sm:$0xff]
        %v2357 = vld [vmem:[%s2342 + $0x70] sm:$0xff]
        %v2358 = vld [vmem:[%s2342 + $0x78] sm:$0xff]
        %v2360 = vrot.slane %v2054, 1
        %v2378 = vunpack.c.l.b16 %v2343
        %v2379 = vunpack.c.h.b16 %v2343
        %v2380 = vunpack.c.l.b16 %v2344
        %v2381 = vunpack.c.h.b16 %v2344
        %v2382 = vunpack.c.l.b16 %v2345
        %v2383 = vunpack.c.h.b16 %v2345
        %v2384 = vunpack.c.l.b16 %v2346
        %v2385 = vunpack.c.h.b16 %v2346
        %v2386 = vunpack.c.l.b16 %v2347
        %v2387 = vunpack.c.h.b16 %v2347
        %v2388 = vunpack.c.l.b16 %v2348
        %v2389 = vunpack.c.h.b16 %v2348
        %v2390 = vunpack.c.l.b16 %v2349
        %v2391 = vunpack.c.h.b16 %v2349
        %v2392 = vunpack.c.l.b16 %v2350
        %v2393 = vunpack.c.h.b16 %v2350
        %v2394 = vunpack.c.l.b16 %v2351
        %v2395 = vunpack.c.h.b16 %v2351
        %v2396 = vunpack.c.l.b16 %v2352
        %v2397 = vunpack.c.h.b16 %v2352
        %v2398 = vunpack.c.l.b16 %v2353
        %v2399 = vunpack.c.h.b16 %v2353
        %v2400 = vunpack.c.l.b16 %v2354
        %v2401 = vunpack.c.h.b16 %v2354
        %v2402 = vunpack.c.l.b16 %v2355
        %v2403 = vunpack.c.h.b16 %v2355
        %v2404 = vunpack.c.l.b16 %v2356
        %v2405 = vunpack.c.h.b16 %v2356
        %v2406 = vunpack.c.l.b16 %v2357
        %v2407 = vunpack.c.h.b16 %v2357
        %v2408 = vunpack.c.l.b16 %v2358
        %v2409 = vunpack.c.h.b16 %v2358
        %v2410 = vpack.c.b16 %v2380, %v2378
        %v2411 = vpack.c.b16 %v2381, %v2379
        %v2412 = vpack.c.b16 %v2384, %v2382
        %v2413 = vpack.c.b16 %v2385, %v2383
        %v2414 = vpack.c.b16 %v2388, %v2386
        %v2415 = vpack.c.b16 %v2389, %v2387
        %v2416 = vpack.c.b16 %v2392, %v2390
        %v2417 = vpack.c.b16 %v2393, %v2391
        %v2418 = vpack.c.b16 %v2396, %v2394
        %v2419 = vpack.c.b16 %v2397, %v2395
        %v2420 = vpack.c.b16 %v2400, %v2398
        %v2421 = vpack.c.b16 %v2401, %v2399
        %v2422 = vpack.c.b16 %v2404, %v2402
        %v2423 = vpack.c.b16 %v2405, %v2403
        %v2424 = vpack.c.b16 %v2408, %v2406
        %v2425 = vpack.c.b16 %v2409, %v2407
        %2442 = vmatprep.subr.bf16.mxu0 %v2411
        %2443 = vmatpush1.bf16.msra.mxu0 %v2410
        %2444 = vmatprep.subr.bf16.mxu0 %v2413
        %2445 = vmatpush1.bf16.msra.mxu0 %v2412
        %2446 = vmatprep.subr.bf16.mxu0 %v2415
        %2447 = vmatpush1.bf16.msra.mxu0 %v2414
        %2448 = vmatprep.subr.bf16.mxu0 %v2417
        %2449 = vmatpush1.bf16.msra.mxu0 %v2416
        %2450 = vmatprep.subr.bf16.mxu0 %v2419
        %2451 = vmatpush1.bf16.msra.mxu0 %v2418
        %2452 = vmatprep.subr.bf16.mxu0 %v2421
        %2453 = vmatpush1.bf16.msra.mxu0 %v2420
        %2454 = vmatprep.subr.bf16.mxu0 %v2423
        %2455 = vmatpush1.bf16.msra.mxu0 %v2422
        %2456 = vmatprep.subr.bf16.mxu0 %v2425
        %2457 = vmatpush1.bf16.msra.mxu0 %v2424
        %2458 = vmatprep.subr.bf16.mxu0 0
        %2459 = vmatpush1.bf16.msra.mxu0 0
        %2460 = vmatprep.subr.bf16.mxu0 0
        %2461 = vmatpush1.bf16.msra.mxu0 0
        %2462 = vmatprep.subr.bf16.mxu0 0
        %2463 = vmatpush1.bf16.msra.mxu0 0
        %2464 = vmatprep.subr.bf16.mxu0 0
        %2465 = vmatpush1.bf16.msra.mxu0 0
        %2466 = vmatprep.subr.bf16.mxu0 0
        %2467 = vmatpush1.bf16.msra.mxu0 0
        %2468 = vmatprep.subr.bf16.mxu0 0
        %2469 = vmatpush1.bf16.msra.mxu0 0
        %2470 = vmatprep.subr.bf16.mxu0 0
        %2471 = vmatpush1.bf16.msra.mxu0 0
        %2472 = vmatprep.subr.bf16.mxu0 0
        %2473 = vmatpush1.bf16.msra.mxu0 0
        %2474 = vmatprep.mubr.bf16.mxu0 0
        %2475 = vmatmul.mubr.bf16.gmra.mrb[0].mxu0 %v2360
        %v2476 = vpop.f32.mrb[0].mxu0
        %v2477 = vadd.f32 0.0, %v2476
        %v2478 = vpop.f32.mrb[0].mxu0
        %v2479 = vadd.f32 0.0, %v2478
        %v2480 = vpop.f32.mrb[0].mxu0
        %v2481 = vadd.f32 0.0, %v2480
        %v2482 = vpop.f32.mrb[0].mxu0
        %v2483 = vadd.f32 0.0, %v2482
        %2484 = vdwg.mxu0
        %v2485 = vadd.f32 %v2334, %v2477
        %v2486 = vadd.f32 %v2336, %v2479
        %v2487 = vadd.f32 %v2338, %v2481
        %v2488 = vadd.f32 %v2340, %v2483
        %v2489 = vld [vmem:[%s6] sm:$0x3]
        %v2491 = vlaneseq
        %v2492 = vshrl.u32 %v2491, 7
        %v2493 = vsub.s32 0, %v2492
        %v2494 = vrot.slane %v2489, %v2493
        %v2495 = vlaneseq
        %v2496 = vshrl.u32 %v2495, 7
        %v2497 = vsub.s32 1, %v2496
        %v2498 = vrot.slane %v2489, %v2497
        %v2501 = vadd.f32 %v2485, %v2494
        %v2502 = vadd.f32 %v2486, %v2498
        %v2503 = vadd.f32 %v2487, %v2494
        %v2504 = vadd.f32 %v2488, %v2498
        %v2505 = vmax.f32 %v2501, 0.0
        %v2506 = vmax.f32 %v2502, 0.0
        %v2507 = vmax.f32 %v2503, 0.0
        %v2508 = vmax.f32 %v2504, 0.0
        %2513 = vrot.lane.b32.xlu0 %v2505, 16
        %v2514 = vpop.permute.xlu0 %2513
        %2515 = vrot.lane.b32.xlu0 %v2506, 16
        %v2516 = vpop.permute.xlu0 %2515
        %2517 = vrot.lane.b32.xlu0 %v2507, 16
        %v2518 = vpop.permute.xlu0 %2517
        %2519 = vrot.lane.b32.xlu0 %v2508, 16
        %v2520 = vpop.permute.xlu0 %2519
        %v2521 = vsel %vm1998, %v2514, %v2516
        %v2522 = vsel %vm1998, %v2518, %v2520
        %v2527 = vsel %vm1998, 0.0, %v2514
        %v2528 = vsel %vm1998, 0.0, %v2518
        %v2529 = vsel %vm1192, %v2521, 0.0
        %v2530 = vsel %vm1192, %v2522, 0.0
        %v2535 = vrot.slane %v2527, 7
        %v2536 = vrot.slane %v2529, 7
        %v2537 = vrot.slane %v2528, 7
        %v2538 = vsel %vm527, %v2535, %v2537
        %v2539 = vrot.slane %v2530, 7
        %v2540 = vsel %vm527, %v2536, %v2539
        %v2545 = vsel %vm527, 0.0, %v2535
        %v2546 = vsel %vm527, 0.0, %v2536
        %v2547 = vsel %vm594, %v2538, 0.0
        %v2548 = vsel %vm594, %v2540, 0.0
        %v2549 = vpack.c.bf16 %v2547, %v2545
        %v2550 = vpack.c.bf16 %v2548, %v2546
        %v2551 = vld [vmem:[%s7] sm:$0xff]
        %v2552 = vld [vmem:[%s7 + $0x8] sm:$0xff]
        %v2553 = vld [vmem:[%s7 + $0x10] sm:$0xff]
        %v2554 = vld [vmem:[%s7 + $0x18] sm:$0xff]
        %v2555 = vld [vmem:[%s7 + $0x20] sm:$0xff]
        %v2556 = vld [vmem:[%s7 + $0x28] sm:$0xff]
        %v2557 = vld [vmem:[%s7 + $0x30] sm:$0xff]
        %v2558 = vld [vmem:[%s7 + $0x38] sm:$0xff]
        %v2559 = vld [vmem:[%s7 + $0x40] sm:$0xff]
        %v2560 = vld [vmem:[%s7 + $0x48] sm:$0xff]
        %v2561 = vld [vmem:[%s7 + $0x50] sm:$0xff]
        %v2562 = vld [vmem:[%s7 + $0x58] sm:$0xff]
        %v2563 = vld [vmem:[%s7 + $0x60] sm:$0xff]
        %v2564 = vld [vmem:[%s7 + $0x68] sm:$0xff]
        %v2565 = vld [vmem:[%s7 + $0x70] sm:$0xff]
        %v2566 = vld [vmem:[%s7 + $0x78] sm:$0xff]
        %v2567 = vld [vmem:[%s7 + $0x80] sm:$0xff]
        %v2568 = vld [vmem:[%s7 + $0x88] sm:$0xff]
        %v2569 = vld [vmem:[%s7 + $0x90] sm:$0xff]
        %v2570 = vld [vmem:[%s7 + $0x98] sm:$0xff]
        %v2571 = vld [vmem:[%s7 + $0xa0] sm:$0xff]
        %v2572 = vld [vmem:[%s7 + $0xa8] sm:$0xff]
        %v2573 = vld [vmem:[%s7 + $0xb0] sm:$0xff]
        %v2574 = vld [vmem:[%s7 + $0xb8] sm:$0xff]
        %v2575 = vld [vmem:[%s7 + $0xc0] sm:$0xff]
        %v2576 = vld [vmem:[%s7 + $0xc8] sm:$0xff]
        %v2577 = vld [vmem:[%s7 + $0xd0] sm:$0xff]
        %v2578 = vld [vmem:[%s7 + $0xd8] sm:$0xff]
        %v2579 = vld [vmem:[%s7 + $0xe0] sm:$0xff]
        %v2580 = vld [vmem:[%s7 + $0xe8] sm:$0xff]
        %v2581 = vld [vmem:[%s7 + $0xf0] sm:$0xff]
        %v2582 = vld [vmem:[%s7 + $0xf8] sm:$0xff]
        %s2583 = scalar_lea.vmem %s7, 256
        %v2584 = vld [vmem:[%s2583] sm:$0xff]
        %v2585 = vld [vmem:[%s2583 + $0x8] sm:$0xff]
        %v2586 = vld [vmem:[%s2583 + $0x10] sm:$0xff]
        %v2587 = vld [vmem:[%s2583 + $0x18] sm:$0xff]
        %v2588 = vld [vmem:[%s2583 + $0x20] sm:$0xff]
        %v2589 = vld [vmem:[%s2583 + $0x28] sm:$0xff]
        %v2590 = vld [vmem:[%s2583 + $0x30] sm:$0xff]
        %v2591 = vld [vmem:[%s2583 + $0x38] sm:$0xff]
        %v2592 = vld [vmem:[%s2583 + $0x40] sm:$0xff]
        %v2593 = vld [vmem:[%s2583 + $0x48] sm:$0xff]
        %v2594 = vld [vmem:[%s2583 + $0x50] sm:$0xff]
        %v2595 = vld [vmem:[%s2583 + $0x58] sm:$0xff]
        %v2596 = vld [vmem:[%s2583 + $0x60] sm:$0xff]
        %v2597 = vld [vmem:[%s2583 + $0x68] sm:$0xff]
        %v2598 = vld [vmem:[%s2583 + $0x70] sm:$0xff]
        %v2599 = vld [vmem:[%s2583 + $0x78] sm:$0xff]
        %v2600 = vld [vmem:[%s2583 + $0x80] sm:$0xff]
        %v2601 = vld [vmem:[%s2583 + $0x88] sm:$0xff]
        %v2602 = vld [vmem:[%s2583 + $0x90] sm:$0xff]
        %v2603 = vld [vmem:[%s2583 + $0x98] sm:$0xff]
        %v2604 = vld [vmem:[%s2583 + $0xa0] sm:$0xff]
        %v2605 = vld [vmem:[%s2583 + $0xa8] sm:$0xff]
        %v2606 = vld [vmem:[%s2583 + $0xb0] sm:$0xff]
        %v2607 = vld [vmem:[%s2583 + $0xb8] sm:$0xff]
        %v2608 = vld [vmem:[%s2583 + $0xc0] sm:$0xff]
        %v2609 = vld [vmem:[%s2583 + $0xc8] sm:$0xff]
        %v2610 = vld [vmem:[%s2583 + $0xd0] sm:$0xff]
        %v2611 = vld [vmem:[%s2583 + $0xd8] sm:$0xff]
        %v2612 = vld [vmem:[%s2583 + $0xe0] sm:$0xff]
        %v2613 = vld [vmem:[%s2583 + $0xe8] sm:$0xff]
        %v2614 = vld [vmem:[%s2583 + $0xf0] sm:$0xff]
        %v2615 = vld [vmem:[%s2583 + $0xf8] sm:$0xff]
        %v2617 = vshrl.u32 %v2549, 16
        %v2619 = vshll.u32 %v2549, 16
        %v2621 = vrot.slane %v2619, 1
        %v2622 = vor.u32 %v2617, %v2621
        %v2624 = vshrl.u32 %v2550, 16
        %v2626 = vshll.u32 %v2550, 16
        %v2628 = vrot.slane %v2626, 1
        %v2629 = vor.u32 %v2624, %v2628
        %v2664 = vunpack.c.l.b16 %v2584
        %v2665 = vunpack.c.h.b16 %v2584
        %v2666 = vunpack.c.l.b16 %v2585
        %v2667 = vunpack.c.h.b16 %v2585
        %v2668 = vunpack.c.l.b16 %v2586
        %v2669 = vunpack.c.h.b16 %v2586
        %v2670 = vunpack.c.l.b16 %v2587
        %v2671 = vunpack.c.h.b16 %v2587
        %v2672 = vunpack.c.l.b16 %v2588
        %v2673 = vunpack.c.h.b16 %v2588
        %v2674 = vunpack.c.l.b16 %v2589
        %v2675 = vunpack.c.h.b16 %v2589
        %v2676 = vunpack.c.l.b16 %v2590
        %v2677 = vunpack.c.h.b16 %v2590
        %v2678 = vunpack.c.l.b16 %v2591
        %v2679 = vunpack.c.h.b16 %v2591
        %v2680 = vunpack.c.l.b16 %v2592
        %v2681 = vunpack.c.h.b16 %v2592
        %v2682 = vunpack.c.l.b16 %v2593
        %v2683 = vunpack.c.h.b16 %v2593
        %v2684 = vunpack.c.l.b16 %v2594
        %v2685 = vunpack.c.h.b16 %v2594
        %v2686 = vunpack.c.l.b16 %v2595
        %v2687 = vunpack.c.h.b16 %v2595
        %v2688 = vunpack.c.l.b16 %v2596
        %v2689 = vunpack.c.h.b16 %v2596
        %v2690 = vunpack.c.l.b16 %v2597
        %v2691 = vunpack.c.h.b16 %v2597
        %v2692 = vunpack.c.l.b16 %v2598
        %v2693 = vunpack.c.h.b16 %v2598
        %v2694 = vunpack.c.l.b16 %v2599
        %v2695 = vunpack.c.h.b16 %v2599
        %v2696 = vunpack.c.l.b16 %v2600
        %v2697 = vunpack.c.h.b16 %v2600
        %v2698 = vunpack.c.l.b16 %v2601
        %v2699 = vunpack.c.h.b16 %v2601
        %v2700 = vunpack.c.l.b16 %v2602
        %v2701 = vunpack.c.h.b16 %v2602
        %v2702 = vunpack.c.l.b16 %v2603
        %v2703 = vunpack.c.h.b16 %v2603
        %v2704 = vunpack.c.l.b16 %v2604
        %v2705 = vunpack.c.h.b16 %v2604
        %v2706 = vunpack.c.l.b16 %v2605
        %v2707 = vunpack.c.h.b16 %v2605
        %v2708 = vunpack.c.l.b16 %v2606
        %v2709 = vunpack.c.h.b16 %v2606
        %v2710 = vunpack.c.l.b16 %v2607
        %v2711 = vunpack.c.h.b16 %v2607
        %v2712 = vunpack.c.l.b16 %v2608
        %v2713 = vunpack.c.h.b16 %v2608
        %v2714 = vunpack.c.l.b16 %v2609
        %v2715 = vunpack.c.h.b16 %v2609
        %v2716 = vunpack.c.l.b16 %v2610
        %v2717 = vunpack.c.h.b16 %v2610
        %v2718 = vunpack.c.l.b16 %v2611
        %v2719 = vunpack.c.h.b16 %v2611
        %v2720 = vunpack.c.l.b16 %v2612
        %v2721 = vunpack.c.h.b16 %v2612
        %v2722 = vunpack.c.l.b16 %v2613
        %v2723 = vunpack.c.h.b16 %v2613
        %v2724 = vunpack.c.l.b16 %v2614
        %v2725 = vunpack.c.h.b16 %v2614
        %v2726 = vunpack.c.l.b16 %v2615
        %v2727 = vunpack.c.h.b16 %v2615
        %v2728 = vpack.c.b16 %v2666, %v2664
        %v2729 = vpack.c.b16 %v2667, %v2665
        %v2730 = vpack.c.b16 %v2670, %v2668
        %v2731 = vpack.c.b16 %v2671, %v2669
        %v2732 = vpack.c.b16 %v2674, %v2672
        %v2733 = vpack.c.b16 %v2675, %v2673
        %v2734 = vpack.c.b16 %v2678, %v2676
        %v2735 = vpack.c.b16 %v2679, %v2677
        %v2736 = vpack.c.b16 %v2682, %v2680
        %v2737 = vpack.c.b16 %v2683, %v2681
        %v2738 = vpack.c.b16 %v2686, %v2684
        %v2739 = vpack.c.b16 %v2687, %v2685
        %v2740 = vpack.c.b16 %v2690, %v2688
        %v2741 = vpack.c.b16 %v2691, %v2689
        %v2742 = vpack.c.b16 %v2694, %v2692
        %v2743 = vpack.c.b16 %v2695, %v2693
        %v2744 = vpack.c.b16 %v2698, %v2696
        %v2745 = vpack.c.b16 %v2699, %v2697
        %v2746 = vpack.c.b16 %v2702, %v2700
        %v2747 = vpack.c.b16 %v2703, %v2701
        %v2748 = vpack.c.b16 %v2706, %v2704
        %v2749 = vpack.c.b16 %v2707, %v2705
        %v2750 = vpack.c.b16 %v2710, %v2708
        %v2751 = vpack.c.b16 %v2711, %v2709
        %v2752 = vpack.c.b16 %v2714, %v2712
        %v2753 = vpack.c.b16 %v2715, %v2713
        %v2754 = vpack.c.b16 %v2718, %v2716
        %v2755 = vpack.c.b16 %v2719, %v2717
        %v2756 = vpack.c.b16 %v2722, %v2720
        %v2757 = vpack.c.b16 %v2723, %v2721
        %v2758 = vpack.c.b16 %v2726, %v2724
        %v2759 = vpack.c.b16 %v2727, %v2725
        %2792 = vmatprep.subr.bf16.mxu0 %v2729
        %2793 = vmatpush1.bf16.msra.mxu0 %v2728
        %2794 = vmatprep.subr.bf16.mxu0 %v2731
        %2795 = vmatpush1.bf16.msra.mxu0 %v2730
        %2796 = vmatprep.subr.bf16.mxu0 %v2733
        %2797 = vmatpush1.bf16.msra.mxu0 %v2732
        %2798 = vmatprep.subr.bf16.mxu0 %v2735
        %2799 = vmatpush1.bf16.msra.mxu0 %v2734
        %2800 = vmatprep.subr.bf16.mxu0 %v2737
        %2801 = vmatpush1.bf16.msra.mxu0 %v2736
        %2802 = vmatprep.subr.bf16.mxu0 %v2739
        %2803 = vmatpush1.bf16.msra.mxu0 %v2738
        %2804 = vmatprep.subr.bf16.mxu0 %v2741
        %2805 = vmatpush1.bf16.msra.mxu0 %v2740
        %2806 = vmatprep.subr.bf16.mxu0 %v2743
        %2807 = vmatpush1.bf16.msra.mxu0 %v2742
        %2808 = vmatprep.subr.bf16.mxu0 %v2745
        %2809 = vmatpush1.bf16.msra.mxu0 %v2744
        %2810 = vmatprep.subr.bf16.mxu0 %v2747
        %2811 = vmatpush1.bf16.msra.mxu0 %v2746
        %2812 = vmatprep.subr.bf16.mxu0 %v2749
        %2813 = vmatpush1.bf16.msra.mxu0 %v2748
        %2814 = vmatprep.subr.bf16.mxu0 %v2751
        %2815 = vmatpush1.bf16.msra.mxu0 %v2750
        %2816 = vmatprep.subr.bf16.mxu0 %v2753
        %2817 = vmatpush1.bf16.msra.mxu0 %v2752
        %2818 = vmatprep.subr.bf16.mxu0 %v2755
        %2819 = vmatpush1.bf16.msra.mxu0 %v2754
        %2820 = vmatprep.subr.bf16.mxu0 %v2757
        %2821 = vmatpush1.bf16.msra.mxu0 %v2756
        %2822 = vmatprep.subr.bf16.mxu0 %v2759
        %2823 = vmatpush1.bf16.msra.mxu0 %v2758
        %2824 = vmatprep.mubr.bf16.mxu0 %v2629
        %2825 = vmatmul.mubr.bf16.gmra.mrb[0].mxu0 %v2622
        %v2826 = vpop.f32.mrb[0].mxu0
        %v2827 = vadd.f32 0.0, %v2826
        %v2828 = vpop.f32.mrb[0].mxu0
        %v2829 = vadd.f32 0.0, %v2828
        %v2830 = vpop.f32.mrb[0].mxu0
        %v2831 = vadd.f32 0.0, %v2830
        %v2832 = vpop.f32.mrb[0].mxu0
        %v2833 = vadd.f32 0.0, %v2832
        %2834 = vdwg.mxu0
        %v2867 = vunpack.c.l.b16 %v2551
        %v2868 = vunpack.c.h.b16 %v2551
        %v2869 = vunpack.c.l.b16 %v2552
        %v2870 = vunpack.c.h.b16 %v2552
        %v2871 = vunpack.c.l.b16 %v2553
        %v2872 = vunpack.c.h.b16 %v2553
        %v2873 = vunpack.c.l.b16 %v2554
        %v2874 = vunpack.c.h.b16 %v2554
        %v2875 = vunpack.c.l.b16 %v2555
        %v2876 = vunpack.c.h.b16 %v2555
        %v2877 = vunpack.c.l.b16 %v2556
        %v2878 = vunpack.c.h.b16 %v2556
        %v2879 = vunpack.c.l.b16 %v2557
        %v2880 = vunpack.c.h.b16 %v2557
        %v2881 = vunpack.c.l.b16 %v2558
        %v2882 = vunpack.c.h.b16 %v2558
        %v2883 = vunpack.c.l.b16 %v2559
        %v2884 = vunpack.c.h.b16 %v2559
        %v2885 = vunpack.c.l.b16 %v2560
        %v2886 = vunpack.c.h.b16 %v2560
        %v2887 = vunpack.c.l.b16 %v2561
        %v2888 = vunpack.c.h.b16 %v2561
        %v2889 = vunpack.c.l.b16 %v2562
        %v2890 = vunpack.c.h.b16 %v2562
        %v2891 = vunpack.c.l.b16 %v2563
        %v2892 = vunpack.c.h.b16 %v2563
        %v2893 = vunpack.c.l.b16 %v2564
        %v2894 = vunpack.c.h.b16 %v2564
        %v2895 = vunpack.c.l.b16 %v2565
        %v2896 = vunpack.c.h.b16 %v2565
        %v2897 = vunpack.c.l.b16 %v2566
        %v2898 = vunpack.c.h.b16 %v2566
        %v2899 = vunpack.c.l.b16 %v2567
        %v2900 = vunpack.c.h.b16 %v2567
        %v2901 = vunpack.c.l.b16 %v2568
        %v2902 = vunpack.c.h.b16 %v2568
        %v2903 = vunpack.c.l.b16 %v2569
        %v2904 = vunpack.c.h.b16 %v2569
        %v2905 = vunpack.c.l.b16 %v2570
        %v2906 = vunpack.c.h.b16 %v2570
        %v2907 = vunpack.c.l.b16 %v2571
        %v2908 = vunpack.c.h.b16 %v2571
        %v2909 = vunpack.c.l.b16 %v2572
        %v2910 = vunpack.c.h.b16 %v2572
        %v2911 = vunpack.c.l.b16 %v2573
        %v2912 = vunpack.c.h.b16 %v2573
        %v2913 = vunpack.c.l.b16 %v2574
        %v2914 = vunpack.c.h.b16 %v2574
        %v2915 = vunpack.c.l.b16 %v2575
        %v2916 = vunpack.c.h.b16 %v2575
        %v2917 = vunpack.c.l.b16 %v2576
        %v2918 = vunpack.c.h.b16 %v2576
        %v2919 = vunpack.c.l.b16 %v2577
        %v2920 = vunpack.c.h.b16 %v2577
        %v2921 = vunpack.c.l.b16 %v2578
        %v2922 = vunpack.c.h.b16 %v2578
        %v2923 = vunpack.c.l.b16 %v2579
        %v2924 = vunpack.c.h.b16 %v2579
        %v2925 = vunpack.c.l.b16 %v2580
        %v2926 = vunpack.c.h.b16 %v2580
        %v2927 = vunpack.c.l.b16 %v2581
        %v2928 = vunpack.c.h.b16 %v2581
        %v2929 = vunpack.c.l.b16 %v2582
        %v2930 = vunpack.c.h.b16 %v2582
        %v2931 = vpack.c.b16 %v2869, %v2867
        %v2932 = vpack.c.b16 %v2870, %v2868
        %v2933 = vpack.c.b16 %v2873, %v2871
        %v2934 = vpack.c.b16 %v2874, %v2872
        %v2935 = vpack.c.b16 %v2877, %v2875
        %v2936 = vpack.c.b16 %v2878, %v2876
        %v2937 = vpack.c.b16 %v2881, %v2879
        %v2938 = vpack.c.b16 %v2882, %v2880
        %v2939 = vpack.c.b16 %v2885, %v2883
        %v2940 = vpack.c.b16 %v2886, %v2884
        %v2941 = vpack.c.b16 %v2889, %v2887
        %v2942 = vpack.c.b16 %v2890, %v2888
        %v2943 = vpack.c.b16 %v2893, %v2891
        %v2944 = vpack.c.b16 %v2894, %v2892
        %v2945 = vpack.c.b16 %v2897, %v2895
        %v2946 = vpack.c.b16 %v2898, %v2896
        %v2947 = vpack.c.b16 %v2901, %v2899
        %v2948 = vpack.c.b16 %v2902, %v2900
        %v2949 = vpack.c.b16 %v2905, %v2903
        %v2950 = vpack.c.b16 %v2906, %v2904
        %v2951 = vpack.c.b16 %v2909, %v2907
        %v2952 = vpack.c.b16 %v2910, %v2908
        %v2953 = vpack.c.b16 %v2913, %v2911
        %v2954 = vpack.c.b16 %v2914, %v2912
        %v2955 = vpack.c.b16 %v2917, %v2915
        %v2956 = vpack.c.b16 %v2918, %v2916
        %v2957 = vpack.c.b16 %v2921, %v2919
        %v2958 = vpack.c.b16 %v2922, %v2920
        %v2959 = vpack.c.b16 %v2925, %v2923
        %v2960 = vpack.c.b16 %v2926, %v2924
        %v2961 = vpack.c.b16 %v2929, %v2927
        %v2962 = vpack.c.b16 %v2930, %v2928
        %2995 = vmatprep.subr.bf16.mxu0 %v2932
        %2996 = vmatpush1.bf16.msra.mxu0 %v2931
        %2997 = vmatprep.subr.bf16.mxu0 %v2934
        %2998 = vmatpush1.bf16.msra.mxu0 %v2933
        %2999 = vmatprep.subr.bf16.mxu0 %v2936
        %3000 = vmatpush1.bf16.msra.mxu0 %v2935
        %3001 = vmatprep.subr.bf16.mxu0 %v2938
        %3002 = vmatpush1.bf16.msra.mxu0 %v2937
        %3003 = vmatprep.subr.bf16.mxu0 %v2940
        %3004 = vmatpush1.bf16.msra.mxu0 %v2939
        %3005 = vmatprep.subr.bf16.mxu0 %v2942
        %3006 = vmatpush1.bf16.msra.mxu0 %v2941
        %3007 = vmatprep.subr.bf16.mxu0 %v2944
        %3008 = vmatpush1.bf16.msra.mxu0 %v2943
        %3009 = vmatprep.subr.bf16.mxu0 %v2946
        %3010 = vmatpush1.bf16.msra.mxu0 %v2945
        %3011 = vmatprep.subr.bf16.mxu0 %v2948
        %3012 = vmatpush1.bf16.msra.mxu0 %v2947
        %3013 = vmatprep.subr.bf16.mxu0 %v2950
        %3014 = vmatpush1.bf16.msra.mxu0 %v2949
        %3015 = vmatprep.subr.bf16.mxu0 %v2952
        %3016 = vmatpush1.bf16.msra.mxu0 %v2951
        %3017 = vmatprep.subr.bf16.mxu0 %v2954
        %3018 = vmatpush1.bf16.msra.mxu0 %v2953
        %3019 = vmatprep.subr.bf16.mxu0 %v2956
        %3020 = vmatpush1.bf16.msra.mxu0 %v2955
        %3021 = vmatprep.subr.bf16.mxu0 %v2958
        %3022 = vmatpush1.bf16.msra.mxu0 %v2957
        %3023 = vmatprep.subr.bf16.mxu0 %v2960
        %3024 = vmatpush1.bf16.msra.mxu0 %v2959
        %3025 = vmatprep.subr.bf16.mxu0 %v2962
        %3026 = vmatpush1.bf16.msra.mxu0 %v2961
        %3027 = vmatprep.mubr.bf16.mxu0 %v2550
        %3028 = vmatmul.mubr.bf16.gmra.mrb[0].mxu0 %v2549
        %v3029 = vpop.f32.mrb[0].mxu0
        %v3030 = vadd.f32 %v2827, %v3029
        %v3031 = vpop.f32.mrb[0].mxu0
        %v3032 = vadd.f32 %v2829, %v3031
        %v3033 = vpop.f32.mrb[0].mxu0
        %v3034 = vadd.f32 %v2831, %v3033
        %v3035 = vpop.f32.mrb[0].mxu0
        %v3036 = vadd.f32 %v2833, %v3035
        %3037 = vdwg.mxu0
        %s3038 = scalar_lea.vmem %s7, 512
        %v3039 = vld [vmem:[%s3038] sm:$0xff]
        %v3040 = vld [vmem:[%s3038 + $0x8] sm:$0xff]
        %v3041 = vld [vmem:[%s3038 + $0x10] sm:$0xff]
        %v3042 = vld [vmem:[%s3038 + $0x18] sm:$0xff]
        %v3043 = vld [vmem:[%s3038 + $0x20] sm:$0xff]
        %v3044 = vld [vmem:[%s3038 + $0x28] sm:$0xff]
        %v3045 = vld [vmem:[%s3038 + $0x30] sm:$0xff]
        %v3046 = vld [vmem:[%s3038 + $0x38] sm:$0xff]
        %v3047 = vld [vmem:[%s3038 + $0x40] sm:$0xff]
        %v3048 = vld [vmem:[%s3038 + $0x48] sm:$0xff]
        %v3049 = vld [vmem:[%s3038 + $0x50] sm:$0xff]
        %v3050 = vld [vmem:[%s3038 + $0x58] sm:$0xff]
        %v3051 = vld [vmem:[%s3038 + $0x60] sm:$0xff]
        %v3052 = vld [vmem:[%s3038 + $0x68] sm:$0xff]
        %v3053 = vld [vmem:[%s3038 + $0x70] sm:$0xff]
        %v3054 = vld [vmem:[%s3038 + $0x78] sm:$0xff]
        %v3055 = vld [vmem:[%s3038 + $0x80] sm:$0xff]
        %v3056 = vld [vmem:[%s3038 + $0x88] sm:$0xff]
        %v3057 = vld [vmem:[%s3038 + $0x90] sm:$0xff]
        %v3058 = vld [vmem:[%s3038 + $0x98] sm:$0xff]
        %v3059 = vld [vmem:[%s3038 + $0xa0] sm:$0xff]
        %v3060 = vld [vmem:[%s3038 + $0xa8] sm:$0xff]
        %v3061 = vld [vmem:[%s3038 + $0xb0] sm:$0xff]
        %v3062 = vld [vmem:[%s3038 + $0xb8] sm:$0xff]
        %v3063 = vld [vmem:[%s3038 + $0xc0] sm:$0xff]
        %v3064 = vld [vmem:[%s3038 + $0xc8] sm:$0xff]
        %v3065 = vld [vmem:[%s3038 + $0xd0] sm:$0xff]
        %v3066 = vld [vmem:[%s3038 + $0xd8] sm:$0xff]
        %v3067 = vld [vmem:[%s3038 + $0xe0] sm:$0xff]
        %v3068 = vld [vmem:[%s3038 + $0xe8] sm:$0xff]
        %v3069 = vld [vmem:[%s3038 + $0xf0] sm:$0xff]
        %v3070 = vld [vmem:[%s3038 + $0xf8] sm:$0xff]
        %v3073 = vrot.slane %v2549, 1
        %v3074 = vrot.slane %v2550, 1
        %v3109 = vunpack.c.l.b16 %v3039
        %v3110 = vunpack.c.h.b16 %v3039
        %v3111 = vunpack.c.l.b16 %v3040
        %v3112 = vunpack.c.h.b16 %v3040
        %v3113 = vunpack.c.l.b16 %v3041
        %v3114 = vunpack.c.h.b16 %v3041
        %v3115 = vunpack.c.l.b16 %v3042
        %v3116 = vunpack.c.h.b16 %v3042
        %v3117 = vunpack.c.l.b16 %v3043
        %v3118 = vunpack.c.h.b16 %v3043
        %v3119 = vunpack.c.l.b16 %v3044
        %v3120 = vunpack.c.h.b16 %v3044
        %v3121 = vunpack.c.l.b16 %v3045
        %v3122 = vunpack.c.h.b16 %v3045
        %v3123 = vunpack.c.l.b16 %v3046
        %v3124 = vunpack.c.h.b16 %v3046
        %v3125 = vunpack.c.l.b16 %v3047
        %v3126 = vunpack.c.h.b16 %v3047
        %v3127 = vunpack.c.l.b16 %v3048
        %v3128 = vunpack.c.h.b16 %v3048
        %v3129 = vunpack.c.l.b16 %v3049
        %v3130 = vunpack.c.h.b16 %v3049
        %v3131 = vunpack.c.l.b16 %v3050
        %v3132 = vunpack.c.h.b16 %v3050
        %v3133 = vunpack.c.l.b16 %v3051
        %v3134 = vunpack.c.h.b16 %v3051
        %v3135 = vunpack.c.l.b16 %v3052
        %v3136 = vunpack.c.h.b16 %v3052
        %v3137 = vunpack.c.l.b16 %v3053
        %v3138 = vunpack.c.h.b16 %v3053
        %v3139 = vunpack.c.l.b16 %v3054
        %v3140 = vunpack.c.h.b16 %v3054
        %v3141 = vunpack.c.l.b16 %v3055
        %v3142 = vunpack.c.h.b16 %v3055
        %v3143 = vunpack.c.l.b16 %v3056
        %v3144 = vunpack.c.h.b16 %v3056
        %v3145 = vunpack.c.l.b16 %v3057
        %v3146 = vunpack.c.h.b16 %v3057
        %v3147 = vunpack.c.l.b16 %v3058
        %v3148 = vunpack.c.h.b16 %v3058
        %v3149 = vunpack.c.l.b16 %v3059
        %v3150 = vunpack.c.h.b16 %v3059
        %v3151 = vunpack.c.l.b16 %v3060
        %v3152 = vunpack.c.h.b16 %v3060
        %v3153 = vunpack.c.l.b16 %v3061
        %v3154 = vunpack.c.h.b16 %v3061
        %v3155 = vunpack.c.l.b16 %v3062
        %v3156 = vunpack.c.h.b16 %v3062
        %v3157 = vunpack.c.l.b16 %v3063
        %v3158 = vunpack.c.h.b16 %v3063
        %v3159 = vunpack.c.l.b16 %v3064
        %v3160 = vunpack.c.h.b16 %v3064
        %v3161 = vunpack.c.l.b16 %v3065
        %v3162 = vunpack.c.h.b16 %v3065
        %v3163 = vunpack.c.l.b16 %v3066
        %v3164 = vunpack.c.h.b16 %v3066
        %v3165 = vunpack.c.l.b16 %v3067
        %v3166 = vunpack.c.h.b16 %v3067
        %v3167 = vunpack.c.l.b16 %v3068
        %v3168 = vunpack.c.h.b16 %v3068
        %v3169 = vunpack.c.l.b16 %v3069
        %v3170 = vunpack.c.h.b16 %v3069
        %v3171 = vunpack.c.l.b16 %v3070
        %v3172 = vunpack.c.h.b16 %v3070
        %v3173 = vpack.c.b16 %v3111, %v3109
        %v3174 = vpack.c.b16 %v3112, %v3110
        %v3175 = vpack.c.b16 %v3115, %v3113
        %v3176 = vpack.c.b16 %v3116, %v3114
        %v3177 = vpack.c.b16 %v3119, %v3117
        %v3178 = vpack.c.b16 %v3120, %v3118
        %v3179 = vpack.c.b16 %v3123, %v3121
        %v3180 = vpack.c.b16 %v3124, %v3122
        %v3181 = vpack.c.b16 %v3127, %v3125
        %v3182 = vpack.c.b16 %v3128, %v3126
        %v3183 = vpack.c.b16 %v3131, %v3129
        %v3184 = vpack.c.b16 %v3132, %v3130
        %v3185 = vpack.c.b16 %v3135, %v3133
        %v3186 = vpack.c.b16 %v3136, %v3134
        %v3187 = vpack.c.b16 %v3139, %v3137
        %v3188 = vpack.c.b16 %v3140, %v3138
        %v3189 = vpack.c.b16 %v3143, %v3141
        %v3190 = vpack.c.b16 %v3144, %v3142
        %v3191 = vpack.c.b16 %v3147, %v3145
        %v3192 = vpack.c.b16 %v3148, %v3146
        %v3193 = vpack.c.b16 %v3151, %v3149
        %v3194 = vpack.c.b16 %v3152, %v3150
        %v3195 = vpack.c.b16 %v3155, %v3153
        %v3196 = vpack.c.b16 %v3156, %v3154
        %v3197 = vpack.c.b16 %v3159, %v3157
        %v3198 = vpack.c.b16 %v3160, %v3158
        %v3199 = vpack.c.b16 %v3163, %v3161
        %v3200 = vpack.c.b16 %v3164, %v3162
        %v3201 = vpack.c.b16 %v3167, %v3165
        %v3202 = vpack.c.b16 %v3168, %v3166
        %v3203 = vpack.c.b16 %v3171, %v3169
        %v3204 = vpack.c.b16 %v3172, %v3170
        %3237 = vmatprep.subr.bf16.mxu0 %v3174
        %3238 = vmatpush1.bf16.msra.mxu0 %v3173
        %3239 = vmatprep.subr.bf16.mxu0 %v3176
        %3240 = vmatpush1.bf16.msra.mxu0 %v3175
        %3241 = vmatprep.subr.bf16.mxu0 %v3178
        %3242 = vmatpush1.bf16.msra.mxu0 %v3177
        %3243 = vmatprep.subr.bf16.mxu0 %v3180
        %3244 = vmatpush1.bf16.msra.mxu0 %v3179
        %3245 = vmatprep.subr.bf16.mxu0 %v3182
        %3246 = vmatpush1.bf16.msra.mxu0 %v3181
        %3247 = vmatprep.subr.bf16.mxu0 %v3184
        %3248 = vmatpush1.bf16.msra.mxu0 %v3183
        %3249 = vmatprep.subr.bf16.mxu0 %v3186
        %3250 = vmatpush1.bf16.msra.mxu0 %v3185
        %3251 = vmatprep.subr.bf16.mxu0 %v3188
        %3252 = vmatpush1.bf16.msra.mxu0 %v3187
        %3253 = vmatprep.subr.bf16.mxu0 %v3190
        %3254 = vmatpush1.bf16.msra.mxu0 %v3189
        %3255 = vmatprep.subr.bf16.mxu0 %v3192
        %3256 = vmatpush1.bf16.msra.mxu0 %v3191
        %3257 = vmatprep.subr.bf16.mxu0 %v3194
        %3258 = vmatpush1.bf16.msra.mxu0 %v3193
        %3259 = vmatprep.subr.bf16.mxu0 %v3196
        %3260 = vmatpush1.bf16.msra.mxu0 %v3195
        %3261 = vmatprep.subr.bf16.mxu0 %v3198
        %3262 = vmatpush1.bf16.msra.mxu0 %v3197
        %3263 = vmatprep.subr.bf16.mxu0 %v3200
        %3264 = vmatpush1.bf16.msra.mxu0 %v3199
        %3265 = vmatprep.subr.bf16.mxu0 %v3202
        %3266 = vmatpush1.bf16.msra.mxu0 %v3201
        %3267 = vmatprep.subr.bf16.mxu0 %v3204
        %3268 = vmatpush1.bf16.msra.mxu0 %v3203
        %3269 = vmatprep.mubr.bf16.mxu0 %v3074
        %3270 = vmatmul.mubr.bf16.gmra.mrb[0].mxu0 %v3073
        %v3271 = vpop.f32.mrb[0].mxu0
        %v3272 = vadd.f32 0.0, %v3271
        %v3273 = vpop.f32.mrb[0].mxu0
        %v3274 = vadd.f32 0.0, %v3273
        %v3275 = vpop.f32.mrb[0].mxu0
        %v3276 = vadd.f32 0.0, %v3275
        %v3277 = vpop.f32.mrb[0].mxu0
        %v3278 = vadd.f32 0.0, %v3277
        %3279 = vdwg.mxu0
        %v3280 = vadd.f32 %v3030, %v3272
        %v3281 = vadd.f32 %v3032, %v3274
        %v3282 = vadd.f32 %v3034, %v3276
        %v3283 = vadd.f32 %v3036, %v3278
        %v3284 = vld [vmem:[%s8] sm:$0x3]
        %v3286 = vlaneseq
        %v3287 = vshrl.u32 %v3286, 7
        %v3288 = vsub.s32 0, %v3287
        %v3289 = vrot.slane %v3284, %v3288
        %v3290 = vlaneseq
        %v3291 = vshrl.u32 %v3290, 7
        %v3292 = vsub.s32 1, %v3291
        %v3293 = vrot.slane %v3284, %v3292
        %v3296 = vadd.f32 %v3280, %v3289
        %v3297 = vadd.f32 %v3281, %v3293
        %v3298 = vadd.f32 %v3282, %v3289
        %v3299 = vadd.f32 %v3283, %v3293
        %v3300 = vmax.f32 %v3296, 0.0
        %v3301 = vmax.f32 %v3297, 0.0
        %v3302 = vmax.f32 %v3298, 0.0
        %v3303 = vmax.f32 %v3299, 0.0
        %v3308 = vrot.slane %v3300, 1
        %v3309 = vrot.slane %v3302, 1
        %v3310 = vsel %vm594, %v3308, %v3309
        %v3311 = vrot.slane %v3301, 1
        %v3312 = vrot.slane %v3303, 1
        %v3313 = vsel %vm594, %v3311, %v3312
        %v3318 = vmax.f32 %v3300, %v3310
        %v3319 = vmax.f32 %v3301, %v3313
        %v3320 = vmax.f32 %v3302, %v3309
        %v3321 = vmax.f32 %v3303, %v3312
        %3326 = vrot.lane.b32.xlu0 %v3318, 112
        %v3327 = vpop.permute.xlu0 %3326
        %3328 = vrot.lane.b32.xlu0 %v3319, 112
        %v3329 = vpop.permute.xlu0 %3328
        %3330 = vrot.lane.b32.xlu0 %v3320, 112
        %v3331 = vpop.permute.xlu0 %3330
        %3332 = vrot.lane.b32.xlu0 %v3321, 112
        %v3333 = vpop.permute.xlu0 %3332
        %v3334 = vsel %vm1192, %v3327, %v3329
        %v3335 = vsel %vm1192, %v3331, %v3333
        %v3340 = vmax.f32 %v3318, %v3334
        %v3341 = vmax.f32 %v3319, %v3329
        %v3342 = vmax.f32 %v3320, %v3335
        %v3343 = vmax.f32 %v3321, %v3333
        %v3346 = vrot.slane %v3340, 1
        %v3347 = vrot.slane %v3341, 1
        %v3350 = vrot.slane %v3340, 2
        %v3351 = vrot.slane %v3341, 2
        %v3354 = vrot.slane %v3340, 3
        %v3355 = vrot.slane %v3341, 3
        %v3360 = vrot.slane %v3342, 4
        %v3361 = vrot.slane %v3343, 4
        %v3364 = vrot.slane %v3342, 5
        %v3365 = vrot.slane %v3343, 5
        %v3368 = vrot.slane %v3342, 6
        %v3369 = vrot.slane %v3343, 6
        %v3372 = vsel %vm527, %v3340, %v3346
        %v3373 = vsel %vm527, %v3341, %v3347
        %v3374 = vsel %vm1888, %v3372, %v3350
        %v3375 = vsel %vm1888, %v3373, %v3351
        %v3376 = vsel %vm1891, %v3374, %v3354
        %v3377 = vsel %vm1891, %v3375, %v3355
        %v3378 = vsel %vm1894, %v3376, %v3360
        %v3379 = vsel %vm1894, %v3377, %v3361
        %v3380 = vsel %vm540, %v3378, %v3364
        %v3381 = vsel %vm540, %v3379, %v3365
        %v3382 = vsel %vm1899, %v3380, %v3368
        %v3383 = vsel %vm1899, %v3381, %v3369
        %3385 = vrot.lane.b32.xlu0 %v3382, 112
        %v3386 = vpop.permute.xlu0 %3385
        %3388 = vrot.lane.b32.xlu0 %v3382, 96
        %v3389 = vpop.permute.xlu0 %3388
        %3391 = vrot.lane.b32.xlu0 %v3382, 80
        %v3392 = vpop.permute.xlu0 %3391
        %3395 = vrot.lane.b32.xlu0 %v3383, 64
        %v3396 = vpop.permute.xlu0 %3395
        %3398 = vrot.lane.b32.xlu0 %v3383, 48
        %v3399 = vpop.permute.xlu0 %3398
        %3401 = vrot.lane.b32.xlu0 %v3383, 32
        %v3402 = vpop.permute.xlu0 %3401
        %v3404 = vsel %vm1998, %v3382, %v3386
        %v3405 = vsel %vm2004, %v3404, %v3389
        %v3406 = vsel %vm2010, %v3405, %v3392
        %v3407 = vsel %vm2016, %v3406, %v3396
        %v3408 = vsel %vm2022, %v3407, %v3399
        %v3409 = vsel %vm2028, %v3408, %v3402
        %3411 = vrot.lane.b32.xlu0 %v3409, 16
        %v3412 = vpop.permute.xlu0 %3411
        %v3414 = vsel %vm1998, 0.0, %v3412
        %v3417 = vrot.slane %v3414, 7
        %v3418 = vrot.slane 0.0, 7
        %v3421 = vsel %vm527, 0.0, %v3417
        %v3422 = vsel %vm527, 0.0, %v3418
        %v3423 = vpack.c.bf16 %v3421, %v3421
        %v3424 = vpack.c.bf16 %v3422, %v3422
        %v3425 = vld [vmem:[%s9] sm:$0xff]
        %v3426 = vld [vmem:[%s9 + $0x8] sm:$0xff]
        %v3427 = vld [vmem:[%s9 + $0x10] sm:$0xff]
        %v3428 = vld [vmem:[%s9 + $0x18] sm:$0xff]
        %v3429 = vld [vmem:[%s9 + $0x20] sm:$0xff]
        %v3430 = vld [vmem:[%s9 + $0x28] sm:$0xff]
        %v3431 = vld [vmem:[%s9 + $0x30] sm:$0xff]
        %v3432 = vld [vmem:[%s9 + $0x38] sm:$0xff]
        %v3433 = vld [vmem:[%s9 + $0x40] sm:$0xff]
        %v3434 = vld [vmem:[%s9 + $0x48] sm:$0xff]
        %v3435 = vld [vmem:[%s9 + $0x50] sm:$0xff]
        %v3436 = vld [vmem:[%s9 + $0x58] sm:$0xff]
        %v3437 = vld [vmem:[%s9 + $0x60] sm:$0xff]
        %v3438 = vld [vmem:[%s9 + $0x68] sm:$0xff]
        %v3439 = vld [vmem:[%s9 + $0x70] sm:$0xff]
        %v3440 = vld [vmem:[%s9 + $0x78] sm:$0xff]
        %v3441 = vld [vmem:[%s9 + $0x80] sm:$0xff]
        %v3442 = vld [vmem:[%s9 + $0x88] sm:$0xff]
        %s3443 = scalar_lea.vmem %s9, 144
        %v3444 = vld [vmem:[%s3443] sm:$0xff]
        %v3445 = vld [vmem:[%s3443 + $0x8] sm:$0xff]
        %v3446 = vld [vmem:[%s3443 + $0x10] sm:$0xff]
        %v3447 = vld [vmem:[%s3443 + $0x18] sm:$0xff]
        %v3448 = vld [vmem:[%s3443 + $0x20] sm:$0xff]
        %v3449 = vld [vmem:[%s3443 + $0x28] sm:$0xff]
        %v3450 = vld [vmem:[%s3443 + $0x30] sm:$0xff]
        %v3451 = vld [vmem:[%s3443 + $0x38] sm:$0xff]
        %v3452 = vld [vmem:[%s3443 + $0x40] sm:$0xff]
        %v3453 = vld [vmem:[%s3443 + $0x48] sm:$0xff]
        %v3454 = vld [vmem:[%s3443 + $0x50] sm:$0xff]
        %v3455 = vld [vmem:[%s3443 + $0x58] sm:$0xff]
        %v3456 = vld [vmem:[%s3443 + $0x60] sm:$0xff]
        %v3457 = vld [vmem:[%s3443 + $0x68] sm:$0xff]
        %v3458 = vld [vmem:[%s3443 + $0x70] sm:$0xff]
        %v3459 = vld [vmem:[%s3443 + $0x78] sm:$0xff]
        %v3460 = vld [vmem:[%s3443 + $0x80] sm:$0xff]
        %v3461 = vld [vmem:[%s3443 + $0x88] sm:$0xff]
        %v3463 = vshrl.u32 %v3423, 16
        %v3465 = vshll.u32 %v3423, 16
        %v3467 = vrot.slane %v3465, 1
        %v3468 = vor.u32 %v3463, %v3467
        %v3470 = vshrl.u32 %v3424, 16
        %v3472 = vshll.u32 %v3424, 16
        %v3474 = vrot.slane %v3472, 1
        %v3475 = vor.u32 %v3470, %v3474
        %v3495 = vunpack.c.l.b16 %v3444
        %v3496 = vunpack.c.h.b16 %v3444
        %v3497 = vunpack.c.l.b16 %v3445
        %v3498 = vunpack.c.h.b16 %v3445
        %v3499 = vunpack.c.l.b16 %v3446
        %v3500 = vunpack.c.h.b16 %v3446
        %v3501 = vunpack.c.l.b16 %v3447
        %v3502 = vunpack.c.h.b16 %v3447
        %v3503 = vunpack.c.l.b16 %v3448
        %v3504 = vunpack.c.h.b16 %v3448
        %v3505 = vunpack.c.l.b16 %v3449
        %v3506 = vunpack.c.h.b16 %v3449
        %v3507 = vunpack.c.l.b16 %v3450
        %v3508 = vunpack.c.h.b16 %v3450
        %v3509 = vunpack.c.l.b16 %v3451
        %v3510 = vunpack.c.h.b16 %v3451
        %v3511 = vunpack.c.l.b16 %v3452
        %v3512 = vunpack.c.h.b16 %v3452
        %v3513 = vunpack.c.l.b16 %v3453
        %v3514 = vunpack.c.h.b16 %v3453
        %v3515 = vunpack.c.l.b16 %v3454
        %v3516 = vunpack.c.h.b16 %v3454
        %v3517 = vunpack.c.l.b16 %v3455
        %v3518 = vunpack.c.h.b16 %v3455
        %v3519 = vunpack.c.l.b16 %v3456
        %v3520 = vunpack.c.h.b16 %v3456
        %v3521 = vunpack.c.l.b16 %v3457
        %v3522 = vunpack.c.h.b16 %v3457
        %v3523 = vunpack.c.l.b16 %v3458
        %v3524 = vunpack.c.h.b16 %v3458
        %v3525 = vunpack.c.l.b16 %v3459
        %v3526 = vunpack.c.h.b16 %v3459
        %v3527 = vunpack.c.l.b16 %v3460
        %v3528 = vunpack.c.h.b16 %v3460
        %v3529 = vunpack.c.l.b16 %v3461
        %v3530 = vunpack.c.h.b16 %v3461
        %v3531 = vpack.c.b16 %v3497, %v3495
        %v3532 = vpack.c.b16 %v3498, %v3496
        %v3533 = vpack.c.b16 %v3501, %v3499
        %v3534 = vpack.c.b16 %v3502, %v3500
        %v3535 = vpack.c.b16 %v3505, %v3503
        %v3536 = vpack.c.b16 %v3506, %v3504
        %v3537 = vpack.c.b16 %v3509, %v3507
        %v3538 = vpack.c.b16 %v3510, %v3508
        %v3539 = vpack.c.b16 %v3513, %v3511
        %v3540 = vpack.c.b16 %v3514, %v3512
        %v3541 = vpack.c.b16 %v3517, %v3515
        %v3542 = vpack.c.b16 %v3518, %v3516
        %v3543 = vpack.c.b16 %v3521, %v3519
        %v3544 = vpack.c.b16 %v3522, %v3520
        %v3545 = vpack.c.b16 %v3525, %v3523
        %v3546 = vpack.c.b16 %v3526, %v3524
        %v3547 = vpack.c.b16 %v3529, %v3527
        %v3548 = vpack.c.b16 %v3530, %v3528
        %v3568 = vsel %vm1998, %v3475, 0
        %3570 = vmatprep.subr.bf16.mxu0 %v3532
        %3571 = vmatpush1.bf16.msra.mxu0 %v3531
        %3572 = vmatprep.subr.bf16.mxu0 %v3534
        %3573 = vmatpush1.bf16.msra.mxu0 %v3533
        %3574 = vmatprep.subr.bf16.mxu0 %v3536
        %3575 = vmatpush1.bf16.msra.mxu0 %v3535
        %3576 = vmatprep.subr.bf16.mxu0 %v3538
        %3577 = vmatpush1.bf16.msra.mxu0 %v3537
        %3578 = vmatprep.subr.bf16.mxu0 %v3540
        %3579 = vmatpush1.bf16.msra.mxu0 %v3539
        %3580 = vmatprep.subr.bf16.mxu0 %v3542
        %3581 = vmatpush1.bf16.msra.mxu0 %v3541
        %3582 = vmatprep.subr.bf16.mxu0 %v3544
        %3583 = vmatpush1.bf16.msra.mxu0 %v3543
        %3584 = vmatprep.subr.bf16.mxu0 %v3546
        %3585 = vmatpush1.bf16.msra.mxu0 %v3545
        %3586 = vmatprep.subr.bf16.mxu0 %v3548
        %3587 = vmatpush1.bf16.msra.mxu0 %v3547
        %3588 = vmatprep.subr.bf16.mxu0 0
        %3589 = vmatpush1.bf16.msra.mxu0 0
        %3590 = vmatprep.subr.bf16.mxu0 0
        %3591 = vmatpush1.bf16.msra.mxu0 0
        %3592 = vmatprep.subr.bf16.mxu0 0
        %3593 = vmatpush1.bf16.msra.mxu0 0
        %3594 = vmatprep.subr.bf16.mxu0 0
        %3595 = vmatpush1.bf16.msra.mxu0 0
        %3596 = vmatprep.subr.bf16.mxu0 0
        %3597 = vmatpush1.bf16.msra.mxu0 0
        %3598 = vmatprep.subr.bf16.mxu0 0
        %3599 = vmatpush1.bf16.msra.mxu0 0
        %3600 = vmatprep.subr.bf16.mxu0 0
        %3601 = vmatpush1.bf16.msra.mxu0 0
        %3602 = vmatprep.mubr.bf16.mxu0 %v3568
        %3603 = vmatmul.mubr.bf16.gmra.mrb[0].mxu0 %v3468
        %v3604 = vpop.f32.mrb[0].mxu0
        %v3605 = vadd.f32 0.0, %v3604
        %v3606 = vpop.f32.mrb[0].mxu0
        %v3607 = vadd.f32 0.0, %v3606
        %v3608 = vpop.f32.mrb[0].mxu0
        %v3609 = vpop.f32.mrb[0].mxu0
        %3610 = vdwg.mxu0
        %v3629 = vunpack.c.l.b16 %v3425
        %v3630 = vunpack.c.h.b16 %v3425
        %v3631 = vunpack.c.l.b16 %v3426
        %v3632 = vunpack.c.h.b16 %v3426
        %v3633 = vunpack.c.l.b16 %v3427
        %v3634 = vunpack.c.h.b16 %v3427
        %v3635 = vunpack.c.l.b16 %v3428
        %v3636 = vunpack.c.h.b16 %v3428
        %v3637 = vunpack.c.l.b16 %v3429
        %v3638 = vunpack.c.h.b16 %v3429
        %v3639 = vunpack.c.l.b16 %v3430
        %v3640 = vunpack.c.h.b16 %v3430
        %v3641 = vunpack.c.l.b16 %v3431
        %v3642 = vunpack.c.h.b16 %v3431
        %v3643 = vunpack.c.l.b16 %v3432
        %v3644 = vunpack.c.h.b16 %v3432
        %v3645 = vunpack.c.l.b16 %v3433
        %v3646 = vunpack.c.h.b16 %v3433
        %v3647 = vunpack.c.l.b16 %v3434
        %v3648 = vunpack.c.h.b16 %v3434
        %v3649 = vunpack.c.l.b16 %v3435
        %v3650 = vunpack.c.h.b16 %v3435
        %v3651 = vunpack.c.l.b16 %v3436
        %v3652 = vunpack.c.h.b16 %v3436
        %v3653 = vunpack.c.l.b16 %v3437
        %v3654 = vunpack.c.h.b16 %v3437
        %v3655 = vunpack.c.l.b16 %v3438
        %v3656 = vunpack.c.h.b16 %v3438
        %v3657 = vunpack.c.l.b16 %v3439
        %v3658 = vunpack.c.h.b16 %v3439
        %v3659 = vunpack.c.l.b16 %v3440
        %v3660 = vunpack.c.h.b16 %v3440
        %v3661 = vunpack.c.l.b16 %v3441
        %v3662 = vunpack.c.h.b16 %v3441
        %v3663 = vunpack.c.l.b16 %v3442
        %v3664 = vunpack.c.h.b16 %v3442
        %v3665 = vpack.c.b16 %v3631, %v3629
        %v3666 = vpack.c.b16 %v3632, %v3630
        %v3667 = vpack.c.b16 %v3635, %v3633
        %v3668 = vpack.c.b16 %v3636, %v3634
        %v3669 = vpack.c.b16 %v3639, %v3637
        %v3670 = vpack.c.b16 %v3640, %v3638
        %v3671 = vpack.c.b16 %v3643, %v3641
        %v3672 = vpack.c.b16 %v3644, %v3642
        %v3673 = vpack.c.b16 %v3647, %v3645
        %v3674 = vpack.c.b16 %v3648, %v3646
        %v3675 = vpack.c.b16 %v3651, %v3649
        %v3676 = vpack.c.b16 %v3652, %v3650
        %v3677 = vpack.c.b16 %v3655, %v3653
        %v3678 = vpack.c.b16 %v3656, %v3654
        %v3679 = vpack.c.b16 %v3659, %v3657
        %v3680 = vpack.c.b16 %v3660, %v3658
        %v3681 = vpack.c.b16 %v3663, %v3661
        %v3682 = vpack.c.b16 %v3664, %v3662
        %v3701 = vsel %vm1998, %v3424, 0
        %3703 = vmatprep.subr.bf16.mxu0 %v3666
        %3704 = vmatpush1.bf16.msra.mxu0 %v3665
        %3705 = vmatprep.subr.bf16.mxu0 %v3668
        %3706 = vmatpush1.bf16.msra.mxu0 %v3667
        %3707 = vmatprep.subr.bf16.mxu0 %v3670
        %3708 = vmatpush1.bf16.msra.mxu0 %v3669
        %3709 = vmatprep.subr.bf16.mxu0 %v3672
        %3710 = vmatpush1.bf16.msra.mxu0 %v3671
        %3711 = vmatprep.subr.bf16.mxu0 %v3674
        %3712 = vmatpush1.bf16.msra.mxu0 %v3673
        %3713 = vmatprep.subr.bf16.mxu0 %v3676
        %3714 = vmatpush1.bf16.msra.mxu0 %v3675
        %3715 = vmatprep.subr.bf16.mxu0 %v3678
        %3716 = vmatpush1.bf16.msra.mxu0 %v3677
        %3717 = vmatprep.subr.bf16.mxu0 %v3680
        %3718 = vmatpush1.bf16.msra.mxu0 %v3679
        %3719 = vmatprep.subr.bf16.mxu0 %v3682
        %3720 = vmatpush1.bf16.msra.mxu0 %v3681
        %3721 = vmatprep.subr.bf16.mxu0 0
        %3722 = vmatpush1.bf16.msra.mxu0 0
        %3723 = vmatprep.subr.bf16.mxu0 0
        %3724 = vmatpush1.bf16.msra.mxu0 0
        %3725 = vmatprep.subr.bf16.mxu0 0
        %3726 = vmatpush1.bf16.msra.mxu0 0
        %3727 = vmatprep.subr.bf16.mxu0 0
        %3728 = vmatpush1.bf16.msra.mxu0 0
        %3729 = vmatprep.subr.bf16.mxu0 0
        %3730 = vmatpush1.bf16.msra.mxu0 0
        %3731 = vmatprep.subr.bf16.mxu0 0
        %3732 = vmatpush1.bf16.msra.mxu0 0
        %3733 = vmatprep.subr.bf16.mxu0 0
        %3734 = vmatpush1.bf16.msra.mxu0 0
        %3735 = vmatprep.mubr.bf16.mxu0 %v3701
        %3736 = vmatmul.mubr.bf16.gmra.mrb[0].mxu0 %v3423
        %v3737 = vpop.f32.mrb[0].mxu0
        %v3738 = vadd.f32 %v3605, %v3737
        %v3739 = vpop.f32.mrb[0].mxu0
        %v3740 = vadd.f32 %v3607, %v3739
        %v3741 = vpop.f32.mrb[0].mxu0
        %v3742 = vpop.f32.mrb[0].mxu0
        %3743 = vdwg.mxu0
        %v3744 = vpack.c.bf16 0.0, %v3421
        %v3745 = vpack.c.bf16 0.0, %v3422
        %s3746 = scalar_lea.vmem %s9, 288
        %v3747 = vld [vmem:[%s3746] sm:$0xff]
        %v3748 = vld [vmem:[%s3746 + $0x8] sm:$0xff]
        %v3749 = vld [vmem:[%s3746 + $0x10] sm:$0xff]
        %v3750 = vld [vmem:[%s3746 + $0x18] sm:$0xff]
        %v3751 = vld [vmem:[%s3746 + $0x20] sm:$0xff]
        %v3752 = vld [vmem:[%s3746 + $0x28] sm:$0xff]
        %v3753 = vld [vmem:[%s3746 + $0x30] sm:$0xff]
        %v3754 = vld [vmem:[%s3746 + $0x38] sm:$0xff]
        %v3755 = vld [vmem:[%s3746 + $0x40] sm:$0xff]
        %v3756 = vld [vmem:[%s3746 + $0x48] sm:$0xff]
        %v3757 = vld [vmem:[%s3746 + $0x50] sm:$0xff]
        %v3758 = vld [vmem:[%s3746 + $0x58] sm:$0xff]
        %v3759 = vld [vmem:[%s3746 + $0x60] sm:$0xff]
        %v3760 = vld [vmem:[%s3746 + $0x68] sm:$0xff]
        %v3761 = vld [vmem:[%s3746 + $0x70] sm:$0xff]
        %v3762 = vld [vmem:[%s3746 + $0x78] sm:$0xff]
        %v3763 = vld [vmem:[%s3746 + $0x80] sm:$0xff]
        %v3764 = vld [vmem:[%s3746 + $0x88] sm:$0xff]
        %v3767 = vrot.slane %v3744, 1
        %v3768 = vrot.slane %v3745, 1
        %v3788 = vunpack.c.l.b16 %v3747
        %v3789 = vunpack.c.h.b16 %v3747
        %v3790 = vunpack.c.l.b16 %v3748
        %v3791 = vunpack.c.h.b16 %v3748
        %v3792 = vunpack.c.l.b16 %v3749
        %v3793 = vunpack.c.h.b16 %v3749
        %v3794 = vunpack.c.l.b16 %v3750
        %v3795 = vunpack.c.h.b16 %v3750
        %v3796 = vunpack.c.l.b16 %v3751
        %v3797 = vunpack.c.h.b16 %v3751
        %v3798 = vunpack.c.l.b16 %v3752
        %v3799 = vunpack.c.h.b16 %v3752
        %v3800 = vunpack.c.l.b16 %v3753
        %v3801 = vunpack.c.h.b16 %v3753
        %v3802 = vunpack.c.l.b16 %v3754
        %v3803 = vunpack.c.h.b16 %v3754
        %v3804 = vunpack.c.l.b16 %v3755
        %v3805 = vunpack.c.h.b16 %v3755
        %v3806 = vunpack.c.l.b16 %v3756
        %v3807 = vunpack.c.h.b16 %v3756
        %v3808 = vunpack.c.l.b16 %v3757
        %v3809 = vunpack.c.h.b16 %v3757
        %v3810 = vunpack.c.l.b16 %v3758
        %v3811 = vunpack.c.h.b16 %v3758
        %v3812 = vunpack.c.l.b16 %v3759
        %v3813 = vunpack.c.h.b16 %v3759
        %v3814 = vunpack.c.l.b16 %v3760
        %v3815 = vunpack.c.h.b16 %v3760
        %v3816 = vunpack.c.l.b16 %v3761
        %v3817 = vunpack.c.h.b16 %v3761
        %v3818 = vunpack.c.l.b16 %v3762
        %v3819 = vunpack.c.h.b16 %v3762
        %v3820 = vunpack.c.l.b16 %v3763
        %v3821 = vunpack.c.h.b16 %v3763
        %v3822 = vunpack.c.l.b16 %v3764
        %v3823 = vunpack.c.h.b16 %v3764
        %v3824 = vpack.c.b16 %v3790, %v3788
        %v3825 = vpack.c.b16 %v3791, %v3789
        %v3826 = vpack.c.b16 %v3794, %v3792
        %v3827 = vpack.c.b16 %v3795, %v3793
        %v3828 = vpack.c.b16 %v3798, %v3796
        %v3829 = vpack.c.b16 %v3799, %v3797
        %v3830 = vpack.c.b16 %v3802, %v3800
        %v3831 = vpack.c.b16 %v3803, %v3801
        %v3832 = vpack.c.b16 %v3806, %v3804
        %v3833 = vpack.c.b16 %v3807, %v3805
        %v3834 = vpack.c.b16 %v3810, %v3808
        %v3835 = vpack.c.b16 %v3811, %v3809
        %v3836 = vpack.c.b16 %v3814, %v3812
        %v3837 = vpack.c.b16 %v3815, %v3813
        %v3838 = vpack.c.b16 %v3818, %v3816
        %v3839 = vpack.c.b16 %v3819, %v3817
        %v3840 = vpack.c.b16 %v3822, %v3820
        %v3841 = vpack.c.b16 %v3823, %v3821
        %v3861 = vsel %vm1998, %v3768, 0
        %3863 = vmatprep.subr.bf16.mxu0 %v3825
        %3864 = vmatpush1.bf16.msra.mxu0 %v3824
        %3865 = vmatprep.subr.bf16.mxu0 %v3827
        %3866 = vmatpush1.bf16.msra.mxu0 %v3826
        %3867 = vmatprep.subr.bf16.mxu0 %v3829
        %3868 = vmatpush1.bf16.msra.mxu0 %v3828
        %3869 = vmatprep.subr.bf16.mxu0 %v3831
        %3870 = vmatpush1.bf16.msra.mxu0 %v3830
        %3871 = vmatprep.subr.bf16.mxu0 %v3833
        %3872 = vmatpush1.bf16.msra.mxu0 %v3832
        %3873 = vmatprep.subr.bf16.mxu0 %v3835
        %3874 = vmatpush1.bf16.msra.mxu0 %v3834
        %3875 = vmatprep.subr.bf16.mxu0 %v3837
        %3876 = vmatpush1.bf16.msra.mxu0 %v3836
        %3877 = vmatprep.subr.bf16.mxu0 %v3839
        %3878 = vmatpush1.bf16.msra.mxu0 %v3838
        %3879 = vmatprep.subr.bf16.mxu0 %v3841
        %3880 = vmatpush1.bf16.msra.mxu0 %v3840
        %3881 = vmatprep.subr.bf16.mxu0 0
        %3882 = vmatpush1.bf16.msra.mxu0 0
        %3883 = vmatprep.subr.bf16.mxu0 0
        %3884 = vmatpush1.bf16.msra.mxu0 0
        %3885 = vmatprep.subr.bf16.mxu0 0
        %3886 = vmatpush1.bf16.msra.mxu0 0
        %3887 = vmatprep.subr.bf16.mxu0 0
        %3888 = vmatpush1.bf16.msra.mxu0 0
        %3889 = vmatprep.subr.bf16.mxu0 0
        %3890 = vmatpush1.bf16.msra.mxu0 0
        %3891 = vmatprep.subr.bf16.mxu0 0
        %3892 = vmatpush1.bf16.msra.mxu0 0
        %3893 = vmatprep.subr.bf16.mxu0 0
        %3894 = vmatpush1.bf16.msra.mxu0 0
        %3895 = vmatprep.mubr.bf16.mxu0 %v3861
        %3896 = vmatmul.mubr.bf16.gmra.mrb[0].mxu0 %v3767
        %v3897 = vpop.f32.mrb[0].mxu0
        %v3898 = vadd.f32 0.0, %v3897
        %v3899 = vpop.f32.mrb[0].mxu0
        %v3900 = vadd.f32 0.0, %v3899
        %v3901 = vpop.f32.mrb[0].mxu0
        %v3902 = vpop.f32.mrb[0].mxu0
        %3903 = vdwg.mxu0
        %v3904 = vadd.f32 %v3738, %v3898
        %v3905 = vadd.f32 %v3740, %v3900
        %v3906 = vld [vmem:[%s10] sm:$0x3]
        %v3908 = vlaneseq
        %v3909 = vshrl.u32 %v3908, 7
        %v3910 = vsub.s32 0, %v3909
        %v3911 = vrot.slane %v3906, %v3910
        %v3912 = vlaneseq
        %v3913 = vshrl.u32 %v3912, 7
        %v3914 = vsub.s32 1, %v3913
        %v3915 = vrot.slane %v3906, %v3914
        %v3918 = vadd.f32 %v3904, %v3911
        %v3919 = vadd.f32 %v3905, %v3915
        %v3920 = vmax.f32 %v3918, 0.0
        %v3921 = vmax.f32 %v3919, 0.0
        %3924 = vrot.lane.b32.xlu0 %v3920, 64
        %v3925 = vpop.permute.xlu0 %3924
        %3926 = vrot.lane.b32.xlu0 %v3921, 64
        %v3927 = vpop.permute.xlu0 %3926
        %v3928 = vsel %vm2016, %v3925, %v3927
        %v3931 = vsel %vm2016, 0.0, %v3925
        %v3932 = vsel %vm2004, %v3927, 0.0
        %v3935 = vrot.slane %v3931, 6
        %v3936 = vrot.slane %v3928, 6
        %v3937 = vrot.slane %v3932, 6
        %v3941 = vsel %vm1888, 0.0, %v3935
        %v3942 = vsel %vm1888, 0.0, %v3936
        %v3943 = vsel %vm1888, 0.0, %v3937
        %v3944 = vsel %vm527, %v3935, 0.0
        %v3945 = vsel %vm527, %v3936, 0.0
        %v3946 = vsel %vm527, %v3937, 0.0
        %v3950 = vrot.slane %v3941, 1
        %v3951 = vrot.slane %v3942, 1
        %v3952 = vrot.slane %v3943, 1
        %v3956 = vrot.slane %v3941, 2
        %v3957 = vrot.slane %v3942, 2
        %v3958 = vrot.slane %v3943, 2
        %v3962 = vrot.slane %v3941, 3
        %v3963 = vrot.slane %v3942, 3
        %v3964 = vrot.slane %v3943, 3
        %v3968 = vsel %vm527, %v3941, %v3950
        %v3969 = vsel %vm527, %v3942, %v3951
        %v3970 = vsel %vm527, %v3943, %v3952
        %v3971 = vsel %vm1888, %v3968, %v3956
        %v3972 = vsel %vm1888, %v3969, %v3957
        %v3973 = vsel %vm1888, %v3970, %v3958
        %v3974 = vsel %vm1891, %v3971, %v3962
        %v3975 = vsel %vm1891, %v3972, %v3963
        %v3976 = vsel %vm1891, %v3973, %v3964
        %v3977 = vpack.c.bf16 %v3974, %v3974
        %v3978 = vpack.c.bf16 %v3975, %v3975
        %v3979 = vpack.c.bf16 %v3976, %v3976
        %v3980 = vld [vmem:[%s11] sm:$0xff]
        %v3981 = vld [vmem:[%s11 + $0x8] sm:$0xff]
        %v3982 = vld [vmem:[%s11 + $0x10] sm:$0xff]
        %v3983 = vld [vmem:[%s11 + $0x18] sm:$0xff]
        %v3984 = vld [vmem:[%s11 + $0x20] sm:$0xff]
        %v3985 = vld [vmem:[%s11 + $0x28] sm:$0xff]
        %v3986 = vld [vmem:[%s11 + $0x30] sm:$0xff]
        %v3987 = vld [vmem:[%s11 + $0x38] sm:$0xff]
        %v3988 = vld [vmem:[%s11 + $0x40] sm:$0xff]
        %v3989 = vld [vmem:[%s11 + $0x48] sm:$0xff]
        %v3990 = vld [vmem:[%s11 + $0x50] sm:$0xff]
        %v3991 = vld [vmem:[%s11 + $0x58] sm:$0xff]
        %v3992 = vld [vmem:[%s11 + $0x60] sm:$0xff]
        %v3993 = vld [vmem:[%s11 + $0x68] sm:$0xff]
        %v3994 = vld [vmem:[%s11 + $0x70] sm:$0xff]
        %v3995 = vld [vmem:[%s11 + $0x78] sm:$0xff]
        %v3996 = vld [vmem:[%s11 + $0x80] sm:$0xff]
        %v3997 = vld [vmem:[%s11 + $0x88] sm:$0xff]
        %v3998 = vld [vmem:[%s11 + $0x90] sm:$0xff]
        %v3999 = vld [vmem:[%s11 + $0x98] sm:$0xff]
        %v4000 = vld [vmem:[%s11 + $0xa0] sm:$0xff]
        %v4001 = vld [vmem:[%s11 + $0xa8] sm:$0xff]
        %v4002 = vld [vmem:[%s11 + $0xb0] sm:$0xff]
        %v4003 = vld [vmem:[%s11 + $0xb8] sm:$0xff]
        %v4004 = vld [vmem:[%s11 + $0xc0] sm:$0xff]
        %v4005 = vld [vmem:[%s11 + $0xc8] sm:$0xff]
        %v4006 = vld [vmem:[%s11 + $0xd0] sm:$0xff]
        %v4007 = vld [vmem:[%s11 + $0xd8] sm:$0xff]
        %v4008 = vld [vmem:[%s11 + $0xe0] sm:$0xff]
        %v4009 = vld [vmem:[%s11 + $0xe8] sm:$0xff]
        %v4010 = vld [vmem:[%s11 + $0xf0] sm:$0xff]
        %v4011 = vld [vmem:[%s11 + $0xf8] sm:$0xff]
        %v4012 = vld [vmem:[%s11 + $0x100] sm:$0xff]
        %v4013 = vld [vmem:[%s11 + $0x108] sm:$0xff]
        %v4014 = vld [vmem:[%s11 + $0x110] sm:$0xff]
        %v4015 = vld [vmem:[%s11 + $0x118] sm:$0xff]
        %v4016 = vld [vmem:[%s11 + $0x120] sm:$0xff]
        %v4017 = vld [vmem:[%s11 + $0x128] sm:$0xff]
        %v4018 = vld [vmem:[%s11 + $0x130] sm:$0xff]
        %v4019 = vld [vmem:[%s11 + $0x138] sm:$0xff]
        %v4020 = vld [vmem:[%s11 + $0x140] sm:$0xff]
        %v4021 = vld [vmem:[%s11 + $0x148] sm:$0xff]
        %v4022 = vld [vmem:[%s11 + $0x150] sm:$0xff]
        %v4023 = vld [vmem:[%s11 + $0x158] sm:$0xff]
        %v4024 = vrot.slane %v3941, 4
        %v4025 = vrot.slane %v3942, 4
        %v4026 = vrot.slane %v3943, 4
        %v4030 = vsel %vm527, %v3950, %v3956
        %v4031 = vsel %vm527, %v3951, %v3957
        %v4032 = vsel %vm527, %v3952, %v3958
        %v4033 = vsel %vm1888, %v4030, %v3962
        %v4034 = vsel %vm1888, %v4031, %v3963
        %v4035 = vsel %vm1888, %v4032, %v3964
        %v4036 = vsel %vm1891, %v4033, %v4024
        %v4037 = vsel %vm1891, %v4034, %v4025
        %v4038 = vsel %vm1891, %v4035, %v4026
        %v4039 = vpack.c.bf16 %v4036, %v4036
        %v4040 = vpack.c.bf16 %v4037, %v4037
        %v4041 = vpack.c.bf16 %v4038, %v4038
        %s4042 = scalar_lea.vmem %s11, 352
        %v4043 = vld [vmem:[%s4042] sm:$0xff]
        %v4044 = vld [vmem:[%s4042 + $0x8] sm:$0xff]
        %v4045 = vld [vmem:[%s4042 + $0x10] sm:$0xff]
        %v4046 = vld [vmem:[%s4042 + $0x18] sm:$0xff]
        %v4047 = vld [vmem:[%s4042 + $0x20] sm:$0xff]
        %v4048 = vld [vmem:[%s4042 + $0x28] sm:$0xff]
        %v4049 = vld [vmem:[%s4042 + $0x30] sm:$0xff]
        %v4050 = vld [vmem:[%s4042 + $0x38] sm:$0xff]
        %v4051 = vld [vmem:[%s4042 + $0x40] sm:$0xff]
        %v4052 = vld [vmem:[%s4042 + $0x48] sm:$0xff]
        %v4053 = vld [vmem:[%s4042 + $0x50] sm:$0xff]
        %v4054 = vld [vmem:[%s4042 + $0x58] sm:$0xff]
        %v4055 = vld [vmem:[%s4042 + $0x60] sm:$0xff]
        %v4056 = vld [vmem:[%s4042 + $0x68] sm:$0xff]
        %v4057 = vld [vmem:[%s4042 + $0x70] sm:$0xff]
        %v4058 = vld [vmem:[%s4042 + $0x78] sm:$0xff]
        %v4059 = vld [vmem:[%s4042 + $0x80] sm:$0xff]
        %v4060 = vld [vmem:[%s4042 + $0x88] sm:$0xff]
        %v4061 = vld [vmem:[%s4042 + $0x90] sm:$0xff]
        %v4062 = vld [vmem:[%s4042 + $0x98] sm:$0xff]
        %v4063 = vld [vmem:[%s4042 + $0xa0] sm:$0xff]
        %v4064 = vld [vmem:[%s4042 + $0xa8] sm:$0xff]
        %v4065 = vld [vmem:[%s4042 + $0xb0] sm:$0xff]
        %v4066 = vld [vmem:[%s4042 + $0xb8] sm:$0xff]
        %v4067 = vld [vmem:[%s4042 + $0xc0] sm:$0xff]
        %v4068 = vld [vmem:[%s4042 + $0xc8] sm:$0xff]
        %v4069 = vld [vmem:[%s4042 + $0xd0] sm:$0xff]
        %v4070 = vld [vmem:[%s4042 + $0xd8] sm:$0xff]
        %v4071 = vld [vmem:[%s4042 + $0xe0] sm:$0xff]
        %v4072 = vld [vmem:[%s4042 + $0xe8] sm:$0xff]
        %v4073 = vld [vmem:[%s4042 + $0xf0] sm:$0xff]
        %v4074 = vld [vmem:[%s4042 + $0xf8] sm:$0xff]
        %v4075 = vld [vmem:[%s4042 + $0x100] sm:$0xff]
        %v4076 = vld [vmem:[%s4042 + $0x108] sm:$0xff]
        %v4077 = vld [vmem:[%s4042 + $0x110] sm:$0xff]
        %v4078 = vld [vmem:[%s4042 + $0x118] sm:$0xff]
        %v4079 = vld [vmem:[%s4042 + $0x120] sm:$0xff]
        %v4080 = vld [vmem:[%s4042 + $0x128] sm:$0xff]
        %v4081 = vld [vmem:[%s4042 + $0x130] sm:$0xff]
        %v4082 = vld [vmem:[%s4042 + $0x138] sm:$0xff]
        %v4083 = vld [vmem:[%s4042 + $0x140] sm:$0xff]
        %v4084 = vld [vmem:[%s4042 + $0x148] sm:$0xff]
        %v4085 = vld [vmem:[%s4042 + $0x150] sm:$0xff]
        %v4086 = vld [vmem:[%s4042 + $0x158] sm:$0xff]
        %v4131 = vunpack.c.l.b16 %v4043
        %v4132 = vunpack.c.h.b16 %v4043
        %v4133 = vunpack.c.l.b16 %v4044
        %v4134 = vunpack.c.h.b16 %v4044
        %v4135 = vunpack.c.l.b16 %v4045
        %v4136 = vunpack.c.h.b16 %v4045
        %v4137 = vunpack.c.l.b16 %v4046
        %v4138 = vunpack.c.h.b16 %v4046
        %v4139 = vunpack.c.l.b16 %v4047
        %v4140 = vunpack.c.h.b16 %v4047
        %v4141 = vunpack.c.l.b16 %v4048
        %v4142 = vunpack.c.h.b16 %v4048
        %v4143 = vunpack.c.l.b16 %v4049
        %v4144 = vunpack.c.h.b16 %v4049
        %v4145 = vunpack.c.l.b16 %v4050
        %v4146 = vunpack.c.h.b16 %v4050
        %v4147 = vunpack.c.l.b16 %v4051
        %v4148 = vunpack.c.h.b16 %v4051
        %v4149 = vunpack.c.l.b16 %v4052
        %v4150 = vunpack.c.h.b16 %v4052
        %v4151 = vunpack.c.l.b16 %v4053
        %v4152 = vunpack.c.h.b16 %v4053
        %v4153 = vunpack.c.l.b16 %v4054
        %v4154 = vunpack.c.h.b16 %v4054
        %v4155 = vunpack.c.l.b16 %v4055
        %v4156 = vunpack.c.h.b16 %v4055
        %v4157 = vunpack.c.l.b16 %v4056
        %v4158 = vunpack.c.h.b16 %v4056
        %v4159 = vunpack.c.l.b16 %v4057
        %v4160 = vunpack.c.h.b16 %v4057
        %v4161 = vunpack.c.l.b16 %v4058
        %v4162 = vunpack.c.h.b16 %v4058
        %v4163 = vunpack.c.l.b16 %v4059
        %v4164 = vunpack.c.h.b16 %v4059
        %v4165 = vunpack.c.l.b16 %v4060
        %v4166 = vunpack.c.h.b16 %v4060
        %v4167 = vunpack.c.l.b16 %v4061
        %v4168 = vunpack.c.h.b16 %v4061
        %v4169 = vunpack.c.l.b16 %v4062
        %v4170 = vunpack.c.h.b16 %v4062
        %v4171 = vunpack.c.l.b16 %v4063
        %v4172 = vunpack.c.h.b16 %v4063
        %v4173 = vunpack.c.l.b16 %v4064
        %v4174 = vunpack.c.h.b16 %v4064
        %v4175 = vunpack.c.l.b16 %v4065
        %v4176 = vunpack.c.h.b16 %v4065
        %v4177 = vunpack.c.l.b16 %v4066
        %v4178 = vunpack.c.h.b16 %v4066
        %v4179 = vunpack.c.l.b16 %v4067
        %v4180 = vunpack.c.h.b16 %v4067
        %v4181 = vunpack.c.l.b16 %v4068
        %v4182 = vunpack.c.h.b16 %v4068
        %v4183 = vunpack.c.l.b16 %v4069
        %v4184 = vunpack.c.h.b16 %v4069
        %v4185 = vunpack.c.l.b16 %v4070
        %v4186 = vunpack.c.h.b16 %v4070
        %v4187 = vunpack.c.l.b16 %v4071
        %v4188 = vunpack.c.h.b16 %v4071
        %v4189 = vunpack.c.l.b16 %v4072
        %v4190 = vunpack.c.h.b16 %v4072
        %v4191 = vunpack.c.l.b16 %v4073
        %v4192 = vunpack.c.h.b16 %v4073
        %v4193 = vunpack.c.l.b16 %v4074
        %v4194 = vunpack.c.h.b16 %v4074
        %v4195 = vunpack.c.l.b16 %v4075
        %v4196 = vunpack.c.h.b16 %v4075
        %v4197 = vunpack.c.l.b16 %v4076
        %v4198 = vunpack.c.h.b16 %v4076
        %v4199 = vunpack.c.l.b16 %v4077
        %v4200 = vunpack.c.h.b16 %v4077
        %v4201 = vunpack.c.l.b16 %v4078
        %v4202 = vunpack.c.h.b16 %v4078
        %v4203 = vunpack.c.l.b16 %v4079
        %v4204 = vunpack.c.h.b16 %v4079
        %v4205 = vunpack.c.l.b16 %v4080
        %v4206 = vunpack.c.h.b16 %v4080
        %v4207 = vunpack.c.l.b16 %v4081
        %v4208 = vunpack.c.h.b16 %v4081
        %v4209 = vunpack.c.l.b16 %v4082
        %v4210 = vunpack.c.h.b16 %v4082
        %v4211 = vunpack.c.l.b16 %v4083
        %v4212 = vunpack.c.h.b16 %v4083
        %v4213 = vunpack.c.l.b16 %v4084
        %v4214 = vunpack.c.h.b16 %v4084
        %v4215 = vunpack.c.l.b16 %v4085
        %v4216 = vunpack.c.h.b16 %v4085
        %v4217 = vunpack.c.l.b16 %v4086
        %v4218 = vunpack.c.h.b16 %v4086
        %v4219 = vpack.c.b16 %v4133, %v4131
        %v4220 = vpack.c.b16 %v4134, %v4132
        %v4221 = vpack.c.b16 %v4137, %v4135
        %v4222 = vpack.c.b16 %v4138, %v4136
        %v4223 = vpack.c.b16 %v4141, %v4139
        %v4224 = vpack.c.b16 %v4142, %v4140
        %v4225 = vpack.c.b16 %v4145, %v4143
        %v4226 = vpack.c.b16 %v4146, %v4144
        %v4227 = vpack.c.b16 %v4149, %v4147
        %v4228 = vpack.c.b16 %v4150, %v4148
        %v4229 = vpack.c.b16 %v4153, %v4151
        %v4230 = vpack.c.b16 %v4154, %v4152
        %v4231 = vpack.c.b16 %v4157, %v4155
        %v4232 = vpack.c.b16 %v4158, %v4156
        %v4233 = vpack.c.b16 %v4161, %v4159
        %v4234 = vpack.c.b16 %v4162, %v4160
        %v4235 = vpack.c.b16 %v4165, %v4163
        %v4236 = vpack.c.b16 %v4166, %v4164
        %v4237 = vpack.c.b16 %v4169, %v4167
        %v4238 = vpack.c.b16 %v4170, %v4168
        %v4239 = vpack.c.b16 %v4173, %v4171
        %v4240 = vpack.c.b16 %v4174, %v4172
        %v4241 = vpack.c.b16 %v4177, %v4175
        %v4242 = vpack.c.b16 %v4178, %v4176
        %v4243 = vpack.c.b16 %v4181, %v4179
        %v4244 = vpack.c.b16 %v4182, %v4180
        %v4245 = vpack.c.b16 %v4185, %v4183
        %v4246 = vpack.c.b16 %v4186, %v4184
        %v4247 = vpack.c.b16 %v4189, %v4187
        %v4248 = vpack.c.b16 %v4190, %v4188
        %v4249 = vpack.c.b16 %v4193, %v4191
        %v4250 = vpack.c.b16 %v4194, %v4192
        %v4251 = vpack.c.b16 %v4197, %v4195
        %v4252 = vpack.c.b16 %v4198, %v4196
        %v4253 = vpack.c.b16 %v4201, %v4199
        %v4254 = vpack.c.b16 %v4202, %v4200
        %v4255 = vpack.c.b16 %v4205, %v4203
        %v4256 = vpack.c.b16 %v4206, %v4204
        %v4257 = vpack.c.b16 %v4209, %v4207
        %v4258 = vpack.c.b16 %v4210, %v4208
        %v4259 = vpack.c.b16 %v4213, %v4211
        %v4260 = vpack.c.b16 %v4214, %v4212
        %v4261 = vpack.c.b16 %v4217, %v4215
        %v4262 = vpack.c.b16 %v4218, %v4216
        %v4308 = vsel %vm2028, %v4041, 0
        %4310 = vmatprep.subr.bf16.mxu0 %v4220
        %4311 = vmatpush1.bf16.msra.mxu0 %v4219
        %4312 = vmatprep.subr.bf16.mxu0 %v4222
        %4313 = vmatpush1.bf16.msra.mxu0 %v4221
        %4314 = vmatprep.subr.bf16.mxu0 %v4224
        %4315 = vmatpush1.bf16.msra.mxu0 %v4223
        %4316 = vmatprep.subr.bf16.mxu0 %v4226
        %4317 = vmatpush1.bf16.msra.mxu0 %v4225
        %4318 = vmatprep.subr.bf16.mxu0 %v4228
        %4319 = vmatpush1.bf16.msra.mxu0 %v4227
        %4320 = vmatprep.subr.bf16.mxu0 %v4230
        %4321 = vmatpush1.bf16.msra.mxu0 %v4229
        %4322 = vmatprep.subr.bf16.mxu0 %v4232
        %4323 = vmatpush1.bf16.msra.mxu0 %v4231
        %4324 = vmatprep.subr.bf16.mxu0 %v4234
        %4325 = vmatpush1.bf16.msra.mxu0 %v4233
        %4326 = vmatprep.subr.bf16.mxu0 %v4236
        %4327 = vmatpush1.bf16.msra.mxu0 %v4235
        %4328 = vmatprep.subr.bf16.mxu0 %v4238
        %4329 = vmatpush1.bf16.msra.mxu0 %v4237
        %4330 = vmatprep.subr.bf16.mxu0 %v4240
        %4331 = vmatpush1.bf16.msra.mxu0 %v4239
        %4332 = vmatprep.subr.bf16.mxu0 %v4242
        %4333 = vmatpush1.bf16.msra.mxu0 %v4241
        %4334 = vmatprep.subr.bf16.mxu0 %v4244
        %4335 = vmatpush1.bf16.msra.mxu0 %v4243
        %4336 = vmatprep.subr.bf16.mxu0 %v4246
        %4337 = vmatpush1.bf16.msra.mxu0 %v4245
        %4338 = vmatprep.subr.bf16.mxu0 %v4248
        %4339 = vmatpush1.bf16.msra.mxu0 %v4247
        %4340 = vmatprep.subr.bf16.mxu0 %v4250
        %4341 = vmatpush1.bf16.msra.mxu0 %v4249
        %4342 = vmatprep.mubr.bf16.mxu0 %v4040
        %4343 = vmatmul.mubr.bf16.gmra.mrb[0].mxu0 %v4039
        %v4344 = vpop.f32.mrb[0].mxu0
        %v4345 = vadd.f32 0.0, %v4344
        %v4346 = vpop.f32.mrb[0].mxu0
        %v4347 = vadd.f32 0.0, %v4346
        %v4348 = vpop.f32.mrb[0].mxu0
        %v4349 = vpop.f32.mrb[0].mxu0
        %4350 = vdwg.mxu0
        %4351 = vmatprep.subr.bf16.mxu0 %v4252
        %4352 = vmatpush1.bf16.msra.mxu0 %v4251
        %4353 = vmatprep.subr.bf16.mxu0 %v4254
        %4354 = vmatpush1.bf16.msra.mxu0 %v4253
        %4355 = vmatprep.subr.bf16.mxu0 %v4256
        %4356 = vmatpush1.bf16.msra.mxu0 %v4255
        %4357 = vmatprep.subr.bf16.mxu0 %v4258
        %4358 = vmatpush1.bf16.msra.mxu0 %v4257
        %4359 = vmatprep.subr.bf16.mxu0 %v4260
        %4360 = vmatpush1.bf16.msra.mxu0 %v4259
        %4361 = vmatprep.subr.bf16.mxu0 %v4262
        %4362 = vmatpush1.bf16.msra.mxu0 %v4261
        %4363 = vmatprep.subr.bf16.mxu0 0
        %4364 = vmatpush1.bf16.msra.mxu0 0
        %4365 = vmatprep.subr.bf16.mxu0 0
        %4366 = vmatpush1.bf16.msra.mxu0 0
        %4367 = vmatprep.subr.bf16.mxu0 0
        %4368 = vmatpush1.bf16.msra.mxu0 0
        %4369 = vmatprep.subr.bf16.mxu0 0
        %4370 = vmatpush1.bf16.msra.mxu0 0
        %4371 = vmatprep.subr.bf16.mxu0 0
        %4372 = vmatpush1.bf16.msra.mxu0 0
        %4373 = vmatprep.subr.bf16.mxu0 0
        %4374 = vmatpush1.bf16.msra.mxu0 0
        %4375 = vmatprep.subr.bf16.mxu0 0
        %4376 = vmatpush1.bf16.msra.mxu0 0
        %4377 = vmatprep.subr.bf16.mxu0 0
        %4378 = vmatpush1.bf16.msra.mxu0 0
        %4379 = vmatprep.subr.bf16.mxu0 0
        %4380 = vmatpush1.bf16.msra.mxu0 0
        %4381 = vmatprep.subr.bf16.mxu0 0
        %4382 = vmatpush1.bf16.msra.mxu0 0
        %4383 = vmatprep.mubr.bf16.mxu0 0
        %4384 = vmatmul.mubr.bf16.gmra.mrb[0].mxu0 %v4308
        %v4385 = vpop.f32.mrb[0].mxu0
        %v4386 = vadd.f32 %v4345, %v4385
        %v4387 = vpop.f32.mrb[0].mxu0
        %v4388 = vadd.f32 %v4347, %v4387
        %v4389 = vpop.f32.mrb[0].mxu0
        %v4390 = vpop.f32.mrb[0].mxu0
        %4391 = vdwg.mxu0
        %v4436 = vunpack.c.l.b16 %v3980
        %v4437 = vunpack.c.h.b16 %v3980
        %v4438 = vunpack.c.l.b16 %v3981
        %v4439 = vunpack.c.h.b16 %v3981
        %v4440 = vunpack.c.l.b16 %v3982
        %v4441 = vunpack.c.h.b16 %v3982
        %v4442 = vunpack.c.l.b16 %v3983
        %v4443 = vunpack.c.h.b16 %v3983
        %v4444 = vunpack.c.l.b16 %v3984
        %v4445 = vunpack.c.h.b16 %v3984
        %v4446 = vunpack.c.l.b16 %v3985
        %v4447 = vunpack.c.h.b16 %v3985
        %v4448 = vunpack.c.l.b16 %v3986
        %v4449 = vunpack.c.h.b16 %v3986
        %v4450 = vunpack.c.l.b16 %v3987
        %v4451 = vunpack.c.h.b16 %v3987
        %v4452 = vunpack.c.l.b16 %v3988
        %v4453 = vunpack.c.h.b16 %v3988
        %v4454 = vunpack.c.l.b16 %v3989
        %v4455 = vunpack.c.h.b16 %v3989
        %v4456 = vunpack.c.l.b16 %v3990
        %v4457 = vunpack.c.h.b16 %v3990
        %v4458 = vunpack.c.l.b16 %v3991
        %v4459 = vunpack.c.h.b16 %v3991
        %v4460 = vunpack.c.l.b16 %v3992
        %v4461 = vunpack.c.h.b16 %v3992
        %v4462 = vunpack.c.l.b16 %v3993
        %v4463 = vunpack.c.h.b16 %v3993
        %v4464 = vunpack.c.l.b16 %v3994
        %v4465 = vunpack.c.h.b16 %v3994
        %v4466 = vunpack.c.l.b16 %v3995
        %v4467 = vunpack.c.h.b16 %v3995
        %v4468 = vunpack.c.l.b16 %v3996
        %v4469 = vunpack.c.h.b16 %v3996
        %v4470 = vunpack.c.l.b16 %v3997
        %v4471 = vunpack.c.h.b16 %v3997
        %v4472 = vunpack.c.l.b16 %v3998
        %v4473 = vunpack.c.h.b16 %v3998
        %v4474 = vunpack.c.l.b16 %v3999
        %v4475 = vunpack.c.h.b16 %v3999
        %v4476 = vunpack.c.l.b16 %v4000
        %v4477 = vunpack.c.h.b16 %v4000
        %v4478 = vunpack.c.l.b16 %v4001
        %v4479 = vunpack.c.h.b16 %v4001
        %v4480 = vunpack.c.l.b16 %v4002
        %v4481 = vunpack.c.h.b16 %v4002
        %v4482 = vunpack.c.l.b16 %v4003
        %v4483 = vunpack.c.h.b16 %v4003
        %v4484 = vunpack.c.l.b16 %v4004
        %v4485 = vunpack.c.h.b16 %v4004
        %v4486 = vunpack.c.l.b16 %v4005
        %v4487 = vunpack.c.h.b16 %v4005
        %v4488 = vunpack.c.l.b16 %v4006
        %v4489 = vunpack.c.h.b16 %v4006
        %v4490 = vunpack.c.l.b16 %v4007
        %v4491 = vunpack.c.h.b16 %v4007
        %v4492 = vunpack.c.l.b16 %v4008
        %v4493 = vunpack.c.h.b16 %v4008
        %v4494 = vunpack.c.l.b16 %v4009
        %v4495 = vunpack.c.h.b16 %v4009
        %v4496 = vunpack.c.l.b16 %v4010
        %v4497 = vunpack.c.h.b16 %v4010
        %v4498 = vunpack.c.l.b16 %v4011
        %v4499 = vunpack.c.h.b16 %v4011
        %v4500 = vunpack.c.l.b16 %v4012
        %v4501 = vunpack.c.h.b16 %v4012
        %v4502 = vunpack.c.l.b16 %v4013
        %v4503 = vunpack.c.h.b16 %v4013
        %v4504 = vunpack.c.l.b16 %v4014
        %v4505 = vunpack.c.h.b16 %v4014
        %v4506 = vunpack.c.l.b16 %v4015
        %v4507 = vunpack.c.h.b16 %v4015
        %v4508 = vunpack.c.l.b16 %v4016
        %v4509 = vunpack.c.h.b16 %v4016
        %v4510 = vunpack.c.l.b16 %v4017
        %v4511 = vunpack.c.h.b16 %v4017
        %v4512 = vunpack.c.l.b16 %v4018
        %v4513 = vunpack.c.h.b16 %v4018
        %v4514 = vunpack.c.l.b16 %v4019
        %v4515 = vunpack.c.h.b16 %v4019
        %v4516 = vunpack.c.l.b16 %v4020
        %v4517 = vunpack.c.h.b16 %v4020
        %v4518 = vunpack.c.l.b16 %v4021
        %v4519 = vunpack.c.h.b16 %v4021
        %v4520 = vunpack.c.l.b16 %v4022
        %v4521 = vunpack.c.h.b16 %v4022
        %v4522 = vunpack.c.l.b16 %v4023
        %v4523 = vunpack.c.h.b16 %v4023
        %v4524 = vpack.c.b16 %v4438, %v4436
        %v4525 = vpack.c.b16 %v4439, %v4437
        %v4526 = vpack.c.b16 %v4442, %v4440
        %v4527 = vpack.c.b16 %v4443, %v4441
        %v4528 = vpack.c.b16 %v4446, %v4444
        %v4529 = vpack.c.b16 %v4447, %v4445
        %v4530 = vpack.c.b16 %v4450, %v4448
        %v4531 = vpack.c.b16 %v4451, %v4449
        %v4532 = vpack.c.b16 %v4454, %v4452
        %v4533 = vpack.c.b16 %v4455, %v4453
        %v4534 = vpack.c.b16 %v4458, %v4456
        %v4535 = vpack.c.b16 %v4459, %v4457
        %v4536 = vpack.c.b16 %v4462, %v4460
        %v4537 = vpack.c.b16 %v4463, %v4461
        %v4538 = vpack.c.b16 %v4466, %v4464
        %v4539 = vpack.c.b16 %v4467, %v4465
        %v4540 = vpack.c.b16 %v4470, %v4468
        %v4541 = vpack.c.b16 %v4471, %v4469
        %v4542 = vpack.c.b16 %v4474, %v4472
        %v4543 = vpack.c.b16 %v4475, %v4473
        %v4544 = vpack.c.b16 %v4478, %v4476
        %v4545 = vpack.c.b16 %v4479, %v4477
        %v4546 = vpack.c.b16 %v4482, %v4480
        %v4547 = vpack.c.b16 %v4483, %v4481
        %v4548 = vpack.c.b16 %v4486, %v4484
        %v4549 = vpack.c.b16 %v4487, %v4485
        %v4550 = vpack.c.b16 %v4490, %v4488
        %v4551 = vpack.c.b16 %v4491, %v4489
        %v4552 = vpack.c.b16 %v4494, %v4492
        %v4553 = vpack.c.b16 %v4495, %v4493
        %v4554 = vpack.c.b16 %v4498, %v4496
        %v4555 = vpack.c.b16 %v4499, %v4497
        %v4556 = vpack.c.b16 %v4502, %v4500
        %v4557 = vpack.c.b16 %v4503, %v4501
        %v4558 = vpack.c.b16 %v4506, %v4504
        %v4559 = vpack.c.b16 %v4507, %v4505
        %v4560 = vpack.c.b16 %v4510, %v4508
        %v4561 = vpack.c.b16 %v4511, %v4509
        %v4562 = vpack.c.b16 %v4514, %v4512
        %v4563 = vpack.c.b16 %v4515, %v4513
        %v4564 = vpack.c.b16 %v4518, %v4516
        %v4565 = vpack.c.b16 %v4519, %v4517
        %v4566 = vpack.c.b16 %v4522, %v4520
        %v4567 = vpack.c.b16 %v4523, %v4521
        %v4613 = vsel %vm2028, %v3979, 0
        %4615 = vmatprep.subr.bf16.mxu0 %v4525
        %4616 = vmatpush1.bf16.msra.mxu0 %v4524
        %4617 = vmatprep.subr.bf16.mxu0 %v4527
        %4618 = vmatpush1.bf16.msra.mxu0 %v4526
        %4619 = vmatprep.subr.bf16.mxu0 %v4529
        %4620 = vmatpush1.bf16.msra.mxu0 %v4528
        %4621 = vmatprep.subr.bf16.mxu0 %v4531
        %4622 = vmatpush1.bf16.msra.mxu0 %v4530
        %4623 = vmatprep.subr.bf16.mxu0 %v4533
        %4624 = vmatpush1.bf16.msra.mxu0 %v4532
        %4625 = vmatprep.subr.bf16.mxu0 %v4535
        %4626 = vmatpush1.bf16.msra.mxu0 %v4534
        %4627 = vmatprep.subr.bf16.mxu0 %v4537
        %4628 = vmatpush1.bf16.msra.mxu0 %v4536
        %4629 = vmatprep.subr.bf16.mxu0 %v4539
        %4630 = vmatpush1.bf16.msra.mxu0 %v4538
        %4631 = vmatprep.subr.bf16.mxu0 %v4541
        %4632 = vmatpush1.bf16.msra.mxu0 %v4540
        %4633 = vmatprep.subr.bf16.mxu0 %v4543
        %4634 = vmatpush1.bf16.msra.mxu0 %v4542
        %4635 = vmatprep.subr.bf16.mxu0 %v4545
        %4636 = vmatpush1.bf16.msra.mxu0 %v4544
        %4637 = vmatprep.subr.bf16.mxu0 %v4547
        %4638 = vmatpush1.bf16.msra.mxu0 %v4546
        %4639 = vmatprep.subr.bf16.mxu0 %v4549
        %4640 = vmatpush1.bf16.msra.mxu0 %v4548
        %4641 = vmatprep.subr.bf16.mxu0 %v4551
        %4642 = vmatpush1.bf16.msra.mxu0 %v4550
        %4643 = vmatprep.subr.bf16.mxu0 %v4553
        %4644 = vmatpush1.bf16.msra.mxu0 %v4552
        %4645 = vmatprep.subr.bf16.mxu0 %v4555
        %4646 = vmatpush1.bf16.msra.mxu0 %v4554
        %4647 = vmatprep.mubr.bf16.mxu0 %v3978
        %4648 = vmatmul.mubr.bf16.gmra.mrb[0].mxu0 %v3977
        %v4649 = vpop.f32.mrb[0].mxu0
        %v4650 = vadd.f32 %v4386, %v4649
        %v4651 = vpop.f32.mrb[0].mxu0
        %v4652 = vadd.f32 %v4388, %v4651
        %v4653 = vpop.f32.mrb[0].mxu0
        %v4654 = vpop.f32.mrb[0].mxu0
        %4655 = vdwg.mxu0
        %4656 = vmatprep.subr.bf16.mxu0 %v4557
        %4657 = vmatpush1.bf16.msra.mxu0 %v4556
        %4658 = vmatprep.subr.bf16.mxu0 %v4559
        %4659 = vmatpush1.bf16.msra.mxu0 %v4558
        %4660 = vmatprep.subr.bf16.mxu0 %v4561
        %4661 = vmatpush1.bf16.msra.mxu0 %v4560
        %4662 = vmatprep.subr.bf16.mxu0 %v4563
        %4663 = vmatpush1.bf16.msra.mxu0 %v4562
        %4664 = vmatprep.subr.bf16.mxu0 %v4565
        %4665 = vmatpush1.bf16.msra.mxu0 %v4564
        %4666 = vmatprep.subr.bf16.mxu0 %v4567
        %4667 = vmatpush1.bf16.msra.mxu0 %v4566
        %4668 = vmatprep.subr.bf16.mxu0 0
        %4669 = vmatpush1.bf16.msra.mxu0 0
        %4670 = vmatprep.subr.bf16.mxu0 0
        %4671 = vmatpush1.bf16.msra.mxu0 0
        %4672 = vmatprep.subr.bf16.mxu0 0
        %4673 = vmatpush1.bf16.msra.mxu0 0
        %4674 = vmatprep.subr.bf16.mxu0 0
        %4675 = vmatpush1.bf16.msra.mxu0 0
        %4676 = vmatprep.subr.bf16.mxu0 0
        %4677 = vmatpush1.bf16.msra.mxu0 0
        %4678 = vmatprep.subr.bf16.mxu0 0
        %4679 = vmatpush1.bf16.msra.mxu0 0
        %4680 = vmatprep.subr.bf16.mxu0 0
        %4681 = vmatpush1.bf16.msra.mxu0 0
        %4682 = vmatprep.subr.bf16.mxu0 0
        %4683 = vmatpush1.bf16.msra.mxu0 0
        %4684 = vmatprep.subr.bf16.mxu0 0
        %4685 = vmatpush1.bf16.msra.mxu0 0
        %4686 = vmatprep.subr.bf16.mxu0 0
        %4687 = vmatpush1.bf16.msra.mxu0 0
        %4688 = vmatprep.mubr.bf16.mxu0 0
        %4689 = vmatmul.mubr.bf16.gmra.mrb[0].mxu0 %v4613
        %v4690 = vpop.f32.mrb[0].mxu0
        %v4691 = vadd.f32 %v4650, %v4690
        %v4692 = vpop.f32.mrb[0].mxu0
        %v4693 = vadd.f32 %v4652, %v4692
        %v4694 = vpop.f32.mrb[0].mxu0
        %v4695 = vpop.f32.mrb[0].mxu0
        %4696 = vdwg.mxu0
        %v4700 = vrot.slane %v3944, 5
        %v4701 = vrot.slane %v3945, 5
        %v4702 = vrot.slane %v3946, 5
        %v4706 = vsel %vm527, %v3956, %v3962
        %v4707 = vsel %vm527, %v3957, %v3963
        %v4708 = vsel %vm527, %v3958, %v3964
        %v4709 = vsel %vm1888, %v4706, %v4024
        %v4710 = vsel %vm1888, %v4707, %v4025
        %v4711 = vsel %vm1888, %v4708, %v4026
        %v4712 = vsel %vm1891, %v4709, %v4700
        %v4713 = vsel %vm1891, %v4710, %v4701
        %v4714 = vsel %vm1891, %v4711, %v4702
        %v4715 = vpack.c.bf16 %v4712, %v4712
        %v4716 = vpack.c.bf16 %v4713, %v4713
        %v4717 = vpack.c.bf16 %v4714, %v4714
        %s4718 = scalar_lea.vmem %s11, 704
        %v4719 = vld [vmem:[%s4718] sm:$0xff]
        %v4720 = vld [vmem:[%s4718 + $0x8] sm:$0xff]
        %v4721 = vld [vmem:[%s4718 + $0x10] sm:$0xff]
        %v4722 = vld [vmem:[%s4718 + $0x18] sm:$0xff]
        %v4723 = vld [vmem:[%s4718 + $0x20] sm:$0xff]
        %v4724 = vld [vmem:[%s4718 + $0x28] sm:$0xff]
        %v4725 = vld [vmem:[%s4718 + $0x30] sm:$0xff]
        %v4726 = vld [vmem:[%s4718 + $0x38] sm:$0xff]
        %v4727 = vld [vmem:[%s4718 + $0x40] sm:$0xff]
        %v4728 = vld [vmem:[%s4718 + $0x48] sm:$0xff]
        %v4729 = vld [vmem:[%s4718 + $0x50] sm:$0xff]
        %v4730 = vld [vmem:[%s4718 + $0x58] sm:$0xff]
        %v4731 = vld [vmem:[%s4718 + $0x60] sm:$0xff]
        %v4732 = vld [vmem:[%s4718 + $0x68] sm:$0xff]
        %v4733 = vld [vmem:[%s4718 + $0x70] sm:$0xff]
        %v4734 = vld [vmem:[%s4718 + $0x78] sm:$0xff]
        %v4735 = vld [vmem:[%s4718 + $0x80] sm:$0xff]
        %v4736 = vld [vmem:[%s4718 + $0x88] sm:$0xff]
        %v4737 = vld [vmem:[%s4718 + $0x90] sm:$0xff]
        %v4738 = vld [vmem:[%s4718 + $0x98] sm:$0xff]
        %v4739 = vld [vmem:[%s4718 + $0xa0] sm:$0xff]
        %v4740 = vld [vmem:[%s4718 + $0xa8] sm:$0xff]
        %v4741 = vld [vmem:[%s4718 + $0xb0] sm:$0xff]
        %v4742 = vld [vmem:[%s4718 + $0xb8] sm:$0xff]
        %v4743 = vld [vmem:[%s4718 + $0xc0] sm:$0xff]
        %v4744 = vld [vmem:[%s4718 + $0xc8] sm:$0xff]
        %v4745 = vld [vmem:[%s4718 + $0xd0] sm:$0xff]
        %v4746 = vld [vmem:[%s4718 + $0xd8] sm:$0xff]
        %v4747 = vld [vmem:[%s4718 + $0xe0] sm:$0xff]
        %v4748 = vld [vmem:[%s4718 + $0xe8] sm:$0xff]
        %v4749 = vld [vmem:[%s4718 + $0xf0] sm:$0xff]
        %v4750 = vld [vmem:[%s4718 + $0xf8] sm:$0xff]
        %v4751 = vld [vmem:[%s4718 + $0x100] sm:$0xff]
        %v4752 = vld [vmem:[%s4718 + $0x108] sm:$0xff]
        %v4753 = vld [vmem:[%s4718 + $0x110] sm:$0xff]
        %v4754 = vld [vmem:[%s4718 + $0x118] sm:$0xff]
        %v4755 = vld [vmem:[%s4718 + $0x120] sm:$0xff]
        %v4756 = vld [vmem:[%s4718 + $0x128] sm:$0xff]
        %v4757 = vld [vmem:[%s4718 + $0x130] sm:$0xff]
        %v4758 = vld [vmem:[%s4718 + $0x138] sm:$0xff]
        %v4759 = vld [vmem:[%s4718 + $0x140] sm:$0xff]
        %v4760 = vld [vmem:[%s4718 + $0x148] sm:$0xff]
        %v4761 = vld [vmem:[%s4718 + $0x150] sm:$0xff]
        %v4762 = vld [vmem:[%s4718 + $0x158] sm:$0xff]
        %v4807 = vunpack.c.l.b16 %v4719
        %v4808 = vunpack.c.h.b16 %v4719
        %v4809 = vunpack.c.l.b16 %v4720
        %v4810 = vunpack.c.h.b16 %v4720
        %v4811 = vunpack.c.l.b16 %v4721
        %v4812 = vunpack.c.h.b16 %v4721
        %v4813 = vunpack.c.l.b16 %v4722
        %v4814 = vunpack.c.h.b16 %v4722
        %v4815 = vunpack.c.l.b16 %v4723
        %v4816 = vunpack.c.h.b16 %v4723
        %v4817 = vunpack.c.l.b16 %v4724
        %v4818 = vunpack.c.h.b16 %v4724
        %v4819 = vunpack.c.l.b16 %v4725
        %v4820 = vunpack.c.h.b16 %v4725
        %v4821 = vunpack.c.l.b16 %v4726
        %v4822 = vunpack.c.h.b16 %v4726
        %v4823 = vunpack.c.l.b16 %v4727
        %v4824 = vunpack.c.h.b16 %v4727
        %v4825 = vunpack.c.l.b16 %v4728
        %v4826 = vunpack.c.h.b16 %v4728
        %v4827 = vunpack.c.l.b16 %v4729
        %v4828 = vunpack.c.h.b16 %v4729
        %v4829 = vunpack.c.l.b16 %v4730
        %v4830 = vunpack.c.h.b16 %v4730
        %v4831 = vunpack.c.l.b16 %v4731
        %v4832 = vunpack.c.h.b16 %v4731
        %v4833 = vunpack.c.l.b16 %v4732
        %v4834 = vunpack.c.h.b16 %v4732
        %v4835 = vunpack.c.l.b16 %v4733
        %v4836 = vunpack.c.h.b16 %v4733
        %v4837 = vunpack.c.l.b16 %v4734
        %v4838 = vunpack.c.h.b16 %v4734
        %v4839 = vunpack.c.l.b16 %v4735
        %v4840 = vunpack.c.h.b16 %v4735
        %v4841 = vunpack.c.l.b16 %v4736
        %v4842 = vunpack.c.h.b16 %v4736
        %v4843 = vunpack.c.l.b16 %v4737
        %v4844 = vunpack.c.h.b16 %v4737
        %v4845 = vunpack.c.l.b16 %v4738
        %v4846 = vunpack.c.h.b16 %v4738
        %v4847 = vunpack.c.l.b16 %v4739
        %v4848 = vunpack.c.h.b16 %v4739
        %v4849 = vunpack.c.l.b16 %v4740
        %v4850 = vunpack.c.h.b16 %v4740
        %v4851 = vunpack.c.l.b16 %v4741
        %v4852 = vunpack.c.h.b16 %v4741
        %v4853 = vunpack.c.l.b16 %v4742
        %v4854 = vunpack.c.h.b16 %v4742
        %v4855 = vunpack.c.l.b16 %v4743
        %v4856 = vunpack.c.h.b16 %v4743
        %v4857 = vunpack.c.l.b16 %v4744
        %v4858 = vunpack.c.h.b16 %v4744
        %v4859 = vunpack.c.l.b16 %v4745
        %v4860 = vunpack.c.h.b16 %v4745
        %v4861 = vunpack.c.l.b16 %v4746
        %v4862 = vunpack.c.h.b16 %v4746
        %v4863 = vunpack.c.l.b16 %v4747
        %v4864 = vunpack.c.h.b16 %v4747
        %v4865 = vunpack.c.l.b16 %v4748
        %v4866 = vunpack.c.h.b16 %v4748
        %v4867 = vunpack.c.l.b16 %v4749
        %v4868 = vunpack.c.h.b16 %v4749
        %v4869 = vunpack.c.l.b16 %v4750
        %v4870 = vunpack.c.h.b16 %v4750
        %v4871 = vunpack.c.l.b16 %v4751
        %v4872 = vunpack.c.h.b16 %v4751
        %v4873 = vunpack.c.l.b16 %v4752
        %v4874 = vunpack.c.h.b16 %v4752
        %v4875 = vunpack.c.l.b16 %v4753
        %v4876 = vunpack.c.h.b16 %v4753
        %v4877 = vunpack.c.l.b16 %v4754
        %v4878 = vunpack.c.h.b16 %v4754
        %v4879 = vunpack.c.l.b16 %v4755
        %v4880 = vunpack.c.h.b16 %v4755
        %v4881 = vunpack.c.l.b16 %v4756
        %v4882 = vunpack.c.h.b16 %v4756
        %v4883 = vunpack.c.l.b16 %v4757
        %v4884 = vunpack.c.h.b16 %v4757
        %v4885 = vunpack.c.l.b16 %v4758
        %v4886 = vunpack.c.h.b16 %v4758
        %v4887 = vunpack.c.l.b16 %v4759
        %v4888 = vunpack.c.h.b16 %v4759
        %v4889 = vunpack.c.l.b16 %v4760
        %v4890 = vunpack.c.h.b16 %v4760
        %v4891 = vunpack.c.l.b16 %v4761
        %v4892 = vunpack.c.h.b16 %v4761
        %v4893 = vunpack.c.l.b16 %v4762
        %v4894 = vunpack.c.h.b16 %v4762
        %v4895 = vpack.c.b16 %v4809, %v4807
        %v4896 = vpack.c.b16 %v4810, %v4808
        %v4897 = vpack.c.b16 %v4813, %v4811
        %v4898 = vpack.c.b16 %v4814, %v4812
        %v4899 = vpack.c.b16 %v4817, %v4815
        %v4900 = vpack.c.b16 %v4818, %v4816
        %v4901 = vpack.c.b16 %v4821, %v4819
        %v4902 = vpack.c.b16 %v4822, %v4820
        %v4903 = vpack.c.b16 %v4825, %v4823
        %v4904 = vpack.c.b16 %v4826, %v4824
        %v4905 = vpack.c.b16 %v4829, %v4827
        %v4906 = vpack.c.b16 %v4830, %v4828
        %v4907 = vpack.c.b16 %v4833, %v4831
        %v4908 = vpack.c.b16 %v4834, %v4832
        %v4909 = vpack.c.b16 %v4837, %v4835
        %v4910 = vpack.c.b16 %v4838, %v4836
        %v4911 = vpack.c.b16 %v4841, %v4839
        %v4912 = vpack.c.b16 %v4842, %v4840
        %v4913 = vpack.c.b16 %v4845, %v4843
        %v4914 = vpack.c.b16 %v4846, %v4844
        %v4915 = vpack.c.b16 %v4849, %v4847
        %v4916 = vpack.c.b16 %v4850, %v4848
        %v4917 = vpack.c.b16 %v4853, %v4851
        %v4918 = vpack.c.b16 %v4854, %v4852
        %v4919 = vpack.c.b16 %v4857, %v4855
        %v4920 = vpack.c.b16 %v4858, %v4856
        %v4921 = vpack.c.b16 %v4861, %v4859
        %v4922 = vpack.c.b16 %v4862, %v4860
        %v4923 = vpack.c.b16 %v4865, %v4863
        %v4924 = vpack.c.b16 %v4866, %v4864
        %v4925 = vpack.c.b16 %v4869, %v4867
        %v4926 = vpack.c.b16 %v4870, %v4868
        %v4927 = vpack.c.b16 %v4873, %v4871
        %v4928 = vpack.c.b16 %v4874, %v4872
        %v4929 = vpack.c.b16 %v4877, %v4875
        %v4930 = vpack.c.b16 %v4878, %v4876
        %v4931 = vpack.c.b16 %v4881, %v4879
        %v4932 = vpack.c.b16 %v4882, %v4880
        %v4933 = vpack.c.b16 %v4885, %v4883
        %v4934 = vpack.c.b16 %v4886, %v4884
        %v4935 = vpack.c.b16 %v4889, %v4887
        %v4936 = vpack.c.b16 %v4890, %v4888
        %v4937 = vpack.c.b16 %v4893, %v4891
        %v4938 = vpack.c.b16 %v4894, %v4892
        %v4984 = vsel %vm2028, %v4717, 0
        %4986 = vmatprep.subr.bf16.mxu0 %v4896
        %4987 = vmatpush1.bf16.msra.mxu0 %v4895
        %4988 = vmatprep.subr.bf16.mxu0 %v4898
        %4989 = vmatpush1.bf16.msra.mxu0 %v4897
        %4990 = vmatprep.subr.bf16.mxu0 %v4900
        %4991 = vmatpush1.bf16.msra.mxu0 %v4899
        %4992 = vmatprep.subr.bf16.mxu0 %v4902
        %4993 = vmatpush1.bf16.msra.mxu0 %v4901
        %4994 = vmatprep.subr.bf16.mxu0 %v4904
        %4995 = vmatpush1.bf16.msra.mxu0 %v4903
        %4996 = vmatprep.subr.bf16.mxu0 %v4906
        %4997 = vmatpush1.bf16.msra.mxu0 %v4905
        %4998 = vmatprep.subr.bf16.mxu0 %v4908
        %4999 = vmatpush1.bf16.msra.mxu0 %v4907
        %5000 = vmatprep.subr.bf16.mxu0 %v4910
        %5001 = vmatpush1.bf16.msra.mxu0 %v4909
        %5002 = vmatprep.subr.bf16.mxu0 %v4912
        %5003 = vmatpush1.bf16.msra.mxu0 %v4911
        %5004 = vmatprep.subr.bf16.mxu0 %v4914
        %5005 = vmatpush1.bf16.msra.mxu0 %v4913
        %5006 = vmatprep.subr.bf16.mxu0 %v4916
        %5007 = vmatpush1.bf16.msra.mxu0 %v4915
        %5008 = vmatprep.subr.bf16.mxu0 %v4918
        %5009 = vmatpush1.bf16.msra.mxu0 %v4917
        %5010 = vmatprep.subr.bf16.mxu0 %v4920
        %5011 = vmatpush1.bf16.msra.mxu0 %v4919
        %5012 = vmatprep.subr.bf16.mxu0 %v4922
        %5013 = vmatpush1.bf16.msra.mxu0 %v4921
        %5014 = vmatprep.subr.bf16.mxu0 %v4924
        %5015 = vmatpush1.bf16.msra.mxu0 %v4923
        %5016 = vmatprep.subr.bf16.mxu0 %v4926
        %5017 = vmatpush1.bf16.msra.mxu0 %v4925
        %5018 = vmatprep.mubr.bf16.mxu0 %v4716
        %5019 = vmatmul.mubr.bf16.gmra.mrb[0].mxu0 %v4715
        %v5020 = vpop.f32.mrb[0].mxu0
        %v5021 = vadd.f32 0.0, %v5020
        %v5022 = vpop.f32.mrb[0].mxu0
        %v5023 = vadd.f32 0.0, %v5022
        %v5024 = vpop.f32.mrb[0].mxu0
        %v5025 = vpop.f32.mrb[0].mxu0
        %5026 = vdwg.mxu0
        %5027 = vmatprep.subr.bf16.mxu0 %v4928
        %5028 = vmatpush1.bf16.msra.mxu0 %v4927
        %5029 = vmatprep.subr.bf16.mxu0 %v4930
        %5030 = vmatpush1.bf16.msra.mxu0 %v4929
        %5031 = vmatprep.subr.bf16.mxu0 %v4932
        %5032 = vmatpush1.bf16.msra.mxu0 %v4931
        %5033 = vmatprep.subr.bf16.mxu0 %v4934
        %5034 = vmatpush1.bf16.msra.mxu0 %v4933
        %5035 = vmatprep.subr.bf16.mxu0 %v4936
        %5036 = vmatpush1.bf16.msra.mxu0 %v4935
        %5037 = vmatprep.subr.bf16.mxu0 %v4938
        %5038 = vmatpush1.bf16.msra.mxu0 %v4937
        %5039 = vmatprep.subr.bf16.mxu0 0
        %5040 = vmatpush1.bf16.msra.mxu0 0
        %5041 = vmatprep.subr.bf16.mxu0 0
        %5042 = vmatpush1.bf16.msra.mxu0 0
        %5043 = vmatprep.subr.bf16.mxu0 0
        %5044 = vmatpush1.bf16.msra.mxu0 0
        %5045 = vmatprep.subr.bf16.mxu0 0
        %5046 = vmatpush1.bf16.msra.mxu0 0
        %5047 = vmatprep.subr.bf16.mxu0 0
        %5048 = vmatpush1.bf16.msra.mxu0 0
        %5049 = vmatprep.subr.bf16.mxu0 0
        %5050 = vmatpush1.bf16.msra.mxu0 0
        %5051 = vmatprep.subr.bf16.mxu0 0
        %5052 = vmatpush1.bf16.msra.mxu0 0
        %5053 = vmatprep.subr.bf16.mxu0 0
        %5054 = vmatpush1.bf16.msra.mxu0 0
        %5055 = vmatprep.subr.bf16.mxu0 0
        %5056 = vmatpush1.bf16.msra.mxu0 0
        %5057 = vmatprep.subr.bf16.mxu0 0
        %5058 = vmatpush1.bf16.msra.mxu0 0
        %5059 = vmatprep.mubr.bf16.mxu0 0
        %5060 = vmatmul.mubr.bf16.gmra.mrb[0].mxu0 %v4984
        %v5061 = vpop.f32.mrb[0].mxu0
        %v5062 = vadd.f32 %v5021, %v5061
        %v5063 = vpop.f32.mrb[0].mxu0
        %v5064 = vadd.f32 %v5023, %v5063
        %v5065 = vpop.f32.mrb[0].mxu0
        %v5066 = vpop.f32.mrb[0].mxu0
        %5067 = vdwg.mxu0
        %v5068 = vadd.f32 %v4691, %v5062
        %v5069 = vadd.f32 %v4693, %v5064
        %v5070 = vrot.slane %v3941, 5
        %v5071 = vrot.slane %v3942, 5
        %v5072 = vrot.slane %v3943, 5
        %v5076 = vrot.slane %v3944, 6
        %v5077 = vrot.slane %v3945, 6
        %v5078 = vrot.slane %v3946, 6
        %v5082 = vsel %vm527, %v3962, %v4024
        %v5083 = vsel %vm527, %v3963, %v4025
        %v5084 = vsel %vm527, %v3964, %v4026
        %v5085 = vsel %vm1888, %v5082, %v5070
        %v5086 = vsel %vm1888, %v5083, %v5071
        %v5087 = vsel %vm1888, %v5084, %v5072
        %v5088 = vsel %vm1891, %v5085, %v5076
        %v5089 = vsel %vm1891, %v5086, %v5077
        %v5090 = vsel %vm1891, %v5087, %v5078
        %v5091 = vpack.c.bf16 %v5088, %v5088
        %v5092 = vpack.c.bf16 %v5089, %v5089
        %v5093 = vpack.c.bf16 %v5090, %v5090
        %s5094 = scalar_lea.vmem %s11, 1056
        %v5095 = vld [vmem:[%s5094] sm:$0xff]
        %v5096 = vld [vmem:[%s5094 + $0x8] sm:$0xff]
        %v5097 = vld [vmem:[%s5094 + $0x10] sm:$0xff]
        %v5098 = vld [vmem:[%s5094 + $0x18] sm:$0xff]
        %v5099 = vld [vmem:[%s5094 + $0x20] sm:$0xff]
        %v5100 = vld [vmem:[%s5094 + $0x28] sm:$0xff]
        %v5101 = vld [vmem:[%s5094 + $0x30] sm:$0xff]
        %v5102 = vld [vmem:[%s5094 + $0x38] sm:$0xff]
        %v5103 = vld [vmem:[%s5094 + $0x40] sm:$0xff]
        %v5104 = vld [vmem:[%s5094 + $0x48] sm:$0xff]
        %v5105 = vld [vmem:[%s5094 + $0x50] sm:$0xff]
        %v5106 = vld [vmem:[%s5094 + $0x58] sm:$0xff]
        %v5107 = vld [vmem:[%s5094 + $0x60] sm:$0xff]
        %v5108 = vld [vmem:[%s5094 + $0x68] sm:$0xff]
        %v5109 = vld [vmem:[%s5094 + $0x70] sm:$0xff]
        %v5110 = vld [vmem:[%s5094 + $0x78] sm:$0xff]
        %v5111 = vld [vmem:[%s5094 + $0x80] sm:$0xff]
        %v5112 = vld [vmem:[%s5094 + $0x88] sm:$0xff]
        %v5113 = vld [vmem:[%s5094 + $0x90] sm:$0xff]
        %v5114 = vld [vmem:[%s5094 + $0x98] sm:$0xff]
        %v5115 = vld [vmem:[%s5094 + $0xa0] sm:$0xff]
        %v5116 = vld [vmem:[%s5094 + $0xa8] sm:$0xff]
        %v5117 = vld [vmem:[%s5094 + $0xb0] sm:$0xff]
        %v5118 = vld [vmem:[%s5094 + $0xb8] sm:$0xff]
        %v5119 = vld [vmem:[%s5094 + $0xc0] sm:$0xff]
        %v5120 = vld [vmem:[%s5094 + $0xc8] sm:$0xff]
        %v5121 = vld [vmem:[%s5094 + $0xd0] sm:$0xff]
        %v5122 = vld [vmem:[%s5094 + $0xd8] sm:$0xff]
        %v5123 = vld [vmem:[%s5094 + $0xe0] sm:$0xff]
        %v5124 = vld [vmem:[%s5094 + $0xe8] sm:$0xff]
        %v5125 = vld [vmem:[%s5094 + $0xf0] sm:$0xff]
        %v5126 = vld [vmem:[%s5094 + $0xf8] sm:$0xff]
        %v5127 = vld [vmem:[%s5094 + $0x100] sm:$0xff]
        %v5128 = vld [vmem:[%s5094 + $0x108] sm:$0xff]
        %v5129 = vld [vmem:[%s5094 + $0x110] sm:$0xff]
        %v5130 = vld [vmem:[%s5094 + $0x118] sm:$0xff]
        %v5131 = vld [vmem:[%s5094 + $0x120] sm:$0xff]
        %v5132 = vld [vmem:[%s5094 + $0x128] sm:$0xff]
        %v5133 = vld [vmem:[%s5094 + $0x130] sm:$0xff]
        %v5134 = vld [vmem:[%s5094 + $0x138] sm:$0xff]
        %v5135 = vld [vmem:[%s5094 + $0x140] sm:$0xff]
        %v5136 = vld [vmem:[%s5094 + $0x148] sm:$0xff]
        %v5137 = vld [vmem:[%s5094 + $0x150] sm:$0xff]
        %v5138 = vld [vmem:[%s5094 + $0x158] sm:$0xff]
        %v5183 = vunpack.c.l.b16 %v5095
        %v5184 = vunpack.c.h.b16 %v5095
        %v5185 = vunpack.c.l.b16 %v5096
        %v5186 = vunpack.c.h.b16 %v5096
        %v5187 = vunpack.c.l.b16 %v5097
        %v5188 = vunpack.c.h.b16 %v5097
        %v5189 = vunpack.c.l.b16 %v5098
        %v5190 = vunpack.c.h.b16 %v5098
        %v5191 = vunpack.c.l.b16 %v5099
        %v5192 = vunpack.c.h.b16 %v5099
        %v5193 = vunpack.c.l.b16 %v5100
        %v5194 = vunpack.c.h.b16 %v5100
        %v5195 = vunpack.c.l.b16 %v5101
        %v5196 = vunpack.c.h.b16 %v5101
        %v5197 = vunpack.c.l.b16 %v5102
        %v5198 = vunpack.c.h.b16 %v5102
        %v5199 = vunpack.c.l.b16 %v5103
        %v5200 = vunpack.c.h.b16 %v5103
        %v5201 = vunpack.c.l.b16 %v5104
        %v5202 = vunpack.c.h.b16 %v5104
        %v5203 = vunpack.c.l.b16 %v5105
        %v5204 = vunpack.c.h.b16 %v5105
        %v5205 = vunpack.c.l.b16 %v5106
        %v5206 = vunpack.c.h.b16 %v5106
        %v5207 = vunpack.c.l.b16 %v5107
        %v5208 = vunpack.c.h.b16 %v5107
        %v5209 = vunpack.c.l.b16 %v5108
        %v5210 = vunpack.c.h.b16 %v5108
        %v5211 = vunpack.c.l.b16 %v5109
        %v5212 = vunpack.c.h.b16 %v5109
        %v5213 = vunpack.c.l.b16 %v5110
        %v5214 = vunpack.c.h.b16 %v5110
        %v5215 = vunpack.c.l.b16 %v5111
        %v5216 = vunpack.c.h.b16 %v5111
        %v5217 = vunpack.c.l.b16 %v5112
        %v5218 = vunpack.c.h.b16 %v5112
        %v5219 = vunpack.c.l.b16 %v5113
        %v5220 = vunpack.c.h.b16 %v5113
        %v5221 = vunpack.c.l.b16 %v5114
        %v5222 = vunpack.c.h.b16 %v5114
        %v5223 = vunpack.c.l.b16 %v5115
        %v5224 = vunpack.c.h.b16 %v5115
        %v5225 = vunpack.c.l.b16 %v5116
        %v5226 = vunpack.c.h.b16 %v5116
        %v5227 = vunpack.c.l.b16 %v5117
        %v5228 = vunpack.c.h.b16 %v5117
        %v5229 = vunpack.c.l.b16 %v5118
        %v5230 = vunpack.c.h.b16 %v5118
        %v5231 = vunpack.c.l.b16 %v5119
        %v5232 = vunpack.c.h.b16 %v5119
        %v5233 = vunpack.c.l.b16 %v5120
        %v5234 = vunpack.c.h.b16 %v5120
        %v5235 = vunpack.c.l.b16 %v5121
        %v5236 = vunpack.c.h.b16 %v5121
        %v5237 = vunpack.c.l.b16 %v5122
        %v5238 = vunpack.c.h.b16 %v5122
        %v5239 = vunpack.c.l.b16 %v5123
        %v5240 = vunpack.c.h.b16 %v5123
        %v5241 = vunpack.c.l.b16 %v5124
        %v5242 = vunpack.c.h.b16 %v5124
        %v5243 = vunpack.c.l.b16 %v5125
        %v5244 = vunpack.c.h.b16 %v5125
        %v5245 = vunpack.c.l.b16 %v5126
        %v5246 = vunpack.c.h.b16 %v5126
        %v5247 = vunpack.c.l.b16 %v5127
        %v5248 = vunpack.c.h.b16 %v5127
        %v5249 = vunpack.c.l.b16 %v5128
        %v5250 = vunpack.c.h.b16 %v5128
        %v5251 = vunpack.c.l.b16 %v5129
        %v5252 = vunpack.c.h.b16 %v5129
        %v5253 = vunpack.c.l.b16 %v5130
        %v5254 = vunpack.c.h.b16 %v5130
        %v5255 = vunpack.c.l.b16 %v5131
        %v5256 = vunpack.c.h.b16 %v5131
        %v5257 = vunpack.c.l.b16 %v5132
        %v5258 = vunpack.c.h.b16 %v5132
        %v5259 = vunpack.c.l.b16 %v5133
        %v5260 = vunpack.c.h.b16 %v5133
        %v5261 = vunpack.c.l.b16 %v5134
        %v5262 = vunpack.c.h.b16 %v5134
        %v5263 = vunpack.c.l.b16 %v5135
        %v5264 = vunpack.c.h.b16 %v5135
        %v5265 = vunpack.c.l.b16 %v5136
        %v5266 = vunpack.c.h.b16 %v5136
        %v5267 = vunpack.c.l.b16 %v5137
        %v5268 = vunpack.c.h.b16 %v5137
        %v5269 = vunpack.c.l.b16 %v5138
        %v5270 = vunpack.c.h.b16 %v5138
        %v5271 = vpack.c.b16 %v5185, %v5183
        %v5272 = vpack.c.b16 %v5186, %v5184
        %v5273 = vpack.c.b16 %v5189, %v5187
        %v5274 = vpack.c.b16 %v5190, %v5188
        %v5275 = vpack.c.b16 %v5193, %v5191
        %v5276 = vpack.c.b16 %v5194, %v5192
        %v5277 = vpack.c.b16 %v5197, %v5195
        %v5278 = vpack.c.b16 %v5198, %v5196
        %v5279 = vpack.c.b16 %v5201, %v5199
        %v5280 = vpack.c.b16 %v5202, %v5200
        %v5281 = vpack.c.b16 %v5205, %v5203
        %v5282 = vpack.c.b16 %v5206, %v5204
        %v5283 = vpack.c.b16 %v5209, %v5207
        %v5284 = vpack.c.b16 %v5210, %v5208
        %v5285 = vpack.c.b16 %v5213, %v5211
        %v5286 = vpack.c.b16 %v5214, %v5212
        %v5287 = vpack.c.b16 %v5217, %v5215
        %v5288 = vpack.c.b16 %v5218, %v5216
        %v5289 = vpack.c.b16 %v5221, %v5219
        %v5290 = vpack.c.b16 %v5222, %v5220
        %v5291 = vpack.c.b16 %v5225, %v5223
        %v5292 = vpack.c.b16 %v5226, %v5224
        %v5293 = vpack.c.b16 %v5229, %v5227
        %v5294 = vpack.c.b16 %v5230, %v5228
        %v5295 = vpack.c.b16 %v5233, %v5231
        %v5296 = vpack.c.b16 %v5234, %v5232
        %v5297 = vpack.c.b16 %v5237, %v5235
        %v5298 = vpack.c.b16 %v5238, %v5236
        %v5299 = vpack.c.b16 %v5241, %v5239
        %v5300 = vpack.c.b16 %v5242, %v5240
        %v5301 = vpack.c.b16 %v5245, %v5243
        %v5302 = vpack.c.b16 %v5246, %v5244
        %v5303 = vpack.c.b16 %v5249, %v5247
        %v5304 = vpack.c.b16 %v5250, %v5248
        %v5305 = vpack.c.b16 %v5253, %v5251
        %v5306 = vpack.c.b16 %v5254, %v5252
        %v5307 = vpack.c.b16 %v5257, %v5255
        %v5308 = vpack.c.b16 %v5258, %v5256
        %v5309 = vpack.c.b16 %v5261, %v5259
        %v5310 = vpack.c.b16 %v5262, %v5260
        %v5311 = vpack.c.b16 %v5265, %v5263
        %v5312 = vpack.c.b16 %v5266, %v5264
        %v5313 = vpack.c.b16 %v5269, %v5267
        %v5314 = vpack.c.b16 %v5270, %v5268
        %v5360 = vsel %vm2028, %v5093, 0
        %5362 = vmatprep.subr.bf16.mxu0 %v5272
        %5363 = vmatpush1.bf16.msra.mxu0 %v5271
        %5364 = vmatprep.subr.bf16.mxu0 %v5274
        %5365 = vmatpush1.bf16.msra.mxu0 %v5273
        %5366 = vmatprep.subr.bf16.mxu0 %v5276
        %5367 = vmatpush1.bf16.msra.mxu0 %v5275
        %5368 = vmatprep.subr.bf16.mxu0 %v5278
        %5369 = vmatpush1.bf16.msra.mxu0 %v5277
        %5370 = vmatprep.subr.bf16.mxu0 %v5280
        %5371 = vmatpush1.bf16.msra.mxu0 %v5279
        %5372 = vmatprep.subr.bf16.mxu0 %v5282
        %5373 = vmatpush1.bf16.msra.mxu0 %v5281
        %5374 = vmatprep.subr.bf16.mxu0 %v5284
        %5375 = vmatpush1.bf16.msra.mxu0 %v5283
        %5376 = vmatprep.subr.bf16.mxu0 %v5286
        %5377 = vmatpush1.bf16.msra.mxu0 %v5285
        %5378 = vmatprep.subr.bf16.mxu0 %v5288
        %5379 = vmatpush1.bf16.msra.mxu0 %v5287
        %5380 = vmatprep.subr.bf16.mxu0 %v5290
        %5381 = vmatpush1.bf16.msra.mxu0 %v5289
        %5382 = vmatprep.subr.bf16.mxu0 %v5292
        %5383 = vmatpush1.bf16.msra.mxu0 %v5291
        %5384 = vmatprep.subr.bf16.mxu0 %v5294
        %5385 = vmatpush1.bf16.msra.mxu0 %v5293
        %5386 = vmatprep.subr.bf16.mxu0 %v5296
        %5387 = vmatpush1.bf16.msra.mxu0 %v5295
        %5388 = vmatprep.subr.bf16.mxu0 %v5298
        %5389 = vmatpush1.bf16.msra.mxu0 %v5297
        %5390 = vmatprep.subr.bf16.mxu0 %v5300
        %5391 = vmatpush1.bf16.msra.mxu0 %v5299
        %5392 = vmatprep.subr.bf16.mxu0 %v5302
        %5393 = vmatpush1.bf16.msra.mxu0 %v5301
        %5394 = vmatprep.mubr.bf16.mxu0 %v5092
        %5395 = vmatmul.mubr.bf16.gmra.mrb[0].mxu0 %v5091
        %v5396 = vpop.f32.mrb[0].mxu0
        %v5397 = vadd.f32 0.0, %v5396
        %v5398 = vpop.f32.mrb[0].mxu0
        %v5399 = vadd.f32 0.0, %v5398
        %v5400 = vpop.f32.mrb[0].mxu0
        %v5401 = vpop.f32.mrb[0].mxu0
        %5402 = vdwg.mxu0
        %5403 = vmatprep.subr.bf16.mxu0 %v5304
        %5404 = vmatpush1.bf16.msra.mxu0 %v5303
        %5405 = vmatprep.subr.bf16.mxu0 %v5306
        %5406 = vmatpush1.bf16.msra.mxu0 %v5305
        %5407 = vmatprep.subr.bf16.mxu0 %v5308
        %5408 = vmatpush1.bf16.msra.mxu0 %v5307
        %5409 = vmatprep.subr.bf16.mxu0 %v5310
        %5410 = vmatpush1.bf16.msra.mxu0 %v5309
        %5411 = vmatprep.subr.bf16.mxu0 %v5312
        %5412 = vmatpush1.bf16.msra.mxu0 %v5311
        %5413 = vmatprep.subr.bf16.mxu0 %v5314
        %5414 = vmatpush1.bf16.msra.mxu0 %v5313
        %5415 = vmatprep.subr.bf16.mxu0 0
        %5416 = vmatpush1.bf16.msra.mxu0 0
        %5417 = vmatprep.subr.bf16.mxu0 0
        %5418 = vmatpush1.bf16.msra.mxu0 0
        %5419 = vmatprep.subr.bf16.mxu0 0
        %5420 = vmatpush1.bf16.msra.mxu0 0
        %5421 = vmatprep.subr.bf16.mxu0 0
        %5422 = vmatpush1.bf16.msra.mxu0 0
        %5423 = vmatprep.subr.bf16.mxu0 0
        %5424 = vmatpush1.bf16.msra.mxu0 0
        %5425 = vmatprep.subr.bf16.mxu0 0
        %5426 = vmatpush1.bf16.msra.mxu0 0
        %5427 = vmatprep.subr.bf16.mxu0 0
        %5428 = vmatpush1.bf16.msra.mxu0 0
        %5429 = vmatprep.subr.bf16.mxu0 0
        %5430 = vmatpush1.bf16.msra.mxu0 0
        %5431 = vmatprep.subr.bf16.mxu0 0
        %5432 = vmatpush1.bf16.msra.mxu0 0
        %5433 = vmatprep.subr.bf16.mxu0 0
        %5434 = vmatpush1.bf16.msra.mxu0 0
        %5435 = vmatprep.mubr.bf16.mxu0 0
        %5436 = vmatmul.mubr.bf16.gmra.mrb[0].mxu0 %v5360
        %v5437 = vpop.f32.mrb[0].mxu0
        %v5438 = vadd.f32 %v5397, %v5437
        %v5439 = vpop.f32.mrb[0].mxu0
        %v5440 = vadd.f32 %v5399, %v5439
        %v5441 = vpop.f32.mrb[0].mxu0
        %v5442 = vpop.f32.mrb[0].mxu0
        %5443 = vdwg.mxu0
        %v5444 = vadd.f32 %v5068, %v5438
        %v5445 = vadd.f32 %v5069, %v5440
        %v5446 = vrot.slane %v3944, 7
        %v5447 = vrot.slane %v3945, 7
        %v5448 = vrot.slane %v3946, 7
        %v5452 = vsel %vm527, %v4024, %v5070
        %v5453 = vsel %vm527, %v4025, %v5071
        %v5454 = vsel %vm527, %v4026, %v5072
        %v5455 = vsel %vm1888, %v5452, %v5076
        %v5456 = vsel %vm1888, %v5453, %v5077
        %v5457 = vsel %vm1888, %v5454, %v5078
        %v5458 = vsel %vm1891, %v5455, %v5446
        %v5459 = vsel %vm1891, %v5456, %v5447
        %v5460 = vsel %vm1891, %v5457, %v5448
        %v5461 = vpack.c.bf16 %v5458, %v5458
        %v5462 = vpack.c.bf16 %v5459, %v5459
        %v5463 = vpack.c.bf16 %v5460, %v5460
        %s5464 = scalar_lea.vmem %s11, 1408
        %v5465 = vld [vmem:[%s5464] sm:$0xff]
        %v5466 = vld [vmem:[%s5464 + $0x8] sm:$0xff]
        %v5467 = vld [vmem:[%s5464 + $0x10] sm:$0xff]
        %v5468 = vld [vmem:[%s5464 + $0x18] sm:$0xff]
        %v5469 = vld [vmem:[%s5464 + $0x20] sm:$0xff]
        %v5470 = vld [vmem:[%s5464 + $0x28] sm:$0xff]
        %v5471 = vld [vmem:[%s5464 + $0x30] sm:$0xff]
        %v5472 = vld [vmem:[%s5464 + $0x38] sm:$0xff]
        %v5473 = vld [vmem:[%s5464 + $0x40] sm:$0xff]
        %v5474 = vld [vmem:[%s5464 + $0x48] sm:$0xff]
        %v5475 = vld [vmem:[%s5464 + $0x50] sm:$0xff]
        %v5476 = vld [vmem:[%s5464 + $0x58] sm:$0xff]
        %v5477 = vld [vmem:[%s5464 + $0x60] sm:$0xff]
        %v5478 = vld [vmem:[%s5464 + $0x68] sm:$0xff]
        %v5479 = vld [vmem:[%s5464 + $0x70] sm:$0xff]
        %v5480 = vld [vmem:[%s5464 + $0x78] sm:$0xff]
        %v5481 = vld [vmem:[%s5464 + $0x80] sm:$0xff]
        %v5482 = vld [vmem:[%s5464 + $0x88] sm:$0xff]
        %v5483 = vld [vmem:[%s5464 + $0x90] sm:$0xff]
        %v5484 = vld [vmem:[%s5464 + $0x98] sm:$0xff]
        %v5485 = vld [vmem:[%s5464 + $0xa0] sm:$0xff]
        %v5486 = vld [vmem:[%s5464 + $0xa8] sm:$0xff]
        %v5487 = vld [vmem:[%s5464 + $0xb0] sm:$0xff]
        %v5488 = vld [vmem:[%s5464 + $0xb8] sm:$0xff]
        %v5489 = vld [vmem:[%s5464 + $0xc0] sm:$0xff]
        %v5490 = vld [vmem:[%s5464 + $0xc8] sm:$0xff]
        %v5491 = vld [vmem:[%s5464 + $0xd0] sm:$0xff]
        %v5492 = vld [vmem:[%s5464 + $0xd8] sm:$0xff]
        %v5493 = vld [vmem:[%s5464 + $0xe0] sm:$0xff]
        %v5494 = vld [vmem:[%s5464 + $0xe8] sm:$0xff]
        %v5495 = vld [vmem:[%s5464 + $0xf0] sm:$0xff]
        %v5496 = vld [vmem:[%s5464 + $0xf8] sm:$0xff]
        %v5497 = vld [vmem:[%s5464 + $0x100] sm:$0xff]
        %v5498 = vld [vmem:[%s5464 + $0x108] sm:$0xff]
        %v5499 = vld [vmem:[%s5464 + $0x110] sm:$0xff]
        %v5500 = vld [vmem:[%s5464 + $0x118] sm:$0xff]
        %v5501 = vld [vmem:[%s5464 + $0x120] sm:$0xff]
        %v5502 = vld [vmem:[%s5464 + $0x128] sm:$0xff]
        %v5503 = vld [vmem:[%s5464 + $0x130] sm:$0xff]
        %v5504 = vld [vmem:[%s5464 + $0x138] sm:$0xff]
        %v5505 = vld [vmem:[%s5464 + $0x140] sm:$0xff]
        %v5506 = vld [vmem:[%s5464 + $0x148] sm:$0xff]
        %v5507 = vld [vmem:[%s5464 + $0x150] sm:$0xff]
        %v5508 = vld [vmem:[%s5464 + $0x158] sm:$0xff]
        %v5553 = vunpack.c.l.b16 %v5465
        %v5554 = vunpack.c.h.b16 %v5465
        %v5555 = vunpack.c.l.b16 %v5466
        %v5556 = vunpack.c.h.b16 %v5466
        %v5557 = vunpack.c.l.b16 %v5467
        %v5558 = vunpack.c.h.b16 %v5467
        %v5559 = vunpack.c.l.b16 %v5468
        %v5560 = vunpack.c.h.b16 %v5468
        %v5561 = vunpack.c.l.b16 %v5469
        %v5562 = vunpack.c.h.b16 %v5469
        %v5563 = vunpack.c.l.b16 %v5470
        %v5564 = vunpack.c.h.b16 %v5470
        %v5565 = vunpack.c.l.b16 %v5471
        %v5566 = vunpack.c.h.b16 %v5471
        %v5567 = vunpack.c.l.b16 %v5472
        %v5568 = vunpack.c.h.b16 %v5472
        %v5569 = vunpack.c.l.b16 %v5473
        %v5570 = vunpack.c.h.b16 %v5473
        %v5571 = vunpack.c.l.b16 %v5474
        %v5572 = vunpack.c.h.b16 %v5474
        %v5573 = vunpack.c.l.b16 %v5475
        %v5574 = vunpack.c.h.b16 %v5475
        %v5575 = vunpack.c.l.b16 %v5476
        %v5576 = vunpack.c.h.b16 %v5476
        %v5577 = vunpack.c.l.b16 %v5477
        %v5578 = vunpack.c.h.b16 %v5477
        %v5579 = vunpack.c.l.b16 %v5478
        %v5580 = vunpack.c.h.b16 %v5478
        %v5581 = vunpack.c.l.b16 %v5479
        %v5582 = vunpack.c.h.b16 %v5479
        %v5583 = vunpack.c.l.b16 %v5480
        %v5584 = vunpack.c.h.b16 %v5480
        %v5585 = vunpack.c.l.b16 %v5481
        %v5586 = vunpack.c.h.b16 %v5481
        %v5587 = vunpack.c.l.b16 %v5482
        %v5588 = vunpack.c.h.b16 %v5482
        %v5589 = vunpack.c.l.b16 %v5483
        %v5590 = vunpack.c.h.b16 %v5483
        %v5591 = vunpack.c.l.b16 %v5484
        %v5592 = vunpack.c.h.b16 %v5484
        %v5593 = vunpack.c.l.b16 %v5485
        %v5594 = vunpack.c.h.b16 %v5485
        %v5595 = vunpack.c.l.b16 %v5486
        %v5596 = vunpack.c.h.b16 %v5486
        %v5597 = vunpack.c.l.b16 %v5487
        %v5598 = vunpack.c.h.b16 %v5487
        %v5599 = vunpack.c.l.b16 %v5488
        %v5600 = vunpack.c.h.b16 %v5488
        %v5601 = vunpack.c.l.b16 %v5489
        %v5602 = vunpack.c.h.b16 %v5489
        %v5603 = vunpack.c.l.b16 %v5490
        %v5604 = vunpack.c.h.b16 %v5490
        %v5605 = vunpack.c.l.b16 %v5491
        %v5606 = vunpack.c.h.b16 %v5491
        %v5607 = vunpack.c.l.b16 %v5492
        %v5608 = vunpack.c.h.b16 %v5492
        %v5609 = vunpack.c.l.b16 %v5493
        %v5610 = vunpack.c.h.b16 %v5493
        %v5611 = vunpack.c.l.b16 %v5494
        %v5612 = vunpack.c.h.b16 %v5494
        %v5613 = vunpack.c.l.b16 %v5495
        %v5614 = vunpack.c.h.b16 %v5495
        %v5615 = vunpack.c.l.b16 %v5496
        %v5616 = vunpack.c.h.b16 %v5496
        %v5617 = vunpack.c.l.b16 %v5497
        %v5618 = vunpack.c.h.b16 %v5497
        %v5619 = vunpack.c.l.b16 %v5498
        %v5620 = vunpack.c.h.b16 %v5498
        %v5621 = vunpack.c.l.b16 %v5499
        %v5622 = vunpack.c.h.b16 %v5499
        %v5623 = vunpack.c.l.b16 %v5500
        %v5624 = vunpack.c.h.b16 %v5500
        %v5625 = vunpack.c.l.b16 %v5501
        %v5626 = vunpack.c.h.b16 %v5501
        %v5627 = vunpack.c.l.b16 %v5502
        %v5628 = vunpack.c.h.b16 %v5502
        %v5629 = vunpack.c.l.b16 %v5503
        %v5630 = vunpack.c.h.b16 %v5503
        %v5631 = vunpack.c.l.b16 %v5504
        %v5632 = vunpack.c.h.b16 %v5504
        %v5633 = vunpack.c.l.b16 %v5505
        %v5634 = vunpack.c.h.b16 %v5505
        %v5635 = vunpack.c.l.b16 %v5506
        %v5636 = vunpack.c.h.b16 %v5506
        %v5637 = vunpack.c.l.b16 %v5507
        %v5638 = vunpack.c.h.b16 %v5507
        %v5639 = vunpack.c.l.b16 %v5508
        %v5640 = vunpack.c.h.b16 %v5508
        %v5641 = vpack.c.b16 %v5555, %v5553
        %v5642 = vpack.c.b16 %v5556, %v5554
        %v5643 = vpack.c.b16 %v5559, %v5557
        %v5644 = vpack.c.b16 %v5560, %v5558
        %v5645 = vpack.c.b16 %v5563, %v5561
        %v5646 = vpack.c.b16 %v5564, %v5562
        %v5647 = vpack.c.b16 %v5567, %v5565
        %v5648 = vpack.c.b16 %v5568, %v5566
        %v5649 = vpack.c.b16 %v5571, %v5569
        %v5650 = vpack.c.b16 %v5572, %v5570
        %v5651 = vpack.c.b16 %v5575, %v5573
        %v5652 = vpack.c.b16 %v5576, %v5574
        %v5653 = vpack.c.b16 %v5579, %v5577
        %v5654 = vpack.c.b16 %v5580, %v5578
        %v5655 = vpack.c.b16 %v5583, %v5581
        %v5656 = vpack.c.b16 %v5584, %v5582
        %v5657 = vpack.c.b16 %v5587, %v5585
        %v5658 = vpack.c.b16 %v5588, %v5586
        %v5659 = vpack.c.b16 %v5591, %v5589
        %v5660 = vpack.c.b16 %v5592, %v5590
        %v5661 = vpack.c.b16 %v5595, %v5593
        %v5662 = vpack.c.b16 %v5596, %v5594
        %v5663 = vpack.c.b16 %v5599, %v5597
        %v5664 = vpack.c.b16 %v5600, %v5598
        %v5665 = vpack.c.b16 %v5603, %v5601
        %v5666 = vpack.c.b16 %v5604, %v5602
        %v5667 = vpack.c.b16 %v5607, %v5605
        %v5668 = vpack.c.b16 %v5608, %v5606
        %v5669 = vpack.c.b16 %v5611, %v5609
        %v5670 = vpack.c.b16 %v5612, %v5610
        %v5671 = vpack.c.b16 %v5615, %v5613
        %v5672 = vpack.c.b16 %v5616, %v5614
        %v5673 = vpack.c.b16 %v5619, %v5617
        %v5674 = vpack.c.b16 %v5620, %v5618
        %v5675 = vpack.c.b16 %v5623, %v5621
        %v5676 = vpack.c.b16 %v5624, %v5622
        %v5677 = vpack.c.b16 %v5627, %v5625
        %v5678 = vpack.c.b16 %v5628, %v5626
        %v5679 = vpack.c.b16 %v5631, %v5629
        %v5680 = vpack.c.b16 %v5632, %v5630
        %v5681 = vpack.c.b16 %v5635, %v5633
        %v5682 = vpack.c.b16 %v5636, %v5634
        %v5683 = vpack.c.b16 %v5639, %v5637
        %v5684 = vpack.c.b16 %v5640, %v5638
        %v5730 = vsel %vm2028, %v5463, 0
        %5732 = vmatprep.subr.bf16.mxu0 %v5642
        %5733 = vmatpush1.bf16.msra.mxu0 %v5641
        %5734 = vmatprep.subr.bf16.mxu0 %v5644
        %5735 = vmatpush1.bf16.msra.mxu0 %v5643
        %5736 = vmatprep.subr.bf16.mxu0 %v5646
        %5737 = vmatpush1.bf16.msra.mxu0 %v5645
        %5738 = vmatprep.subr.bf16.mxu0 %v5648
        %5739 = vmatpush1.bf16.msra.mxu0 %v5647
        %5740 = vmatprep.subr.bf16.mxu0 %v5650
        %5741 = vmatpush1.bf16.msra.mxu0 %v5649
        %5742 = vmatprep.subr.bf16.mxu0 %v5652
        %5743 = vmatpush1.bf16.msra.mxu0 %v5651
        %5744 = vmatprep.subr.bf16.mxu0 %v5654
        %5745 = vmatpush1.bf16.msra.mxu0 %v5653
        %5746 = vmatprep.subr.bf16.mxu0 %v5656
        %5747 = vmatpush1.bf16.msra.mxu0 %v5655
        %5748 = vmatprep.subr.bf16.mxu0 %v5658
        %5749 = vmatpush1.bf16.msra.mxu0 %v5657
        %5750 = vmatprep.subr.bf16.mxu0 %v5660
        %5751 = vmatpush1.bf16.msra.mxu0 %v5659
        %5752 = vmatprep.subr.bf16.mxu0 %v5662
        %5753 = vmatpush1.bf16.msra.mxu0 %v5661
        %5754 = vmatprep.subr.bf16.mxu0 %v5664
        %5755 = vmatpush1.bf16.msra.mxu0 %v5663
        %5756 = vmatprep.subr.bf16.mxu0 %v5666
        %5757 = vmatpush1.bf16.msra.mxu0 %v5665
        %5758 = vmatprep.subr.bf16.mxu0 %v5668
        %5759 = vmatpush1.bf16.msra.mxu0 %v5667
        %5760 = vmatprep.subr.bf16.mxu0 %v5670
        %5761 = vmatpush1.bf16.msra.mxu0 %v5669
        %5762 = vmatprep.subr.bf16.mxu0 %v5672
        %5763 = vmatpush1.bf16.msra.mxu0 %v5671
        %5764 = vmatprep.mubr.bf16.mxu0 %v5462
        %5765 = vmatmul.mubr.bf16.gmra.mrb[0].mxu0 %v5461
        %v5766 = vpop.f32.mrb[0].mxu0
        %v5767 = vadd.f32 0.0, %v5766
        %v5768 = vpop.f32.mrb[0].mxu0
        %v5769 = vadd.f32 0.0, %v5768
        %v5770 = vpop.f32.mrb[0].mxu0
        %v5771 = vpop.f32.mrb[0].mxu0
        %5772 = vdwg.mxu0
        %5773 = vmatprep.subr.bf16.mxu0 %v5674
        %5774 = vmatpush1.bf16.msra.mxu0 %v5673
        %5775 = vmatprep.subr.bf16.mxu0 %v5676
        %5776 = vmatpush1.bf16.msra.mxu0 %v5675
        %5777 = vmatprep.subr.bf16.mxu0 %v5678
        %5778 = vmatpush1.bf16.msra.mxu0 %v5677
        %5779 = vmatprep.subr.bf16.mxu0 %v5680
        %5780 = vmatpush1.bf16.msra.mxu0 %v5679
        %5781 = vmatprep.subr.bf16.mxu0 %v5682
        %5782 = vmatpush1.bf16.msra.mxu0 %v5681
        %5783 = vmatprep.subr.bf16.mxu0 %v5684
        %5784 = vmatpush1.bf16.msra.mxu0 %v5683
        %5785 = vmatprep.subr.bf16.mxu0 0
        %5786 = vmatpush1.bf16.msra.mxu0 0
        %5787 = vmatprep.subr.bf16.mxu0 0
        %5788 = vmatpush1.bf16.msra.mxu0 0
        %5789 = vmatprep.subr.bf16.mxu0 0
        %5790 = vmatpush1.bf16.msra.mxu0 0
        %5791 = vmatprep.subr.bf16.mxu0 0
        %5792 = vmatpush1.bf16.msra.mxu0 0
        %5793 = vmatprep.subr.bf16.mxu0 0
        %5794 = vmatpush1.bf16.msra.mxu0 0
        %5795 = vmatprep.subr.bf16.mxu0 0
        %5796 = vmatpush1.bf16.msra.mxu0 0
        %5797 = vmatprep.subr.bf16.mxu0 0
        %5798 = vmatpush1.bf16.msra.mxu0 0
        %5799 = vmatprep.subr.bf16.mxu0 0
        %5800 = vmatpush1.bf16.msra.mxu0 0
        %5801 = vmatprep.subr.bf16.mxu0 0
        %5802 = vmatpush1.bf16.msra.mxu0 0
        %5803 = vmatprep.subr.bf16.mxu0 0
        %5804 = vmatpush1.bf16.msra.mxu0 0
        %5805 = vmatprep.mubr.bf16.mxu0 0
        %5806 = vmatmul.mubr.bf16.gmra.mrb[0].mxu0 %v5730
        %v5807 = vpop.f32.mrb[0].mxu0
        %v5808 = vadd.f32 %v5767, %v5807
        %v5809 = vpop.f32.mrb[0].mxu0
        %v5810 = vadd.f32 %v5769, %v5809
        %v5811 = vpop.f32.mrb[0].mxu0
        %v5812 = vpop.f32.mrb[0].mxu0
        %5813 = vdwg.mxu0
        %v5814 = vadd.f32 %v5444, %v5808
        %v5815 = vadd.f32 %v5445, %v5810
        %v5816 = vld [vmem:[%s12] sm:$0x3]
        %v5818 = vlaneseq
        %v5819 = vshrl.u32 %v5818, 7
        %v5820 = vsub.s32 0, %v5819
        %v5821 = vrot.slane %v5816, %v5820
        %v5822 = vlaneseq
        %v5823 = vshrl.u32 %v5822, 7
        %v5824 = vsub.s32 1, %v5823
        %v5825 = vrot.slane %v5816, %v5824
        %v5828 = vadd.f32 %v5814, %v5821
        %v5829 = vadd.f32 %v5815, %v5825
        %v5830 = vmax.f32 %v5828, 0.0
        %v5831 = vmax.f32 %v5829, 0.0
        %v5832 = vld [vmem:[%s14] sm:$0x1]
        %v5833 = vpack.c.bf16 %v5830, %v5830
        %v5834 = vpack.c.bf16 %v5831, %v5831
        %v5835 = vld [vmem:[%s13] sm:$0xf]
        %v5836 = vld [vmem:[%s13 + $0x4] sm:$0xf]
        %v5837 = vld [vmem:[%s13 + $0x8] sm:$0xf]
        %v5838 = vld [vmem:[%s13 + $0xc] sm:$0xf]
        %v5839 = vld [vmem:[%s13 + $0x10] sm:$0xf]
        %v5840 = vld [vmem:[%s13 + $0x14] sm:$0xf]
        %v5841 = vld [vmem:[%s13 + $0x18] sm:$0xf]
        %v5842 = vld [vmem:[%s13 + $0x1c] sm:$0xf]
        %v5843 = vld [vmem:[%s13 + $0x20] sm:$0xf]
        %v5844 = vld [vmem:[%s13 + $0x24] sm:$0xf]
        %v5845 = vld [vmem:[%s13 + $0x28] sm:$0xf]
        %v5846 = vld [vmem:[%s13 + $0x2c] sm:$0xf]
        %v5847 = vld [vmem:[%s13 + $0x30] sm:$0xf]
        %v5848 = vld [vmem:[%s13 + $0x34] sm:$0xf]
        %v5849 = vld [vmem:[%s13 + $0x38] sm:$0xf]
        %v5850 = vld [vmem:[%s13 + $0x3c] sm:$0xf]
        %v5851 = vld [vmem:[%s13 + $0x40] sm:$0xf]
        %v5852 = vld [vmem:[%s13 + $0x44] sm:$0xf]
        %v5853 = vld [vmem:[%s13 + $0x48] sm:$0xf]
        %v5854 = vld [vmem:[%s13 + $0x4c] sm:$0xf]
        %v5855 = vld [vmem:[%s13 + $0x50] sm:$0xf]
        %v5856 = vld [vmem:[%s13 + $0x54] sm:$0xf]
        %v5857 = vld [vmem:[%s13 + $0x58] sm:$0xf]
        %v5858 = vld [vmem:[%s13 + $0x5c] sm:$0xf]
        %v5859 = vld [vmem:[%s13 + $0x60] sm:$0xf]
        %v5860 = vld [vmem:[%s13 + $0x64] sm:$0xf]
        %v5861 = vld [vmem:[%s13 + $0x68] sm:$0xf]
        %v5862 = vld [vmem:[%s13 + $0x6c] sm:$0xf]
        %v5863 = vld [vmem:[%s13 + $0x70] sm:$0xf]
        %v5864 = vld [vmem:[%s13 + $0x74] sm:$0xf]
        %v5865 = vld [vmem:[%s13 + $0x78] sm:$0xf]
        %v5866 = vld [vmem:[%s13 + $0x7c] sm:$0xf]
        %v5899 = vunpack.c.l.b16 %v5835
        %v5900 = vunpack.c.l.b16 %v5836
        %v5901 = vunpack.c.l.b16 %v5837
        %v5902 = vunpack.c.l.b16 %v5838
        %v5903 = vunpack.c.l.b16 %v5839
        %v5904 = vunpack.c.l.b16 %v5840
        %v5905 = vunpack.c.l.b16 %v5841
        %v5906 = vunpack.c.l.b16 %v5842
        %v5907 = vunpack.c.l.b16 %v5843
        %v5908 = vunpack.c.l.b16 %v5844
        %v5909 = vunpack.c.l.b16 %v5845
        %v5910 = vunpack.c.l.b16 %v5846
        %v5911 = vunpack.c.l.b16 %v5847
        %v5912 = vunpack.c.l.b16 %v5848
        %v5913 = vunpack.c.l.b16 %v5849
        %v5914 = vunpack.c.l.b16 %v5850
        %v5915 = vunpack.c.l.b16 %v5851
        %v5916 = vunpack.c.l.b16 %v5852
        %v5917 = vunpack.c.l.b16 %v5853
        %v5918 = vunpack.c.l.b16 %v5854
        %v5919 = vunpack.c.l.b16 %v5855
        %v5920 = vunpack.c.l.b16 %v5856
        %v5921 = vunpack.c.l.b16 %v5857
        %v5922 = vunpack.c.l.b16 %v5858
        %v5923 = vunpack.c.l.b16 %v5859
        %v5924 = vunpack.c.l.b16 %v5860
        %v5925 = vunpack.c.l.b16 %v5861
        %v5926 = vunpack.c.l.b16 %v5862
        %v5927 = vunpack.c.l.b16 %v5863
        %v5928 = vunpack.c.l.b16 %v5864
        %v5929 = vunpack.c.l.b16 %v5865
        %v5930 = vunpack.c.l.b16 %v5866
        %v5931 = vpack.c.b16 %v5900, %v5899
        %v5932 = vpack.c.b16 %v5902, %v5901
        %v5933 = vpack.c.b16 %v5904, %v5903
        %v5934 = vpack.c.b16 %v5906, %v5905
        %v5935 = vpack.c.b16 %v5908, %v5907
        %v5936 = vpack.c.b16 %v5910, %v5909
        %v5937 = vpack.c.b16 %v5912, %v5911
        %v5938 = vpack.c.b16 %v5914, %v5913
        %v5939 = vpack.c.b16 %v5916, %v5915
        %v5940 = vpack.c.b16 %v5918, %v5917
        %v5941 = vpack.c.b16 %v5920, %v5919
        %v5942 = vpack.c.b16 %v5922, %v5921
        %v5943 = vpack.c.b16 %v5924, %v5923
        %v5944 = vpack.c.b16 %v5926, %v5925
        %v5945 = vpack.c.b16 %v5928, %v5927
        %v5946 = vpack.c.b16 %v5930, %v5929
        %5963 = vmatprep.subr.bf16.mxu0 0
        %5964 = vmatpush1.bf16.msra.mxu0 %v5931
        %5965 = vmatprep.subr.bf16.mxu0 0
        %5966 = vmatpush1.bf16.msra.mxu0 %v5932
        %5967 = vmatprep.subr.bf16.mxu0 0
        %5968 = vmatpush1.bf16.msra.mxu0 %v5933
        %5969 = vmatprep.subr.bf16.mxu0 0
        %5970 = vmatpush1.bf16.msra.mxu0 %v5934
        %5971 = vmatprep.subr.bf16.mxu0 0
        %5972 = vmatpush1.bf16.msra.mxu0 %v5935
        %5973 = vmatprep.subr.bf16.mxu0 0
        %5974 = vmatpush1.bf16.msra.mxu0 %v5936
        %5975 = vmatprep.subr.bf16.mxu0 0
        %5976 = vmatpush1.bf16.msra.mxu0 %v5937
        %5977 = vmatprep.subr.bf16.mxu0 0
        %5978 = vmatpush1.bf16.msra.mxu0 %v5938
        %5979 = vmatprep.subr.bf16.mxu0 0
        %5980 = vmatpush1.bf16.msra.mxu0 %v5939
        %5981 = vmatprep.subr.bf16.mxu0 0
        %5982 = vmatpush1.bf16.msra.mxu0 %v5940
        %5983 = vmatprep.subr.bf16.mxu0 0
        %5984 = vmatpush1.bf16.msra.mxu0 %v5941
        %5985 = vmatprep.subr.bf16.mxu0 0
        %5986 = vmatpush1.bf16.msra.mxu0 %v5942
        %5987 = vmatprep.subr.bf16.mxu0 0
        %5988 = vmatpush1.bf16.msra.mxu0 %v5943
        %5989 = vmatprep.subr.bf16.mxu0 0
        %5990 = vmatpush1.bf16.msra.mxu0 %v5944
        %5991 = vmatprep.subr.bf16.mxu0 0
        %5992 = vmatpush1.bf16.msra.mxu0 %v5945
        %5993 = vmatprep.subr.bf16.mxu0 0
        %5994 = vmatpush1.bf16.msra.mxu0 %v5946
        %5995 = vmatprep.mubr.bf16.mxu0 %v5834
        %5996 = vmatmul.mubr.bf16.gmra.mrb[0].mxu0 %v5833
        %v5997 = vpop.f32.mrb[0].mxu0
        %v5998 = vadd.f32 0.0, %v5997
        %v5999 = vpop.f32.mrb[0].mxu0
        %v6000 = vpop.f32.mrb[0].mxu0
        %v6001 = vpop.f32.mrb[0].mxu0
        %6002 = vdwg.mxu0
        %v6003 = vadd.f32 %v5832, %v5998
        %s6004 = scalar_lea.vmem %s13, 128
        %v6005 = vld [vmem:[%s6004] sm:$0xf]
        %v6006 = vld [vmem:[%s6004 + $0x4] sm:$0xf]
        %v6007 = vld [vmem:[%s6004 + $0x8] sm:$0xf]
        %v6008 = vld [vmem:[%s6004 + $0xc] sm:$0xf]
        %v6009 = vld [vmem:[%s6004 + $0x10] sm:$0xf]
        %v6010 = vld [vmem:[%s6004 + $0x14] sm:$0xf]
        %v6011 = vld [vmem:[%s6004 + $0x18] sm:$0xf]
        %v6012 = vld [vmem:[%s6004 + $0x1c] sm:$0xf]
        %v6013 = vld [vmem:[%s6004 + $0x20] sm:$0xf]
        %v6014 = vld [vmem:[%s6004 + $0x24] sm:$0xf]
        %v6015 = vld [vmem:[%s6004 + $0x28] sm:$0xf]
        %v6016 = vld [vmem:[%s6004 + $0x2c] sm:$0xf]
        %v6017 = vld [vmem:[%s6004 + $0x30] sm:$0xf]
        %v6018 = vld [vmem:[%s6004 + $0x34] sm:$0xf]
        %v6019 = vld [vmem:[%s6004 + $0x38] sm:$0xf]
        %v6020 = vld [vmem:[%s6004 + $0x3c] sm:$0xf]
        %v6021 = vld [vmem:[%s6004 + $0x40] sm:$0xf]
        %v6022 = vld [vmem:[%s6004 + $0x44] sm:$0xf]
        %v6023 = vld [vmem:[%s6004 + $0x48] sm:$0xf]
        %v6024 = vld [vmem:[%s6004 + $0x4c] sm:$0xf]
        %v6025 = vld [vmem:[%s6004 + $0x50] sm:$0xf]
        %v6026 = vld [vmem:[%s6004 + $0x54] sm:$0xf]
        %v6027 = vld [vmem:[%s6004 + $0x58] sm:$0xf]
        %v6028 = vld [vmem:[%s6004 + $0x5c] sm:$0xf]
        %v6029 = vld [vmem:[%s6004 + $0x60] sm:$0xf]
        %v6030 = vld [vmem:[%s6004 + $0x64] sm:$0xf]
        %v6031 = vld [vmem:[%s6004 + $0x68] sm:$0xf]
        %v6032 = vld [vmem:[%s6004 + $0x6c] sm:$0xf]
        %v6033 = vld [vmem:[%s6004 + $0x70] sm:$0xf]
        %v6034 = vld [vmem:[%s6004 + $0x74] sm:$0xf]
        %v6035 = vld [vmem:[%s6004 + $0x78] sm:$0xf]
        %v6036 = vld [vmem:[%s6004 + $0x7c] sm:$0xf]
        %v6038 = vshrl.u32 %v5833, 16
        %v6041 = vshrl.u32 %v5834, 16
        %v6077 = vunpack.c.l.b16 %v6005
        %v6078 = vunpack.c.l.b16 %v6006
        %v6079 = vunpack.c.l.b16 %v6007
        %v6080 = vunpack.c.l.b16 %v6008
        %v6081 = vunpack.c.l.b16 %v6009
        %v6082 = vunpack.c.l.b16 %v6010
        %v6083 = vunpack.c.l.b16 %v6011
        %v6084 = vunpack.c.l.b16 %v6012
        %v6085 = vunpack.c.l.b16 %v6013
        %v6086 = vunpack.c.l.b16 %v6014
        %v6087 = vunpack.c.l.b16 %v6015
        %v6088 = vunpack.c.l.b16 %v6016
        %v6089 = vunpack.c.l.b16 %v6017
        %v6090 = vunpack.c.l.b16 %v6018
        %v6091 = vunpack.c.l.b16 %v6019
        %v6092 = vunpack.c.l.b16 %v6020
        %v6093 = vunpack.c.l.b16 %v6021
        %v6094 = vunpack.c.l.b16 %v6022
        %v6095 = vunpack.c.l.b16 %v6023
        %v6096 = vunpack.c.l.b16 %v6024
        %v6097 = vunpack.c.l.b16 %v6025
        %v6098 = vunpack.c.l.b16 %v6026
        %v6099 = vunpack.c.l.b16 %v6027
        %v6100 = vunpack.c.l.b16 %v6028
        %v6101 = vunpack.c.l.b16 %v6029
        %v6102 = vunpack.c.l.b16 %v6030
        %v6103 = vunpack.c.l.b16 %v6031
        %v6104 = vunpack.c.l.b16 %v6032
        %v6105 = vunpack.c.l.b16 %v6033
        %v6106 = vunpack.c.l.b16 %v6034
        %v6107 = vunpack.c.l.b16 %v6035
        %v6108 = vunpack.c.l.b16 %v6036
        %v6109 = vpack.c.b16 %v6078, %v6077
        %v6110 = vpack.c.b16 %v6080, %v6079
        %v6111 = vpack.c.b16 %v6082, %v6081
        %v6112 = vpack.c.b16 %v6084, %v6083
        %v6113 = vpack.c.b16 %v6086, %v6085
        %v6114 = vpack.c.b16 %v6088, %v6087
        %v6115 = vpack.c.b16 %v6090, %v6089
        %v6116 = vpack.c.b16 %v6092, %v6091
        %v6117 = vpack.c.b16 %v6094, %v6093
        %v6118 = vpack.c.b16 %v6096, %v6095
        %v6119 = vpack.c.b16 %v6098, %v6097
        %v6120 = vpack.c.b16 %v6100, %v6099
        %v6121 = vpack.c.b16 %v6102, %v6101
        %v6122 = vpack.c.b16 %v6104, %v6103
        %v6123 = vpack.c.b16 %v6106, %v6105
        %v6124 = vpack.c.b16 %v6108, %v6107
        %6141 = vmatprep.subr.bf16.mxu0 0
        %6142 = vmatpush1.bf16.msra.mxu0 %v6109
        %6143 = vmatprep.subr.bf16.mxu0 0
        %6144 = vmatpush1.bf16.msra.mxu0 %v6110
        %6145 = vmatprep.subr.bf16.mxu0 0
        %6146 = vmatpush1.bf16.msra.mxu0 %v6111
        %6147 = vmatprep.subr.bf16.mxu0 0
        %6148 = vmatpush1.bf16.msra.mxu0 %v6112
        %6149 = vmatprep.subr.bf16.mxu0 0
        %6150 = vmatpush1.bf16.msra.mxu0 %v6113
        %6151 = vmatprep.subr.bf16.mxu0 0
        %6152 = vmatpush1.bf16.msra.mxu0 %v6114
        %6153 = vmatprep.subr.bf16.mxu0 0
        %6154 = vmatpush1.bf16.msra.mxu0 %v6115
        %6155 = vmatprep.subr.bf16.mxu0 0
        %6156 = vmatpush1.bf16.msra.mxu0 %v6116
        %6157 = vmatprep.subr.bf16.mxu0 0
        %6158 = vmatpush1.bf16.msra.mxu0 %v6117
        %6159 = vmatprep.subr.bf16.mxu0 0
        %6160 = vmatpush1.bf16.msra.mxu0 %v6118
        %6161 = vmatprep.subr.bf16.mxu0 0
        %6162 = vmatpush1.bf16.msra.mxu0 %v6119
        %6163 = vmatprep.subr.bf16.mxu0 0
        %6164 = vmatpush1.bf16.msra.mxu0 %v6120
        %6165 = vmatprep.subr.bf16.mxu0 0
        %6166 = vmatpush1.bf16.msra.mxu0 %v6121
        %6167 = vmatprep.subr.bf16.mxu0 0
        %6168 = vmatpush1.bf16.msra.mxu0 %v6122
        %6169 = vmatprep.subr.bf16.mxu0 0
        %6170 = vmatpush1.bf16.msra.mxu0 %v6123
        %6171 = vmatprep.subr.bf16.mxu0 0
        %6172 = vmatpush1.bf16.msra.mxu0 %v6124
        %6173 = vmatprep.mubr.bf16.mxu0 %v6041
        %6174 = vmatmul.mubr.bf16.gmra.mrb[0].mxu0 %v6038
        %v6175 = vpop.f32.mrb[0].mxu0
        %v6176 = vadd.f32 0.0, %v6175
        %v6177 = vpop.f32.mrb[0].mxu0
        %v6178 = vpop.f32.mrb[0].mxu0
        %v6179 = vpop.f32.mrb[0].mxu0
        %6180 = vdwg.mxu0
        %v6181 = vadd.f32 %v6003, %v6176
        %s6182 = scalar_lea.vmem %s13, 256
        %v6183 = vld [vmem:[%s6182] sm:$0xf]
        %v6184 = vld [vmem:[%s6182 + $0x4] sm:$0xf]
        %v6185 = vld [vmem:[%s6182 + $0x8] sm:$0xf]
        %v6186 = vld [vmem:[%s6182 + $0xc] sm:$0xf]
        %v6187 = vld [vmem:[%s6182 + $0x10] sm:$0xf]
        %v6188 = vld [vmem:[%s6182 + $0x14] sm:$0xf]
        %v6189 = vld [vmem:[%s6182 + $0x18] sm:$0xf]
        %v6190 = vld [vmem:[%s6182 + $0x1c] sm:$0xf]
        %v6191 = vld [vmem:[%s6182 + $0x20] sm:$0xf]
        %v6192 = vld [vmem:[%s6182 + $0x24] sm:$0xf]
        %v6193 = vld [vmem:[%s6182 + $0x28] sm:$0xf]
        %v6194 = vld [vmem:[%s6182 + $0x2c] sm:$0xf]
        %v6195 = vld [vmem:[%s6182 + $0x30] sm:$0xf]
        %v6196 = vld [vmem:[%s6182 + $0x34] sm:$0xf]
        %v6197 = vld [vmem:[%s6182 + $0x38] sm:$0xf]
        %v6198 = vld [vmem:[%s6182 + $0x3c] sm:$0xf]
        %v6199 = vld [vmem:[%s6182 + $0x40] sm:$0xf]
        %v6200 = vld [vmem:[%s6182 + $0x44] sm:$0xf]
        %v6201 = vld [vmem:[%s6182 + $0x48] sm:$0xf]
        %v6202 = vld [vmem:[%s6182 + $0x4c] sm:$0xf]
        %v6203 = vld [vmem:[%s6182 + $0x50] sm:$0xf]
        %v6204 = vld [vmem:[%s6182 + $0x54] sm:$0xf]
        %v6205 = vld [vmem:[%s6182 + $0x58] sm:$0xf]
        %v6206 = vld [vmem:[%s6182 + $0x5c] sm:$0xf]
        %v6207 = vld [vmem:[%s6182 + $0x60] sm:$0xf]
        %v6208 = vld [vmem:[%s6182 + $0x64] sm:$0xf]
        %v6209 = vld [vmem:[%s6182 + $0x68] sm:$0xf]
        %v6210 = vld [vmem:[%s6182 + $0x6c] sm:$0xf]
        %v6211 = vld [vmem:[%s6182 + $0x70] sm:$0xf]
        %v6212 = vld [vmem:[%s6182 + $0x74] sm:$0xf]
        %v6213 = vld [vmem:[%s6182 + $0x78] sm:$0xf]
        %v6214 = vld [vmem:[%s6182 + $0x7c] sm:$0xf]
        %v6217 = vrot.slane %v5833, 1
        %v6218 = vrot.slane %v5834, 1
        %v6253 = vunpack.c.l.b16 %v6183
        %v6254 = vunpack.c.l.b16 %v6184
        %v6255 = vunpack.c.l.b16 %v6185
        %v6256 = vunpack.c.l.b16 %v6186
        %v6257 = vunpack.c.l.b16 %v6187
        %v6258 = vunpack.c.l.b16 %v6188
        %v6259 = vunpack.c.l.b16 %v6189
        %v6260 = vunpack.c.l.b16 %v6190
        %v6261 = vunpack.c.l.b16 %v6191
        %v6262 = vunpack.c.l.b16 %v6192
        %v6263 = vunpack.c.l.b16 %v6193
        %v6264 = vunpack.c.l.b16 %v6194
        %v6265 = vunpack.c.l.b16 %v6195
        %v6266 = vunpack.c.l.b16 %v6196
        %v6267 = vunpack.c.l.b16 %v6197
        %v6268 = vunpack.c.l.b16 %v6198
        %v6269 = vunpack.c.l.b16 %v6199
        %v6270 = vunpack.c.l.b16 %v6200
        %v6271 = vunpack.c.l.b16 %v6201
        %v6272 = vunpack.c.l.b16 %v6202
        %v6273 = vunpack.c.l.b16 %v6203
        %v6274 = vunpack.c.l.b16 %v6204
        %v6275 = vunpack.c.l.b16 %v6205
        %v6276 = vunpack.c.l.b16 %v6206
        %v6277 = vunpack.c.l.b16 %v6207
        %v6278 = vunpack.c.l.b16 %v6208
        %v6279 = vunpack.c.l.b16 %v6209
        %v6280 = vunpack.c.l.b16 %v6210
        %v6281 = vunpack.c.l.b16 %v6211
        %v6282 = vunpack.c.l.b16 %v6212
        %v6283 = vunpack.c.l.b16 %v6213
        %v6284 = vunpack.c.l.b16 %v6214
        %v6285 = vpack.c.b16 %v6254, %v6253
        %v6286 = vpack.c.b16 %v6256, %v6255
        %v6287 = vpack.c.b16 %v6258, %v6257
        %v6288 = vpack.c.b16 %v6260, %v6259
        %v6289 = vpack.c.b16 %v6262, %v6261
        %v6290 = vpack.c.b16 %v6264, %v6263
        %v6291 = vpack.c.b16 %v6266, %v6265
        %v6292 = vpack.c.b16 %v6268, %v6267
        %v6293 = vpack.c.b16 %v6270, %v6269
        %v6294 = vpack.c.b16 %v6272, %v6271
        %v6295 = vpack.c.b16 %v6274, %v6273
        %v6296 = vpack.c.b16 %v6276, %v6275
        %v6297 = vpack.c.b16 %v6278, %v6277
        %v6298 = vpack.c.b16 %v6280, %v6279
        %v6299 = vpack.c.b16 %v6282, %v6281
        %v6300 = vpack.c.b16 %v6284, %v6283
        %6317 = vmatprep.subr.bf16.mxu0 0
        %6318 = vmatpush1.bf16.msra.mxu0 %v6285
        %6319 = vmatprep.subr.bf16.mxu0 0
        %6320 = vmatpush1.bf16.msra.mxu0 %v6286
        %6321 = vmatprep.subr.bf16.mxu0 0
        %6322 = vmatpush1.bf16.msra.mxu0 %v6287
        %6323 = vmatprep.subr.bf16.mxu0 0
        %6324 = vmatpush1.bf16.msra.mxu0 %v6288
        %6325 = vmatprep.subr.bf16.mxu0 0
        %6326 = vmatpush1.bf16.msra.mxu0 %v6289
        %6327 = vmatprep.subr.bf16.mxu0 0
        %6328 = vmatpush1.bf16.msra.mxu0 %v6290
        %6329 = vmatprep.subr.bf16.mxu0 0
        %6330 = vmatpush1.bf16.msra.mxu0 %v6291
        %6331 = vmatprep.subr.bf16.mxu0 0
        %6332 = vmatpush1.bf16.msra.mxu0 %v6292
        %6333 = vmatprep.subr.bf16.mxu0 0
        %6334 = vmatpush1.bf16.msra.mxu0 %v6293
        %6335 = vmatprep.subr.bf16.mxu0 0
        %6336 = vmatpush1.bf16.msra.mxu0 %v6294
        %6337 = vmatprep.subr.bf16.mxu0 0
        %6338 = vmatpush1.bf16.msra.mxu0 %v6295
        %6339 = vmatprep.subr.bf16.mxu0 0
        %6340 = vmatpush1.bf16.msra.mxu0 %v6296
        %6341 = vmatprep.subr.bf16.mxu0 0
        %6342 = vmatpush1.bf16.msra.mxu0 %v6297
        %6343 = vmatprep.subr.bf16.mxu0 0
        %6344 = vmatpush1.bf16.msra.mxu0 %v6298
        %6345 = vmatprep.subr.bf16.mxu0 0
        %6346 = vmatpush1.bf16.msra.mxu0 %v6299
        %6347 = vmatprep.subr.bf16.mxu0 0
        %6348 = vmatpush1.bf16.msra.mxu0 %v6300
        %6349 = vmatprep.mubr.bf16.mxu0 %v6218
        %6350 = vmatmul.mubr.bf16.gmra.mrb[0].mxu0 %v6217
        %v6351 = vpop.f32.mrb[0].mxu0
        %v6352 = vadd.f32 0.0, %v6351
        %v6353 = vpop.f32.mrb[0].mxu0
        %v6354 = vpop.f32.mrb[0].mxu0
        %v6355 = vpop.f32.mrb[0].mxu0
        %6356 = vdwg.mxu0
        %v6357 = vadd.f32 %v6181, %v6352
        %s6358 = scalar_lea.vmem %s13, 384
        %v6359 = vld [vmem:[%s6358] sm:$0xf]
        %v6360 = vld [vmem:[%s6358 + $0x4] sm:$0xf]
        %v6361 = vld [vmem:[%s6358 + $0x8] sm:$0xf]
        %v6362 = vld [vmem:[%s6358 + $0xc] sm:$0xf]
        %v6363 = vld [vmem:[%s6358 + $0x10] sm:$0xf]
        %v6364 = vld [vmem:[%s6358 + $0x14] sm:$0xf]
        %v6365 = vld [vmem:[%s6358 + $0x18] sm:$0xf]
        %v6366 = vld [vmem:[%s6358 + $0x1c] sm:$0xf]
        %v6367 = vld [vmem:[%s6358 + $0x20] sm:$0xf]
        %v6368 = vld [vmem:[%s6358 + $0x24] sm:$0xf]
        %v6369 = vld [vmem:[%s6358 + $0x28] sm:$0xf]
        %v6370 = vld [vmem:[%s6358 + $0x2c] sm:$0xf]
        %v6371 = vld [vmem:[%s6358 + $0x30] sm:$0xf]
        %v6372 = vld [vmem:[%s6358 + $0x34] sm:$0xf]
        %v6373 = vld [vmem:[%s6358 + $0x38] sm:$0xf]
        %v6374 = vld [vmem:[%s6358 + $0x3c] sm:$0xf]
        %v6375 = vld [vmem:[%s6358 + $0x40] sm:$0xf]
        %v6376 = vld [vmem:[%s6358 + $0x44] sm:$0xf]
        %v6377 = vld [vmem:[%s6358 + $0x48] sm:$0xf]
        %v6378 = vld [vmem:[%s6358 + $0x4c] sm:$0xf]
        %v6379 = vld [vmem:[%s6358 + $0x50] sm:$0xf]
        %v6380 = vld [vmem:[%s6358 + $0x54] sm:$0xf]
        %v6381 = vld [vmem:[%s6358 + $0x58] sm:$0xf]
        %v6382 = vld [vmem:[%s6358 + $0x5c] sm:$0xf]
        %v6383 = vld [vmem:[%s6358 + $0x60] sm:$0xf]
        %v6384 = vld [vmem:[%s6358 + $0x64] sm:$0xf]
        %v6385 = vld [vmem:[%s6358 + $0x68] sm:$0xf]
        %v6386 = vld [vmem:[%s6358 + $0x6c] sm:$0xf]
        %v6387 = vld [vmem:[%s6358 + $0x70] sm:$0xf]
        %v6388 = vld [vmem:[%s6358 + $0x74] sm:$0xf]
        %v6389 = vld [vmem:[%s6358 + $0x78] sm:$0xf]
        %v6390 = vld [vmem:[%s6358 + $0x7c] sm:$0xf]
        %v6391 = vrot.slane %v6038, 1
        %v6392 = vrot.slane %v6041, 1
        %v6427 = vunpack.c.l.b16 %v6359
        %v6428 = vunpack.c.l.b16 %v6360
        %v6429 = vunpack.c.l.b16 %v6361
        %v6430 = vunpack.c.l.b16 %v6362
        %v6431 = vunpack.c.l.b16 %v6363
        %v6432 = vunpack.c.l.b16 %v6364
        %v6433 = vunpack.c.l.b16 %v6365
        %v6434 = vunpack.c.l.b16 %v6366
        %v6435 = vunpack.c.l.b16 %v6367
        %v6436 = vunpack.c.l.b16 %v6368
        %v6437 = vunpack.c.l.b16 %v6369
        %v6438 = vunpack.c.l.b16 %v6370
        %v6439 = vunpack.c.l.b16 %v6371
        %v6440 = vunpack.c.l.b16 %v6372
        %v6441 = vunpack.c.l.b16 %v6373
        %v6442 = vunpack.c.l.b16 %v6374
        %v6443 = vunpack.c.l.b16 %v6375
        %v6444 = vunpack.c.l.b16 %v6376
        %v6445 = vunpack.c.l.b16 %v6377
        %v6446 = vunpack.c.l.b16 %v6378
        %v6447 = vunpack.c.l.b16 %v6379
        %v6448 = vunpack.c.l.b16 %v6380
        %v6449 = vunpack.c.l.b16 %v6381
        %v6450 = vunpack.c.l.b16 %v6382
        %v6451 = vunpack.c.l.b16 %v6383
        %v6452 = vunpack.c.l.b16 %v6384
        %v6453 = vunpack.c.l.b16 %v6385
        %v6454 = vunpack.c.l.b16 %v6386
        %v6455 = vunpack.c.l.b16 %v6387
        %v6456 = vunpack.c.l.b16 %v6388
        %v6457 = vunpack.c.l.b16 %v6389
        %v6458 = vunpack.c.l.b16 %v6390
        %v6459 = vpack.c.b16 %v6428, %v6427
        %v6460 = vpack.c.b16 %v6430, %v6429
        %v6461 = vpack.c.b16 %v6432, %v6431
        %v6462 = vpack.c.b16 %v6434, %v6433
        %v6463 = vpack.c.b16 %v6436, %v6435
        %v6464 = vpack.c.b16 %v6438, %v6437
        %v6465 = vpack.c.b16 %v6440, %v6439
        %v6466 = vpack.c.b16 %v6442, %v6441
        %v6467 = vpack.c.b16 %v6444, %v6443
        %v6468 = vpack.c.b16 %v6446, %v6445
        %v6469 = vpack.c.b16 %v6448, %v6447
        %v6470 = vpack.c.b16 %v6450, %v6449
        %v6471 = vpack.c.b16 %v6452, %v6451
        %v6472 = vpack.c.b16 %v6454, %v6453
        %v6473 = vpack.c.b16 %v6456, %v6455
        %v6474 = vpack.c.b16 %v6458, %v6457
        %6491 = vmatprep.subr.bf16.mxu0 0
        %6492 = vmatpush1.bf16.msra.mxu0 %v6459
        %6493 = vmatprep.subr.bf16.mxu0 0
        %6494 = vmatpush1.bf16.msra.mxu0 %v6460
        %6495 = vmatprep.subr.bf16.mxu0 0
        %6496 = vmatpush1.bf16.msra.mxu0 %v6461
        %6497 = vmatprep.subr.bf16.mxu0 0
        %6498 = vmatpush1.bf16.msra.mxu0 %v6462
        %6499 = vmatprep.subr.bf16.mxu0 0
        %6500 = vmatpush1.bf16.msra.mxu0 %v6463
        %6501 = vmatprep.subr.bf16.mxu0 0
        %6502 = vmatpush1.bf16.msra.mxu0 %v6464
        %6503 = vmatprep.subr.bf16.mxu0 0
        %6504 = vmatpush1.bf16.msra.mxu0 %v6465
        %6505 = vmatprep.subr.bf16.mxu0 0
        %6506 = vmatpush1.bf16.msra.mxu0 %v6466
        %6507 = vmatprep.subr.bf16.mxu0 0
        %6508 = vmatpush1.bf16.msra.mxu0 %v6467
        %6509 = vmatprep.subr.bf16.mxu0 0
        %6510 = vmatpush1.bf16.msra.mxu0 %v6468
        %6511 = vmatprep.subr.bf16.mxu0 0
        %6512 = vmatpush1.bf16.msra.mxu0 %v6469
        %6513 = vmatprep.subr.bf16.mxu0 0
        %6514 = vmatpush1.bf16.msra.mxu0 %v6470
        %6515 = vmatprep.subr.bf16.mxu0 0
        %6516 = vmatpush1.bf16.msra.mxu0 %v6471
        %6517 = vmatprep.subr.bf16.mxu0 0
        %6518 = vmatpush1.bf16.msra.mxu0 %v6472
        %6519 = vmatprep.subr.bf16.mxu0 0
        %6520 = vmatpush1.bf16.msra.mxu0 %v6473
        %6521 = vmatprep.subr.bf16.mxu0 0
        %6522 = vmatpush1.bf16.msra.mxu0 %v6474
        %6523 = vmatprep.mubr.bf16.mxu0 %v6392
        %6524 = vmatmul.mubr.bf16.gmra.mrb[0].mxu0 %v6391
        %v6525 = vpop.f32.mrb[0].mxu0
        %v6526 = vadd.f32 0.0, %v6525
        %v6527 = vpop.f32.mrb[0].mxu0
        %v6528 = vpop.f32.mrb[0].mxu0
        %v6529 = vpop.f32.mrb[0].mxu0
        %6530 = vdwg.mxu0
        %v6531 = vadd.f32 %v6357, %v6526
        %vm6532 = vcmask 122880
        %6533 = vst.msk [vmem:[%s486] sm:$0x1] %vm6532, %v6531
        %s6534 = sand.u32 %s357, 1
        %s6535 = scalar_lea.sflag [#allocation3], %s6534
        %s6536 = sand.u32 %s357, 1
        %s6537 = scalar_lea.vmem [#allocation2], %s6536
        // Predicated region
        $region81: #{vae_encoder_forward.1} parent=79 // pred_check
          %p6538 = pneg %p367
        $region82: #{vae_encoder_forward.1} parent=79 // pred_check_branch
          %6540 = sbr.rel (%p6538) target = $region84
        $region83: #{vae_encoder_forward.1} parent=79 // pred_region
          %s6542 = ssub.s32 16, 16
          %6543 = vsyncadd %s6535, %s6542
          %s6544 = smul.addr %s29, 16
          %s6545 = scalar_lea.hbm %s15, %s6544
          %s6547 = sshll.u32 %s6537, 4
          %s6548 = int_to_ptr.vmem [resolvable:$true] %s6547
          %6550 = dma.vmem_to_hbm [thread:$0]  %s6548, 16, %s6545, %s6535
        $region84: #{vae_encoder_forward.1} parent=79 // pred_fallthru
          _
      $region80: #{vae_encoder_forward.1} parent=5 // pred_fallthru
        _
      %p6551 = scmp.le.s32.totalorder 2, %s24
      // Predicated region
      $region85: #{vae_encoder_forward.1} parent=5 // pred_check
        %p6552 = pneg %p6551
      $region86: #{vae_encoder_forward.1} parent=5 // pred_check_branch
        %6554 = sbr.rel (%p6552) target = $region88
      $region87: #{vae_encoder_forward.1} parent=5 // pred_region
        %s6555 = ssub.s32 %s24, 2
        // Predicated region
        $region89: #{vae_encoder_forward.1} parent=87 // pred_check
          %p6556 = pneg %p373
        $region90: #{vae_encoder_forward.1} parent=87 // pred_check_branch
          %6558 = sbr.rel (%p6556) target = $region92
        $region91: #{vae_encoder_forward.1} parent=87 // pred_region
          %s6559 = sand.u32 %s358, 1
          %s6560 = scalar_lea.sflag [#allocation3], %s6559
          %s6561 = sand.u32 %s358, 1
          %s6562 = scalar_lea.vmem [#allocation2], %s6561
          %6563 = dma.done %s6560, 16
        $region92: #{vae_encoder_forward.1} parent=87 // pred_fallthru
          _
      $region88: #{vae_encoder_forward.1} parent=5 // pred_fallthru
        _
    $region6: #{vae_encoder_forward.1} parent=1 // loop_footer
      %s28 = sadd.s32 1, %s24
    $region7: #{vae_encoder_forward.1} parent=1 // loop_footer_branch
      %23 = sbr.rel target = $region3
    $region8: #{vae_encoder_forward.1} parent=1 // loop_exit
      _
    %6564 = vsyncpa [#allocation3], 1
    %s6565 = scalar_lea.sflag [#allocation3], 1
    %6566 = vsyncpa %s6565, 1

</llo_original>
